<compile_context>
chip_gen: v7x
topology: tpu7x:2x2x1
jax: 0.10.0
libtpu: 0.0.40
codegen_flags: <defaults>
</compile_context>

<pallas_src>
import numpy as np
import jax
import jax.numpy as jnp
from jax.experimental import pallas as pl
from jax.experimental.pallas import tpu as pltpu


def _round_up(x, m):
    return ((x + m - 1) // m) * m


# --------------------------------------------------------------------------- #
# Kernel
# --------------------------------------------------------------------------- #
def make_decoder_kernel(n_layers, hidden_size):
    L, H = n_layers, hidden_size

    def kernel(*refs):
        # inputs : x_seq(padded), emb_w, emb_b, (w_ih, w_hh, b)*L, lin_w, lin_b, h0, c0
        # outputs: pred (lane-padded), h_out, c_out
        # scratch: gx0 [T,B,4H] f32, hL [T,B,H] f32
        x_ref, emb_w_ref, emb_b_ref = refs[0:3]
        lstm_refs = refs[3:3 + 3 * L]
        lin_w_ref, lin_b_ref, h0_ref, c0_ref = refs[3 + 3 * L:7 + 3 * L]
        pred_ref, h_ref, c_ref = refs[7 + 3 * L:10 + 3 * L]
        gx0_ref, hL_ref = refs[10 + 3 * L:12 + 3 * L]

        T, B, _ = x_ref.shape
        O_pad = lin_w_ref.shape[1]

        # Recurrent state lives in the VMEM-resident output buffers for the
        # whole rollout; written back to HBM once, at the end of the call.
        h_ref[...] = h0_ref[...]
        c_ref[...] = c0_ref[...]

        # ---- HOISTED: embedding + layer-0 input projection for ALL T steps ---
        # (dropout == identity, eval semantics)
        emb_w = emb_w_ref[...]                                   # [K_in_pad, E]
        x_all = x_ref[...].reshape(T * B, x_ref.shape[2])        # [T*B, K_in_pad]
        emb = jnp.maximum(
            jnp.dot(x_all.astype(emb_w.dtype), emb_w,
                    preferred_element_type=jnp.float32) + emb_b_ref[...],
            0.0)                                                 # [T*B, E] f32
        w_ih0 = lstm_refs[0][...]                                # [E, 4H]
        gx0_ref[...] = (jnp.dot(emb.astype(w_ih0.dtype), w_ih0,
                                preferred_element_type=jnp.float32)
                        + lstm_refs[2][...]).reshape(T, B, 4 * H)

        def sigmoid(z):
            # one EUP tanh per gate instead of exp + full-precision divide
            return 0.5 * (jnp.tanh(0.5 * z) + 1.0)

        # ---- recurrence: fully unrolled over the (static, small) T steps -----
        # Full unroll with static indices == fori_loop(unroll=True); gives the
        # LLO scheduler cross-step visibility.
        for t in range(T):
            inp = None
            for l in range(L):
                w_hh = lstm_refs[3 * l + 1][...]                 # [H, 4H]
                h_prev = h_ref[l]                                # [B, H] f32
                c_prev = c_ref[l]                                # [B, H] f32
                hh = jnp.dot(h_prev.astype(w_hh.dtype), w_hh,
                             preferred_element_type=jnp.float32)
                if l == 0:
                    gates = gx0_ref[t] + hh                      # x-side precomputed
                else:
                    w_ih = lstm_refs[3 * l][...]                 # [H, 4H]
                    gates = (jnp.dot(inp.astype(w_ih.dtype), w_ih,
                                     preferred_element_type=jnp.float32)
                             + hh + lstm_refs[3 * l + 2][...])
                # H % 128 == 0 -> each gate slice is lane-dense (no relayout).
                i_g = sigmoid(gates[:, 0 * H:1 * H])
                f_g = sigmoid(gates[:, 1 * H:2 * H])
                g_g = jnp.tanh(gates[:, 2 * H:3 * H])
                o_g = sigmoid(gates[:, 3 * H:4 * H])
                c_new = f_g * c_prev + i_g * g_g
                h_new = o_g * jnp.tanh(c_new)
                h_ref[l] = h_new
                c_ref[l] = c_new
                inp = h_new                                      # feed next layer
            hL_ref[t] = inp                                      # top-layer output

        # ---- HOISTED: output projection over all T steps at once -------------
        lin_w = lin_w_ref[...]                                   # [H, O_pad]
        hL = hL_ref[...].reshape(T * B, H)
        pred = (jnp.dot(hL.astype(lin_w.dtype), lin_w,
                        preferred_element_type=jnp.float32) + lin_b_ref[...])
        pred_ref[...] = pred.reshape(T, B, O_pad)                # unmasked stores

    return kernel


# --------------------------------------------------------------------------- #
# Wrapper
# --------------------------------------------------------------------------- #
def pack_params(params, weight_dtype=jnp.bfloat16):
    """Pre-transpose / pad weights for the kernel.

    * W_ih / W_hh kept separate (two accumulated dots per layer, no concat).
    * b_ih + b_hh pre-summed; biases stay f32.
    * embedding input dim and linear head output dim padded to 128 lanes.
    * matmul weights cast to bf16 by default (f32 accumulation in-kernel).
    """
    n_layers = len(params["w_ih"])
    H = params["w_hh"][0].shape[1]
    E, O_in = params["emb_w"].shape
    O = params["lin_w"].shape[0]
    K_in_pad = _round_up(O_in, 128)
    O_pad = _round_up(O, 128)

    packed = {
        "emb_w": jnp.zeros((K_in_pad, E), weight_dtype)
                    .at[:O_in, :].set(params["emb_w"].T.astype(weight_dtype)),
        "emb_b": params["emb_b"].reshape(1, -1).astype(jnp.float32),
        "w_ih": [], "w_hh": [], "lstm_b": [],
        "lin_w": jnp.zeros((H, O_pad), weight_dtype)
                    .at[:, :O].set(params["lin_w"].T.astype(weight_dtype)),
        "lin_b": jnp.zeros((1, O_pad), jnp.float32)
                    .at[:, :O].set(params["lin_b"].astype(jnp.float32)),
    }
    for l in range(n_layers):
        packed["w_ih"].append(params["w_ih"][l].T.astype(weight_dtype))   # [in_l, 4H]
        packed["w_hh"].append(params["w_hh"][l].T.astype(weight_dtype))   # [H, 4H]
        packed["lstm_b"].append(
            (params["b_ih"][l] + params["b_hh"][l]).reshape(1, -1).astype(jnp.float32))
    return packed


@jax.jit
def decoder_rollout(x_seq, packed, h0, c0):
    """Run T decoder steps inside a single pallas_call.

    x_seq : [T, B, O] f32 (per-step inputs), h0/c0 : [L, B, H] f32.
    Returns (pred [T, B, O] f32, (h, c)).
    """
    L, B, H = h0.shape
    T, _, O = x_seq.shape
    K_in_pad = packed["emb_w"].shape[0]
    O_pad = packed["lin_w"].shape[1]

    # Lane-pad the tiny (O=4) input feature dim -> unmasked in-kernel loads.
    x_pad = jnp.zeros((T, B, K_in_pad), jnp.float32).at[:, :, :O].set(x_seq)

    inputs = [x_pad, packed["emb_w"], packed["emb_b"]]
    for w_ih, w_hh, b in zip(packed["w_ih"], packed["w_hh"], packed["lstm_b"]):
        inputs += [w_ih, w_hh, b]
    inputs += [packed["lin_w"], packed["lin_b"], h0, c0]
    n_in = len(inputs)

    vmem = pl.BlockSpec(memory_space=pltpu.MemorySpace.VMEM)
    out_shape = (
        jax.ShapeDtypeStruct((T, B, O_pad), jnp.float32),   # lane-dense predictions
        jax.ShapeDtypeStruct((L, B, H), jnp.float32),       # h_out (aliases h0)
        jax.ShapeDtypeStruct((L, B, H), jnp.float32),       # c_out (aliases c0)
    )
    pred_pad, h_out, c_out = pl.pallas_call(
        make_decoder_kernel(L, H),
        out_shape=out_shape,
        in_specs=[vmem] * n_in,
        out_specs=(vmem, vmem, vmem),
        scratch_shapes=[
            pltpu.VMEM((T, B, 4 * H), jnp.float32),   # layer-0 x-side gates, all T
            pltpu.VMEM((T, B, H), jnp.float32),       # top-layer h per step
        ],
        input_output_aliases={n_in - 2: 1, n_in - 1: 2},    # h0 -> h_out, c0 -> c_out
    )(*inputs)
    return pred_pad[:, :, :O], (h_out, c_out)


def decoder_forward(x, packed, hidden):
    """Single decode step, matching Decoder.forward(x, hidden) (eval mode)."""
    pred_seq, hidden_out = decoder_rollout(x[None], packed, hidden[0], hidden[1])
    return pred_seq[0], hidden_out


# --------------------------------------------------------------------------- #
# Pure-JAX reference (mirrors torch semantics, eval mode)
# --------------------------------------------------------------------------- #
def decoder_reference_step(x, params, hidden):
    h0, c0 = hidden
    L, _, H = h0.shape
    inp = jnp.maximum(x @ params["emb_w"].T + params["emb_b"], 0.0)
    hs, cs = [], []
    for l in range(L):
        gates = (inp @ params["w_ih"][l].T + params["b_ih"][l]
                 + h0[l] @ params["w_hh"][l].T + params["b_hh"][l])
        i_g = jax.nn.sigmoid(gates[:, 0 * H:1 * H])
        f_g = jax.nn.sigmoid(gates[:, 1 * H:2 * H])
        g_g = jnp.tanh(gates[:, 2 * H:3 * H])
        o_g = jax.nn.sigmoid(gates[:, 3 * H:4 * H])
        c_new = f_g * c0[l] + i_g * g_g
        h_new = o_g * jnp.tanh(c_new)
        hs.append(h_new)
        cs.append(c_new)
        inp = h_new
    pred = inp @ params["lin_w"].T + params["lin_b"]
    return pred, (jnp.stack(hs), jnp.stack(cs))


def decoder_reference_rollout(x_seq, params, hidden):
    h, c = hidden
    preds = []
    for t in range(x_seq.shape[0]):
        p, (h, c) = decoder_reference_step(x_seq[t], params, (h, c))
        preds.append(p)
    return jnp.stack(preds), (h, c)


def round_weights(params, dtype):
    """Round matmul weights to `dtype` and back to f32 (reference for bf16 kernel)."""
    if dtype == jnp.float32:
        return params
    rd = lambda w: w.astype(dtype).astype(jnp.float32)
    out = dict(params)
    out["emb_w"] = rd(params["emb_w"])
    out["lin_w"] = rd(params["lin_w"])
    out["w_ih"] = [rd(w) for w in params["w_ih"]]
    out["w_hh"] = [rd(w) for w in params["w_hh"]]
    return out


# --------------------------------------------------------------------------- #
# Parameter init (matches torch nn.Linear / nn.LSTM default uniform init)
# --------------------------------------------------------------------------- #
def init_params(key, output_size, embedding_size, hidden_size, n_layers):
    ks = iter(jax.random.split(key, 4 + 4 * n_layers))

    def unif(k, shape, bound):
        return jax.random.uniform(k, shape, jnp.float32, -bound, bound)

    params = {
        "emb_w": unif(next(ks), (embedding_size, output_size), 1.0 / np.sqrt(output_size)),
        "emb_b": unif(next(ks), (embedding_size,), 1.0 / np.sqrt(output_size)),
        "lin_w": unif(next(ks), (output_size, hidden_size), 1.0 / np.sqrt(hidden_size)),
        "lin_b": unif(next(ks), (output_size,), 1.0 / np.sqrt(hidden_size)),
        "w_ih": [], "w_hh": [], "b_ih": [], "b_hh": [],
    }
    bound = 1.0 / np.sqrt(hidden_size)
    for l in range(n_layers):
        in_l = embedding_size if l == 0 else hidden_size
        params["w_ih"].append(unif(next(ks), (4 * hidden_size, in_l), bound))
        params["w_hh"].append(unif(next(ks), (4 * hidden_size, hidden_size), bound))
        params["b_ih"].append(unif(next(ks), (4 * hidden_size,), bound))
        params["b_hh"].append(unif(next(ks), (4 * hidden_size,), bound))
    return params


# --------------------------------------------------------------------------- #
if __name__ == "__main__":
    # Module defaults: Decoder(output_size=4, embedding_size=128, hidden_size=256,
    # n_layers=4).  H = 2*128 keeps gate slices lane-dense; B=8 fills sublanes.
    B, O, E, H, L, T = 8, 4, 128, 256, 4, 6

    key = jax.random.PRNGKey(0)
    k_p, k_x, k_h, k_c = jax.random.split(key, 4)
    params = init_params(k_p, O, E, H, L)
    x_seq = jax.random.normal(k_x, (T, B, O), jnp.float32)
    h0 = jax.random.normal(k_h, (L, B, H), jnp.float32)
    c0 = jax.random.normal(k_c, (L, B, H), jnp.float32)

    # ---- f32 weights: single step (module forward) + T-step rollout ----------
    packed_f32 = pack_params(params, jnp.float32)

    pred1, (h1, c1) = decoder_forward(x_seq[0], packed_f32, (h0, c0))
    jax.block_until_ready((pred1, h1, c1))
    pred1_r, (h1_r, c1_r) = decoder_reference_step(x_seq[0], params, (h0, c0))
    np.testing.assert_allclose(np.asarray(pred1), np.asarray(pred1_r), rtol=1e-4, atol=1e-4)
    np.testing.assert_allclose(np.asarray(h1), np.asarray(h1_r), rtol=1e-4, atol=1e-4)
    np.testing.assert_allclose(np.asarray(c1), np.asarray(c1_r), rtol=1e-4, atol=1e-4)

    preds, (hT, cT) = decoder_rollout(x_seq, packed_f32, h0, c0)
    jax.block_until_ready((preds, hT, cT))
    preds_r, (hT_r, cT_r) = decoder_reference_rollout(x_seq, params, (h0, c0))
    np.testing.assert_allclose(np.asarray(preds), np.asarray(preds_r), rtol=1e-3, atol=1e-3)
    np.testing.assert_allclose(np.asarray(hT), np.asarray(hT_r), rtol=1e-3, atol=1e-3)
    np.testing.assert_allclose(np.asarray(cT), np.asarray(cT_r), rtol=1e-3, atol=1e-3)

    # ---- bf16 weights (the default), f32 accumulation / gate math ------------
    # NOTE: the kernel also casts activations to bf16 at each MXU input; the
    # reference only rounds weights, so tolerance is looser for this check.
    packed_bf16 = pack_params(params)                      # default weight_dtype=bf16
    preds16, (h16, c16) = decoder_rollout(x_seq, packed_bf16, h0, c0)
    jax.block_until_ready((preds16, h16, c16))
    params_rt = round_weights(params, jnp.bfloat16)
    preds16_r, (h16_r, c16_r) = decoder_reference_rollout(x_seq, params_rt, (h0, c0))
    np.testing.assert_allclose(np.asarray(preds16), np.asarray(preds16_r), rtol=3e-2, atol=3e-2)
    np.testing.assert_allclose(np.asarray(h16), np.asarray(h16_r), rtol=3e-2, atol=3e-2)
    np.testing.assert_allclose(np.asarray(c16), np.asarray(c16_r), rtol=3e-2, atol=3e-2)

    print("KERNEL_OK")
</pallas_src>

<mosaic_0001>
module attributes {stable_mosaic.version = 11 : i64} {
  func.func @kernel(%arg0: memref<1x8x128xf32, #tpu.memory_space<vmem>>, %arg1: memref<128x128xf32, #tpu.memory_space<vmem>>, %arg2: memref<1x128xf32, #tpu.memory_space<vmem>>, %arg3: memref<128x1024xf32, #tpu.memory_space<vmem>>, %arg4: memref<256x1024xf32, #tpu.memory_space<vmem>>, %arg5: memref<1x1024xf32, #tpu.memory_space<vmem>>, %arg6: memref<256x1024xf32, #tpu.memory_space<vmem>>, %arg7: memref<256x1024xf32, #tpu.memory_space<vmem>>, %arg8: memref<1x1024xf32, #tpu.memory_space<vmem>>, %arg9: memref<256x1024xf32, #tpu.memory_space<vmem>>, %arg10: memref<256x1024xf32, #tpu.memory_space<vmem>>, %arg11: memref<1x1024xf32, #tpu.memory_space<vmem>>, %arg12: memref<256x1024xf32, #tpu.memory_space<vmem>>, %arg13: memref<256x1024xf32, #tpu.memory_space<vmem>>, %arg14: memref<1x1024xf32, #tpu.memory_space<vmem>>, %arg15: memref<256x128xf32, #tpu.memory_space<vmem>>, %arg16: memref<1x128xf32, #tpu.memory_space<vmem>>, %arg17: memref<4x8x256xf32, #tpu.memory_space<vmem>>, %arg18: memref<4x8x256xf32, #tpu.memory_space<vmem>>, %arg19: memref<1x8x128xf32, #tpu.memory_space<vmem>>, %arg20: memref<4x8x256xf32, #tpu.memory_space<vmem>>, %arg21: memref<4x8x256xf32, #tpu.memory_space<vmem>>, %arg22: memref<1x8x1024xf32, #tpu.memory_space<vmem>>, %arg23: memref<1x8x256xf32, #tpu.memory_space<vmem>>) attributes {dimension_semantics = [], scalar_prefetch = 0 : i64, scratch_operands = 2 : i64, tpu.core_type = #tpu.core_type<tc>} {
    %c0 = arith.constant 0 : index
    %c0_0 = arith.constant 0 : index
    %c0_1 = arith.constant 0 : index
    %0 = vector.load %arg17[%c0, %c0_0, %c0_1] : memref<4x8x256xf32, #tpu.memory_space<vmem>>, vector<4x8x256xf32>
    %c0_2 = arith.constant 0 : index
    %c0_3 = arith.constant 0 : index
    %c0_4 = arith.constant 0 : index
    %1 = vector.load %arg20[%c0_2, %c0_3, %c0_4] : memref<4x8x256xf32, #tpu.memory_space<vmem>>, vector<4x8x256xf32>
    tpu.vector_store %arg20[%c0_2, %c0_3, %c0_4], %0 {strides = array<i32>} : memref<4x8x256xf32, #tpu.memory_space<vmem>>, vector<4x8x256xf32>,
    %c0_5 = arith.constant 0 : index
    %c0_6 = arith.constant 0 : index
    %c0_7 = arith.constant 0 : index
    %2 = vector.load %arg18[%c0_5, %c0_6, %c0_7] : memref<4x8x256xf32, #tpu.memory_space<vmem>>, vector<4x8x256xf32>
    %c0_8 = arith.constant 0 : index
    %c0_9 = arith.constant 0 : index
    %c0_10 = arith.constant 0 : index
    %3 = vector.load %arg21[%c0_8, %c0_9, %c0_10] : memref<4x8x256xf32, #tpu.memory_space<vmem>>, vector<4x8x256xf32>
    tpu.vector_store %arg21[%c0_8, %c0_9, %c0_10], %2 {strides = array<i32>} : memref<4x8x256xf32, #tpu.memory_space<vmem>>, vector<4x8x256xf32>,
    %c0_11 = arith.constant 0 : index
    %c0_12 = arith.constant 0 : index
    %4 = vector.load %arg1[%c0_11, %c0_12] : memref<128x128xf32, #tpu.memory_space<vmem>>, vector<128x128xf32>
    %c0_13 = arith.constant 0 : index
    %c0_14 = arith.constant 0 : index
    %c0_15 = arith.constant 0 : index
    %5 = vector.load %arg0[%c0_13, %c0_14, %c0_15] : memref<1x8x128xf32, #tpu.memory_space<vmem>>, vector<1x8x128xf32>
    %6 = vector.shape_cast %5 : vector<1x8x128xf32> to vector<8x128xf32>
    %cst = arith.constant dense<0.000000e+00> : vector<8x128xf32>
    %7 = tpu.matmul %6, %4, %cst {dimension_numbers = #tpu.dot_dimension_numbers<[1], [0], [0], [1], [0, 0, 1, 1], [], []>} : vector<8x128xf32>, vector<128x128xf32>, vector<8x128xf32> -> vector<8x128xf32>
    %c0_16 = arith.constant 0 : index
    %c0_17 = arith.constant 0 : index
    %8 = vector.load %arg2[%c0_16, %c0_17] : memref<1x128xf32, #tpu.memory_space<vmem>>, vector<1x128xf32>
    %9 = vector.broadcast %8 : vector<1x128xf32> to vector<8x128xf32>
    %10 = arith.addf %7, %9 : vector<8x128xf32>
    %cst_18 = arith.constant 0.000000e+00 : f32
    %11 = vector.broadcast %cst_18 : f32 to vector<8x128xf32>
    %12 = arith.maximumf %10, %11 : vector<8x128xf32>
    %c0_19 = arith.constant 0 : index
    %c0_20 = arith.constant 0 : index
    %13 = vector.load %arg3[%c0_19, %c0_20] : memref<128x1024xf32, #tpu.memory_space<vmem>>, vector<128x1024xf32>
    %cst_21 = arith.constant dense<0.000000e+00> : vector<8x1024xf32>
    %14 = tpu.matmul %12, %13, %cst_21 {dimension_numbers = #tpu.dot_dimension_numbers<[1], [0], [0], [1], [0, 0, 1, 1], [], []>} : vector<8x128xf32>, vector<128x1024xf32>, vector<8x1024xf32> -> vector<8x1024xf32>
    %c0_22 = arith.constant 0 : index
    %c0_23 = arith.constant 0 : index
    %15 = vector.load %arg5[%c0_22, %c0_23] : memref<1x1024xf32, #tpu.memory_space<vmem>>, vector<1x1024xf32>
    %16 = vector.broadcast %15 : vector<1x1024xf32> to vector<8x1024xf32>
    %17 = arith.addf %14, %16 : vector<8x1024xf32>
    %18 = vector.shape_cast %17 : vector<8x1024xf32> to vector<1x8x1024xf32>
    %c0_24 = arith.constant 0 : index
    %c0_25 = arith.constant 0 : index
    %c0_26 = arith.constant 0 : index
    %19 = vector.load %arg22[%c0_24, %c0_25, %c0_26] : memref<1x8x1024xf32, #tpu.memory_space<vmem>>, vector<1x8x1024xf32>
    tpu.vector_store %arg22[%c0_24, %c0_25, %c0_26], %18 {strides = array<i32>} : memref<1x8x1024xf32, #tpu.memory_space<vmem>>, vector<1x8x1024xf32>,
    %c0_27 = arith.constant 0 : index
    %c0_28 = arith.constant 0 : index
    %20 = vector.load %arg4[%c0_27, %c0_28] : memref<256x1024xf32, #tpu.memory_space<vmem>>, vector<256x1024xf32>
    %c0_29 = arith.constant 0 : index
    %c0_30 = arith.constant 0 : index
    %c0_31 = arith.constant 0 : index
    %21 = vector.load %arg20[%c0_29, %c0_30, %c0_31] : memref<4x8x256xf32, #tpu.memory_space<vmem>>, vector<1x8x256xf32>
    %22 = vector.shape_cast %21 : vector<1x8x256xf32> to vector<8x256xf32>
    %c0_32 = arith.constant 0 : index
    %c0_33 = arith.constant 0 : index
    %c0_34 = arith.constant 0 : index
    %23 = vector.load %arg21[%c0_32, %c0_33, %c0_34] : memref<4x8x256xf32, #tpu.memory_space<vmem>>, vector<1x8x256xf32>
    %24 = vector.shape_cast %23 : vector<1x8x256xf32> to vector<8x256xf32>
    %cst_35 = arith.constant dense<0.000000e+00> : vector<8x1024xf32>
    %25 = tpu.matmul %22, %20, %cst_35 {dimension_numbers = #tpu.dot_dimension_numbers<[1], [0], [0], [1], [0, 0, 1, 1], [], []>} : vector<8x256xf32>, vector<256x1024xf32>, vector<8x1024xf32> -> vector<8x1024xf32>
    %c0_36 = arith.constant 0 : index
    %c0_37 = arith.constant 0 : index
    %c0_38 = arith.constant 0 : index
    %26 = vector.load %arg22[%c0_36, %c0_37, %c0_38] : memref<1x8x1024xf32, #tpu.memory_space<vmem>>, vector<1x8x1024xf32>
    %27 = vector.shape_cast %26 : vector<1x8x1024xf32> to vector<8x1024xf32>
    %28 = arith.addf %27, %25 : vector<8x1024xf32>
    %29 = vector.extract_strided_slice %28 {offsets = [0, 0], sizes = [8, 256], strides = [1, 1]} : vector<8x1024xf32> to vector<8x256xf32>
    %cst_39 = arith.constant 5.000000e-01 : f32
    %30 = vector.broadcast %cst_39 : f32 to vector<8x256xf32>
    %31 = arith.mulf %30, %29 : vector<8x256xf32>
    %32 = math.tanh %31 : vector<8x256xf32>
    %cst_40 = arith.constant 1.000000e+00 : f32
    %33 = vector.broadcast %cst_40 : f32 to vector<8x256xf32>
    %34 = arith.addf %32, %33 : vector<8x256xf32>
    %cst_41 = arith.constant 5.000000e-01 : f32
    %35 = vector.broadcast %cst_41 : f32 to vector<8x256xf32>
    %36 = arith.mulf %35, %34 : vector<8x256xf32>
    %37 = vector.extract_strided_slice %28 {offsets = [0, 256], sizes = [8, 256], strides = [1, 1]} : vector<8x1024xf32> to vector<8x256xf32>
    %cst_42 = arith.constant 5.000000e-01 : f32
    %38 = vector.broadcast %cst_42 : f32 to vector<8x256xf32>
    %39 = arith.mulf %38, %37 : vector<8x256xf32>
    %40 = math.tanh %39 : vector<8x256xf32>
    %cst_43 = arith.constant 1.000000e+00 : f32
    %41 = vector.broadcast %cst_43 : f32 to vector<8x256xf32>
    %42 = arith.addf %40, %41 : vector<8x256xf32>
    %cst_44 = arith.constant 5.000000e-01 : f32
    %43 = vector.broadcast %cst_44 : f32 to vector<8x256xf32>
    %44 = arith.mulf %43, %42 : vector<8x256xf32>
    %45 = vector.extract_strided_slice %28 {offsets = [0, 512], sizes = [8, 256], strides = [1, 1]} : vector<8x1024xf32> to vector<8x256xf32>
    %46 = math.tanh %45 : vector<8x256xf32>
    %47 = vector.extract_strided_slice %28 {offsets = [0, 768], sizes = [8, 256], strides = [1, 1]} : vector<8x1024xf32> to vector<8x256xf32>
    %cst_45 = arith.constant 5.000000e-01 : f32
    %48 = vector.broadcast %cst_45 : f32 to vector<8x256xf32>
    %49 = arith.mulf %48, %47 : vector<8x256xf32>
    %50 = math.tanh %49 : vector<8x256xf32>
    %cst_46 = arith.constant 1.000000e+00 : f32
    %51 = vector.broadcast %cst_46 : f32 to vector<8x256xf32>
    %52 = arith.addf %50, %51 : vector<8x256xf32>
    %cst_47 = arith.constant 5.000000e-01 : f32
    %53 = vector.broadcast %cst_47 : f32 to vector<8x256xf32>
    %54 = arith.mulf %53, %52 : vector<8x256xf32>
    %55 = arith.mulf %44, %24 : vector<8x256xf32>
    %56 = arith.mulf %36, %46 : vector<8x256xf32>
    %57 = arith.addf %55, %56 : vector<8x256xf32>
    %58 = math.tanh %57 : vector<8x256xf32>
    %59 = arith.mulf %54, %58 : vector<8x256xf32>
    %c0_48 = arith.constant 0 : index
    %c0_49 = arith.constant 0 : index
    %c0_50 = arith.constant 0 : index
    %60 = vector.load %arg20[%c0_48, %c0_49, %c0_50] : memref<4x8x256xf32, #tpu.memory_space<vmem>>, vector<1x8x256xf32>
    %61 = vector.shape_cast %60 : vector<1x8x256xf32> to vector<8x256xf32>
    %62 = vector.shape_cast %59 : vector<8x256xf32> to vector<1x8x256xf32>
    tpu.vector_store %arg20[%c0_48, %c0_49, %c0_50], %62 {strides = array<i32>} : memref<4x8x256xf32, #tpu.memory_space<vmem>>, vector<1x8x256xf32>,
    %c0_51 = arith.constant 0 : index
    %c0_52 = arith.constant 0 : index
    %c0_53 = arith.constant 0 : index
    %63 = vector.load %arg21[%c0_51, %c0_52, %c0_53] : memref<4x8x256xf32, #tpu.memory_space<vmem>>, vector<1x8x256xf32>
    %64 = vector.shape_cast %63 : vector<1x8x256xf32> to vector<8x256xf32>
    %65 = vector.shape_cast %57 : vector<8x256xf32> to vector<1x8x256xf32>
    tpu.vector_store %arg21[%c0_51, %c0_52, %c0_53], %65 {strides = array<i32>} : memref<4x8x256xf32, #tpu.memory_space<vmem>>, vector<1x8x256xf32>,
    %c0_54 = arith.constant 0 : index
    %c0_55 = arith.constant 0 : index
    %66 = vector.load %arg7[%c0_54, %c0_55] : memref<256x1024xf32, #tpu.memory_space<vmem>>, vector<256x1024xf32>
    %c1 = arith.constant 1 : index
    %c0_56 = arith.constant 0 : index
    %c0_57 = arith.constant 0 : index
    %67 = vector.load %arg20[%c1, %c0_56, %c0_57] : memref<4x8x256xf32, #tpu.memory_space<vmem>>, vector<1x8x256xf32>
    %68 = vector.shape_cast %67 : vector<1x8x256xf32> to vector<8x256xf32>
    %c1_58 = arith.constant 1 : index
    %c0_59 = arith.constant 0 : index
    %c0_60 = arith.constant 0 : index
    %69 = vector.load %arg21[%c1_58, %c0_59, %c0_60] : memref<4x8x256xf32, #tpu.memory_space<vmem>>, vector<1x8x256xf32>
    %70 = vector.shape_cast %69 : vector<1x8x256xf32> to vector<8x256xf32>
    %cst_61 = arith.constant dense<0.000000e+00> : vector<8x1024xf32>
    %71 = tpu.matmul %68, %66, %cst_61 {dimension_numbers = #tpu.dot_dimension_numbers<[1], [0], [0], [1], [0, 0, 1, 1], [], []>} : vector<8x256xf32>, vector<256x1024xf32>, vector<8x1024xf32> -> vector<8x1024xf32>
    %c0_62 = arith.constant 0 : index
    %c0_63 = arith.constant 0 : index
    %72 = vector.load %arg6[%c0_62, %c0_63] : memref<256x1024xf32, #tpu.memory_space<vmem>>, vector<256x1024xf32>
    %cst_64 = arith.constant dense<0.000000e+00> : vector<8x1024xf32>
    %73 = tpu.matmul %59, %72, %cst_64 {dimension_numbers = #tpu.dot_dimension_numbers<[1], [0], [0], [1], [0, 0, 1, 1], [], []>} : vector<8x256xf32>, vector<256x1024xf32>, vector<8x1024xf32> -> vector<8x1024xf32>
    %74 = arith.addf %73, %71 : vector<8x1024xf32>
    %c0_65 = arith.constant 0 : index
    %c0_66 = arith.constant 0 : index
    %75 = vector.load %arg8[%c0_65, %c0_66] : memref<1x1024xf32, #tpu.memory_space<vmem>>, vector<1x1024xf32>
    %76 = vector.broadcast %75 : vector<1x1024xf32> to vector<8x1024xf32>
    %77 = arith.addf %74, %76 : vector<8x1024xf32>
    %78 = vector.extract_strided_slice %77 {offsets = [0, 0], sizes = [8, 256], strides = [1, 1]} : vector<8x1024xf32> to vector<8x256xf32>
    %cst_67 = arith.constant 5.000000e-01 : f32
    %79 = vector.broadcast %cst_67 : f32 to vector<8x256xf32>
    %80 = arith.mulf %79, %78 : vector<8x256xf32>
    %81 = math.tanh %80 : vector<8x256xf32>
    %cst_68 = arith.constant 1.000000e+00 : f32
    %82 = vector.broadcast %cst_68 : f32 to vector<8x256xf32>
    %83 = arith.addf %81, %82 : vector<8x256xf32>
    %cst_69 = arith.constant 5.000000e-01 : f32
    %84 = vector.broadcast %cst_69 : f32 to vector<8x256xf32>
    %85 = arith.mulf %84, %83 : vector<8x256xf32>
    %86 = vector.extract_strided_slice %77 {offsets = [0, 256], sizes = [8, 256], strides = [1, 1]} : vector<8x1024xf32> to vector<8x256xf32>
    %cst_70 = arith.constant 5.000000e-01 : f32
    %87 = vector.broadcast %cst_70 : f32 to vector<8x256xf32>
    %88 = arith.mulf %87, %86 : vector<8x256xf32>
    %89 = math.tanh %88 : vector<8x256xf32>
    %cst_71 = arith.constant 1.000000e+00 : f32
    %90 = vector.broadcast %cst_71 : f32 to vector<8x256xf32>
    %91 = arith.addf %89, %90 : vector<8x256xf32>
    %cst_72 = arith.constant 5.000000e-01 : f32
    %92 = vector.broadcast %cst_72 : f32 to vector<8x256xf32>
    %93 = arith.mulf %92, %91 : vector<8x256xf32>
    %94 = vector.extract_strided_slice %77 {offsets = [0, 512], sizes = [8, 256], strides = [1, 1]} : vector<8x1024xf32> to vector<8x256xf32>
    %95 = math.tanh %94 : vector<8x256xf32>
    %96 = vector.extract_strided_slice %77 {offsets = [0, 768], sizes = [8, 256], strides = [1, 1]} : vector<8x1024xf32> to vector<8x256xf32>
    %cst_73 = arith.constant 5.000000e-01 : f32
    %97 = vector.broadcast %cst_73 : f32 to vector<8x256xf32>
    %98 = arith.mulf %97, %96 : vector<8x256xf32>
    %99 = math.tanh %98 : vector<8x256xf32>
    %cst_74 = arith.constant 1.000000e+00 : f32
    %100 = vector.broadcast %cst_74 : f32 to vector<8x256xf32>
    %101 = arith.addf %99, %100 : vector<8x256xf32>
    %cst_75 = arith.constant 5.000000e-01 : f32
    %102 = vector.broadcast %cst_75 : f32 to vector<8x256xf32>
    %103 = arith.mulf %102, %101 : vector<8x256xf32>
    %104 = arith.mulf %93, %70 : vector<8x256xf32>
    %105 = arith.mulf %85, %95 : vector<8x256xf32>
    %106 = arith.addf %104, %105 : vector<8x256xf32>
    %107 = math.tanh %106 : vector<8x256xf32>
    %108 = arith.mulf %103, %107 : vector<8x256xf32>
    %c1_76 = arith.constant 1 : index
    %c0_77 = arith.constant 0 : index
    %c0_78 = arith.constant 0 : index
    %109 = vector.load %arg20[%c1_76, %c0_77, %c0_78] : memref<4x8x256xf32, #tpu.memory_space<vmem>>, vector<1x8x256xf32>
    %110 = vector.shape_cast %109 : vector<1x8x256xf32> to vector<8x256xf32>
    %111 = vector.shape_cast %108 : vector<8x256xf32> to vector<1x8x256xf32>
    tpu.vector_store %arg20[%c1_76, %c0_77, %c0_78], %111 {strides = array<i32>} : memref<4x8x256xf32, #tpu.memory_space<vmem>>, vector<1x8x256xf32>,
    %c1_79 = arith.constant 1 : index
    %c0_80 = arith.constant 0 : index
    %c0_81 = arith.constant 0 : index
    %112 = vector.load %arg21[%c1_79, %c0_80, %c0_81] : memref<4x8x256xf32, #tpu.memory_space<vmem>>, vector<1x8x256xf32>
    %113 = vector.shape_cast %112 : vector<1x8x256xf32> to vector<8x256xf32>
    %114 = vector.shape_cast %106 : vector<8x256xf32> to vector<1x8x256xf32>
    tpu.vector_store %arg21[%c1_79, %c0_80, %c0_81], %114 {strides = array<i32>} : memref<4x8x256xf32, #tpu.memory_space<vmem>>, vector<1x8x256xf32>,
    %c0_82 = arith.constant 0 : index
    %c0_83 = arith.constant 0 : index
    %115 = vector.load %arg10[%c0_82, %c0_83] : memref<256x1024xf32, #tpu.memory_space<vmem>>, vector<256x1024xf32>
    %c2 = arith.constant 2 : index
    %c0_84 = arith.constant 0 : index
    %c0_85 = arith.constant 0 : index
    %116 = vector.load %arg20[%c2, %c0_84, %c0_85] : memref<4x8x256xf32, #tpu.memory_space<vmem>>, vector<1x8x256xf32>
    %117 = vector.shape_cast %116 : vector<1x8x256xf32> to vector<8x256xf32>
    %c2_86 = arith.constant 2 : index
    %c0_87 = arith.constant 0 : index
    %c0_88 = arith.constant 0 : index
    %118 = vector.load %arg21[%c2_86, %c0_87, %c0_88] : memref<4x8x256xf32, #tpu.memory_space<vmem>>, vector<1x8x256xf32>
    %119 = vector.shape_cast %118 : vector<1x8x256xf32> to vector<8x256xf32>
    %cst_89 = arith.constant dense<0.000000e+00> : vector<8x1024xf32>
    %120 = tpu.matmul %117, %115, %cst_89 {dimension_numbers = #tpu.dot_dimension_numbers<[1], [0], [0], [1], [0, 0, 1, 1], [], []>} : vector<8x256xf32>, vector<256x1024xf32>, vector<8x1024xf32> -> vector<8x1024xf32>
    %c0_90 = arith.constant 0 : index
    %c0_91 = arith.constant 0 : index
    %121 = vector.load %arg9[%c0_90, %c0_91] : memref<256x1024xf32, #tpu.memory_space<vmem>>, vector<256x1024xf32>
    %cst_92 = arith.constant dense<0.000000e+00> : vector<8x1024xf32>
    %122 = tpu.matmul %108, %121, %cst_92 {dimension_numbers = #tpu.dot_dimension_numbers<[1], [0], [0], [1], [0, 0, 1, 1], [], []>} : vector<8x256xf32>, vector<256x1024xf32>, vector<8x1024xf32> -> vector<8x1024xf32>
    %123 = arith.addf %122, %120 : vector<8x1024xf32>
    %c0_93 = arith.constant 0 : index
    %c0_94 = arith.constant 0 : index
    %124 = vector.load %arg11[%c0_93, %c0_94] : memref<1x1024xf32, #tpu.memory_space<vmem>>, vector<1x1024xf32>
    %125 = vector.broadcast %124 : vector<1x1024xf32> to vector<8x1024xf32>
    %126 = arith.addf %123, %125 : vector<8x1024xf32>
    %127 = vector.extract_strided_slice %126 {offsets = [0, 0], sizes = [8, 256], strides = [1, 1]} : vector<8x1024xf32> to vector<8x256xf32>
    %cst_95 = arith.constant 5.000000e-01 : f32
    %128 = vector.broadcast %cst_95 : f32 to vector<8x256xf32>
    %129 = arith.mulf %128, %127 : vector<8x256xf32>
    %130 = math.tanh %129 : vector<8x256xf32>
    %cst_96 = arith.constant 1.000000e+00 : f32
    %131 = vector.broadcast %cst_96 : f32 to vector<8x256xf32>
    %132 = arith.addf %130, %131 : vector<8x256xf32>
    %cst_97 = arith.constant 5.000000e-01 : f32
    %133 = vector.broadcast %cst_97 : f32 to vector<8x256xf32>
    %134 = arith.mulf %133, %132 : vector<8x256xf32>
    %135 = vector.extract_strided_slice %126 {offsets = [0, 256], sizes = [8, 256], strides = [1, 1]} : vector<8x1024xf32> to vector<8x256xf32>
    %cst_98 = arith.constant 5.000000e-01 : f32
    %136 = vector.broadcast %cst_98 : f32 to vector<8x256xf32>
    %137 = arith.mulf %136, %135 : vector<8x256xf32>
    %138 = math.tanh %137 : vector<8x256xf32>
    %cst_99 = arith.constant 1.000000e+00 : f32
    %139 = vector.broadcast %cst_99 : f32 to vector<8x256xf32>
    %140 = arith.addf %138, %139 : vector<8x256xf32>
    %cst_100 = arith.constant 5.000000e-01 : f32
    %141 = vector.broadcast %cst_100 : f32 to vector<8x256xf32>
    %142 = arith.mulf %141, %140 : vector<8x256xf32>
    %143 = vector.extract_strided_slice %126 {offsets = [0, 512], sizes = [8, 256], strides = [1, 1]} : vector<8x1024xf32> to vector<8x256xf32>
    %144 = math.tanh %143 : vector<8x256xf32>
    %145 = vector.extract_strided_slice %126 {offsets = [0, 768], sizes = [8, 256], strides = [1, 1]} : vector<8x1024xf32> to vector<8x256xf32>
    %cst_101 = arith.constant 5.000000e-01 : f32
    %146 = vector.broadcast %cst_101 : f32 to vector<8x256xf32>
    %147 = arith.mulf %146, %145 : vector<8x256xf32>
    %148 = math.tanh %147 : vector<8x256xf32>
    %cst_102 = arith.constant 1.000000e+00 : f32
    %149 = vector.broadcast %cst_102 : f32 to vector<8x256xf32>
    %150 = arith.addf %148, %149 : vector<8x256xf32>
    %cst_103 = arith.constant 5.000000e-01 : f32
    %151 = vector.broadcast %cst_103 : f32 to vector<8x256xf32>
    %152 = arith.mulf %151, %150 : vector<8x256xf32>
    %153 = arith.mulf %142, %119 : vector<8x256xf32>
    %154 = arith.mulf %134, %144 : vector<8x256xf32>
    %155 = arith.addf %153, %154 : vector<8x256xf32>
    %156 = math.tanh %155 : vector<8x256xf32>
    %157 = arith.mulf %152, %156 : vector<8x256xf32>
    %c2_104 = arith.constant 2 : index
    %c0_105 = arith.constant 0 : index
    %c0_106 = arith.constant 0 : index
    %158 = vector.load %arg20[%c2_104, %c0_105, %c0_106] : memref<4x8x256xf32, #tpu.memory_space<vmem>>, vector<1x8x256xf32>
    %159 = vector.shape_cast %158 : vector<1x8x256xf32> to vector<8x256xf32>
    %160 = vector.shape_cast %157 : vector<8x256xf32> to vector<1x8x256xf32>
    tpu.vector_store %arg20[%c2_104, %c0_105, %c0_106], %160 {strides = array<i32>} : memref<4x8x256xf32, #tpu.memory_space<vmem>>, vector<1x8x256xf32>,
    %c2_107 = arith.constant 2 : index
    %c0_108 = arith.constant 0 : index
    %c0_109 = arith.constant 0 : index
    %161 = vector.load %arg21[%c2_107, %c0_108, %c0_109] : memref<4x8x256xf32, #tpu.memory_space<vmem>>, vector<1x8x256xf32>
    %162 = vector.shape_cast %161 : vector<1x8x256xf32> to vector<8x256xf32>
    %163 = vector.shape_cast %155 : vector<8x256xf32> to vector<1x8x256xf32>
    tpu.vector_store %arg21[%c2_107, %c0_108, %c0_109], %163 {strides = array<i32>} : memref<4x8x256xf32, #tpu.memory_space<vmem>>, vector<1x8x256xf32>,
    %c0_110 = arith.constant 0 : index
    %c0_111 = arith.constant 0 : index
    %164 = vector.load %arg13[%c0_110, %c0_111] : memref<256x1024xf32, #tpu.memory_space<vmem>>, vector<256x1024xf32>
    %c3 = arith.constant 3 : index
    %c0_112 = arith.constant 0 : index
    %c0_113 = arith.constant 0 : index
    %165 = vector.load %arg20[%c3, %c0_112, %c0_113] : memref<4x8x256xf32, #tpu.memory_space<vmem>>, vector<1x8x256xf32>
    %166 = vector.shape_cast %165 : vector<1x8x256xf32> to vector<8x256xf32>
    %c3_114 = arith.constant 3 : index
    %c0_115 = arith.constant 0 : index
    %c0_116 = arith.constant 0 : index
    %167 = vector.load %arg21[%c3_114, %c0_115, %c0_116] : memref<4x8x256xf32, #tpu.memory_space<vmem>>, vector<1x8x256xf32>
    %168 = vector.shape_cast %167 : vector<1x8x256xf32> to vector<8x256xf32>
    %cst_117 = arith.constant dense<0.000000e+00> : vector<8x1024xf32>
    %169 = tpu.matmul %166, %164, %cst_117 {dimension_numbers = #tpu.dot_dimension_numbers<[1], [0], [0], [1], [0, 0, 1, 1], [], []>} : vector<8x256xf32>, vector<256x1024xf32>, vector<8x1024xf32> -> vector<8x1024xf32>
    %c0_118 = arith.constant 0 : index
    %c0_119 = arith.constant 0 : index
    %170 = vector.load %arg12[%c0_118, %c0_119] : memref<256x1024xf32, #tpu.memory_space<vmem>>, vector<256x1024xf32>
    %cst_120 = arith.constant dense<0.000000e+00> : vector<8x1024xf32>
    %171 = tpu.matmul %157, %170, %cst_120 {dimension_numbers = #tpu.dot_dimension_numbers<[1], [0], [0], [1], [0, 0, 1, 1], [], []>} : vector<8x256xf32>, vector<256x1024xf32>, vector<8x1024xf32> -> vector<8x1024xf32>
    %172 = arith.addf %171, %169 : vector<8x1024xf32>
    %c0_121 = arith.constant 0 : index
    %c0_122 = arith.constant 0 : index
    %173 = vector.load %arg14[%c0_121, %c0_122] : memref<1x1024xf32, #tpu.memory_space<vmem>>, vector<1x1024xf32>
    %174 = vector.broadcast %173 : vector<1x1024xf32> to vector<8x1024xf32>
    %175 = arith.addf %172, %174 : vector<8x1024xf32>
    %176 = vector.extract_strided_slice %175 {offsets = [0, 0], sizes = [8, 256], strides = [1, 1]} : vector<8x1024xf32> to vector<8x256xf32>
    %cst_123 = arith.constant 5.000000e-01 : f32
    %177 = vector.broadcast %cst_123 : f32 to vector<8x256xf32>
    %178 = arith.mulf %177, %176 : vector<8x256xf32>
    %179 = math.tanh %178 : vector<8x256xf32>
    %cst_124 = arith.constant 1.000000e+00 : f32
    %180 = vector.broadcast %cst_124 : f32 to vector<8x256xf32>
    %181 = arith.addf %179, %180 : vector<8x256xf32>
    %cst_125 = arith.constant 5.000000e-01 : f32
    %182 = vector.broadcast %cst_125 : f32 to vector<8x256xf32>
    %183 = arith.mulf %182, %181 : vector<8x256xf32>
    %184 = vector.extract_strided_slice %175 {offsets = [0, 256], sizes = [8, 256], strides = [1, 1]} : vector<8x1024xf32> to vector<8x256xf32>
    %cst_126 = arith.constant 5.000000e-01 : f32
    %185 = vector.broadcast %cst_126 : f32 to vector<8x256xf32>
    %186 = arith.mulf %185, %184 : vector<8x256xf32>
    %187 = math.tanh %186 : vector<8x256xf32>
    %cst_127 = arith.constant 1.000000e+00 : f32
    %188 = vector.broadcast %cst_127 : f32 to vector<8x256xf32>
    %189 = arith.addf %187, %188 : vector<8x256xf32>
    %cst_128 = arith.constant 5.000000e-01 : f32
    %190 = vector.broadcast %cst_128 : f32 to vector<8x256xf32>
    %191 = arith.mulf %190, %189 : vector<8x256xf32>
    %192 = vector.extract_strided_slice %175 {offsets = [0, 512], sizes = [8, 256], strides = [1, 1]} : vector<8x1024xf32> to vector<8x256xf32>
    %193 = math.tanh %192 : vector<8x256xf32>
    %194 = vector.extract_strided_slice %175 {offsets = [0, 768], sizes = [8, 256], strides = [1, 1]} : vector<8x1024xf32> to vector<8x256xf32>
    %cst_129 = arith.constant 5.000000e-01 : f32
    %195 = vector.broadcast %cst_129 : f32 to vector<8x256xf32>
    %196 = arith.mulf %195, %194 : vector<8x256xf32>
    %197 = math.tanh %196 : vector<8x256xf32>
    %cst_130 = arith.constant 1.000000e+00 : f32
    %198 = vector.broadcast %cst_130 : f32 to vector<8x256xf32>
    %199 = arith.addf %197, %198 : vector<8x256xf32>
    %cst_131 = arith.constant 5.000000e-01 : f32
    %200 = vector.broadcast %cst_131 : f32 to vector<8x256xf32>
    %201 = arith.mulf %200, %199 : vector<8x256xf32>
    %202 = arith.mulf %191, %168 : vector<8x256xf32>
    %203 = arith.mulf %183, %193 : vector<8x256xf32>
    %204 = arith.addf %202, %203 : vector<8x256xf32>
    %205 = math.tanh %204 : vector<8x256xf32>
    %206 = arith.mulf %201, %205 : vector<8x256xf32>
    %c3_132 = arith.constant 3 : index
    %c0_133 = arith.constant 0 : index
    %c0_134 = arith.constant 0 : index
    %207 = vector.load %arg20[%c3_132, %c0_133, %c0_134] : memref<4x8x256xf32, #tpu.memory_space<vmem>>, vector<1x8x256xf32>
    %208 = vector.shape_cast %207 : vector<1x8x256xf32> to vector<8x256xf32>
    %209 = vector.shape_cast %206 : vector<8x256xf32> to vector<1x8x256xf32>
    tpu.vector_store %arg20[%c3_132, %c0_133, %c0_134], %209 {strides = array<i32>} : memref<4x8x256xf32, #tpu.memory_space<vmem>>, vector<1x8x256xf32>,
    %c3_135 = arith.constant 3 : index
    %c0_136 = arith.constant 0 : index
    %c0_137 = arith.constant 0 : index
    %210 = vector.load %arg21[%c3_135, %c0_136, %c0_137] : memref<4x8x256xf32, #tpu.memory_space<vmem>>, vector<1x8x256xf32>
    %211 = vector.shape_cast %210 : vector<1x8x256xf32> to vector<8x256xf32>
    %212 = vector.shape_cast %204 : vector<8x256xf32> to vector<1x8x256xf32>
    tpu.vector_store %arg21[%c3_135, %c0_136, %c0_137], %212 {strides = array<i32>} : memref<4x8x256xf32, #tpu.memory_space<vmem>>, vector<1x8x256xf32>,
    %c0_138 = arith.constant 0 : index
    %c0_139 = arith.constant 0 : index
    %c0_140 = arith.constant 0 : index
    %213 = vector.load %arg23[%c0_138, %c0_139, %c0_140] : memref<1x8x256xf32, #tpu.memory_space<vmem>>, vector<1x8x256xf32>
    %214 = vector.shape_cast %213 : vector<1x8x256xf32> to vector<8x256xf32>
    %215 = vector.shape_cast %206 : vector<8x256xf32> to vector<1x8x256xf32>
    tpu.vector_store %arg23[%c0_138, %c0_139, %c0_140], %215 {strides = array<i32>} : memref<1x8x256xf32, #tpu.memory_space<vmem>>, vector<1x8x256xf32>,
    %c0_141 = arith.constant 0 : index
    %c0_142 = arith.constant 0 : index
    %216 = vector.load %arg15[%c0_141, %c0_142] : memref<256x128xf32, #tpu.memory_space<vmem>>, vector<256x128xf32>
    %c0_143 = arith.constant 0 : index
    %c0_144 = arith.constant 0 : index
    %c0_145 = arith.constant 0 : index
    %217 = vector.load %arg23[%c0_143, %c0_144, %c0_145] : memref<1x8x256xf32, #tpu.memory_space<vmem>>, vector<1x8x256xf32>
    %218 = vector.shape_cast %217 : vector<1x8x256xf32> to vector<8x256xf32>
    %cst_146 = arith.constant dense<0.000000e+00> : vector<8x128xf32>
    %219 = tpu.matmul %218, %216, %cst_146 {dimension_numbers = #tpu.dot_dimension_numbers<[1], [0], [0], [1], [0, 0, 1, 1], [], []>} : vector<8x256xf32>, vector<256x128xf32>, vector<8x128xf32> -> vector<8x128xf32>
    %c0_147 = arith.constant 0 : index
    %c0_148 = arith.constant 0 : index
    %220 = vector.load %arg16[%c0_147, %c0_148] : memref<1x128xf32, #tpu.memory_space<vmem>>, vector<1x128xf32>
    %221 = vector.broadcast %220 : vector<1x128xf32> to vector<8x128xf32>
    %222 = arith.addf %219, %221 : vector<8x128xf32>
    %223 = vector.shape_cast %222 : vector<8x128xf32> to vector<1x8x128xf32>
    %c0_149 = arith.constant 0 : index
    %c0_150 = arith.constant 0 : index
    %c0_151 = arith.constant 0 : index
    %224 = vector.load %arg19[%c0_149, %c0_150, %c0_151] : memref<1x8x128xf32, #tpu.memory_space<vmem>>, vector<1x8x128xf32>
    tpu.vector_store %arg19[%c0_149, %c0_150, %c0_151], %223 {strides = array<i32>} : memref<1x8x128xf32, #tpu.memory_space<vmem>>, vector<1x8x128xf32>,
    return
  }
}

</mosaic_0001>

<llo_original>
// kernel: decoder_rollout.1
$region0: #{decoder_rollout.1}
  #allocation0 [shape = 'u32[]', space=smem, size = 0x4, offset = 0x4, fixed_abs, tag = 'smem constant byte address 0x4 - core index']
  #allocation1 [shape = 'u32[144,128]{1,0:T(1,128)}', space=vmem, size = 0x12000, scoped, tag = 'internal scratch']
  #allocation2 [shape = 'f32[1,8,1024]{2,1,0:T(8,128)}', space=vmem, size = 0x8000, scoped, tag = 'scratch operand']
  #allocation3 [shape = 'f32[1,8,256]{2,1,0:T(8,128)}', space=vmem, size = 0x2000, scoped, tag = 'scratch operand']
  %s0 = inlined_call_operand.vmem [shape: f32[1,8,128], index: 0, kind: input, shape index: {}]
  %s1 = inlined_call_operand.hbm [shape: f32[128,128], index: 1, kind: input, shape index: {}]
  %s2 = inlined_call_operand.vmem [shape: f32[1,128], index: 2, kind: input, shape index: {}]
  %s3 = inlined_call_operand.hbm [shape: f32[128,1024], index: 3, kind: input, shape index: {}]
  %s4 = inlined_call_operand.hbm [shape: f32[256,1024], index: 4, kind: input, shape index: {}]
  %s5 = inlined_call_operand.vmem [shape: f32[1,1024], index: 5, kind: input, shape index: {}]
  %s6 = inlined_call_operand.hbm [shape: f32[256,1024], index: 6, kind: input, shape index: {}]
  %s7 = inlined_call_operand.hbm [shape: f32[256,1024], index: 7, kind: input, shape index: {}]
  %s8 = inlined_call_operand.vmem [shape: f32[1,1024], index: 8, kind: input, shape index: {}]
  %s9 = inlined_call_operand.hbm [shape: f32[256,1024], index: 9, kind: input, shape index: {}]
  %s10 = inlined_call_operand.hbm [shape: f32[256,1024], index: 10, kind: input, shape index: {}]
  %s11 = inlined_call_operand.hbm [shape: f32[1,1024], index: 11, kind: input, shape index: {}]
  %s12 = inlined_call_operand.hbm [shape: f32[256,1024], index: 12, kind: input, shape index: {}]
  %s13 = inlined_call_operand.hbm [shape: f32[256,1024], index: 13, kind: input, shape index: {}]
  %s14 = inlined_call_operand.hbm [shape: f32[1,1024], index: 14, kind: input, shape index: {}]
  %s15 = inlined_call_operand.vmem [shape: f32[256,128], index: 15, kind: input, shape index: {}]
  %s16 = inlined_call_operand.hbm [shape: f32[1,128], index: 16, kind: input, shape index: {}]
  %s17 = inlined_call_operand.vmem [shape: f32[4,8,256], index: 17, kind: input, shape index: {}, may-alias: {17,20}]
  %s18 = inlined_call_operand.vmem [shape: f32[4,8,256], index: 18, kind: input, shape index: {}, may-alias: {18,21}]
  %s19 = inlined_call_operand.vmem [shape: f32[1,8,128], index: 19, kind: output, shape index: {0}]
  %s20 = inlined_call_operand.vmem [shape: f32[4,8,256], index: 20, kind: output, shape index: {1}, may-alias: {17,20}]
  %s21 = inlined_call_operand.vmem [shape: f32[4,8,256], index: 21, kind: output, shape index: {2}, may-alias: {18,21}]
  %22 = xla_tuple %s19, %s20, %s21
  %s23 = sld [smem:[#allocation0]]
  $region150: #{decoder_rollout.1} parent=0
    _
  %s25 = ssub.s32 1, %s23
  %s26 = scalar_select 0, %s25, %s23
  $region1: #{decoder_rollout.1} parent=0
    #allocation4 [shape = 'u8[65536]{0}', space=vmem, size = 0x10000, scoped, tag = 'input window, operand 1, single buffered']
    #allocation5 [shape = 's32[1]{0}', space=sflag, size = 0x4, scoped, tag = 'scoped memory for decoder_rollout.1']
    #allocation6 [shape = 'u8[524288]{0}', space=vmem, size = 0x80000, scoped, tag = 'input window, operand 3, single buffered']
    #allocation7 [shape = 's32[1]{0}', space=sflag, size = 0x4, scoped, tag = 'scoped memory for decoder_rollout.1']
    #allocation8 [shape = 'u8[1048576]{0}', space=vmem, size = 0x100000, scoped, tag = 'input window, operand 4, single buffered']
    #allocation9 [shape = 'u8[1048576]{0}', space=vmem, size = 0x100000, scoped, tag = 'input window, operand 6, single buffered']
    #allocation10 [shape = 's32[1]{0}', space=sflag, size = 0x4, scoped, tag = 'scoped memory for decoder_rollout.1']
    #allocation11 [shape = 'u8[1048576]{0}', space=vmem, size = 0x100000, scoped, tag = 'input window, operand 7, single buffered']
    #allocation12 [shape = 'u8[1048576]{0}', space=vmem, size = 0x100000, scoped, tag = 'input window, operand 9, single buffered']
    #allocation13 [shape = 's32[1]{0}', space=sflag, size = 0x4, scoped, tag = 'scoped memory for decoder_rollout.1']
    #allocation14 [shape = 'u8[1048576]{0}', space=vmem, size = 0x100000, scoped, tag = 'input window, operand 10, single buffered']
    #allocation15 [shape = 'u8[4096]{0}', space=vmem, size = 0x1000, scoped, tag = 'input window, operand 11, single buffered']
    #allocation16 [shape = 's32[1]{0}', space=sflag, size = 0x4, scoped, tag = 'scoped memory for decoder_rollout.1']
    #allocation17 [shape = 'u8[1048576]{0}', space=vmem, size = 0x100000, scoped, tag = 'input window, operand 12, single buffered']
    #allocation18 [shape = 'u8[1048576]{0}', space=vmem, size = 0x100000, scoped, tag = 'input window, operand 13, single buffered']
    #allocation19 [shape = 's32[1]{0}', space=sflag, size = 0x4, scoped, tag = 'scoped memory for decoder_rollout.1']
    #allocation20 [shape = 'u8[4096]{0}', space=vmem, size = 0x1000, scoped, tag = 'input window, operand 14, single buffered']
    #allocation21 [shape = 'u8[512]{0}', space=vmem, size = 0x400, scoped, tag = 'input window, operand 16, single buffered']
    #allocation22 [shape = 's32[1]{0}', space=sflag, size = 0x4, scoped, tag = 'scoped memory for decoder_rollout.1']
    %27 = vsyncpa [#allocation5], 0
    %28 = vsyncpa [#allocation7], 0
    %29 = vsyncpa [#allocation10], 0
    %30 = vsyncpa [#allocation13], 0
    %31 = vsyncpa [#allocation16], 0
    %32 = vsyncpa [#allocation19], 0
    %33 = vsyncpa [#allocation22], 0
    // Predicated region
    $region2: #{decoder_rollout.1} parent=1 // pred_check
      _
    $region3: #{decoder_rollout.1} parent=1 // pred_check_branch
      %35 = sbr.rel (0) target = $region5
    $region4: #{decoder_rollout.1} parent=1 // pred_region
      _
    $region5: #{decoder_rollout.1} parent=1 // pred_fallthru
      _
    // Predicated region
    $region6: #{decoder_rollout.1} parent=1 // pred_check
      _
    $region7: #{decoder_rollout.1} parent=1 // pred_check_branch
      %37 = sbr.rel (0) target = $region9
    $region8: #{decoder_rollout.1} parent=1 // pred_region
      %s39 = ssub.s32 2048, 2048
      %40 = vsyncadd [#allocation5], %s39
      %s41 = sshll.u32 [#allocation4], 4
      %s42 = int_to_ptr.vmem [resolvable:$true] %s41
      %47 = dma.hbm_to_vmem [thread:$0]  %s1, 2048, %s42, [#allocation5], 128, 128, 8
    $region9: #{decoder_rollout.1} parent=1 // pred_fallthru
      _
    // Predicated region
    $region10: #{decoder_rollout.1} parent=1 // pred_check
      _
    $region11: #{decoder_rollout.1} parent=1 // pred_check_branch
      %49 = sbr.rel (0) target = $region13
    $region12: #{decoder_rollout.1} parent=1 // pred_region
      _
    $region13: #{decoder_rollout.1} parent=1 // pred_fallthru
      _
    // Predicated region
    $region14: #{decoder_rollout.1} parent=1 // pred_check
      _
    $region15: #{decoder_rollout.1} parent=1 // pred_check_branch
      %51 = sbr.rel (0) target = $region17
    $region16: #{decoder_rollout.1} parent=1 // pred_region
      %s53 = ssub.s32 16384, 16384
      %54 = vsyncadd [#allocation7], %s53
      %s55 = sshll.u32 [#allocation6], 4
      %s56 = int_to_ptr.vmem [resolvable:$true] %s55
      %61 = dma.hbm_to_vmem [thread:$0]  %s3, 16384, %s56, [#allocation7], 1024, 1024, 64
    $region17: #{decoder_rollout.1} parent=1 // pred_fallthru
      _
    // Predicated region
    $region18: #{decoder_rollout.1} parent=1 // pred_check
      _
    $region19: #{decoder_rollout.1} parent=1 // pred_check_branch
      %63 = sbr.rel (0) target = $region21
    $region20: #{decoder_rollout.1} parent=1 // pred_region
      %s65 = ssub.s32 32768, 32768
      %66 = vsyncadd [#allocation7], %s65
      %s67 = sshll.u32 [#allocation8], 4
      %s68 = int_to_ptr.vmem [resolvable:$true] %s67
      %73 = dma.hbm_to_vmem [thread:$0]  %s4, 32768, %s68, [#allocation7], 1024, 1024, 64
    $region21: #{decoder_rollout.1} parent=1 // pred_fallthru
      _
    // Predicated region
    $region22: #{decoder_rollout.1} parent=1 // pred_check
      _
    $region23: #{decoder_rollout.1} parent=1 // pred_check_branch
      %75 = sbr.rel (0) target = $region25
    $region24: #{decoder_rollout.1} parent=1 // pred_region
      _
    $region25: #{decoder_rollout.1} parent=1 // pred_fallthru
      _
    // Predicated region
    $region26: #{decoder_rollout.1} parent=1 // pred_check
      _
    $region27: #{decoder_rollout.1} parent=1 // pred_check_branch
      %77 = sbr.rel (0) target = $region29
    $region28: #{decoder_rollout.1} parent=1 // pred_region
      %s79 = ssub.s32 32768, 32768
      %80 = vsyncadd [#allocation10], %s79
      %s81 = sshll.u32 [#allocation9], 4
      %s82 = int_to_ptr.vmem [resolvable:$true] %s81
      %87 = dma.hbm_to_vmem [thread:$0]  %s6, 32768, %s82, [#allocation10], 1024, 1024, 64
    $region29: #{decoder_rollout.1} parent=1 // pred_fallthru
      _
    // Predicated region
    $region30: #{decoder_rollout.1} parent=1 // pred_check
      _
    $region31: #{decoder_rollout.1} parent=1 // pred_check_branch
      %89 = sbr.rel (0) target = $region33
    $region32: #{decoder_rollout.1} parent=1 // pred_region
      %s91 = ssub.s32 32768, 32768
      %92 = vsyncadd [#allocation10], %s91
      %s93 = sshll.u32 [#allocation11], 4
      %s94 = int_to_ptr.vmem [resolvable:$true] %s93
      %99 = dma.hbm_to_vmem [thread:$0]  %s7, 32768, %s94, [#allocation10], 1024, 1024, 64
    $region33: #{decoder_rollout.1} parent=1 // pred_fallthru
      _
    // Predicated region
    $region34: #{decoder_rollout.1} parent=1 // pred_check
      _
    $region35: #{decoder_rollout.1} parent=1 // pred_check_branch
      %101 = sbr.rel (0) target = $region37
    $region36: #{decoder_rollout.1} parent=1 // pred_region
      _
    $region37: #{decoder_rollout.1} parent=1 // pred_fallthru
      _
    // Predicated region
    $region38: #{decoder_rollout.1} parent=1 // pred_check
      _
    $region39: #{decoder_rollout.1} parent=1 // pred_check_branch
      %103 = sbr.rel (0) target = $region41
    $region40: #{decoder_rollout.1} parent=1 // pred_region
      %s105 = ssub.s32 32768, 32768
      %106 = vsyncadd [#allocation13], %s105
      %s107 = sshll.u32 [#allocation12], 4
      %s108 = int_to_ptr.vmem [resolvable:$true] %s107
      %113 = dma.hbm_to_vmem [thread:$0]  %s9, 32768, %s108, [#allocation13], 1024, 1024, 64
    $region41: #{decoder_rollout.1} parent=1 // pred_fallthru
      _
    // Predicated region
    $region42: #{decoder_rollout.1} parent=1 // pred_check
      _
    $region43: #{decoder_rollout.1} parent=1 // pred_check_branch
      %115 = sbr.rel (0) target = $region45
    $region44: #{decoder_rollout.1} parent=1 // pred_region
      %s117 = ssub.s32 32768, 32768
      %118 = vsyncadd [#allocation13], %s117
      %s119 = sshll.u32 [#allocation14], 4
      %s120 = int_to_ptr.vmem [resolvable:$true] %s119
      %125 = dma.hbm_to_vmem [thread:$0]  %s10, 32768, %s120, [#allocation13], 1024, 1024, 64
    $region45: #{decoder_rollout.1} parent=1 // pred_fallthru
      _
    // Predicated region
    $region46: #{decoder_rollout.1} parent=1 // pred_check
      _
    $region47: #{decoder_rollout.1} parent=1 // pred_check_branch
      %127 = sbr.rel (0) target = $region49
    $region48: #{decoder_rollout.1} parent=1 // pred_region
      %s129 = ssub.s32 128, 128
      %130 = vsyncadd [#allocation16], %s129
      %s132 = sshll.u32 [#allocation15], 4
      %s133 = int_to_ptr.vmem [resolvable:$true] %s132
      %135 = dma.hbm_to_vmem [thread:$0]  %s11, 128, %s133, [#allocation16]
    $region49: #{decoder_rollout.1} parent=1 // pred_fallthru
      _
    // Predicated region
    $region50: #{decoder_rollout.1} parent=1 // pred_check
      _
    $region51: #{decoder_rollout.1} parent=1 // pred_check_branch
      %137 = sbr.rel (0) target = $region53
    $region52: #{decoder_rollout.1} parent=1 // pred_region
      %s139 = ssub.s32 32768, 32768
      %140 = vsyncadd [#allocation16], %s139
      %s141 = sshll.u32 [#allocation17], 4
      %s142 = int_to_ptr.vmem [resolvable:$true] %s141
      %147 = dma.hbm_to_vmem [thread:$0]  %s12, 32768, %s142, [#allocation16], 1024, 1024, 64
    $region53: #{decoder_rollout.1} parent=1 // pred_fallthru
      _
    // Predicated region
    $region54: #{decoder_rollout.1} parent=1 // pred_check
      _
    $region55: #{decoder_rollout.1} parent=1 // pred_check_branch
      %149 = sbr.rel (0) target = $region57
    $region56: #{decoder_rollout.1} parent=1 // pred_region
      %s151 = ssub.s32 32768, 32768
      %152 = vsyncadd [#allocation19], %s151
      %s153 = sshll.u32 [#allocation18], 4
      %s154 = int_to_ptr.vmem [resolvable:$true] %s153
      %159 = dma.hbm_to_vmem [thread:$0]  %s13, 32768, %s154, [#allocation19], 1024, 1024, 64
    $region57: #{decoder_rollout.1} parent=1 // pred_fallthru
      _
    // Predicated region
    $region58: #{decoder_rollout.1} parent=1 // pred_check
      _
    $region59: #{decoder_rollout.1} parent=1 // pred_check_branch
      %161 = sbr.rel (0) target = $region61
    $region60: #{decoder_rollout.1} parent=1 // pred_region
      %s163 = ssub.s32 128, 128
      %164 = vsyncadd [#allocation19], %s163
      %s166 = sshll.u32 [#allocation20], 4
      %s167 = int_to_ptr.vmem [resolvable:$true] %s166
      %169 = dma.hbm_to_vmem [thread:$0]  %s14, 128, %s167, [#allocation19]
    $region61: #{decoder_rollout.1} parent=1 // pred_fallthru
      _
    // Predicated region
    $region62: #{decoder_rollout.1} parent=1 // pred_check
      _
    $region63: #{decoder_rollout.1} parent=1 // pred_check_branch
      %171 = sbr.rel (0) target = $region65
    $region64: #{decoder_rollout.1} parent=1 // pred_region
      _
    $region65: #{decoder_rollout.1} parent=1 // pred_fallthru
      _
    // Predicated region
    $region66: #{decoder_rollout.1} parent=1 // pred_check
      _
    $region67: #{decoder_rollout.1} parent=1 // pred_check_branch
      %173 = sbr.rel (0) target = $region69
    $region68: #{decoder_rollout.1} parent=1 // pred_region
      %s175 = ssub.s32 16, 16
      %176 = vsyncadd [#allocation22], %s175
      %s178 = sshll.u32 [#allocation21], 4
      %s179 = int_to_ptr.vmem [resolvable:$true] %s178
      %181 = dma.hbm_to_vmem [thread:$0]  %s16, 16, %s179, [#allocation22]
    $region69: #{decoder_rollout.1} parent=1 // pred_fallthru
      _
    // Predicated region
    $region70: #{decoder_rollout.1} parent=1 // pred_check
      _
    $region71: #{decoder_rollout.1} parent=1 // pred_check_branch
      %183 = sbr.rel (0) target = $region73
    $region72: #{decoder_rollout.1} parent=1 // pred_region
      _
    $region73: #{decoder_rollout.1} parent=1 // pred_fallthru
      _
    // Predicated region
    $region74: #{decoder_rollout.1} parent=1 // pred_check
      _
    $region75: #{decoder_rollout.1} parent=1 // pred_check_branch
      %185 = sbr.rel (0) target = $region77
    $region76: #{decoder_rollout.1} parent=1 // pred_region
      _
    $region77: #{decoder_rollout.1} parent=1 // pred_fallthru
      _
    // Predicated region
    $region78: #{decoder_rollout.1} parent=1 // pred_check
      _
    $region79: #{decoder_rollout.1} parent=1 // pred_check_branch
      %187 = sbr.rel (0) target = $region81
    $region80: #{decoder_rollout.1} parent=1 // pred_region
      %188 = dma.done [#allocation5], 2048
    $region81: #{decoder_rollout.1} parent=1 // pred_fallthru
      _
    // Predicated region
    $region82: #{decoder_rollout.1} parent=1 // pred_check
      _
    $region83: #{decoder_rollout.1} parent=1 // pred_check_branch
      %190 = sbr.rel (0) target = $region85
    $region84: #{decoder_rollout.1} parent=1 // pred_region
      %191 = dma.done [#allocation7], 16384
    $region85: #{decoder_rollout.1} parent=1 // pred_fallthru
      _
    // Predicated region
    $region86: #{decoder_rollout.1} parent=1 // pred_check
      _
    $region87: #{decoder_rollout.1} parent=1 // pred_check_branch
      %193 = sbr.rel (0) target = $region89
    $region88: #{decoder_rollout.1} parent=1 // pred_region
      %194 = dma.done [#allocation7], 32768
    $region89: #{decoder_rollout.1} parent=1 // pred_fallthru
      _
    // Predicated region
    $region90: #{decoder_rollout.1} parent=1 // pred_check
      _
    $region91: #{decoder_rollout.1} parent=1 // pred_check_branch
      %196 = sbr.rel (0) target = $region93
    $region92: #{decoder_rollout.1} parent=1 // pred_region
      %197 = dma.done [#allocation10], 32768
    $region93: #{decoder_rollout.1} parent=1 // pred_fallthru
      _
    // Predicated region
    $region94: #{decoder_rollout.1} parent=1 // pred_check
      _
    $region95: #{decoder_rollout.1} parent=1 // pred_check_branch
      %199 = sbr.rel (0) target = $region97
    $region96: #{decoder_rollout.1} parent=1 // pred_region
      %200 = dma.done [#allocation10], 32768
    $region97: #{decoder_rollout.1} parent=1 // pred_fallthru
      _
    // Predicated region
    $region98: #{decoder_rollout.1} parent=1 // pred_check
      _
    $region99: #{decoder_rollout.1} parent=1 // pred_check_branch
      %202 = sbr.rel (0) target = $region101
    $region100: #{decoder_rollout.1} parent=1 // pred_region
      %203 = dma.done [#allocation13], 32768
    $region101: #{decoder_rollout.1} parent=1 // pred_fallthru
      _
    // Predicated region
    $region102: #{decoder_rollout.1} parent=1 // pred_check
      _
    $region103: #{decoder_rollout.1} parent=1 // pred_check_branch
      %205 = sbr.rel (0) target = $region105
    $region104: #{decoder_rollout.1} parent=1 // pred_region
      %206 = dma.done [#allocation13], 32768
    $region105: #{decoder_rollout.1} parent=1 // pred_fallthru
      _
    // Predicated region
    $region106: #{decoder_rollout.1} parent=1 // pred_check
      _
    $region107: #{decoder_rollout.1} parent=1 // pred_check_branch
      %208 = sbr.rel (0) target = $region109
    $region108: #{decoder_rollout.1} parent=1 // pred_region
      %209 = dma.done [#allocation16], 128
    $region109: #{decoder_rollout.1} parent=1 // pred_fallthru
      _
    // Predicated region
    $region110: #{decoder_rollout.1} parent=1 // pred_check
      _
    $region111: #{decoder_rollout.1} parent=1 // pred_check_branch
      %211 = sbr.rel (0) target = $region113
    $region112: #{decoder_rollout.1} parent=1 // pred_region
      %212 = dma.done [#allocation16], 32768
    $region113: #{decoder_rollout.1} parent=1 // pred_fallthru
      _
    // Predicated region
    $region114: #{decoder_rollout.1} parent=1 // pred_check
      _
    $region115: #{decoder_rollout.1} parent=1 // pred_check_branch
      %214 = sbr.rel (0) target = $region117
    $region116: #{decoder_rollout.1} parent=1 // pred_region
      %215 = dma.done [#allocation19], 32768
    $region117: #{decoder_rollout.1} parent=1 // pred_fallthru
      _
    // Predicated region
    $region118: #{decoder_rollout.1} parent=1 // pred_check
      _
    $region119: #{decoder_rollout.1} parent=1 // pred_check_branch
      %217 = sbr.rel (0) target = $region121
    $region120: #{decoder_rollout.1} parent=1 // pred_region
      %218 = dma.done [#allocation19], 128
    $region121: #{decoder_rollout.1} parent=1 // pred_fallthru
      _
    // Predicated region
    $region122: #{decoder_rollout.1} parent=1 // pred_check
      _
    $region123: #{decoder_rollout.1} parent=1 // pred_check_branch
      %220 = sbr.rel (0) target = $region125
    $region124: #{decoder_rollout.1} parent=1 // pred_region
      %221 = dma.done [#allocation22], 16
    $region125: #{decoder_rollout.1} parent=1 // pred_fallthru
      _
    %v222 = vld [vmem:[%s17] sm:$0xff]
    %v223 = vld [vmem:[%s17 + $0x8] sm:$0xff]
    %v224 = vld [vmem:[%s17 + $0x10] sm:$0xff]
    %v225 = vld [vmem:[%s17 + $0x18] sm:$0xff]
    %v226 = vld [vmem:[%s17 + $0x20] sm:$0xff]
    %v227 = vld [vmem:[%s17 + $0x28] sm:$0xff]
    %v228 = vld [vmem:[%s17 + $0x30] sm:$0xff]
    %v229 = vld [vmem:[%s17 + $0x38] sm:$0xff]
    %230 = vst [vmem:[%s20] sm:$0xff] %v222
    %231 = vst [vmem:[%s20 + $0x8] sm:$0xff] %v223
    %232 = vst [vmem:[%s20 + $0x10] sm:$0xff] %v224
    %233 = vst [vmem:[%s20 + $0x18] sm:$0xff] %v225
    %234 = vst [vmem:[%s20 + $0x20] sm:$0xff] %v226
    %235 = vst [vmem:[%s20 + $0x28] sm:$0xff] %v227
    %236 = vst [vmem:[%s20 + $0x30] sm:$0xff] %v228
    %237 = vst [vmem:[%s20 + $0x38] sm:$0xff] %v229
    %v238 = vld [vmem:[%s18] sm:$0xff]
    %v239 = vld [vmem:[%s18 + $0x8] sm:$0xff]
    %v240 = vld [vmem:[%s18 + $0x10] sm:$0xff]
    %v241 = vld [vmem:[%s18 + $0x18] sm:$0xff]
    %v242 = vld [vmem:[%s18 + $0x20] sm:$0xff]
    %v243 = vld [vmem:[%s18 + $0x28] sm:$0xff]
    %v244 = vld [vmem:[%s18 + $0x30] sm:$0xff]
    %v245 = vld [vmem:[%s18 + $0x38] sm:$0xff]
    %246 = vst [vmem:[%s21] sm:$0xff] %v238
    %247 = vst [vmem:[%s21 + $0x8] sm:$0xff] %v239
    %248 = vst [vmem:[%s21 + $0x10] sm:$0xff] %v240
    %249 = vst [vmem:[%s21 + $0x18] sm:$0xff] %v241
    %250 = vst [vmem:[%s21 + $0x20] sm:$0xff] %v242
    %251 = vst [vmem:[%s21 + $0x28] sm:$0xff] %v243
    %252 = vst [vmem:[%s21 + $0x30] sm:$0xff] %v244
    %253 = vst [vmem:[%s21 + $0x38] sm:$0xff] %v245
    %v254 = vld [vmem:[#allocation4] sm:$0xff]
    %v255 = vld [vmem:[#allocation4 + $0x8] sm:$0xff]
    %v256 = vld [vmem:[#allocation4 + $0x10] sm:$0xff]
    %v257 = vld [vmem:[#allocation4 + $0x18] sm:$0xff]
    %v258 = vld [vmem:[#allocation4 + $0x20] sm:$0xff]
    %v259 = vld [vmem:[#allocation4 + $0x28] sm:$0xff]
    %v260 = vld [vmem:[#allocation4 + $0x30] sm:$0xff]
    %v261 = vld [vmem:[#allocation4 + $0x38] sm:$0xff]
    %v262 = vld [vmem:[#allocation4 + $0x40] sm:$0xff]
    %v263 = vld [vmem:[#allocation4 + $0x48] sm:$0xff]
    %v264 = vld [vmem:[#allocation4 + $0x50] sm:$0xff]
    %v265 = vld [vmem:[#allocation4 + $0x58] sm:$0xff]
    %v266 = vld [vmem:[#allocation4 + $0x60] sm:$0xff]
    %v267 = vld [vmem:[#allocation4 + $0x68] sm:$0xff]
    %v268 = vld [vmem:[#allocation4 + $0x70] sm:$0xff]
    %v269 = vld [vmem:[#allocation4 + $0x78] sm:$0xff]
    %v270 = vld [vmem:[%s0] sm:$0xff]
    %v271 = vld [vmem:[%s2] sm:$0x1]
    %v273 = vlaneseq
    %v274 = vshrl.u32 %v273, 7
    %v275 = vsub.s32 0, %v274
    %v276 = vrot.slane %v271, %v275
    %278 = vmatprep.subr.mxu0 0.0
    %279 = vmatpush1.msra.mxu0 %v254
    %280 = vmatprep.subr.mxu0 0.0
    %281 = vmatpush1.msra.mxu0 %v255
    %282 = vmatprep.subr.mxu0 0.0
    %283 = vmatpush1.msra.mxu0 %v256
    %284 = vmatprep.subr.mxu0 0.0
    %285 = vmatpush1.msra.mxu0 %v257
    %286 = vmatprep.subr.mxu0 0.0
    %287 = vmatpush1.msra.mxu0 %v258
    %288 = vmatprep.subr.mxu0 0.0
    %289 = vmatpush1.msra.mxu0 %v259
    %290 = vmatprep.subr.mxu0 0.0
    %291 = vmatpush1.msra.mxu0 %v260
    %292 = vmatprep.subr.mxu0 0.0
    %293 = vmatpush1.msra.mxu0 %v261
    %294 = vmatprep.subr.mxu0 0.0
    %295 = vmatpush1.msra.mxu0 %v262
    %296 = vmatprep.subr.mxu0 0.0
    %297 = vmatpush1.msra.mxu0 %v263
    %298 = vmatprep.subr.mxu0 0.0
    %299 = vmatpush1.msra.mxu0 %v264
    %300 = vmatprep.subr.mxu0 0.0
    %301 = vmatpush1.msra.mxu0 %v265
    %302 = vmatprep.subr.mxu0 0.0
    %303 = vmatpush1.msra.mxu0 %v266
    %304 = vmatprep.subr.mxu0 0.0
    %305 = vmatpush1.msra.mxu0 %v267
    %306 = vmatprep.subr.mxu0 0.0
    %307 = vmatpush1.msra.mxu0 %v268
    %308 = vmatprep.subr.mxu0 0.0
    %309 = vmatpush1.msra.mxu0 %v269
    %310 = vmatprep.subr.mxu0 0.0
    %311 = vmatpush1.msra.mxu0 0.0
    %312 = vmatprep.subr.mxu0 0.0
    %313 = vmatpush1.msra.mxu0 0.0
    %314 = vmatprep.subr.mxu0 0.0
    %315 = vmatpush1.msra.mxu0 0.0
    %316 = vmatprep.subr.mxu0 0.0
    %317 = vmatpush1.msra.mxu0 0.0
    %318 = vmatprep.subr.mxu0 0.0
    %319 = vmatpush1.msra.mxu0 0.0
    %320 = vmatprep.subr.mxu0 0.0
    %321 = vmatpush1.msra.mxu0 0.0
    %322 = vmatprep.subr.mxu0 0.0
    %323 = vmatpush1.msra.mxu0 0.0
    %324 = vmatprep.subr.mxu0 0.0
    %325 = vmatpush1.msra.mxu0 0.0
    %326 = vmatprep.subr.mxu0 0.0
    %327 = vmatpush1.msra.mxu0 0.0
    %328 = vmatprep.subr.mxu0 0.0
    %329 = vmatpush1.msra.mxu0 0.0
    %330 = vmatprep.subr.mxu0 0.0
    %331 = vmatpush1.msra.mxu0 0.0
    %332 = vmatprep.subr.mxu0 0.0
    %333 = vmatpush1.msra.mxu0 0.0
    %334 = vmatprep.subr.mxu0 0.0
    %335 = vmatpush1.msra.mxu0 0.0
    %336 = vmatprep.subr.mxu0 0.0
    %337 = vmatpush1.msra.mxu0 0.0
    %338 = vmatprep.subr.mxu0 0.0
    %339 = vmatpush1.msra.mxu0 0.0
    %340 = vmatprep.subr.mxu0 0.0
    %341 = vmatpush1.msra.mxu0 0.0
    %342 = vmatprep.mubr.f32.mxu0 0.0
    %343 = vmatmul.mubr.f32.gmra.mrb[0].mxu0 %v270
    %v344 = vpop.f32.mrb[0].mxu0
    %v345 = vadd.f32 %v276, %v344
    %v346 = vpop.f32.mrb[0].mxu0
    %347 = vdwg.mxu0
    %v348 = vmax.f32 %v345, 0.0
    %v349 = vld [vmem:[#allocation6] sm:$0xff]
    %v350 = vld [vmem:[#allocation6 + $0x8] sm:$0xff]
    %v351 = vld [vmem:[#allocation6 + $0x10] sm:$0xff]
    %v352 = vld [vmem:[#allocation6 + $0x18] sm:$0xff]
    %v353 = vld [vmem:[#allocation6 + $0x20] sm:$0xff]
    %v354 = vld [vmem:[#allocation6 + $0x28] sm:$0xff]
    %v355 = vld [vmem:[#allocation6 + $0x30] sm:$0xff]
    %v356 = vld [vmem:[#allocation6 + $0x38] sm:$0xff]
    %v357 = vld [vmem:[#allocation6 + $0x40] sm:$0xff]
    %v358 = vld [vmem:[#allocation6 + $0x48] sm:$0xff]
    %v359 = vld [vmem:[#allocation6 + $0x50] sm:$0xff]
    %v360 = vld [vmem:[#allocation6 + $0x58] sm:$0xff]
    %v361 = vld [vmem:[#allocation6 + $0x60] sm:$0xff]
    %v362 = vld [vmem:[#allocation6 + $0x68] sm:$0xff]
    %v363 = vld [vmem:[#allocation6 + $0x70] sm:$0xff]
    %v364 = vld [vmem:[#allocation6 + $0x78] sm:$0xff]
    %v365 = vld [vmem:[#allocation6 + $0x80] sm:$0xff]
    %v366 = vld [vmem:[#allocation6 + $0x88] sm:$0xff]
    %v367 = vld [vmem:[#allocation6 + $0x90] sm:$0xff]
    %v368 = vld [vmem:[#allocation6 + $0x98] sm:$0xff]
    %v369 = vld [vmem:[#allocation6 + $0xa0] sm:$0xff]
    %v370 = vld [vmem:[#allocation6 + $0xa8] sm:$0xff]
    %v371 = vld [vmem:[#allocation6 + $0xb0] sm:$0xff]
    %v372 = vld [vmem:[#allocation6 + $0xb8] sm:$0xff]
    %v373 = vld [vmem:[#allocation6 + $0xc0] sm:$0xff]
    %v374 = vld [vmem:[#allocation6 + $0xc8] sm:$0xff]
    %v375 = vld [vmem:[#allocation6 + $0xd0] sm:$0xff]
    %v376 = vld [vmem:[#allocation6 + $0xd8] sm:$0xff]
    %v377 = vld [vmem:[#allocation6 + $0xe0] sm:$0xff]
    %v378 = vld [vmem:[#allocation6 + $0xe8] sm:$0xff]
    %v379 = vld [vmem:[#allocation6 + $0xf0] sm:$0xff]
    %v380 = vld [vmem:[#allocation6 + $0xf8] sm:$0xff]
    %v381 = vld [vmem:[#allocation6 + $0x100] sm:$0xff]
    %v382 = vld [vmem:[#allocation6 + $0x108] sm:$0xff]
    %v383 = vld [vmem:[#allocation6 + $0x110] sm:$0xff]
    %v384 = vld [vmem:[#allocation6 + $0x118] sm:$0xff]
    %v385 = vld [vmem:[#allocation6 + $0x120] sm:$0xff]
    %v386 = vld [vmem:[#allocation6 + $0x128] sm:$0xff]
    %v387 = vld [vmem:[#allocation6 + $0x130] sm:$0xff]
    %v388 = vld [vmem:[#allocation6 + $0x138] sm:$0xff]
    %v389 = vld [vmem:[#allocation6 + $0x140] sm:$0xff]
    %v390 = vld [vmem:[#allocation6 + $0x148] sm:$0xff]
    %v391 = vld [vmem:[#allocation6 + $0x150] sm:$0xff]
    %v392 = vld [vmem:[#allocation6 + $0x158] sm:$0xff]
    %v393 = vld [vmem:[#allocation6 + $0x160] sm:$0xff]
    %v394 = vld [vmem:[#allocation6 + $0x168] sm:$0xff]
    %v395 = vld [vmem:[#allocation6 + $0x170] sm:$0xff]
    %v396 = vld [vmem:[#allocation6 + $0x178] sm:$0xff]
    %v397 = vld [vmem:[#allocation6 + $0x180] sm:$0xff]
    %v398 = vld [vmem:[#allocation6 + $0x188] sm:$0xff]
    %v399 = vld [vmem:[#allocation6 + $0x190] sm:$0xff]
    %v400 = vld [vmem:[#allocation6 + $0x198] sm:$0xff]
    %v401 = vld [vmem:[#allocation6 + $0x1a0] sm:$0xff]
    %v402 = vld [vmem:[#allocation6 + $0x1a8] sm:$0xff]
    %v403 = vld [vmem:[#allocation6 + $0x1b0] sm:$0xff]
    %v404 = vld [vmem:[#allocation6 + $0x1b8] sm:$0xff]
    %v405 = vld [vmem:[#allocation6 + $0x1c0] sm:$0xff]
    %v406 = vld [vmem:[#allocation6 + $0x1c8] sm:$0xff]
    %v407 = vld [vmem:[#allocation6 + $0x1d0] sm:$0xff]
    %v408 = vld [vmem:[#allocation6 + $0x1d8] sm:$0xff]
    %v409 = vld [vmem:[#allocation6 + $0x1e0] sm:$0xff]
    %v410 = vld [vmem:[#allocation6 + $0x1e8] sm:$0xff]
    %v411 = vld [vmem:[#allocation6 + $0x1f0] sm:$0xff]
    %v412 = vld [vmem:[#allocation6 + $0x1f8] sm:$0xff]
    %v413 = vld [vmem:[#allocation6 + $0x200] sm:$0xff]
    %v414 = vld [vmem:[#allocation6 + $0x208] sm:$0xff]
    %v415 = vld [vmem:[#allocation6 + $0x210] sm:$0xff]
    %v416 = vld [vmem:[#allocation6 + $0x218] sm:$0xff]
    %v417 = vld [vmem:[#allocation6 + $0x220] sm:$0xff]
    %v418 = vld [vmem:[#allocation6 + $0x228] sm:$0xff]
    %v419 = vld [vmem:[#allocation6 + $0x230] sm:$0xff]
    %v420 = vld [vmem:[#allocation6 + $0x238] sm:$0xff]
    %v421 = vld [vmem:[#allocation6 + $0x240] sm:$0xff]
    %v422 = vld [vmem:[#allocation6 + $0x248] sm:$0xff]
    %v423 = vld [vmem:[#allocation6 + $0x250] sm:$0xff]
    %v424 = vld [vmem:[#allocation6 + $0x258] sm:$0xff]
    %v425 = vld [vmem:[#allocation6 + $0x260] sm:$0xff]
    %v426 = vld [vmem:[#allocation6 + $0x268] sm:$0xff]
    %v427 = vld [vmem:[#allocation6 + $0x270] sm:$0xff]
    %v428 = vld [vmem:[#allocation6 + $0x278] sm:$0xff]
    %v429 = vld [vmem:[#allocation6 + $0x280] sm:$0xff]
    %v430 = vld [vmem:[#allocation6 + $0x288] sm:$0xff]
    %v431 = vld [vmem:[#allocation6 + $0x290] sm:$0xff]
    %v432 = vld [vmem:[#allocation6 + $0x298] sm:$0xff]
    %v433 = vld [vmem:[#allocation6 + $0x2a0] sm:$0xff]
    %v434 = vld [vmem:[#allocation6 + $0x2a8] sm:$0xff]
    %v435 = vld [vmem:[#allocation6 + $0x2b0] sm:$0xff]
    %v436 = vld [vmem:[#allocation6 + $0x2b8] sm:$0xff]
    %v437 = vld [vmem:[#allocation6 + $0x2c0] sm:$0xff]
    %v438 = vld [vmem:[#allocation6 + $0x2c8] sm:$0xff]
    %v439 = vld [vmem:[#allocation6 + $0x2d0] sm:$0xff]
    %v440 = vld [vmem:[#allocation6 + $0x2d8] sm:$0xff]
    %v441 = vld [vmem:[#allocation6 + $0x2e0] sm:$0xff]
    %v442 = vld [vmem:[#allocation6 + $0x2e8] sm:$0xff]
    %v443 = vld [vmem:[#allocation6 + $0x2f0] sm:$0xff]
    %v444 = vld [vmem:[#allocation6 + $0x2f8] sm:$0xff]
    %v445 = vld [vmem:[#allocation6 + $0x300] sm:$0xff]
    %v446 = vld [vmem:[#allocation6 + $0x308] sm:$0xff]
    %v447 = vld [vmem:[#allocation6 + $0x310] sm:$0xff]
    %v448 = vld [vmem:[#allocation6 + $0x318] sm:$0xff]
    %v449 = vld [vmem:[#allocation6 + $0x320] sm:$0xff]
    %v450 = vld [vmem:[#allocation6 + $0x328] sm:$0xff]
    %v451 = vld [vmem:[#allocation6 + $0x330] sm:$0xff]
    %v452 = vld [vmem:[#allocation6 + $0x338] sm:$0xff]
    %v453 = vld [vmem:[#allocation6 + $0x340] sm:$0xff]
    %v454 = vld [vmem:[#allocation6 + $0x348] sm:$0xff]
    %v455 = vld [vmem:[#allocation6 + $0x350] sm:$0xff]
    %v456 = vld [vmem:[#allocation6 + $0x358] sm:$0xff]
    %v457 = vld [vmem:[#allocation6 + $0x360] sm:$0xff]
    %v458 = vld [vmem:[#allocation6 + $0x368] sm:$0xff]
    %v459 = vld [vmem:[#allocation6 + $0x370] sm:$0xff]
    %v460 = vld [vmem:[#allocation6 + $0x378] sm:$0xff]
    %v461 = vld [vmem:[#allocation6 + $0x380] sm:$0xff]
    %v462 = vld [vmem:[#allocation6 + $0x388] sm:$0xff]
    %v463 = vld [vmem:[#allocation6 + $0x390] sm:$0xff]
    %v464 = vld [vmem:[#allocation6 + $0x398] sm:$0xff]
    %v465 = vld [vmem:[#allocation6 + $0x3a0] sm:$0xff]
    %v466 = vld [vmem:[#allocation6 + $0x3a8] sm:$0xff]
    %v467 = vld [vmem:[#allocation6 + $0x3b0] sm:$0xff]
    %v468 = vld [vmem:[#allocation6 + $0x3b8] sm:$0xff]
    %v469 = vld [vmem:[#allocation6 + $0x3c0] sm:$0xff]
    %v470 = vld [vmem:[#allocation6 + $0x3c8] sm:$0xff]
    %v471 = vld [vmem:[#allocation6 + $0x3d0] sm:$0xff]
    %v472 = vld [vmem:[#allocation6 + $0x3d8] sm:$0xff]
    %v473 = vld [vmem:[#allocation6 + $0x3e0] sm:$0xff]
    %v474 = vld [vmem:[#allocation6 + $0x3e8] sm:$0xff]
    %v475 = vld [vmem:[#allocation6 + $0x3f0] sm:$0xff]
    %v476 = vld [vmem:[#allocation6 + $0x3f8] sm:$0xff]
    %v477 = vld [vmem:[%s5] sm:$0xff]
    %v479 = vlaneseq
    %v480 = vshrl.u32 %v479, 7
    %v481 = vsub.s32 0, %v480
    %v482 = vrot.slane %v477, %v481
    %v483 = vlaneseq
    %v484 = vshrl.u32 %v483, 7
    %v485 = vsub.s32 1, %v484
    %v486 = vrot.slane %v477, %v485
    %v487 = vlaneseq
    %v488 = vshrl.u32 %v487, 7
    %v489 = vsub.s32 2, %v488
    %v490 = vrot.slane %v477, %v489
    %v491 = vlaneseq
    %v492 = vshrl.u32 %v491, 7
    %v493 = vsub.s32 3, %v492
    %v494 = vrot.slane %v477, %v493
    %v495 = vlaneseq
    %v496 = vshrl.u32 %v495, 7
    %v497 = vsub.s32 4, %v496
    %v498 = vrot.slane %v477, %v497
    %v499 = vlaneseq
    %v500 = vshrl.u32 %v499, 7
    %v501 = vsub.s32 5, %v500
    %v502 = vrot.slane %v477, %v501
    %v503 = vlaneseq
    %v504 = vshrl.u32 %v503, 7
    %v505 = vsub.s32 6, %v504
    %v506 = vrot.slane %v477, %v505
    %v507 = vlaneseq
    %v508 = vshrl.u32 %v507, 7
    %v509 = vsub.s32 7, %v508
    %v510 = vrot.slane %v477, %v509
    %519 = vmatprep.subr.mxu0 %v350
    %520 = vmatpush1.msra.mxu0 %v349
    %521 = vmatprep.subr.mxu0 %v358
    %522 = vmatpush1.msra.mxu0 %v357
    %523 = vmatprep.subr.mxu0 %v366
    %524 = vmatpush1.msra.mxu0 %v365
    %525 = vmatprep.subr.mxu0 %v374
    %526 = vmatpush1.msra.mxu0 %v373
    %527 = vmatprep.subr.mxu0 %v382
    %528 = vmatpush1.msra.mxu0 %v381
    %529 = vmatprep.subr.mxu0 %v390
    %530 = vmatpush1.msra.mxu0 %v389
    %531 = vmatprep.subr.mxu0 %v398
    %532 = vmatpush1.msra.mxu0 %v397
    %533 = vmatprep.subr.mxu0 %v406
    %534 = vmatpush1.msra.mxu0 %v405
    %535 = vmatprep.subr.mxu0 %v414
    %536 = vmatpush1.msra.mxu0 %v413
    %537 = vmatprep.subr.mxu0 %v422
    %538 = vmatpush1.msra.mxu0 %v421
    %539 = vmatprep.subr.mxu0 %v430
    %540 = vmatpush1.msra.mxu0 %v429
    %541 = vmatprep.subr.mxu0 %v438
    %542 = vmatpush1.msra.mxu0 %v437
    %543 = vmatprep.subr.mxu0 %v446
    %544 = vmatpush1.msra.mxu0 %v445
    %545 = vmatprep.subr.mxu0 %v454
    %546 = vmatpush1.msra.mxu0 %v453
    %547 = vmatprep.subr.mxu0 %v462
    %548 = vmatpush1.msra.mxu0 %v461
    %549 = vmatprep.subr.mxu0 %v470
    %550 = vmatpush1.msra.mxu0 %v469
    %551 = vmatprep.subr.mxu0 0.0
    %552 = vmatpush1.msra.mxu0 0.0
    %553 = vmatprep.subr.mxu0 0.0
    %554 = vmatpush1.msra.mxu0 0.0
    %555 = vmatprep.subr.mxu0 0.0
    %556 = vmatpush1.msra.mxu0 0.0
    %557 = vmatprep.subr.mxu0 0.0
    %558 = vmatpush1.msra.mxu0 0.0
    %559 = vmatprep.subr.mxu0 0.0
    %560 = vmatpush1.msra.mxu0 0.0
    %561 = vmatprep.subr.mxu0 0.0
    %562 = vmatpush1.msra.mxu0 0.0
    %563 = vmatprep.subr.mxu0 0.0
    %564 = vmatpush1.msra.mxu0 0.0
    %565 = vmatprep.subr.mxu0 0.0
    %566 = vmatpush1.msra.mxu0 0.0
    %567 = vmatprep.subr.mxu0 0.0
    %568 = vmatpush1.msra.mxu0 0.0
    %569 = vmatprep.subr.mxu0 0.0
    %570 = vmatpush1.msra.mxu0 0.0
    %571 = vmatprep.subr.mxu0 0.0
    %572 = vmatpush1.msra.mxu0 0.0
    %573 = vmatprep.subr.mxu0 0.0
    %574 = vmatpush1.msra.mxu0 0.0
    %575 = vmatprep.subr.mxu0 0.0
    %576 = vmatpush1.msra.mxu0 0.0
    %577 = vmatprep.subr.mxu0 0.0
    %578 = vmatpush1.msra.mxu0 0.0
    %579 = vmatprep.subr.mxu0 0.0
    %580 = vmatpush1.msra.mxu0 0.0
    %581 = vmatprep.subr.mxu0 0.0
    %582 = vmatpush1.msra.mxu0 0.0
    %583 = vmatprep.mubr.f32.mxu0 0.0
    %584 = vmatmul.mubr.f32.gmra.mrb[0].mxu0 %v348
    %v585 = vpop.f32.mrb[0].mxu0
    %v586 = vadd.f32 %v482, %v585
    %v587 = vpop.f32.mrb[0].mxu0
    %v588 = vadd.f32 %v486, %v587
    %589 = vdwg.mxu0
    %590 = vmatprep.subr.mxu0 %v352
    %591 = vmatpush1.msra.mxu0 %v351
    %592 = vmatprep.subr.mxu0 %v360
    %593 = vmatpush1.msra.mxu0 %v359
    %594 = vmatprep.subr.mxu0 %v368
    %595 = vmatpush1.msra.mxu0 %v367
    %596 = vmatprep.subr.mxu0 %v376
    %597 = vmatpush1.msra.mxu0 %v375
    %598 = vmatprep.subr.mxu0 %v384
    %599 = vmatpush1.msra.mxu0 %v383
    %600 = vmatprep.subr.mxu0 %v392
    %601 = vmatpush1.msra.mxu0 %v391
    %602 = vmatprep.subr.mxu0 %v400
    %603 = vmatpush1.msra.mxu0 %v399
    %604 = vmatprep.subr.mxu0 %v408
    %605 = vmatpush1.msra.mxu0 %v407
    %606 = vmatprep.subr.mxu0 %v416
    %607 = vmatpush1.msra.mxu0 %v415
    %608 = vmatprep.subr.mxu0 %v424
    %609 = vmatpush1.msra.mxu0 %v423
    %610 = vmatprep.subr.mxu0 %v432
    %611 = vmatpush1.msra.mxu0 %v431
    %612 = vmatprep.subr.mxu0 %v440
    %613 = vmatpush1.msra.mxu0 %v439
    %614 = vmatprep.subr.mxu0 %v448
    %615 = vmatpush1.msra.mxu0 %v447
    %616 = vmatprep.subr.mxu0 %v456
    %617 = vmatpush1.msra.mxu0 %v455
    %618 = vmatprep.subr.mxu0 %v464
    %619 = vmatpush1.msra.mxu0 %v463
    %620 = vmatprep.subr.mxu0 %v472
    %621 = vmatpush1.msra.mxu0 %v471
    %622 = vmatprep.subr.mxu0 0.0
    %623 = vmatpush1.msra.mxu0 0.0
    %624 = vmatprep.subr.mxu0 0.0
    %625 = vmatpush1.msra.mxu0 0.0
    %626 = vmatprep.subr.mxu0 0.0
    %627 = vmatpush1.msra.mxu0 0.0
    %628 = vmatprep.subr.mxu0 0.0
    %629 = vmatpush1.msra.mxu0 0.0
    %630 = vmatprep.subr.mxu0 0.0
    %631 = vmatpush1.msra.mxu0 0.0
    %632 = vmatprep.subr.mxu0 0.0
    %633 = vmatpush1.msra.mxu0 0.0
    %634 = vmatprep.subr.mxu0 0.0
    %635 = vmatpush1.msra.mxu0 0.0
    %636 = vmatprep.subr.mxu0 0.0
    %637 = vmatpush1.msra.mxu0 0.0
    %638 = vmatprep.subr.mxu0 0.0
    %639 = vmatpush1.msra.mxu0 0.0
    %640 = vmatprep.subr.mxu0 0.0
    %641 = vmatpush1.msra.mxu0 0.0
    %642 = vmatprep.subr.mxu0 0.0
    %643 = vmatpush1.msra.mxu0 0.0
    %644 = vmatprep.subr.mxu0 0.0
    %645 = vmatpush1.msra.mxu0 0.0
    %646 = vmatprep.subr.mxu0 0.0
    %647 = vmatpush1.msra.mxu0 0.0
    %648 = vmatprep.subr.mxu0 0.0
    %649 = vmatpush1.msra.mxu0 0.0
    %650 = vmatprep.subr.mxu0 0.0
    %651 = vmatpush1.msra.mxu0 0.0
    %652 = vmatprep.subr.mxu0 0.0
    %653 = vmatpush1.msra.mxu0 0.0
    %654 = vmatprep.mubr.f32.mxu0 0.0
    %655 = vmatmul.mubr.f32.gmra.mrb[0].mxu0 %v348
    %v656 = vpop.f32.mrb[0].mxu0
    %v657 = vadd.f32 %v490, %v656
    %v658 = vpop.f32.mrb[0].mxu0
    %v659 = vadd.f32 %v494, %v658
    %660 = vdwg.mxu0
    %661 = vmatprep.subr.mxu0 %v354
    %662 = vmatpush1.msra.mxu0 %v353
    %663 = vmatprep.subr.mxu0 %v362
    %664 = vmatpush1.msra.mxu0 %v361
    %665 = vmatprep.subr.mxu0 %v370
    %666 = vmatpush1.msra.mxu0 %v369
    %667 = vmatprep.subr.mxu0 %v378
    %668 = vmatpush1.msra.mxu0 %v377
    %669 = vmatprep.subr.mxu0 %v386
    %670 = vmatpush1.msra.mxu0 %v385
    %671 = vmatprep.subr.mxu0 %v394
    %672 = vmatpush1.msra.mxu0 %v393
    %673 = vmatprep.subr.mxu0 %v402
    %674 = vmatpush1.msra.mxu0 %v401
    %675 = vmatprep.subr.mxu0 %v410
    %676 = vmatpush1.msra.mxu0 %v409
    %677 = vmatprep.subr.mxu0 %v418
    %678 = vmatpush1.msra.mxu0 %v417
    %679 = vmatprep.subr.mxu0 %v426
    %680 = vmatpush1.msra.mxu0 %v425
    %681 = vmatprep.subr.mxu0 %v434
    %682 = vmatpush1.msra.mxu0 %v433
    %683 = vmatprep.subr.mxu0 %v442
    %684 = vmatpush1.msra.mxu0 %v441
    %685 = vmatprep.subr.mxu0 %v450
    %686 = vmatpush1.msra.mxu0 %v449
    %687 = vmatprep.subr.mxu0 %v458
    %688 = vmatpush1.msra.mxu0 %v457
    %689 = vmatprep.subr.mxu0 %v466
    %690 = vmatpush1.msra.mxu0 %v465
    %691 = vmatprep.subr.mxu0 %v474
    %692 = vmatpush1.msra.mxu0 %v473
    %693 = vmatprep.subr.mxu0 0.0
    %694 = vmatpush1.msra.mxu0 0.0
    %695 = vmatprep.subr.mxu0 0.0
    %696 = vmatpush1.msra.mxu0 0.0
    %697 = vmatprep.subr.mxu0 0.0
    %698 = vmatpush1.msra.mxu0 0.0
    %699 = vmatprep.subr.mxu0 0.0
    %700 = vmatpush1.msra.mxu0 0.0
    %701 = vmatprep.subr.mxu0 0.0
    %702 = vmatpush1.msra.mxu0 0.0
    %703 = vmatprep.subr.mxu0 0.0
    %704 = vmatpush1.msra.mxu0 0.0
    %705 = vmatprep.subr.mxu0 0.0
    %706 = vmatpush1.msra.mxu0 0.0
    %707 = vmatprep.subr.mxu0 0.0
    %708 = vmatpush1.msra.mxu0 0.0
    %709 = vmatprep.subr.mxu0 0.0
    %710 = vmatpush1.msra.mxu0 0.0
    %711 = vmatprep.subr.mxu0 0.0
    %712 = vmatpush1.msra.mxu0 0.0
    %713 = vmatprep.subr.mxu0 0.0
    %714 = vmatpush1.msra.mxu0 0.0
    %715 = vmatprep.subr.mxu0 0.0
    %716 = vmatpush1.msra.mxu0 0.0
    %717 = vmatprep.subr.mxu0 0.0
    %718 = vmatpush1.msra.mxu0 0.0
    %719 = vmatprep.subr.mxu0 0.0
    %720 = vmatpush1.msra.mxu0 0.0
    %721 = vmatprep.subr.mxu0 0.0
    %722 = vmatpush1.msra.mxu0 0.0
    %723 = vmatprep.subr.mxu0 0.0
    %724 = vmatpush1.msra.mxu0 0.0
    %725 = vmatprep.mubr.f32.mxu0 0.0
    %726 = vmatmul.mubr.f32.gmra.mrb[0].mxu0 %v348
    %v727 = vpop.f32.mrb[0].mxu0
    %v728 = vadd.f32 %v498, %v727
    %v729 = vpop.f32.mrb[0].mxu0
    %v730 = vadd.f32 %v502, %v729
    %731 = vdwg.mxu0
    %732 = vmatprep.subr.mxu0 %v356
    %733 = vmatpush1.msra.mxu0 %v355
    %734 = vmatprep.subr.mxu0 %v364
    %735 = vmatpush1.msra.mxu0 %v363
    %736 = vmatprep.subr.mxu0 %v372
    %737 = vmatpush1.msra.mxu0 %v371
    %738 = vmatprep.subr.mxu0 %v380
    %739 = vmatpush1.msra.mxu0 %v379
    %740 = vmatprep.subr.mxu0 %v388
    %741 = vmatpush1.msra.mxu0 %v387
    %742 = vmatprep.subr.mxu0 %v396
    %743 = vmatpush1.msra.mxu0 %v395
    %744 = vmatprep.subr.mxu0 %v404
    %745 = vmatpush1.msra.mxu0 %v403
    %746 = vmatprep.subr.mxu0 %v412
    %747 = vmatpush1.msra.mxu0 %v411
    %748 = vmatprep.subr.mxu0 %v420
    %749 = vmatpush1.msra.mxu0 %v419
    %750 = vmatprep.subr.mxu0 %v428
    %751 = vmatpush1.msra.mxu0 %v427
    %752 = vmatprep.subr.mxu0 %v436
    %753 = vmatpush1.msra.mxu0 %v435
    %754 = vmatprep.subr.mxu0 %v444
    %755 = vmatpush1.msra.mxu0 %v443
    %756 = vmatprep.subr.mxu0 %v452
    %757 = vmatpush1.msra.mxu0 %v451
    %758 = vmatprep.subr.mxu0 %v460
    %759 = vmatpush1.msra.mxu0 %v459
    %760 = vmatprep.subr.mxu0 %v468
    %761 = vmatpush1.msra.mxu0 %v467
    %762 = vmatprep.subr.mxu0 %v476
    %763 = vmatpush1.msra.mxu0 %v475
    %764 = vmatprep.subr.mxu0 0.0
    %765 = vmatpush1.msra.mxu0 0.0
    %766 = vmatprep.subr.mxu0 0.0
    %767 = vmatpush1.msra.mxu0 0.0
    %768 = vmatprep.subr.mxu0 0.0
    %769 = vmatpush1.msra.mxu0 0.0
    %770 = vmatprep.subr.mxu0 0.0
    %771 = vmatpush1.msra.mxu0 0.0
    %772 = vmatprep.subr.mxu0 0.0
    %773 = vmatpush1.msra.mxu0 0.0
    %774 = vmatprep.subr.mxu0 0.0
    %775 = vmatpush1.msra.mxu0 0.0
    %776 = vmatprep.subr.mxu0 0.0
    %777 = vmatpush1.msra.mxu0 0.0
    %778 = vmatprep.subr.mxu0 0.0
    %779 = vmatpush1.msra.mxu0 0.0
    %780 = vmatprep.subr.mxu0 0.0
    %781 = vmatpush1.msra.mxu0 0.0
    %782 = vmatprep.subr.mxu0 0.0
    %783 = vmatpush1.msra.mxu0 0.0
    %784 = vmatprep.subr.mxu0 0.0
    %785 = vmatpush1.msra.mxu0 0.0
    %786 = vmatprep.subr.mxu0 0.0
    %787 = vmatpush1.msra.mxu0 0.0
    %788 = vmatprep.subr.mxu0 0.0
    %789 = vmatpush1.msra.mxu0 0.0
    %790 = vmatprep.subr.mxu0 0.0
    %791 = vmatpush1.msra.mxu0 0.0
    %792 = vmatprep.subr.mxu0 0.0
    %793 = vmatpush1.msra.mxu0 0.0
    %794 = vmatprep.subr.mxu0 0.0
    %795 = vmatpush1.msra.mxu0 0.0
    %796 = vmatprep.mubr.f32.mxu0 0.0
    %797 = vmatmul.mubr.f32.gmra.mrb[0].mxu0 %v348
    %v798 = vpop.f32.mrb[0].mxu0
    %v799 = vadd.f32 %v506, %v798
    %v800 = vpop.f32.mrb[0].mxu0
    %v801 = vadd.f32 %v510, %v800
    %802 = vdwg.mxu0
    %803 = vst [vmem:[#allocation2] sm:$0xff] %v586
    %804 = vst [vmem:[#allocation2 + $0x8] sm:$0xff] %v588
    %805 = vst [vmem:[#allocation2 + $0x10] sm:$0xff] %v657
    %806 = vst [vmem:[#allocation2 + $0x18] sm:$0xff] %v659
    %807 = vst [vmem:[#allocation2 + $0x20] sm:$0xff] %v728
    %808 = vst [vmem:[#allocation2 + $0x28] sm:$0xff] %v730
    %809 = vst [vmem:[#allocation2 + $0x30] sm:$0xff] %v799
    %810 = vst [vmem:[#allocation2 + $0x38] sm:$0xff] %v801
    %v811 = vld [vmem:[#allocation8] sm:$0xff]
    %v812 = vld [vmem:[#allocation8 + $0x8] sm:$0xff]
    %v813 = vld [vmem:[#allocation8 + $0x10] sm:$0xff]
    %v814 = vld [vmem:[#allocation8 + $0x18] sm:$0xff]
    %v815 = vld [vmem:[#allocation8 + $0x20] sm:$0xff]
    %v816 = vld [vmem:[#allocation8 + $0x28] sm:$0xff]
    %v817 = vld [vmem:[#allocation8 + $0x30] sm:$0xff]
    %v818 = vld [vmem:[#allocation8 + $0x38] sm:$0xff]
    %v819 = vld [vmem:[#allocation8 + $0x40] sm:$0xff]
    %v820 = vld [vmem:[#allocation8 + $0x48] sm:$0xff]
    %v821 = vld [vmem:[#allocation8 + $0x50] sm:$0xff]
    %v822 = vld [vmem:[#allocation8 + $0x58] sm:$0xff]
    %v823 = vld [vmem:[#allocation8 + $0x60] sm:$0xff]
    %v824 = vld [vmem:[#allocation8 + $0x68] sm:$0xff]
    %v825 = vld [vmem:[#allocation8 + $0x70] sm:$0xff]
    %v826 = vld [vmem:[#allocation8 + $0x78] sm:$0xff]
    %v827 = vld [vmem:[#allocation8 + $0x80] sm:$0xff]
    %v828 = vld [vmem:[#allocation8 + $0x88] sm:$0xff]
    %v829 = vld [vmem:[#allocation8 + $0x90] sm:$0xff]
    %v830 = vld [vmem:[#allocation8 + $0x98] sm:$0xff]
    %v831 = vld [vmem:[#allocation8 + $0xa0] sm:$0xff]
    %v832 = vld [vmem:[#allocation8 + $0xa8] sm:$0xff]
    %v833 = vld [vmem:[#allocation8 + $0xb0] sm:$0xff]
    %v834 = vld [vmem:[#allocation8 + $0xb8] sm:$0xff]
    %v835 = vld [vmem:[#allocation8 + $0xc0] sm:$0xff]
    %v836 = vld [vmem:[#allocation8 + $0xc8] sm:$0xff]
    %v837 = vld [vmem:[#allocation8 + $0xd0] sm:$0xff]
    %v838 = vld [vmem:[#allocation8 + $0xd8] sm:$0xff]
    %v839 = vld [vmem:[#allocation8 + $0xe0] sm:$0xff]
    %v840 = vld [vmem:[#allocation8 + $0xe8] sm:$0xff]
    %v841 = vld [vmem:[#allocation8 + $0xf0] sm:$0xff]
    %v842 = vld [vmem:[#allocation8 + $0xf8] sm:$0xff]
    %v843 = vld [vmem:[#allocation8 + $0x100] sm:$0xff]
    %v844 = vld [vmem:[#allocation8 + $0x108] sm:$0xff]
    %v845 = vld [vmem:[#allocation8 + $0x110] sm:$0xff]
    %v846 = vld [vmem:[#allocation8 + $0x118] sm:$0xff]
    %v847 = vld [vmem:[#allocation8 + $0x120] sm:$0xff]
    %v848 = vld [vmem:[#allocation8 + $0x128] sm:$0xff]
    %v849 = vld [vmem:[#allocation8 + $0x130] sm:$0xff]
    %v850 = vld [vmem:[#allocation8 + $0x138] sm:$0xff]
    %v851 = vld [vmem:[#allocation8 + $0x140] sm:$0xff]
    %v852 = vld [vmem:[#allocation8 + $0x148] sm:$0xff]
    %v853 = vld [vmem:[#allocation8 + $0x150] sm:$0xff]
    %v854 = vld [vmem:[#allocation8 + $0x158] sm:$0xff]
    %v855 = vld [vmem:[#allocation8 + $0x160] sm:$0xff]
    %v856 = vld [vmem:[#allocation8 + $0x168] sm:$0xff]
    %v857 = vld [vmem:[#allocation8 + $0x170] sm:$0xff]
    %v858 = vld [vmem:[#allocation8 + $0x178] sm:$0xff]
    %v859 = vld [vmem:[#allocation8 + $0x180] sm:$0xff]
    %v860 = vld [vmem:[#allocation8 + $0x188] sm:$0xff]
    %v861 = vld [vmem:[#allocation8 + $0x190] sm:$0xff]
    %v862 = vld [vmem:[#allocation8 + $0x198] sm:$0xff]
    %v863 = vld [vmem:[#allocation8 + $0x1a0] sm:$0xff]
    %v864 = vld [vmem:[#allocation8 + $0x1a8] sm:$0xff]
    %v865 = vld [vmem:[#allocation8 + $0x1b0] sm:$0xff]
    %v866 = vld [vmem:[#allocation8 + $0x1b8] sm:$0xff]
    %v867 = vld [vmem:[#allocation8 + $0x1c0] sm:$0xff]
    %v868 = vld [vmem:[#allocation8 + $0x1c8] sm:$0xff]
    %v869 = vld [vmem:[#allocation8 + $0x1d0] sm:$0xff]
    %v870 = vld [vmem:[#allocation8 + $0x1d8] sm:$0xff]
    %v871 = vld [vmem:[#allocation8 + $0x1e0] sm:$0xff]
    %v872 = vld [vmem:[#allocation8 + $0x1e8] sm:$0xff]
    %v873 = vld [vmem:[#allocation8 + $0x1f0] sm:$0xff]
    %v874 = vld [vmem:[#allocation8 + $0x1f8] sm:$0xff]
    %v875 = vld [vmem:[#allocation8 + $0x200] sm:$0xff]
    %v876 = vld [vmem:[#allocation8 + $0x208] sm:$0xff]
    %v877 = vld [vmem:[#allocation8 + $0x210] sm:$0xff]
    %v878 = vld [vmem:[#allocation8 + $0x218] sm:$0xff]
    %v879 = vld [vmem:[#allocation8 + $0x220] sm:$0xff]
    %v880 = vld [vmem:[#allocation8 + $0x228] sm:$0xff]
    %v881 = vld [vmem:[#allocation8 + $0x230] sm:$0xff]
    %v882 = vld [vmem:[#allocation8 + $0x238] sm:$0xff]
    %v883 = vld [vmem:[#allocation8 + $0x240] sm:$0xff]
    %v884 = vld [vmem:[#allocation8 + $0x248] sm:$0xff]
    %v885 = vld [vmem:[#allocation8 + $0x250] sm:$0xff]
    %v886 = vld [vmem:[#allocation8 + $0x258] sm:$0xff]
    %v887 = vld [vmem:[#allocation8 + $0x260] sm:$0xff]
    %v888 = vld [vmem:[#allocation8 + $0x268] sm:$0xff]
    %v889 = vld [vmem:[#allocation8 + $0x270] sm:$0xff]
    %v890 = vld [vmem:[#allocation8 + $0x278] sm:$0xff]
    %v891 = vld [vmem:[#allocation8 + $0x280] sm:$0xff]
    %v892 = vld [vmem:[#allocation8 + $0x288] sm:$0xff]
    %v893 = vld [vmem:[#allocation8 + $0x290] sm:$0xff]
    %v894 = vld [vmem:[#allocation8 + $0x298] sm:$0xff]
    %v895 = vld [vmem:[#allocation8 + $0x2a0] sm:$0xff]
    %v896 = vld [vmem:[#allocation8 + $0x2a8] sm:$0xff]
    %v897 = vld [vmem:[#allocation8 + $0x2b0] sm:$0xff]
    %v898 = vld [vmem:[#allocation8 + $0x2b8] sm:$0xff]
    %v899 = vld [vmem:[#allocation8 + $0x2c0] sm:$0xff]
    %v900 = vld [vmem:[#allocation8 + $0x2c8] sm:$0xff]
    %v901 = vld [vmem:[#allocation8 + $0x2d0] sm:$0xff]
    %v902 = vld [vmem:[#allocation8 + $0x2d8] sm:$0xff]
    %v903 = vld [vmem:[#allocation8 + $0x2e0] sm:$0xff]
    %v904 = vld [vmem:[#allocation8 + $0x2e8] sm:$0xff]
    %v905 = vld [vmem:[#allocation8 + $0x2f0] sm:$0xff]
    %v906 = vld [vmem:[#allocation8 + $0x2f8] sm:$0xff]
    %v907 = vld [vmem:[#allocation8 + $0x300] sm:$0xff]
    %v908 = vld [vmem:[#allocation8 + $0x308] sm:$0xff]
    %v909 = vld [vmem:[#allocation8 + $0x310] sm:$0xff]
    %v910 = vld [vmem:[#allocation8 + $0x318] sm:$0xff]
    %v911 = vld [vmem:[#allocation8 + $0x320] sm:$0xff]
    %v912 = vld [vmem:[#allocation8 + $0x328] sm:$0xff]
    %v913 = vld [vmem:[#allocation8 + $0x330] sm:$0xff]
    %v914 = vld [vmem:[#allocation8 + $0x338] sm:$0xff]
    %v915 = vld [vmem:[#allocation8 + $0x340] sm:$0xff]
    %v916 = vld [vmem:[#allocation8 + $0x348] sm:$0xff]
    %v917 = vld [vmem:[#allocation8 + $0x350] sm:$0xff]
    %v918 = vld [vmem:[#allocation8 + $0x358] sm:$0xff]
    %v919 = vld [vmem:[#allocation8 + $0x360] sm:$0xff]
    %v920 = vld [vmem:[#allocation8 + $0x368] sm:$0xff]
    %v921 = vld [vmem:[#allocation8 + $0x370] sm:$0xff]
    %v922 = vld [vmem:[#allocation8 + $0x378] sm:$0xff]
    %v923 = vld [vmem:[#allocation8 + $0x380] sm:$0xff]
    %v924 = vld [vmem:[#allocation8 + $0x388] sm:$0xff]
    %v925 = vld [vmem:[#allocation8 + $0x390] sm:$0xff]
    %v926 = vld [vmem:[#allocation8 + $0x398] sm:$0xff]
    %v927 = vld [vmem:[#allocation8 + $0x3a0] sm:$0xff]
    %v928 = vld [vmem:[#allocation8 + $0x3a8] sm:$0xff]
    %v929 = vld [vmem:[#allocation8 + $0x3b0] sm:$0xff]
    %v930 = vld [vmem:[#allocation8 + $0x3b8] sm:$0xff]
    %v931 = vld [vmem:[#allocation8 + $0x3c0] sm:$0xff]
    %v932 = vld [vmem:[#allocation8 + $0x3c8] sm:$0xff]
    %v933 = vld [vmem:[#allocation8 + $0x3d0] sm:$0xff]
    %v934 = vld [vmem:[#allocation8 + $0x3d8] sm:$0xff]
    %v935 = vld [vmem:[#allocation8 + $0x3e0] sm:$0xff]
    %v936 = vld [vmem:[#allocation8 + $0x3e8] sm:$0xff]
    %v937 = vld [vmem:[#allocation8 + $0x3f0] sm:$0xff]
    %v938 = vld [vmem:[#allocation8 + $0x3f8] sm:$0xff]
    %v939 = vld [vmem:[#allocation8 + $0x400] sm:$0xff]
    %v940 = vld [vmem:[#allocation8 + $0x408] sm:$0xff]
    %v941 = vld [vmem:[#allocation8 + $0x410] sm:$0xff]
    %v942 = vld [vmem:[#allocation8 + $0x418] sm:$0xff]
    %v943 = vld [vmem:[#allocation8 + $0x420] sm:$0xff]
    %v944 = vld [vmem:[#allocation8 + $0x428] sm:$0xff]
    %v945 = vld [vmem:[#allocation8 + $0x430] sm:$0xff]
    %v946 = vld [vmem:[#allocation8 + $0x438] sm:$0xff]
    %v947 = vld [vmem:[#allocation8 + $0x440] sm:$0xff]
    %v948 = vld [vmem:[#allocation8 + $0x448] sm:$0xff]
    %v949 = vld [vmem:[#allocation8 + $0x450] sm:$0xff]
    %v950 = vld [vmem:[#allocation8 + $0x458] sm:$0xff]
    %v951 = vld [vmem:[#allocation8 + $0x460] sm:$0xff]
    %v952 = vld [vmem:[#allocation8 + $0x468] sm:$0xff]
    %v953 = vld [vmem:[#allocation8 + $0x470] sm:$0xff]
    %v954 = vld [vmem:[#allocation8 + $0x478] sm:$0xff]
    %v955 = vld [vmem:[#allocation8 + $0x480] sm:$0xff]
    %v956 = vld [vmem:[#allocation8 + $0x488] sm:$0xff]
    %v957 = vld [vmem:[#allocation8 + $0x490] sm:$0xff]
    %v958 = vld [vmem:[#allocation8 + $0x498] sm:$0xff]
    %v959 = vld [vmem:[#allocation8 + $0x4a0] sm:$0xff]
    %v960 = vld [vmem:[#allocation8 + $0x4a8] sm:$0xff]
    %v961 = vld [vmem:[#allocation8 + $0x4b0] sm:$0xff]
    %v962 = vld [vmem:[#allocation8 + $0x4b8] sm:$0xff]
    %v963 = vld [vmem:[#allocation8 + $0x4c0] sm:$0xff]
    %v964 = vld [vmem:[#allocation8 + $0x4c8] sm:$0xff]
    %v965 = vld [vmem:[#allocation8 + $0x4d0] sm:$0xff]
    %v966 = vld [vmem:[#allocation8 + $0x4d8] sm:$0xff]
    %v967 = vld [vmem:[#allocation8 + $0x4e0] sm:$0xff]
    %v968 = vld [vmem:[#allocation8 + $0x4e8] sm:$0xff]
    %v969 = vld [vmem:[#allocation8 + $0x4f0] sm:$0xff]
    %v970 = vld [vmem:[#allocation8 + $0x4f8] sm:$0xff]
    %v971 = vld [vmem:[#allocation8 + $0x500] sm:$0xff]
    %v972 = vld [vmem:[#allocation8 + $0x508] sm:$0xff]
    %v973 = vld [vmem:[#allocation8 + $0x510] sm:$0xff]
    %v974 = vld [vmem:[#allocation8 + $0x518] sm:$0xff]
    %v975 = vld [vmem:[#allocation8 + $0x520] sm:$0xff]
    %v976 = vld [vmem:[#allocation8 + $0x528] sm:$0xff]
    %v977 = vld [vmem:[#allocation8 + $0x530] sm:$0xff]
    %v978 = vld [vmem:[#allocation8 + $0x538] sm:$0xff]
    %v979 = vld [vmem:[#allocation8 + $0x540] sm:$0xff]
    %v980 = vld [vmem:[#allocation8 + $0x548] sm:$0xff]
    %v981 = vld [vmem:[#allocation8 + $0x550] sm:$0xff]
    %v982 = vld [vmem:[#allocation8 + $0x558] sm:$0xff]
    %v983 = vld [vmem:[#allocation8 + $0x560] sm:$0xff]
    %v984 = vld [vmem:[#allocation8 + $0x568] sm:$0xff]
    %v985 = vld [vmem:[#allocation8 + $0x570] sm:$0xff]
    %v986 = vld [vmem:[#allocation8 + $0x578] sm:$0xff]
    %v987 = vld [vmem:[#allocation8 + $0x580] sm:$0xff]
    %v988 = vld [vmem:[#allocation8 + $0x588] sm:$0xff]
    %v989 = vld [vmem:[#allocation8 + $0x590] sm:$0xff]
    %v990 = vld [vmem:[#allocation8 + $0x598] sm:$0xff]
    %v991 = vld [vmem:[#allocation8 + $0x5a0] sm:$0xff]
    %v992 = vld [vmem:[#allocation8 + $0x5a8] sm:$0xff]
    %v993 = vld [vmem:[#allocation8 + $0x5b0] sm:$0xff]
    %v994 = vld [vmem:[#allocation8 + $0x5b8] sm:$0xff]
    %v995 = vld [vmem:[#allocation8 + $0x5c0] sm:$0xff]
    %v996 = vld [vmem:[#allocation8 + $0x5c8] sm:$0xff]
    %v997 = vld [vmem:[#allocation8 + $0x5d0] sm:$0xff]
    %v998 = vld [vmem:[#allocation8 + $0x5d8] sm:$0xff]
    %v999 = vld [vmem:[#allocation8 + $0x5e0] sm:$0xff]
    %v1000 = vld [vmem:[#allocation8 + $0x5e8] sm:$0xff]
    %v1001 = vld [vmem:[#allocation8 + $0x5f0] sm:$0xff]
    %v1002 = vld [vmem:[#allocation8 + $0x5f8] sm:$0xff]
    %v1003 = vld [vmem:[#allocation8 + $0x600] sm:$0xff]
    %v1004 = vld [vmem:[#allocation8 + $0x608] sm:$0xff]
    %v1005 = vld [vmem:[#allocation8 + $0x610] sm:$0xff]
    %v1006 = vld [vmem:[#allocation8 + $0x618] sm:$0xff]
    %v1007 = vld [vmem:[#allocation8 + $0x620] sm:$0xff]
    %v1008 = vld [vmem:[#allocation8 + $0x628] sm:$0xff]
    %v1009 = vld [vmem:[#allocation8 + $0x630] sm:$0xff]
    %v1010 = vld [vmem:[#allocation8 + $0x638] sm:$0xff]
    %v1011 = vld [vmem:[#allocation8 + $0x640] sm:$0xff]
    %v1012 = vld [vmem:[#allocation8 + $0x648] sm:$0xff]
    %v1013 = vld [vmem:[#allocation8 + $0x650] sm:$0xff]
    %v1014 = vld [vmem:[#allocation8 + $0x658] sm:$0xff]
    %v1015 = vld [vmem:[#allocation8 + $0x660] sm:$0xff]
    %v1016 = vld [vmem:[#allocation8 + $0x668] sm:$0xff]
    %v1017 = vld [vmem:[#allocation8 + $0x670] sm:$0xff]
    %v1018 = vld [vmem:[#allocation8 + $0x678] sm:$0xff]
    %v1019 = vld [vmem:[#allocation8 + $0x680] sm:$0xff]
    %v1020 = vld [vmem:[#allocation8 + $0x688] sm:$0xff]
    %v1021 = vld [vmem:[#allocation8 + $0x690] sm:$0xff]
    %v1022 = vld [vmem:[#allocation8 + $0x698] sm:$0xff]
    %v1023 = vld [vmem:[#allocation8 + $0x6a0] sm:$0xff]
    %v1024 = vld [vmem:[#allocation8 + $0x6a8] sm:$0xff]
    %v1025 = vld [vmem:[#allocation8 + $0x6b0] sm:$0xff]
    %v1026 = vld [vmem:[#allocation8 + $0x6b8] sm:$0xff]
    %v1027 = vld [vmem:[#allocation8 + $0x6c0] sm:$0xff]
    %v1028 = vld [vmem:[#allocation8 + $0x6c8] sm:$0xff]
    %v1029 = vld [vmem:[#allocation8 + $0x6d0] sm:$0xff]
    %v1030 = vld [vmem:[#allocation8 + $0x6d8] sm:$0xff]
    %v1031 = vld [vmem:[#allocation8 + $0x6e0] sm:$0xff]
    %v1032 = vld [vmem:[#allocation8 + $0x6e8] sm:$0xff]
    %v1033 = vld [vmem:[#allocation8 + $0x6f0] sm:$0xff]
    %v1034 = vld [vmem:[#allocation8 + $0x6f8] sm:$0xff]
    %v1035 = vld [vmem:[#allocation8 + $0x700] sm:$0xff]
    %v1036 = vld [vmem:[#allocation8 + $0x708] sm:$0xff]
    %v1037 = vld [vmem:[#allocation8 + $0x710] sm:$0xff]
    %v1038 = vld [vmem:[#allocation8 + $0x718] sm:$0xff]
    %v1039 = vld [vmem:[#allocation8 + $0x720] sm:$0xff]
    %v1040 = vld [vmem:[#allocation8 + $0x728] sm:$0xff]
    %v1041 = vld [vmem:[#allocation8 + $0x730] sm:$0xff]
    %v1042 = vld [vmem:[#allocation8 + $0x738] sm:$0xff]
    %v1043 = vld [vmem:[#allocation8 + $0x740] sm:$0xff]
    %v1044 = vld [vmem:[#allocation8 + $0x748] sm:$0xff]
    %v1045 = vld [vmem:[#allocation8 + $0x750] sm:$0xff]
    %v1046 = vld [vmem:[#allocation8 + $0x758] sm:$0xff]
    %v1047 = vld [vmem:[#allocation8 + $0x760] sm:$0xff]
    %v1048 = vld [vmem:[#allocation8 + $0x768] sm:$0xff]
    %v1049 = vld [vmem:[#allocation8 + $0x770] sm:$0xff]
    %v1050 = vld [vmem:[#allocation8 + $0x778] sm:$0xff]
    %v1051 = vld [vmem:[#allocation8 + $0x780] sm:$0xff]
    %v1052 = vld [vmem:[#allocation8 + $0x788] sm:$0xff]
    %v1053 = vld [vmem:[#allocation8 + $0x790] sm:$0xff]
    %v1054 = vld [vmem:[#allocation8 + $0x798] sm:$0xff]
    %v1055 = vld [vmem:[#allocation8 + $0x7a0] sm:$0xff]
    %v1056 = vld [vmem:[#allocation8 + $0x7a8] sm:$0xff]
    %v1057 = vld [vmem:[#allocation8 + $0x7b0] sm:$0xff]
    %v1058 = vld [vmem:[#allocation8 + $0x7b8] sm:$0xff]
    %v1059 = vld [vmem:[#allocation8 + $0x7c0] sm:$0xff]
    %v1060 = vld [vmem:[#allocation8 + $0x7c8] sm:$0xff]
    %v1061 = vld [vmem:[#allocation8 + $0x7d0] sm:$0xff]
    %v1062 = vld [vmem:[#allocation8 + $0x7d8] sm:$0xff]
    %v1063 = vld [vmem:[#allocation8 + $0x7e0] sm:$0xff]
    %v1064 = vld [vmem:[#allocation8 + $0x7e8] sm:$0xff]
    %v1065 = vld [vmem:[#allocation8 + $0x7f0] sm:$0xff]
    %v1066 = vld [vmem:[#allocation8 + $0x7f8] sm:$0xff]
    %v1067 = vld [vmem:[%s20] sm:$0xff]
    %v1068 = vld [vmem:[%s20 + $0x8] sm:$0xff]
    %v1069 = vld [vmem:[%s21] sm:$0xff]
    %v1070 = vld [vmem:[%s21 + $0x8] sm:$0xff]
    %1071 = vmatprep.subr.mxu0 %v812
    %1072 = vmatpush1.msra.mxu0 %v811
    %1073 = vmatprep.subr.mxu0 %v820
    %1074 = vmatpush1.msra.mxu0 %v819
    %1075 = vmatprep.subr.mxu0 %v828
    %1076 = vmatpush1.msra.mxu0 %v827
    %1077 = vmatprep.subr.mxu0 %v836
    %1078 = vmatpush1.msra.mxu0 %v835
    %1079 = vmatprep.subr.mxu0 %v844
    %1080 = vmatpush1.msra.mxu0 %v843
    %1081 = vmatprep.subr.mxu0 %v852
    %1082 = vmatpush1.msra.mxu0 %v851
    %1083 = vmatprep.subr.mxu0 %v860
    %1084 = vmatpush1.msra.mxu0 %v859
    %1085 = vmatprep.subr.mxu0 %v868
    %1086 = vmatpush1.msra.mxu0 %v867
    %1087 = vmatprep.subr.mxu0 %v876
    %1088 = vmatpush1.msra.mxu0 %v875
    %1089 = vmatprep.subr.mxu0 %v884
    %1090 = vmatpush1.msra.mxu0 %v883
    %1091 = vmatprep.subr.mxu0 %v892
    %1092 = vmatpush1.msra.mxu0 %v891
    %1093 = vmatprep.subr.mxu0 %v900
    %1094 = vmatpush1.msra.mxu0 %v899
    %1095 = vmatprep.subr.mxu0 %v908
    %1096 = vmatpush1.msra.mxu0 %v907
    %1097 = vmatprep.subr.mxu0 %v916
    %1098 = vmatpush1.msra.mxu0 %v915
    %1099 = vmatprep.subr.mxu0 %v924
    %1100 = vmatpush1.msra.mxu0 %v923
    %1101 = vmatprep.subr.mxu0 %v932
    %1102 = vmatpush1.msra.mxu0 %v931
    %1103 = vmatprep.subr.mxu0 %v940
    %1104 = vmatpush1.msra.mxu0 %v939
    %1105 = vmatprep.subr.mxu0 %v948
    %1106 = vmatpush1.msra.mxu0 %v947
    %1107 = vmatprep.subr.mxu0 %v956
    %1108 = vmatpush1.msra.mxu0 %v955
    %1109 = vmatprep.subr.mxu0 %v964
    %1110 = vmatpush1.msra.mxu0 %v963
    %1111 = vmatprep.subr.mxu0 %v972
    %1112 = vmatpush1.msra.mxu0 %v971
    %1113 = vmatprep.subr.mxu0 %v980
    %1114 = vmatpush1.msra.mxu0 %v979
    %1115 = vmatprep.subr.mxu0 %v988
    %1116 = vmatpush1.msra.mxu0 %v987
    %1117 = vmatprep.subr.mxu0 %v996
    %1118 = vmatpush1.msra.mxu0 %v995
    %1119 = vmatprep.subr.mxu0 %v1004
    %1120 = vmatpush1.msra.mxu0 %v1003
    %1121 = vmatprep.subr.mxu0 %v1012
    %1122 = vmatpush1.msra.mxu0 %v1011
    %1123 = vmatprep.subr.mxu0 %v1020
    %1124 = vmatpush1.msra.mxu0 %v1019
    %1125 = vmatprep.subr.mxu0 %v1028
    %1126 = vmatpush1.msra.mxu0 %v1027
    %1127 = vmatprep.subr.mxu0 %v1036
    %1128 = vmatpush1.msra.mxu0 %v1035
    %1129 = vmatprep.subr.mxu0 %v1044
    %1130 = vmatpush1.msra.mxu0 %v1043
    %1131 = vmatprep.subr.mxu0 %v1052
    %1132 = vmatpush1.msra.mxu0 %v1051
    %1133 = vmatprep.subr.mxu0 %v1060
    %1134 = vmatpush1.msra.mxu0 %v1059
    %1135 = vmatprep.mubr.f32.mxu0 %v1068
    %1136 = vmatmul.mubr.f32.gmra.mrb[0].mxu0 %v1067
    %v1137 = vpop.f32.mrb[0].mxu0
    %v1138 = vadd.f32 0.0, %v1137
    %v1139 = vpop.f32.mrb[0].mxu0
    %v1140 = vadd.f32 0.0, %v1139
    %1141 = vdwg.mxu0
    %1142 = vmatprep.subr.mxu0 %v814
    %1143 = vmatpush1.msra.mxu0 %v813
    %1144 = vmatprep.subr.mxu0 %v822
    %1145 = vmatpush1.msra.mxu0 %v821
    %1146 = vmatprep.subr.mxu0 %v830
    %1147 = vmatpush1.msra.mxu0 %v829
    %1148 = vmatprep.subr.mxu0 %v838
    %1149 = vmatpush1.msra.mxu0 %v837
    %1150 = vmatprep.subr.mxu0 %v846
    %1151 = vmatpush1.msra.mxu0 %v845
    %1152 = vmatprep.subr.mxu0 %v854
    %1153 = vmatpush1.msra.mxu0 %v853
    %1154 = vmatprep.subr.mxu0 %v862
    %1155 = vmatpush1.msra.mxu0 %v861
    %1156 = vmatprep.subr.mxu0 %v870
    %1157 = vmatpush1.msra.mxu0 %v869
    %1158 = vmatprep.subr.mxu0 %v878
    %1159 = vmatpush1.msra.mxu0 %v877
    %1160 = vmatprep.subr.mxu0 %v886
    %1161 = vmatpush1.msra.mxu0 %v885
    %1162 = vmatprep.subr.mxu0 %v894
    %1163 = vmatpush1.msra.mxu0 %v893
    %1164 = vmatprep.subr.mxu0 %v902
    %1165 = vmatpush1.msra.mxu0 %v901
    %1166 = vmatprep.subr.mxu0 %v910
    %1167 = vmatpush1.msra.mxu0 %v909
    %1168 = vmatprep.subr.mxu0 %v918
    %1169 = vmatpush1.msra.mxu0 %v917
    %1170 = vmatprep.subr.mxu0 %v926
    %1171 = vmatpush1.msra.mxu0 %v925
    %1172 = vmatprep.subr.mxu0 %v934
    %1173 = vmatpush1.msra.mxu0 %v933
    %1174 = vmatprep.subr.mxu0 %v942
    %1175 = vmatpush1.msra.mxu0 %v941
    %1176 = vmatprep.subr.mxu0 %v950
    %1177 = vmatpush1.msra.mxu0 %v949
    %1178 = vmatprep.subr.mxu0 %v958
    %1179 = vmatpush1.msra.mxu0 %v957
    %1180 = vmatprep.subr.mxu0 %v966
    %1181 = vmatpush1.msra.mxu0 %v965
    %1182 = vmatprep.subr.mxu0 %v974
    %1183 = vmatpush1.msra.mxu0 %v973
    %1184 = vmatprep.subr.mxu0 %v982
    %1185 = vmatpush1.msra.mxu0 %v981
    %1186 = vmatprep.subr.mxu0 %v990
    %1187 = vmatpush1.msra.mxu0 %v989
    %1188 = vmatprep.subr.mxu0 %v998
    %1189 = vmatpush1.msra.mxu0 %v997
    %1190 = vmatprep.subr.mxu0 %v1006
    %1191 = vmatpush1.msra.mxu0 %v1005
    %1192 = vmatprep.subr.mxu0 %v1014
    %1193 = vmatpush1.msra.mxu0 %v1013
    %1194 = vmatprep.subr.mxu0 %v1022
    %1195 = vmatpush1.msra.mxu0 %v1021
    %1196 = vmatprep.subr.mxu0 %v1030
    %1197 = vmatpush1.msra.mxu0 %v1029
    %1198 = vmatprep.subr.mxu0 %v1038
    %1199 = vmatpush1.msra.mxu0 %v1037
    %1200 = vmatprep.subr.mxu0 %v1046
    %1201 = vmatpush1.msra.mxu0 %v1045
    %1202 = vmatprep.subr.mxu0 %v1054
    %1203 = vmatpush1.msra.mxu0 %v1053
    %1204 = vmatprep.subr.mxu0 %v1062
    %1205 = vmatpush1.msra.mxu0 %v1061
    %1206 = vmatprep.mubr.f32.mxu0 %v1068
    %1207 = vmatmul.mubr.f32.gmra.mrb[0].mxu0 %v1067
    %v1208 = vpop.f32.mrb[0].mxu0
    %v1209 = vadd.f32 0.0, %v1208
    %v1210 = vpop.f32.mrb[0].mxu0
    %v1211 = vadd.f32 0.0, %v1210
    %1212 = vdwg.mxu0
    %1213 = vmatprep.subr.mxu0 %v816
    %1214 = vmatpush1.msra.mxu0 %v815
    %1215 = vmatprep.subr.mxu0 %v824
    %1216 = vmatpush1.msra.mxu0 %v823
    %1217 = vmatprep.subr.mxu0 %v832
    %1218 = vmatpush1.msra.mxu0 %v831
    %1219 = vmatprep.subr.mxu0 %v840
    %1220 = vmatpush1.msra.mxu0 %v839
    %1221 = vmatprep.subr.mxu0 %v848
    %1222 = vmatpush1.msra.mxu0 %v847
    %1223 = vmatprep.subr.mxu0 %v856
    %1224 = vmatpush1.msra.mxu0 %v855
    %1225 = vmatprep.subr.mxu0 %v864
    %1226 = vmatpush1.msra.mxu0 %v863
    %1227 = vmatprep.subr.mxu0 %v872
    %1228 = vmatpush1.msra.mxu0 %v871
    %1229 = vmatprep.subr.mxu0 %v880
    %1230 = vmatpush1.msra.mxu0 %v879
    %1231 = vmatprep.subr.mxu0 %v888
    %1232 = vmatpush1.msra.mxu0 %v887
    %1233 = vmatprep.subr.mxu0 %v896
    %1234 = vmatpush1.msra.mxu0 %v895
    %1235 = vmatprep.subr.mxu0 %v904
    %1236 = vmatpush1.msra.mxu0 %v903
    %1237 = vmatprep.subr.mxu0 %v912
    %1238 = vmatpush1.msra.mxu0 %v911
    %1239 = vmatprep.subr.mxu0 %v920
    %1240 = vmatpush1.msra.mxu0 %v919
    %1241 = vmatprep.subr.mxu0 %v928
    %1242 = vmatpush1.msra.mxu0 %v927
    %1243 = vmatprep.subr.mxu0 %v936
    %1244 = vmatpush1.msra.mxu0 %v935
    %1245 = vmatprep.subr.mxu0 %v944
    %1246 = vmatpush1.msra.mxu0 %v943
    %1247 = vmatprep.subr.mxu0 %v952
    %1248 = vmatpush1.msra.mxu0 %v951
    %1249 = vmatprep.subr.mxu0 %v960
    %1250 = vmatpush1.msra.mxu0 %v959
    %1251 = vmatprep.subr.mxu0 %v968
    %1252 = vmatpush1.msra.mxu0 %v967
    %1253 = vmatprep.subr.mxu0 %v976
    %1254 = vmatpush1.msra.mxu0 %v975
    %1255 = vmatprep.subr.mxu0 %v984
    %1256 = vmatpush1.msra.mxu0 %v983
    %1257 = vmatprep.subr.mxu0 %v992
    %1258 = vmatpush1.msra.mxu0 %v991
    %1259 = vmatprep.subr.mxu0 %v1000
    %1260 = vmatpush1.msra.mxu0 %v999
    %1261 = vmatprep.subr.mxu0 %v1008
    %1262 = vmatpush1.msra.mxu0 %v1007
    %1263 = vmatprep.subr.mxu0 %v1016
    %1264 = vmatpush1.msra.mxu0 %v1015
    %1265 = vmatprep.subr.mxu0 %v1024
    %1266 = vmatpush1.msra.mxu0 %v1023
    %1267 = vmatprep.subr.mxu0 %v1032
    %1268 = vmatpush1.msra.mxu0 %v1031
    %1269 = vmatprep.subr.mxu0 %v1040
    %1270 = vmatpush1.msra.mxu0 %v1039
    %1271 = vmatprep.subr.mxu0 %v1048
    %1272 = vmatpush1.msra.mxu0 %v1047
    %1273 = vmatprep.subr.mxu0 %v1056
    %1274 = vmatpush1.msra.mxu0 %v1055
    %1275 = vmatprep.subr.mxu0 %v1064
    %1276 = vmatpush1.msra.mxu0 %v1063
    %1277 = vmatprep.mubr.f32.mxu0 %v1068
    %1278 = vmatmul.mubr.f32.gmra.mrb[0].mxu0 %v1067
    %v1279 = vpop.f32.mrb[0].mxu0
    %v1280 = vadd.f32 0.0, %v1279
    %v1281 = vpop.f32.mrb[0].mxu0
    %v1282 = vadd.f32 0.0, %v1281
    %1283 = vdwg.mxu0
    %1284 = vmatprep.subr.mxu0 %v818
    %1285 = vmatpush1.msra.mxu0 %v817
    %1286 = vmatprep.subr.mxu0 %v826
    %1287 = vmatpush1.msra.mxu0 %v825
    %1288 = vmatprep.subr.mxu0 %v834
    %1289 = vmatpush1.msra.mxu0 %v833
    %1290 = vmatprep.subr.mxu0 %v842
    %1291 = vmatpush1.msra.mxu0 %v841
    %1292 = vmatprep.subr.mxu0 %v850
    %1293 = vmatpush1.msra.mxu0 %v849
    %1294 = vmatprep.subr.mxu0 %v858
    %1295 = vmatpush1.msra.mxu0 %v857
    %1296 = vmatprep.subr.mxu0 %v866
    %1297 = vmatpush1.msra.mxu0 %v865
    %1298 = vmatprep.subr.mxu0 %v874
    %1299 = vmatpush1.msra.mxu0 %v873
    %1300 = vmatprep.subr.mxu0 %v882
    %1301 = vmatpush1.msra.mxu0 %v881
    %1302 = vmatprep.subr.mxu0 %v890
    %1303 = vmatpush1.msra.mxu0 %v889
    %1304 = vmatprep.subr.mxu0 %v898
    %1305 = vmatpush1.msra.mxu0 %v897
    %1306 = vmatprep.subr.mxu0 %v906
    %1307 = vmatpush1.msra.mxu0 %v905
    %1308 = vmatprep.subr.mxu0 %v914
    %1309 = vmatpush1.msra.mxu0 %v913
    %1310 = vmatprep.subr.mxu0 %v922
    %1311 = vmatpush1.msra.mxu0 %v921
    %1312 = vmatprep.subr.mxu0 %v930
    %1313 = vmatpush1.msra.mxu0 %v929
    %1314 = vmatprep.subr.mxu0 %v938
    %1315 = vmatpush1.msra.mxu0 %v937
    %1316 = vmatprep.subr.mxu0 %v946
    %1317 = vmatpush1.msra.mxu0 %v945
    %1318 = vmatprep.subr.mxu0 %v954
    %1319 = vmatpush1.msra.mxu0 %v953
    %1320 = vmatprep.subr.mxu0 %v962
    %1321 = vmatpush1.msra.mxu0 %v961
    %1322 = vmatprep.subr.mxu0 %v970
    %1323 = vmatpush1.msra.mxu0 %v969
    %1324 = vmatprep.subr.mxu0 %v978
    %1325 = vmatpush1.msra.mxu0 %v977
    %1326 = vmatprep.subr.mxu0 %v986
    %1327 = vmatpush1.msra.mxu0 %v985
    %1328 = vmatprep.subr.mxu0 %v994
    %1329 = vmatpush1.msra.mxu0 %v993
    %1330 = vmatprep.subr.mxu0 %v1002
    %1331 = vmatpush1.msra.mxu0 %v1001
    %1332 = vmatprep.subr.mxu0 %v1010
    %1333 = vmatpush1.msra.mxu0 %v1009
    %1334 = vmatprep.subr.mxu0 %v1018
    %1335 = vmatpush1.msra.mxu0 %v1017
    %1336 = vmatprep.subr.mxu0 %v1026
    %1337 = vmatpush1.msra.mxu0 %v1025
    %1338 = vmatprep.subr.mxu0 %v1034
    %1339 = vmatpush1.msra.mxu0 %v1033
    %1340 = vmatprep.subr.mxu0 %v1042
    %1341 = vmatpush1.msra.mxu0 %v1041
    %1342 = vmatprep.subr.mxu0 %v1050
    %1343 = vmatpush1.msra.mxu0 %v1049
    %1344 = vmatprep.subr.mxu0 %v1058
    %1345 = vmatpush1.msra.mxu0 %v1057
    %1346 = vmatprep.subr.mxu0 %v1066
    %1347 = vmatpush1.msra.mxu0 %v1065
    %1348 = vmatprep.mubr.f32.mxu0 %v1068
    %1349 = vmatmul.mubr.f32.gmra.mrb[0].mxu0 %v1067
    %v1350 = vpop.f32.mrb[0].mxu0
    %v1351 = vadd.f32 0.0, %v1350
    %v1352 = vpop.f32.mrb[0].mxu0
    %v1353 = vadd.f32 0.0, %v1352
    %1354 = vdwg.mxu0
    %v1355 = vld [vmem:[#allocation2] sm:$0xff]
    %v1356 = vld [vmem:[#allocation2 + $0x8] sm:$0xff]
    %v1357 = vld [vmem:[#allocation2 + $0x10] sm:$0xff]
    %v1358 = vld [vmem:[#allocation2 + $0x18] sm:$0xff]
    %v1359 = vld [vmem:[#allocation2 + $0x20] sm:$0xff]
    %v1360 = vld [vmem:[#allocation2 + $0x28] sm:$0xff]
    %v1361 = vld [vmem:[#allocation2 + $0x30] sm:$0xff]
    %v1362 = vld [vmem:[#allocation2 + $0x38] sm:$0xff]
    %v1363 = vadd.f32 %v1355, %v1138
    %v1364 = vadd.f32 %v1356, %v1140
    %v1365 = vadd.f32 %v1357, %v1209
    %v1366 = vadd.f32 %v1358, %v1211
    %v1367 = vadd.f32 %v1359, %v1280
    %v1368 = vadd.f32 %v1360, %v1282
    %v1369 = vadd.f32 %v1361, %v1351
    %v1370 = vadd.f32 %v1362, %v1353
    %v1371 = vmul.f32 %v1363, 0.5
    %v1372 = vmul.f32 %v1364, 0.5
    %v1373 = vtanh.pop %v1371
    %v1374 = vtanh.pop %v1372
    %v1375 = vadd.f32 %v1373, 1.0
    %v1376 = vadd.f32 %v1374, 1.0
    %v1377 = vmul.f32 %v1375, 0.5
    %v1378 = vmul.f32 %v1376, 0.5
    %v1379 = vmul.f32 %v1365, 0.5
    %v1380 = vmul.f32 %v1366, 0.5
    %v1381 = vtanh.pop %v1379
    %v1382 = vtanh.pop %v1380
    %v1383 = vadd.f32 %v1381, 1.0
    %v1384 = vadd.f32 %v1382, 1.0
    %v1385 = vmul.f32 %v1383, 0.5
    %v1386 = vmul.f32 %v1384, 0.5
    %v1387 = vtanh.pop %v1367
    %v1388 = vtanh.pop %v1368
    %v1389 = vmul.f32 %v1369, 0.5
    %v1390 = vmul.f32 %v1370, 0.5
    %v1391 = vtanh.pop %v1389
    %v1392 = vtanh.pop %v1390
    %v1393 = vadd.f32 %v1391, 1.0
    %v1394 = vadd.f32 %v1392, 1.0
    %v1395 = vmul.f32 %v1393, 0.5
    %v1396 = vmul.f32 %v1394, 0.5
    %v1397 = vmul.f32 %v1385, %v1069
    %v1398 = vmul.f32 %v1386, %v1070
    %v1399 = vmul.f32 %v1377, %v1387
    %v1400 = vmul.f32 %v1378, %v1388
    %v1401 = vadd.f32 %v1397, %v1399
    %v1402 = vadd.f32 %v1398, %v1400
    %v1403 = vtanh.pop %v1401
    %v1404 = vtanh.pop %v1402
    %v1405 = vmul.f32 %v1395, %v1403
    %v1406 = vmul.f32 %v1396, %v1404
    %1407 = vst [vmem:[%s20] sm:$0xff] %v1405
    %1408 = vst [vmem:[%s20 + $0x8] sm:$0xff] %v1406
    %1409 = vst [vmem:[%s21] sm:$0xff] %v1401
    %1410 = vst [vmem:[%s21 + $0x8] sm:$0xff] %v1402
    %v1411 = vld [vmem:[#allocation11] sm:$0xff]
    %v1412 = vld [vmem:[#allocation11 + $0x8] sm:$0xff]
    %v1413 = vld [vmem:[#allocation11 + $0x10] sm:$0xff]
    %v1414 = vld [vmem:[#allocation11 + $0x18] sm:$0xff]
    %v1415 = vld [vmem:[#allocation11 + $0x20] sm:$0xff]
    %v1416 = vld [vmem:[#allocation11 + $0x28] sm:$0xff]
    %v1417 = vld [vmem:[#allocation11 + $0x30] sm:$0xff]
    %v1418 = vld [vmem:[#allocation11 + $0x38] sm:$0xff]
    %v1419 = vld [vmem:[#allocation11 + $0x40] sm:$0xff]
    %v1420 = vld [vmem:[#allocation11 + $0x48] sm:$0xff]
    %v1421 = vld [vmem:[#allocation11 + $0x50] sm:$0xff]
    %v1422 = vld [vmem:[#allocation11 + $0x58] sm:$0xff]
    %v1423 = vld [vmem:[#allocation11 + $0x60] sm:$0xff]
    %v1424 = vld [vmem:[#allocation11 + $0x68] sm:$0xff]
    %v1425 = vld [vmem:[#allocation11 + $0x70] sm:$0xff]
    %v1426 = vld [vmem:[#allocation11 + $0x78] sm:$0xff]
    %v1427 = vld [vmem:[#allocation11 + $0x80] sm:$0xff]
    %v1428 = vld [vmem:[#allocation11 + $0x88] sm:$0xff]
    %v1429 = vld [vmem:[#allocation11 + $0x90] sm:$0xff]
    %v1430 = vld [vmem:[#allocation11 + $0x98] sm:$0xff]
    %v1431 = vld [vmem:[#allocation11 + $0xa0] sm:$0xff]
    %v1432 = vld [vmem:[#allocation11 + $0xa8] sm:$0xff]
    %v1433 = vld [vmem:[#allocation11 + $0xb0] sm:$0xff]
    %v1434 = vld [vmem:[#allocation11 + $0xb8] sm:$0xff]
    %v1435 = vld [vmem:[#allocation11 + $0xc0] sm:$0xff]
    %v1436 = vld [vmem:[#allocation11 + $0xc8] sm:$0xff]
    %v1437 = vld [vmem:[#allocation11 + $0xd0] sm:$0xff]
    %v1438 = vld [vmem:[#allocation11 + $0xd8] sm:$0xff]
    %v1439 = vld [vmem:[#allocation11 + $0xe0] sm:$0xff]
    %v1440 = vld [vmem:[#allocation11 + $0xe8] sm:$0xff]
    %v1441 = vld [vmem:[#allocation11 + $0xf0] sm:$0xff]
    %v1442 = vld [vmem:[#allocation11 + $0xf8] sm:$0xff]
    %v1443 = vld [vmem:[#allocation11 + $0x100] sm:$0xff]
    %v1444 = vld [vmem:[#allocation11 + $0x108] sm:$0xff]
    %v1445 = vld [vmem:[#allocation11 + $0x110] sm:$0xff]
    %v1446 = vld [vmem:[#allocation11 + $0x118] sm:$0xff]
    %v1447 = vld [vmem:[#allocation11 + $0x120] sm:$0xff]
    %v1448 = vld [vmem:[#allocation11 + $0x128] sm:$0xff]
    %v1449 = vld [vmem:[#allocation11 + $0x130] sm:$0xff]
    %v1450 = vld [vmem:[#allocation11 + $0x138] sm:$0xff]
    %v1451 = vld [vmem:[#allocation11 + $0x140] sm:$0xff]
    %v1452 = vld [vmem:[#allocation11 + $0x148] sm:$0xff]
    %v1453 = vld [vmem:[#allocation11 + $0x150] sm:$0xff]
    %v1454 = vld [vmem:[#allocation11 + $0x158] sm:$0xff]
    %v1455 = vld [vmem:[#allocation11 + $0x160] sm:$0xff]
    %v1456 = vld [vmem:[#allocation11 + $0x168] sm:$0xff]
    %v1457 = vld [vmem:[#allocation11 + $0x170] sm:$0xff]
    %v1458 = vld [vmem:[#allocation11 + $0x178] sm:$0xff]
    %v1459 = vld [vmem:[#allocation11 + $0x180] sm:$0xff]
    %v1460 = vld [vmem:[#allocation11 + $0x188] sm:$0xff]
    %v1461 = vld [vmem:[#allocation11 + $0x190] sm:$0xff]
    %v1462 = vld [vmem:[#allocation11 + $0x198] sm:$0xff]
    %v1463 = vld [vmem:[#allocation11 + $0x1a0] sm:$0xff]
    %v1464 = vld [vmem:[#allocation11 + $0x1a8] sm:$0xff]
    %v1465 = vld [vmem:[#allocation11 + $0x1b0] sm:$0xff]
    %v1466 = vld [vmem:[#allocation11 + $0x1b8] sm:$0xff]
    %v1467 = vld [vmem:[#allocation11 + $0x1c0] sm:$0xff]
    %v1468 = vld [vmem:[#allocation11 + $0x1c8] sm:$0xff]
    %v1469 = vld [vmem:[#allocation11 + $0x1d0] sm:$0xff]
    %v1470 = vld [vmem:[#allocation11 + $0x1d8] sm:$0xff]
    %v1471 = vld [vmem:[#allocation11 + $0x1e0] sm:$0xff]
    %v1472 = vld [vmem:[#allocation11 + $0x1e8] sm:$0xff]
    %v1473 = vld [vmem:[#allocation11 + $0x1f0] sm:$0xff]
    %v1474 = vld [vmem:[#allocation11 + $0x1f8] sm:$0xff]
    %v1475 = vld [vmem:[#allocation11 + $0x200] sm:$0xff]
    %v1476 = vld [vmem:[#allocation11 + $0x208] sm:$0xff]
    %v1477 = vld [vmem:[#allocation11 + $0x210] sm:$0xff]
    %v1478 = vld [vmem:[#allocation11 + $0x218] sm:$0xff]
    %v1479 = vld [vmem:[#allocation11 + $0x220] sm:$0xff]
    %v1480 = vld [vmem:[#allocation11 + $0x228] sm:$0xff]
    %v1481 = vld [vmem:[#allocation11 + $0x230] sm:$0xff]
    %v1482 = vld [vmem:[#allocation11 + $0x238] sm:$0xff]
    %v1483 = vld [vmem:[#allocation11 + $0x240] sm:$0xff]
    %v1484 = vld [vmem:[#allocation11 + $0x248] sm:$0xff]
    %v1485 = vld [vmem:[#allocation11 + $0x250] sm:$0xff]
    %v1486 = vld [vmem:[#allocation11 + $0x258] sm:$0xff]
    %v1487 = vld [vmem:[#allocation11 + $0x260] sm:$0xff]
    %v1488 = vld [vmem:[#allocation11 + $0x268] sm:$0xff]
    %v1489 = vld [vmem:[#allocation11 + $0x270] sm:$0xff]
    %v1490 = vld [vmem:[#allocation11 + $0x278] sm:$0xff]
    %v1491 = vld [vmem:[#allocation11 + $0x280] sm:$0xff]
    %v1492 = vld [vmem:[#allocation11 + $0x288] sm:$0xff]
    %v1493 = vld [vmem:[#allocation11 + $0x290] sm:$0xff]
    %v1494 = vld [vmem:[#allocation11 + $0x298] sm:$0xff]
    %v1495 = vld [vmem:[#allocation11 + $0x2a0] sm:$0xff]
    %v1496 = vld [vmem:[#allocation11 + $0x2a8] sm:$0xff]
    %v1497 = vld [vmem:[#allocation11 + $0x2b0] sm:$0xff]
    %v1498 = vld [vmem:[#allocation11 + $0x2b8] sm:$0xff]
    %v1499 = vld [vmem:[#allocation11 + $0x2c0] sm:$0xff]
    %v1500 = vld [vmem:[#allocation11 + $0x2c8] sm:$0xff]
    %v1501 = vld [vmem:[#allocation11 + $0x2d0] sm:$0xff]
    %v1502 = vld [vmem:[#allocation11 + $0x2d8] sm:$0xff]
    %v1503 = vld [vmem:[#allocation11 + $0x2e0] sm:$0xff]
    %v1504 = vld [vmem:[#allocation11 + $0x2e8] sm:$0xff]
    %v1505 = vld [vmem:[#allocation11 + $0x2f0] sm:$0xff]
    %v1506 = vld [vmem:[#allocation11 + $0x2f8] sm:$0xff]
    %v1507 = vld [vmem:[#allocation11 + $0x300] sm:$0xff]
    %v1508 = vld [vmem:[#allocation11 + $0x308] sm:$0xff]
    %v1509 = vld [vmem:[#allocation11 + $0x310] sm:$0xff]
    %v1510 = vld [vmem:[#allocation11 + $0x318] sm:$0xff]
    %v1511 = vld [vmem:[#allocation11 + $0x320] sm:$0xff]
    %v1512 = vld [vmem:[#allocation11 + $0x328] sm:$0xff]
    %v1513 = vld [vmem:[#allocation11 + $0x330] sm:$0xff]
    %v1514 = vld [vmem:[#allocation11 + $0x338] sm:$0xff]
    %v1515 = vld [vmem:[#allocation11 + $0x340] sm:$0xff]
    %v1516 = vld [vmem:[#allocation11 + $0x348] sm:$0xff]
    %v1517 = vld [vmem:[#allocation11 + $0x350] sm:$0xff]
    %v1518 = vld [vmem:[#allocation11 + $0x358] sm:$0xff]
    %v1519 = vld [vmem:[#allocation11 + $0x360] sm:$0xff]
    %v1520 = vld [vmem:[#allocation11 + $0x368] sm:$0xff]
    %v1521 = vld [vmem:[#allocation11 + $0x370] sm:$0xff]
    %v1522 = vld [vmem:[#allocation11 + $0x378] sm:$0xff]
    %v1523 = vld [vmem:[#allocation11 + $0x380] sm:$0xff]
    %v1524 = vld [vmem:[#allocation11 + $0x388] sm:$0xff]
    %v1525 = vld [vmem:[#allocation11 + $0x390] sm:$0xff]
    %v1526 = vld [vmem:[#allocation11 + $0x398] sm:$0xff]
    %v1527 = vld [vmem:[#allocation11 + $0x3a0] sm:$0xff]
    %v1528 = vld [vmem:[#allocation11 + $0x3a8] sm:$0xff]
    %v1529 = vld [vmem:[#allocation11 + $0x3b0] sm:$0xff]
    %v1530 = vld [vmem:[#allocation11 + $0x3b8] sm:$0xff]
    %v1531 = vld [vmem:[#allocation11 + $0x3c0] sm:$0xff]
    %v1532 = vld [vmem:[#allocation11 + $0x3c8] sm:$0xff]
    %v1533 = vld [vmem:[#allocation11 + $0x3d0] sm:$0xff]
    %v1534 = vld [vmem:[#allocation11 + $0x3d8] sm:$0xff]
    %v1535 = vld [vmem:[#allocation11 + $0x3e0] sm:$0xff]
    %v1536 = vld [vmem:[#allocation11 + $0x3e8] sm:$0xff]
    %v1537 = vld [vmem:[#allocation11 + $0x3f0] sm:$0xff]
    %v1538 = vld [vmem:[#allocation11 + $0x3f8] sm:$0xff]
    %v1539 = vld [vmem:[#allocation11 + $0x400] sm:$0xff]
    %v1540 = vld [vmem:[#allocation11 + $0x408] sm:$0xff]
    %v1541 = vld [vmem:[#allocation11 + $0x410] sm:$0xff]
    %v1542 = vld [vmem:[#allocation11 + $0x418] sm:$0xff]
    %v1543 = vld [vmem:[#allocation11 + $0x420] sm:$0xff]
    %v1544 = vld [vmem:[#allocation11 + $0x428] sm:$0xff]
    %v1545 = vld [vmem:[#allocation11 + $0x430] sm:$0xff]
    %v1546 = vld [vmem:[#allocation11 + $0x438] sm:$0xff]
    %v1547 = vld [vmem:[#allocation11 + $0x440] sm:$0xff]
    %v1548 = vld [vmem:[#allocation11 + $0x448] sm:$0xff]
    %v1549 = vld [vmem:[#allocation11 + $0x450] sm:$0xff]
    %v1550 = vld [vmem:[#allocation11 + $0x458] sm:$0xff]
    %v1551 = vld [vmem:[#allocation11 + $0x460] sm:$0xff]
    %v1552 = vld [vmem:[#allocation11 + $0x468] sm:$0xff]
    %v1553 = vld [vmem:[#allocation11 + $0x470] sm:$0xff]
    %v1554 = vld [vmem:[#allocation11 + $0x478] sm:$0xff]
    %v1555 = vld [vmem:[#allocation11 + $0x480] sm:$0xff]
    %v1556 = vld [vmem:[#allocation11 + $0x488] sm:$0xff]
    %v1557 = vld [vmem:[#allocation11 + $0x490] sm:$0xff]
    %v1558 = vld [vmem:[#allocation11 + $0x498] sm:$0xff]
    %v1559 = vld [vmem:[#allocation11 + $0x4a0] sm:$0xff]
    %v1560 = vld [vmem:[#allocation11 + $0x4a8] sm:$0xff]
    %v1561 = vld [vmem:[#allocation11 + $0x4b0] sm:$0xff]
    %v1562 = vld [vmem:[#allocation11 + $0x4b8] sm:$0xff]
    %v1563 = vld [vmem:[#allocation11 + $0x4c0] sm:$0xff]
    %v1564 = vld [vmem:[#allocation11 + $0x4c8] sm:$0xff]
    %v1565 = vld [vmem:[#allocation11 + $0x4d0] sm:$0xff]
    %v1566 = vld [vmem:[#allocation11 + $0x4d8] sm:$0xff]
    %v1567 = vld [vmem:[#allocation11 + $0x4e0] sm:$0xff]
    %v1568 = vld [vmem:[#allocation11 + $0x4e8] sm:$0xff]
    %v1569 = vld [vmem:[#allocation11 + $0x4f0] sm:$0xff]
    %v1570 = vld [vmem:[#allocation11 + $0x4f8] sm:$0xff]
    %v1571 = vld [vmem:[#allocation11 + $0x500] sm:$0xff]
    %v1572 = vld [vmem:[#allocation11 + $0x508] sm:$0xff]
    %v1573 = vld [vmem:[#allocation11 + $0x510] sm:$0xff]
    %v1574 = vld [vmem:[#allocation11 + $0x518] sm:$0xff]
    %v1575 = vld [vmem:[#allocation11 + $0x520] sm:$0xff]
    %v1576 = vld [vmem:[#allocation11 + $0x528] sm:$0xff]
    %v1577 = vld [vmem:[#allocation11 + $0x530] sm:$0xff]
    %v1578 = vld [vmem:[#allocation11 + $0x538] sm:$0xff]
    %v1579 = vld [vmem:[#allocation11 + $0x540] sm:$0xff]
    %v1580 = vld [vmem:[#allocation11 + $0x548] sm:$0xff]
    %v1581 = vld [vmem:[#allocation11 + $0x550] sm:$0xff]
    %v1582 = vld [vmem:[#allocation11 + $0x558] sm:$0xff]
    %v1583 = vld [vmem:[#allocation11 + $0x560] sm:$0xff]
    %v1584 = vld [vmem:[#allocation11 + $0x568] sm:$0xff]
    %v1585 = vld [vmem:[#allocation11 + $0x570] sm:$0xff]
    %v1586 = vld [vmem:[#allocation11 + $0x578] sm:$0xff]
    %v1587 = vld [vmem:[#allocation11 + $0x580] sm:$0xff]
    %v1588 = vld [vmem:[#allocation11 + $0x588] sm:$0xff]
    %v1589 = vld [vmem:[#allocation11 + $0x590] sm:$0xff]
    %v1590 = vld [vmem:[#allocation11 + $0x598] sm:$0xff]
    %v1591 = vld [vmem:[#allocation11 + $0x5a0] sm:$0xff]
    %v1592 = vld [vmem:[#allocation11 + $0x5a8] sm:$0xff]
    %v1593 = vld [vmem:[#allocation11 + $0x5b0] sm:$0xff]
    %v1594 = vld [vmem:[#allocation11 + $0x5b8] sm:$0xff]
    %v1595 = vld [vmem:[#allocation11 + $0x5c0] sm:$0xff]
    %v1596 = vld [vmem:[#allocation11 + $0x5c8] sm:$0xff]
    %v1597 = vld [vmem:[#allocation11 + $0x5d0] sm:$0xff]
    %v1598 = vld [vmem:[#allocation11 + $0x5d8] sm:$0xff]
    %v1599 = vld [vmem:[#allocation11 + $0x5e0] sm:$0xff]
    %v1600 = vld [vmem:[#allocation11 + $0x5e8] sm:$0xff]
    %v1601 = vld [vmem:[#allocation11 + $0x5f0] sm:$0xff]
    %v1602 = vld [vmem:[#allocation11 + $0x5f8] sm:$0xff]
    %v1603 = vld [vmem:[#allocation11 + $0x600] sm:$0xff]
    %v1604 = vld [vmem:[#allocation11 + $0x608] sm:$0xff]
    %v1605 = vld [vmem:[#allocation11 + $0x610] sm:$0xff]
    %v1606 = vld [vmem:[#allocation11 + $0x618] sm:$0xff]
    %v1607 = vld [vmem:[#allocation11 + $0x620] sm:$0xff]
    %v1608 = vld [vmem:[#allocation11 + $0x628] sm:$0xff]
    %v1609 = vld [vmem:[#allocation11 + $0x630] sm:$0xff]
    %v1610 = vld [vmem:[#allocation11 + $0x638] sm:$0xff]
    %v1611 = vld [vmem:[#allocation11 + $0x640] sm:$0xff]
    %v1612 = vld [vmem:[#allocation11 + $0x648] sm:$0xff]
    %v1613 = vld [vmem:[#allocation11 + $0x650] sm:$0xff]
    %v1614 = vld [vmem:[#allocation11 + $0x658] sm:$0xff]
    %v1615 = vld [vmem:[#allocation11 + $0x660] sm:$0xff]
    %v1616 = vld [vmem:[#allocation11 + $0x668] sm:$0xff]
    %v1617 = vld [vmem:[#allocation11 + $0x670] sm:$0xff]
    %v1618 = vld [vmem:[#allocation11 + $0x678] sm:$0xff]
    %v1619 = vld [vmem:[#allocation11 + $0x680] sm:$0xff]
    %v1620 = vld [vmem:[#allocation11 + $0x688] sm:$0xff]
    %v1621 = vld [vmem:[#allocation11 + $0x690] sm:$0xff]
    %v1622 = vld [vmem:[#allocation11 + $0x698] sm:$0xff]
    %v1623 = vld [vmem:[#allocation11 + $0x6a0] sm:$0xff]
    %v1624 = vld [vmem:[#allocation11 + $0x6a8] sm:$0xff]
    %v1625 = vld [vmem:[#allocation11 + $0x6b0] sm:$0xff]
    %v1626 = vld [vmem:[#allocation11 + $0x6b8] sm:$0xff]
    %v1627 = vld [vmem:[#allocation11 + $0x6c0] sm:$0xff]
    %v1628 = vld [vmem:[#allocation11 + $0x6c8] sm:$0xff]
    %v1629 = vld [vmem:[#allocation11 + $0x6d0] sm:$0xff]
    %v1630 = vld [vmem:[#allocation11 + $0x6d8] sm:$0xff]
    %v1631 = vld [vmem:[#allocation11 + $0x6e0] sm:$0xff]
    %v1632 = vld [vmem:[#allocation11 + $0x6e8] sm:$0xff]
    %v1633 = vld [vmem:[#allocation11 + $0x6f0] sm:$0xff]
    %v1634 = vld [vmem:[#allocation11 + $0x6f8] sm:$0xff]
    %v1635 = vld [vmem:[#allocation11 + $0x700] sm:$0xff]
    %v1636 = vld [vmem:[#allocation11 + $0x708] sm:$0xff]
    %v1637 = vld [vmem:[#allocation11 + $0x710] sm:$0xff]
    %v1638 = vld [vmem:[#allocation11 + $0x718] sm:$0xff]
    %v1639 = vld [vmem:[#allocation11 + $0x720] sm:$0xff]
    %v1640 = vld [vmem:[#allocation11 + $0x728] sm:$0xff]
    %v1641 = vld [vmem:[#allocation11 + $0x730] sm:$0xff]
    %v1642 = vld [vmem:[#allocation11 + $0x738] sm:$0xff]
    %v1643 = vld [vmem:[#allocation11 + $0x740] sm:$0xff]
    %v1644 = vld [vmem:[#allocation11 + $0x748] sm:$0xff]
    %v1645 = vld [vmem:[#allocation11 + $0x750] sm:$0xff]
    %v1646 = vld [vmem:[#allocation11 + $0x758] sm:$0xff]
    %v1647 = vld [vmem:[#allocation11 + $0x760] sm:$0xff]
    %v1648 = vld [vmem:[#allocation11 + $0x768] sm:$0xff]
    %v1649 = vld [vmem:[#allocation11 + $0x770] sm:$0xff]
    %v1650 = vld [vmem:[#allocation11 + $0x778] sm:$0xff]
    %v1651 = vld [vmem:[#allocation11 + $0x780] sm:$0xff]
    %v1652 = vld [vmem:[#allocation11 + $0x788] sm:$0xff]
    %v1653 = vld [vmem:[#allocation11 + $0x790] sm:$0xff]
    %v1654 = vld [vmem:[#allocation11 + $0x798] sm:$0xff]
    %v1655 = vld [vmem:[#allocation11 + $0x7a0] sm:$0xff]
    %v1656 = vld [vmem:[#allocation11 + $0x7a8] sm:$0xff]
    %v1657 = vld [vmem:[#allocation11 + $0x7b0] sm:$0xff]
    %v1658 = vld [vmem:[#allocation11 + $0x7b8] sm:$0xff]
    %v1659 = vld [vmem:[#allocation11 + $0x7c0] sm:$0xff]
    %v1660 = vld [vmem:[#allocation11 + $0x7c8] sm:$0xff]
    %v1661 = vld [vmem:[#allocation11 + $0x7d0] sm:$0xff]
    %v1662 = vld [vmem:[#allocation11 + $0x7d8] sm:$0xff]
    %v1663 = vld [vmem:[#allocation11 + $0x7e0] sm:$0xff]
    %v1664 = vld [vmem:[#allocation11 + $0x7e8] sm:$0xff]
    %v1665 = vld [vmem:[#allocation11 + $0x7f0] sm:$0xff]
    %v1666 = vld [vmem:[#allocation11 + $0x7f8] sm:$0xff]
    %s1667 = scalar_lea.vmem %s20, 16
    %v1668 = vld [vmem:[%s1667] sm:$0xff]
    %v1669 = vld [vmem:[%s1667 + $0x8] sm:$0xff]
    %s1670 = scalar_lea.vmem %s21, 16
    %v1671 = vld [vmem:[%s1670] sm:$0xff]
    %v1672 = vld [vmem:[%s1670 + $0x8] sm:$0xff]
    %1673 = vmatprep.subr.mxu0 %v1412
    %1674 = vmatpush1.msra.mxu0 %v1411
    %1675 = vmatprep.subr.mxu0 %v1420
    %1676 = vmatpush1.msra.mxu0 %v1419
    %1677 = vmatprep.subr.mxu0 %v1428
    %1678 = vmatpush1.msra.mxu0 %v1427
    %1679 = vmatprep.subr.mxu0 %v1436
    %1680 = vmatpush1.msra.mxu0 %v1435
    %1681 = vmatprep.subr.mxu0 %v1444
    %1682 = vmatpush1.msra.mxu0 %v1443
    %1683 = vmatprep.subr.mxu0 %v1452
    %1684 = vmatpush1.msra.mxu0 %v1451
    %1685 = vmatprep.subr.mxu0 %v1460
    %1686 = vmatpush1.msra.mxu0 %v1459
    %1687 = vmatprep.subr.mxu0 %v1468
    %1688 = vmatpush1.msra.mxu0 %v1467
    %1689 = vmatprep.subr.mxu0 %v1476
    %1690 = vmatpush1.msra.mxu0 %v1475
    %1691 = vmatprep.subr.mxu0 %v1484
    %1692 = vmatpush1.msra.mxu0 %v1483
    %1693 = vmatprep.subr.mxu0 %v1492
    %1694 = vmatpush1.msra.mxu0 %v1491
    %1695 = vmatprep.subr.mxu0 %v1500
    %1696 = vmatpush1.msra.mxu0 %v1499
    %1697 = vmatprep.subr.mxu0 %v1508
    %1698 = vmatpush1.msra.mxu0 %v1507
    %1699 = vmatprep.subr.mxu0 %v1516
    %1700 = vmatpush1.msra.mxu0 %v1515
    %1701 = vmatprep.subr.mxu0 %v1524
    %1702 = vmatpush1.msra.mxu0 %v1523
    %1703 = vmatprep.subr.mxu0 %v1532
    %1704 = vmatpush1.msra.mxu0 %v1531
    %1705 = vmatprep.subr.mxu0 %v1540
    %1706 = vmatpush1.msra.mxu0 %v1539
    %1707 = vmatprep.subr.mxu0 %v1548
    %1708 = vmatpush1.msra.mxu0 %v1547
    %1709 = vmatprep.subr.mxu0 %v1556
    %1710 = vmatpush1.msra.mxu0 %v1555
    %1711 = vmatprep.subr.mxu0 %v1564
    %1712 = vmatpush1.msra.mxu0 %v1563
    %1713 = vmatprep.subr.mxu0 %v1572
    %1714 = vmatpush1.msra.mxu0 %v1571
    %1715 = vmatprep.subr.mxu0 %v1580
    %1716 = vmatpush1.msra.mxu0 %v1579
    %1717 = vmatprep.subr.mxu0 %v1588
    %1718 = vmatpush1.msra.mxu0 %v1587
    %1719 = vmatprep.subr.mxu0 %v1596
    %1720 = vmatpush1.msra.mxu0 %v1595
    %1721 = vmatprep.subr.mxu0 %v1604
    %1722 = vmatpush1.msra.mxu0 %v1603
    %1723 = vmatprep.subr.mxu0 %v1612
    %1724 = vmatpush1.msra.mxu0 %v1611
    %1725 = vmatprep.subr.mxu0 %v1620
    %1726 = vmatpush1.msra.mxu0 %v1619
    %1727 = vmatprep.subr.mxu0 %v1628
    %1728 = vmatpush1.msra.mxu0 %v1627
    %1729 = vmatprep.subr.mxu0 %v1636
    %1730 = vmatpush1.msra.mxu0 %v1635
    %1731 = vmatprep.subr.mxu0 %v1644
    %1732 = vmatpush1.msra.mxu0 %v1643
    %1733 = vmatprep.subr.mxu0 %v1652
    %1734 = vmatpush1.msra.mxu0 %v1651
    %1735 = vmatprep.subr.mxu0 %v1660
    %1736 = vmatpush1.msra.mxu0 %v1659
    %1737 = vmatprep.mubr.f32.mxu0 %v1669
    %1738 = vmatmul.mubr.f32.gmra.mrb[0].mxu0 %v1668
    %v1739 = vpop.f32.mrb[0].mxu0
    %v1740 = vadd.f32 0.0, %v1739
    %v1741 = vpop.f32.mrb[0].mxu0
    %v1742 = vadd.f32 0.0, %v1741
    %1743 = vdwg.mxu0
    %1744 = vmatprep.subr.mxu0 %v1414
    %1745 = vmatpush1.msra.mxu0 %v1413
    %1746 = vmatprep.subr.mxu0 %v1422
    %1747 = vmatpush1.msra.mxu0 %v1421
    %1748 = vmatprep.subr.mxu0 %v1430
    %1749 = vmatpush1.msra.mxu0 %v1429
    %1750 = vmatprep.subr.mxu0 %v1438
    %1751 = vmatpush1.msra.mxu0 %v1437
    %1752 = vmatprep.subr.mxu0 %v1446
    %1753 = vmatpush1.msra.mxu0 %v1445
    %1754 = vmatprep.subr.mxu0 %v1454
    %1755 = vmatpush1.msra.mxu0 %v1453
    %1756 = vmatprep.subr.mxu0 %v1462
    %1757 = vmatpush1.msra.mxu0 %v1461
    %1758 = vmatprep.subr.mxu0 %v1470
    %1759 = vmatpush1.msra.mxu0 %v1469
    %1760 = vmatprep.subr.mxu0 %v1478
    %1761 = vmatpush1.msra.mxu0 %v1477
    %1762 = vmatprep.subr.mxu0 %v1486
    %1763 = vmatpush1.msra.mxu0 %v1485
    %1764 = vmatprep.subr.mxu0 %v1494
    %1765 = vmatpush1.msra.mxu0 %v1493
    %1766 = vmatprep.subr.mxu0 %v1502
    %1767 = vmatpush1.msra.mxu0 %v1501
    %1768 = vmatprep.subr.mxu0 %v1510
    %1769 = vmatpush1.msra.mxu0 %v1509
    %1770 = vmatprep.subr.mxu0 %v1518
    %1771 = vmatpush1.msra.mxu0 %v1517
    %1772 = vmatprep.subr.mxu0 %v1526
    %1773 = vmatpush1.msra.mxu0 %v1525
    %1774 = vmatprep.subr.mxu0 %v1534
    %1775 = vmatpush1.msra.mxu0 %v1533
    %1776 = vmatprep.subr.mxu0 %v1542
    %1777 = vmatpush1.msra.mxu0 %v1541
    %1778 = vmatprep.subr.mxu0 %v1550
    %1779 = vmatpush1.msra.mxu0 %v1549
    %1780 = vmatprep.subr.mxu0 %v1558
    %1781 = vmatpush1.msra.mxu0 %v1557
    %1782 = vmatprep.subr.mxu0 %v1566
    %1783 = vmatpush1.msra.mxu0 %v1565
    %1784 = vmatprep.subr.mxu0 %v1574
    %1785 = vmatpush1.msra.mxu0 %v1573
    %1786 = vmatprep.subr.mxu0 %v1582
    %1787 = vmatpush1.msra.mxu0 %v1581
    %1788 = vmatprep.subr.mxu0 %v1590
    %1789 = vmatpush1.msra.mxu0 %v1589
    %1790 = vmatprep.subr.mxu0 %v1598
    %1791 = vmatpush1.msra.mxu0 %v1597
    %1792 = vmatprep.subr.mxu0 %v1606
    %1793 = vmatpush1.msra.mxu0 %v1605
    %1794 = vmatprep.subr.mxu0 %v1614
    %1795 = vmatpush1.msra.mxu0 %v1613
    %1796 = vmatprep.subr.mxu0 %v1622
    %1797 = vmatpush1.msra.mxu0 %v1621
    %1798 = vmatprep.subr.mxu0 %v1630
    %1799 = vmatpush1.msra.mxu0 %v1629
    %1800 = vmatprep.subr.mxu0 %v1638
    %1801 = vmatpush1.msra.mxu0 %v1637
    %1802 = vmatprep.subr.mxu0 %v1646
    %1803 = vmatpush1.msra.mxu0 %v1645
    %1804 = vmatprep.subr.mxu0 %v1654
    %1805 = vmatpush1.msra.mxu0 %v1653
    %1806 = vmatprep.subr.mxu0 %v1662
    %1807 = vmatpush1.msra.mxu0 %v1661
    %1808 = vmatprep.mubr.f32.mxu0 %v1669
    %1809 = vmatmul.mubr.f32.gmra.mrb[0].mxu0 %v1668
    %v1810 = vpop.f32.mrb[0].mxu0
    %v1811 = vadd.f32 0.0, %v1810
    %v1812 = vpop.f32.mrb[0].mxu0
    %v1813 = vadd.f32 0.0, %v1812
    %1814 = vdwg.mxu0
    %1815 = vmatprep.subr.mxu0 %v1416
    %1816 = vmatpush1.msra.mxu0 %v1415
    %1817 = vmatprep.subr.mxu0 %v1424
    %1818 = vmatpush1.msra.mxu0 %v1423
    %1819 = vmatprep.subr.mxu0 %v1432
    %1820 = vmatpush1.msra.mxu0 %v1431
    %1821 = vmatprep.subr.mxu0 %v1440
    %1822 = vmatpush1.msra.mxu0 %v1439
    %1823 = vmatprep.subr.mxu0 %v1448
    %1824 = vmatpush1.msra.mxu0 %v1447
    %1825 = vmatprep.subr.mxu0 %v1456
    %1826 = vmatpush1.msra.mxu0 %v1455
    %1827 = vmatprep.subr.mxu0 %v1464
    %1828 = vmatpush1.msra.mxu0 %v1463
    %1829 = vmatprep.subr.mxu0 %v1472
    %1830 = vmatpush1.msra.mxu0 %v1471
    %1831 = vmatprep.subr.mxu0 %v1480
    %1832 = vmatpush1.msra.mxu0 %v1479
    %1833 = vmatprep.subr.mxu0 %v1488
    %1834 = vmatpush1.msra.mxu0 %v1487
    %1835 = vmatprep.subr.mxu0 %v1496
    %1836 = vmatpush1.msra.mxu0 %v1495
    %1837 = vmatprep.subr.mxu0 %v1504
    %1838 = vmatpush1.msra.mxu0 %v1503
    %1839 = vmatprep.subr.mxu0 %v1512
    %1840 = vmatpush1.msra.mxu0 %v1511
    %1841 = vmatprep.subr.mxu0 %v1520
    %1842 = vmatpush1.msra.mxu0 %v1519
    %1843 = vmatprep.subr.mxu0 %v1528
    %1844 = vmatpush1.msra.mxu0 %v1527
    %1845 = vmatprep.subr.mxu0 %v1536
    %1846 = vmatpush1.msra.mxu0 %v1535
    %1847 = vmatprep.subr.mxu0 %v1544
    %1848 = vmatpush1.msra.mxu0 %v1543
    %1849 = vmatprep.subr.mxu0 %v1552
    %1850 = vmatpush1.msra.mxu0 %v1551
    %1851 = vmatprep.subr.mxu0 %v1560
    %1852 = vmatpush1.msra.mxu0 %v1559
    %1853 = vmatprep.subr.mxu0 %v1568
    %1854 = vmatpush1.msra.mxu0 %v1567
    %1855 = vmatprep.subr.mxu0 %v1576
    %1856 = vmatpush1.msra.mxu0 %v1575
    %1857 = vmatprep.subr.mxu0 %v1584
    %1858 = vmatpush1.msra.mxu0 %v1583
    %1859 = vmatprep.subr.mxu0 %v1592
    %1860 = vmatpush1.msra.mxu0 %v1591
    %1861 = vmatprep.subr.mxu0 %v1600
    %1862 = vmatpush1.msra.mxu0 %v1599
    %1863 = vmatprep.subr.mxu0 %v1608
    %1864 = vmatpush1.msra.mxu0 %v1607
    %1865 = vmatprep.subr.mxu0 %v1616
    %1866 = vmatpush1.msra.mxu0 %v1615
    %1867 = vmatprep.subr.mxu0 %v1624
    %1868 = vmatpush1.msra.mxu0 %v1623
    %1869 = vmatprep.subr.mxu0 %v1632
    %1870 = vmatpush1.msra.mxu0 %v1631
    %1871 = vmatprep.subr.mxu0 %v1640
    %1872 = vmatpush1.msra.mxu0 %v1639
    %1873 = vmatprep.subr.mxu0 %v1648
    %1874 = vmatpush1.msra.mxu0 %v1647
    %1875 = vmatprep.subr.mxu0 %v1656
    %1876 = vmatpush1.msra.mxu0 %v1655
    %1877 = vmatprep.subr.mxu0 %v1664
    %1878 = vmatpush1.msra.mxu0 %v1663
    %1879 = vmatprep.mubr.f32.mxu0 %v1669
    %1880 = vmatmul.mubr.f32.gmra.mrb[0].mxu0 %v1668
    %v1881 = vpop.f32.mrb[0].mxu0
    %v1882 = vadd.f32 0.0, %v1881
    %v1883 = vpop.f32.mrb[0].mxu0
    %v1884 = vadd.f32 0.0, %v1883
    %1885 = vdwg.mxu0
    %1886 = vmatprep.subr.mxu0 %v1418
    %1887 = vmatpush1.msra.mxu0 %v1417
    %1888 = vmatprep.subr.mxu0 %v1426
    %1889 = vmatpush1.msra.mxu0 %v1425
    %1890 = vmatprep.subr.mxu0 %v1434
    %1891 = vmatpush1.msra.mxu0 %v1433
    %1892 = vmatprep.subr.mxu0 %v1442
    %1893 = vmatpush1.msra.mxu0 %v1441
    %1894 = vmatprep.subr.mxu0 %v1450
    %1895 = vmatpush1.msra.mxu0 %v1449
    %1896 = vmatprep.subr.mxu0 %v1458
    %1897 = vmatpush1.msra.mxu0 %v1457
    %1898 = vmatprep.subr.mxu0 %v1466
    %1899 = vmatpush1.msra.mxu0 %v1465
    %1900 = vmatprep.subr.mxu0 %v1474
    %1901 = vmatpush1.msra.mxu0 %v1473
    %1902 = vmatprep.subr.mxu0 %v1482
    %1903 = vmatpush1.msra.mxu0 %v1481
    %1904 = vmatprep.subr.mxu0 %v1490
    %1905 = vmatpush1.msra.mxu0 %v1489
    %1906 = vmatprep.subr.mxu0 %v1498
    %1907 = vmatpush1.msra.mxu0 %v1497
    %1908 = vmatprep.subr.mxu0 %v1506
    %1909 = vmatpush1.msra.mxu0 %v1505
    %1910 = vmatprep.subr.mxu0 %v1514
    %1911 = vmatpush1.msra.mxu0 %v1513
    %1912 = vmatprep.subr.mxu0 %v1522
    %1913 = vmatpush1.msra.mxu0 %v1521
    %1914 = vmatprep.subr.mxu0 %v1530
    %1915 = vmatpush1.msra.mxu0 %v1529
    %1916 = vmatprep.subr.mxu0 %v1538
    %1917 = vmatpush1.msra.mxu0 %v1537
    %1918 = vmatprep.subr.mxu0 %v1546
    %1919 = vmatpush1.msra.mxu0 %v1545
    %1920 = vmatprep.subr.mxu0 %v1554
    %1921 = vmatpush1.msra.mxu0 %v1553
    %1922 = vmatprep.subr.mxu0 %v1562
    %1923 = vmatpush1.msra.mxu0 %v1561
    %1924 = vmatprep.subr.mxu0 %v1570
    %1925 = vmatpush1.msra.mxu0 %v1569
    %1926 = vmatprep.subr.mxu0 %v1578
    %1927 = vmatpush1.msra.mxu0 %v1577
    %1928 = vmatprep.subr.mxu0 %v1586
    %1929 = vmatpush1.msra.mxu0 %v1585
    %1930 = vmatprep.subr.mxu0 %v1594
    %1931 = vmatpush1.msra.mxu0 %v1593
    %1932 = vmatprep.subr.mxu0 %v1602
    %1933 = vmatpush1.msra.mxu0 %v1601
    %1934 = vmatprep.subr.mxu0 %v1610
    %1935 = vmatpush1.msra.mxu0 %v1609
    %1936 = vmatprep.subr.mxu0 %v1618
    %1937 = vmatpush1.msra.mxu0 %v1617
    %1938 = vmatprep.subr.mxu0 %v1626
    %1939 = vmatpush1.msra.mxu0 %v1625
    %1940 = vmatprep.subr.mxu0 %v1634
    %1941 = vmatpush1.msra.mxu0 %v1633
    %1942 = vmatprep.subr.mxu0 %v1642
    %1943 = vmatpush1.msra.mxu0 %v1641
    %1944 = vmatprep.subr.mxu0 %v1650
    %1945 = vmatpush1.msra.mxu0 %v1649
    %1946 = vmatprep.subr.mxu0 %v1658
    %1947 = vmatpush1.msra.mxu0 %v1657
    %1948 = vmatprep.subr.mxu0 %v1666
    %1949 = vmatpush1.msra.mxu0 %v1665
    %1950 = vmatprep.mubr.f32.mxu0 %v1669
    %1951 = vmatmul.mubr.f32.gmra.mrb[0].mxu0 %v1668
    %v1952 = vpop.f32.mrb[0].mxu0
    %v1953 = vadd.f32 0.0, %v1952
    %v1954 = vpop.f32.mrb[0].mxu0
    %v1955 = vadd.f32 0.0, %v1954
    %1956 = vdwg.mxu0
    %v1957 = vld [vmem:[#allocation9] sm:$0xff]
    %v1958 = vld [vmem:[#allocation9 + $0x8] sm:$0xff]
    %v1959 = vld [vmem:[#allocation9 + $0x10] sm:$0xff]
    %v1960 = vld [vmem:[#allocation9 + $0x18] sm:$0xff]
    %v1961 = vld [vmem:[#allocation9 + $0x20] sm:$0xff]
    %v1962 = vld [vmem:[#allocation9 + $0x28] sm:$0xff]
    %v1963 = vld [vmem:[#allocation9 + $0x30] sm:$0xff]
    %v1964 = vld [vmem:[#allocation9 + $0x38] sm:$0xff]
    %v1965 = vld [vmem:[#allocation9 + $0x40] sm:$0xff]
    %v1966 = vld [vmem:[#allocation9 + $0x48] sm:$0xff]
    %v1967 = vld [vmem:[#allocation9 + $0x50] sm:$0xff]
    %v1968 = vld [vmem:[#allocation9 + $0x58] sm:$0xff]
    %v1969 = vld [vmem:[#allocation9 + $0x60] sm:$0xff]
    %v1970 = vld [vmem:[#allocation9 + $0x68] sm:$0xff]
    %v1971 = vld [vmem:[#allocation9 + $0x70] sm:$0xff]
    %v1972 = vld [vmem:[#allocation9 + $0x78] sm:$0xff]
    %v1973 = vld [vmem:[#allocation9 + $0x80] sm:$0xff]
    %v1974 = vld [vmem:[#allocation9 + $0x88] sm:$0xff]
    %v1975 = vld [vmem:[#allocation9 + $0x90] sm:$0xff]
    %v1976 = vld [vmem:[#allocation9 + $0x98] sm:$0xff]
    %v1977 = vld [vmem:[#allocation9 + $0xa0] sm:$0xff]
    %v1978 = vld [vmem:[#allocation9 + $0xa8] sm:$0xff]
    %v1979 = vld [vmem:[#allocation9 + $0xb0] sm:$0xff]
    %v1980 = vld [vmem:[#allocation9 + $0xb8] sm:$0xff]
    %v1981 = vld [vmem:[#allocation9 + $0xc0] sm:$0xff]
    %v1982 = vld [vmem:[#allocation9 + $0xc8] sm:$0xff]
    %v1983 = vld [vmem:[#allocation9 + $0xd0] sm:$0xff]
    %v1984 = vld [vmem:[#allocation9 + $0xd8] sm:$0xff]
    %v1985 = vld [vmem:[#allocation9 + $0xe0] sm:$0xff]
    %v1986 = vld [vmem:[#allocation9 + $0xe8] sm:$0xff]
    %v1987 = vld [vmem:[#allocation9 + $0xf0] sm:$0xff]
    %v1988 = vld [vmem:[#allocation9 + $0xf8] sm:$0xff]
    %v1989 = vld [vmem:[#allocation9 + $0x100] sm:$0xff]
    %v1990 = vld [vmem:[#allocation9 + $0x108] sm:$0xff]
    %v1991 = vld [vmem:[#allocation9 + $0x110] sm:$0xff]
    %v1992 = vld [vmem:[#allocation9 + $0x118] sm:$0xff]
    %v1993 = vld [vmem:[#allocation9 + $0x120] sm:$0xff]
    %v1994 = vld [vmem:[#allocation9 + $0x128] sm:$0xff]
    %v1995 = vld [vmem:[#allocation9 + $0x130] sm:$0xff]
    %v1996 = vld [vmem:[#allocation9 + $0x138] sm:$0xff]
    %v1997 = vld [vmem:[#allocation9 + $0x140] sm:$0xff]
    %v1998 = vld [vmem:[#allocation9 + $0x148] sm:$0xff]
    %v1999 = vld [vmem:[#allocation9 + $0x150] sm:$0xff]
    %v2000 = vld [vmem:[#allocation9 + $0x158] sm:$0xff]
    %v2001 = vld [vmem:[#allocation9 + $0x160] sm:$0xff]
    %v2002 = vld [vmem:[#allocation9 + $0x168] sm:$0xff]
    %v2003 = vld [vmem:[#allocation9 + $0x170] sm:$0xff]
    %v2004 = vld [vmem:[#allocation9 + $0x178] sm:$0xff]
    %v2005 = vld [vmem:[#allocation9 + $0x180] sm:$0xff]
    %v2006 = vld [vmem:[#allocation9 + $0x188] sm:$0xff]
    %v2007 = vld [vmem:[#allocation9 + $0x190] sm:$0xff]
    %v2008 = vld [vmem:[#allocation9 + $0x198] sm:$0xff]
    %v2009 = vld [vmem:[#allocation9 + $0x1a0] sm:$0xff]
    %v2010 = vld [vmem:[#allocation9 + $0x1a8] sm:$0xff]
    %v2011 = vld [vmem:[#allocation9 + $0x1b0] sm:$0xff]
    %v2012 = vld [vmem:[#allocation9 + $0x1b8] sm:$0xff]
    %v2013 = vld [vmem:[#allocation9 + $0x1c0] sm:$0xff]
    %v2014 = vld [vmem:[#allocation9 + $0x1c8] sm:$0xff]
    %v2015 = vld [vmem:[#allocation9 + $0x1d0] sm:$0xff]
    %v2016 = vld [vmem:[#allocation9 + $0x1d8] sm:$0xff]
    %v2017 = vld [vmem:[#allocation9 + $0x1e0] sm:$0xff]
    %v2018 = vld [vmem:[#allocation9 + $0x1e8] sm:$0xff]
    %v2019 = vld [vmem:[#allocation9 + $0x1f0] sm:$0xff]
    %v2020 = vld [vmem:[#allocation9 + $0x1f8] sm:$0xff]
    %v2021 = vld [vmem:[#allocation9 + $0x200] sm:$0xff]
    %v2022 = vld [vmem:[#allocation9 + $0x208] sm:$0xff]
    %v2023 = vld [vmem:[#allocation9 + $0x210] sm:$0xff]
    %v2024 = vld [vmem:[#allocation9 + $0x218] sm:$0xff]
    %v2025 = vld [vmem:[#allocation9 + $0x220] sm:$0xff]
    %v2026 = vld [vmem:[#allocation9 + $0x228] sm:$0xff]
    %v2027 = vld [vmem:[#allocation9 + $0x230] sm:$0xff]
    %v2028 = vld [vmem:[#allocation9 + $0x238] sm:$0xff]
    %v2029 = vld [vmem:[#allocation9 + $0x240] sm:$0xff]
    %v2030 = vld [vmem:[#allocation9 + $0x248] sm:$0xff]
    %v2031 = vld [vmem:[#allocation9 + $0x250] sm:$0xff]
    %v2032 = vld [vmem:[#allocation9 + $0x258] sm:$0xff]
    %v2033 = vld [vmem:[#allocation9 + $0x260] sm:$0xff]
    %v2034 = vld [vmem:[#allocation9 + $0x268] sm:$0xff]
    %v2035 = vld [vmem:[#allocation9 + $0x270] sm:$0xff]
    %v2036 = vld [vmem:[#allocation9 + $0x278] sm:$0xff]
    %v2037 = vld [vmem:[#allocation9 + $0x280] sm:$0xff]
    %v2038 = vld [vmem:[#allocation9 + $0x288] sm:$0xff]
    %v2039 = vld [vmem:[#allocation9 + $0x290] sm:$0xff]
    %v2040 = vld [vmem:[#allocation9 + $0x298] sm:$0xff]
    %v2041 = vld [vmem:[#allocation9 + $0x2a0] sm:$0xff]
    %v2042 = vld [vmem:[#allocation9 + $0x2a8] sm:$0xff]
    %v2043 = vld [vmem:[#allocation9 + $0x2b0] sm:$0xff]
    %v2044 = vld [vmem:[#allocation9 + $0x2b8] sm:$0xff]
    %v2045 = vld [vmem:[#allocation9 + $0x2c0] sm:$0xff]
    %v2046 = vld [vmem:[#allocation9 + $0x2c8] sm:$0xff]
    %v2047 = vld [vmem:[#allocation9 + $0x2d0] sm:$0xff]
    %v2048 = vld [vmem:[#allocation9 + $0x2d8] sm:$0xff]
    %v2049 = vld [vmem:[#allocation9 + $0x2e0] sm:$0xff]
    %v2050 = vld [vmem:[#allocation9 + $0x2e8] sm:$0xff]
    %v2051 = vld [vmem:[#allocation9 + $0x2f0] sm:$0xff]
    %v2052 = vld [vmem:[#allocation9 + $0x2f8] sm:$0xff]
    %v2053 = vld [vmem:[#allocation9 + $0x300] sm:$0xff]
    %v2054 = vld [vmem:[#allocation9 + $0x308] sm:$0xff]
    %v2055 = vld [vmem:[#allocation9 + $0x310] sm:$0xff]
    %v2056 = vld [vmem:[#allocation9 + $0x318] sm:$0xff]
    %v2057 = vld [vmem:[#allocation9 + $0x320] sm:$0xff]
    %v2058 = vld [vmem:[#allocation9 + $0x328] sm:$0xff]
    %v2059 = vld [vmem:[#allocation9 + $0x330] sm:$0xff]
    %v2060 = vld [vmem:[#allocation9 + $0x338] sm:$0xff]
    %v2061 = vld [vmem:[#allocation9 + $0x340] sm:$0xff]
    %v2062 = vld [vmem:[#allocation9 + $0x348] sm:$0xff]
    %v2063 = vld [vmem:[#allocation9 + $0x350] sm:$0xff]
    %v2064 = vld [vmem:[#allocation9 + $0x358] sm:$0xff]
    %v2065 = vld [vmem:[#allocation9 + $0x360] sm:$0xff]
    %v2066 = vld [vmem:[#allocation9 + $0x368] sm:$0xff]
    %v2067 = vld [vmem:[#allocation9 + $0x370] sm:$0xff]
    %v2068 = vld [vmem:[#allocation9 + $0x378] sm:$0xff]
    %v2069 = vld [vmem:[#allocation9 + $0x380] sm:$0xff]
    %v2070 = vld [vmem:[#allocation9 + $0x388] sm:$0xff]
    %v2071 = vld [vmem:[#allocation9 + $0x390] sm:$0xff]
    %v2072 = vld [vmem:[#allocation9 + $0x398] sm:$0xff]
    %v2073 = vld [vmem:[#allocation9 + $0x3a0] sm:$0xff]
    %v2074 = vld [vmem:[#allocation9 + $0x3a8] sm:$0xff]
    %v2075 = vld [vmem:[#allocation9 + $0x3b0] sm:$0xff]
    %v2076 = vld [vmem:[#allocation9 + $0x3b8] sm:$0xff]
    %v2077 = vld [vmem:[#allocation9 + $0x3c0] sm:$0xff]
    %v2078 = vld [vmem:[#allocation9 + $0x3c8] sm:$0xff]
    %v2079 = vld [vmem:[#allocation9 + $0x3d0] sm:$0xff]
    %v2080 = vld [vmem:[#allocation9 + $0x3d8] sm:$0xff]
    %v2081 = vld [vmem:[#allocation9 + $0x3e0] sm:$0xff]
    %v2082 = vld [vmem:[#allocation9 + $0x3e8] sm:$0xff]
    %v2083 = vld [vmem:[#allocation9 + $0x3f0] sm:$0xff]
    %v2084 = vld [vmem:[#allocation9 + $0x3f8] sm:$0xff]
    %v2085 = vld [vmem:[#allocation9 + $0x400] sm:$0xff]
    %v2086 = vld [vmem:[#allocation9 + $0x408] sm:$0xff]
    %v2087 = vld [vmem:[#allocation9 + $0x410] sm:$0xff]
    %v2088 = vld [vmem:[#allocation9 + $0x418] sm:$0xff]
    %v2089 = vld [vmem:[#allocation9 + $0x420] sm:$0xff]
    %v2090 = vld [vmem:[#allocation9 + $0x428] sm:$0xff]
    %v2091 = vld [vmem:[#allocation9 + $0x430] sm:$0xff]
    %v2092 = vld [vmem:[#allocation9 + $0x438] sm:$0xff]
    %v2093 = vld [vmem:[#allocation9 + $0x440] sm:$0xff]
    %v2094 = vld [vmem:[#allocation9 + $0x448] sm:$0xff]
    %v2095 = vld [vmem:[#allocation9 + $0x450] sm:$0xff]
    %v2096 = vld [vmem:[#allocation9 + $0x458] sm:$0xff]
    %v2097 = vld [vmem:[#allocation9 + $0x460] sm:$0xff]
    %v2098 = vld [vmem:[#allocation9 + $0x468] sm:$0xff]
    %v2099 = vld [vmem:[#allocation9 + $0x470] sm:$0xff]
    %v2100 = vld [vmem:[#allocation9 + $0x478] sm:$0xff]
    %v2101 = vld [vmem:[#allocation9 + $0x480] sm:$0xff]
    %v2102 = vld [vmem:[#allocation9 + $0x488] sm:$0xff]
    %v2103 = vld [vmem:[#allocation9 + $0x490] sm:$0xff]
    %v2104 = vld [vmem:[#allocation9 + $0x498] sm:$0xff]
    %v2105 = vld [vmem:[#allocation9 + $0x4a0] sm:$0xff]
    %v2106 = vld [vmem:[#allocation9 + $0x4a8] sm:$0xff]
    %v2107 = vld [vmem:[#allocation9 + $0x4b0] sm:$0xff]
    %v2108 = vld [vmem:[#allocation9 + $0x4b8] sm:$0xff]
    %v2109 = vld [vmem:[#allocation9 + $0x4c0] sm:$0xff]
    %v2110 = vld [vmem:[#allocation9 + $0x4c8] sm:$0xff]
    %v2111 = vld [vmem:[#allocation9 + $0x4d0] sm:$0xff]
    %v2112 = vld [vmem:[#allocation9 + $0x4d8] sm:$0xff]
    %v2113 = vld [vmem:[#allocation9 + $0x4e0] sm:$0xff]
    %v2114 = vld [vmem:[#allocation9 + $0x4e8] sm:$0xff]
    %v2115 = vld [vmem:[#allocation9 + $0x4f0] sm:$0xff]
    %v2116 = vld [vmem:[#allocation9 + $0x4f8] sm:$0xff]
    %v2117 = vld [vmem:[#allocation9 + $0x500] sm:$0xff]
    %v2118 = vld [vmem:[#allocation9 + $0x508] sm:$0xff]
    %v2119 = vld [vmem:[#allocation9 + $0x510] sm:$0xff]
    %v2120 = vld [vmem:[#allocation9 + $0x518] sm:$0xff]
    %v2121 = vld [vmem:[#allocation9 + $0x520] sm:$0xff]
    %v2122 = vld [vmem:[#allocation9 + $0x528] sm:$0xff]
    %v2123 = vld [vmem:[#allocation9 + $0x530] sm:$0xff]
    %v2124 = vld [vmem:[#allocation9 + $0x538] sm:$0xff]
    %v2125 = vld [vmem:[#allocation9 + $0x540] sm:$0xff]
    %v2126 = vld [vmem:[#allocation9 + $0x548] sm:$0xff]
    %v2127 = vld [vmem:[#allocation9 + $0x550] sm:$0xff]
    %v2128 = vld [vmem:[#allocation9 + $0x558] sm:$0xff]
    %v2129 = vld [vmem:[#allocation9 + $0x560] sm:$0xff]
    %v2130 = vld [vmem:[#allocation9 + $0x568] sm:$0xff]
    %v2131 = vld [vmem:[#allocation9 + $0x570] sm:$0xff]
    %v2132 = vld [vmem:[#allocation9 + $0x578] sm:$0xff]
    %v2133 = vld [vmem:[#allocation9 + $0x580] sm:$0xff]
    %v2134 = vld [vmem:[#allocation9 + $0x588] sm:$0xff]
    %v2135 = vld [vmem:[#allocation9 + $0x590] sm:$0xff]
    %v2136 = vld [vmem:[#allocation9 + $0x598] sm:$0xff]
    %v2137 = vld [vmem:[#allocation9 + $0x5a0] sm:$0xff]
    %v2138 = vld [vmem:[#allocation9 + $0x5a8] sm:$0xff]
    %v2139 = vld [vmem:[#allocation9 + $0x5b0] sm:$0xff]
    %v2140 = vld [vmem:[#allocation9 + $0x5b8] sm:$0xff]
    %v2141 = vld [vmem:[#allocation9 + $0x5c0] sm:$0xff]
    %v2142 = vld [vmem:[#allocation9 + $0x5c8] sm:$0xff]
    %v2143 = vld [vmem:[#allocation9 + $0x5d0] sm:$0xff]
    %v2144 = vld [vmem:[#allocation9 + $0x5d8] sm:$0xff]
    %v2145 = vld [vmem:[#allocation9 + $0x5e0] sm:$0xff]
    %v2146 = vld [vmem:[#allocation9 + $0x5e8] sm:$0xff]
    %v2147 = vld [vmem:[#allocation9 + $0x5f0] sm:$0xff]
    %v2148 = vld [vmem:[#allocation9 + $0x5f8] sm:$0xff]
    %v2149 = vld [vmem:[#allocation9 + $0x600] sm:$0xff]
    %v2150 = vld [vmem:[#allocation9 + $0x608] sm:$0xff]
    %v2151 = vld [vmem:[#allocation9 + $0x610] sm:$0xff]
    %v2152 = vld [vmem:[#allocation9 + $0x618] sm:$0xff]
    %v2153 = vld [vmem:[#allocation9 + $0x620] sm:$0xff]
    %v2154 = vld [vmem:[#allocation9 + $0x628] sm:$0xff]
    %v2155 = vld [vmem:[#allocation9 + $0x630] sm:$0xff]
    %v2156 = vld [vmem:[#allocation9 + $0x638] sm:$0xff]
    %v2157 = vld [vmem:[#allocation9 + $0x640] sm:$0xff]
    %v2158 = vld [vmem:[#allocation9 + $0x648] sm:$0xff]
    %v2159 = vld [vmem:[#allocation9 + $0x650] sm:$0xff]
    %v2160 = vld [vmem:[#allocation9 + $0x658] sm:$0xff]
    %v2161 = vld [vmem:[#allocation9 + $0x660] sm:$0xff]
    %v2162 = vld [vmem:[#allocation9 + $0x668] sm:$0xff]
    %v2163 = vld [vmem:[#allocation9 + $0x670] sm:$0xff]
    %v2164 = vld [vmem:[#allocation9 + $0x678] sm:$0xff]
    %v2165 = vld [vmem:[#allocation9 + $0x680] sm:$0xff]
    %v2166 = vld [vmem:[#allocation9 + $0x688] sm:$0xff]
    %v2167 = vld [vmem:[#allocation9 + $0x690] sm:$0xff]
    %v2168 = vld [vmem:[#allocation9 + $0x698] sm:$0xff]
    %v2169 = vld [vmem:[#allocation9 + $0x6a0] sm:$0xff]
    %v2170 = vld [vmem:[#allocation9 + $0x6a8] sm:$0xff]
    %v2171 = vld [vmem:[#allocation9 + $0x6b0] sm:$0xff]
    %v2172 = vld [vmem:[#allocation9 + $0x6b8] sm:$0xff]
    %v2173 = vld [vmem:[#allocation9 + $0x6c0] sm:$0xff]
    %v2174 = vld [vmem:[#allocation9 + $0x6c8] sm:$0xff]
    %v2175 = vld [vmem:[#allocation9 + $0x6d0] sm:$0xff]
    %v2176 = vld [vmem:[#allocation9 + $0x6d8] sm:$0xff]
    %v2177 = vld [vmem:[#allocation9 + $0x6e0] sm:$0xff]
    %v2178 = vld [vmem:[#allocation9 + $0x6e8] sm:$0xff]
    %v2179 = vld [vmem:[#allocation9 + $0x6f0] sm:$0xff]
    %v2180 = vld [vmem:[#allocation9 + $0x6f8] sm:$0xff]
    %v2181 = vld [vmem:[#allocation9 + $0x700] sm:$0xff]
    %v2182 = vld [vmem:[#allocation9 + $0x708] sm:$0xff]
    %v2183 = vld [vmem:[#allocation9 + $0x710] sm:$0xff]
    %v2184 = vld [vmem:[#allocation9 + $0x718] sm:$0xff]
    %v2185 = vld [vmem:[#allocation9 + $0x720] sm:$0xff]
    %v2186 = vld [vmem:[#allocation9 + $0x728] sm:$0xff]
    %v2187 = vld [vmem:[#allocation9 + $0x730] sm:$0xff]
    %v2188 = vld [vmem:[#allocation9 + $0x738] sm:$0xff]
    %v2189 = vld [vmem:[#allocation9 + $0x740] sm:$0xff]
    %v2190 = vld [vmem:[#allocation9 + $0x748] sm:$0xff]
    %v2191 = vld [vmem:[#allocation9 + $0x750] sm:$0xff]
    %v2192 = vld [vmem:[#allocation9 + $0x758] sm:$0xff]
    %v2193 = vld [vmem:[#allocation9 + $0x760] sm:$0xff]
    %v2194 = vld [vmem:[#allocation9 + $0x768] sm:$0xff]
    %v2195 = vld [vmem:[#allocation9 + $0x770] sm:$0xff]
    %v2196 = vld [vmem:[#allocation9 + $0x778] sm:$0xff]
    %v2197 = vld [vmem:[#allocation9 + $0x780] sm:$0xff]
    %v2198 = vld [vmem:[#allocation9 + $0x788] sm:$0xff]
    %v2199 = vld [vmem:[#allocation9 + $0x790] sm:$0xff]
    %v2200 = vld [vmem:[#allocation9 + $0x798] sm:$0xff]
    %v2201 = vld [vmem:[#allocation9 + $0x7a0] sm:$0xff]
    %v2202 = vld [vmem:[#allocation9 + $0x7a8] sm:$0xff]
    %v2203 = vld [vmem:[#allocation9 + $0x7b0] sm:$0xff]
    %v2204 = vld [vmem:[#allocation9 + $0x7b8] sm:$0xff]
    %v2205 = vld [vmem:[#allocation9 + $0x7c0] sm:$0xff]
    %v2206 = vld [vmem:[#allocation9 + $0x7c8] sm:$0xff]
    %v2207 = vld [vmem:[#allocation9 + $0x7d0] sm:$0xff]
    %v2208 = vld [vmem:[#allocation9 + $0x7d8] sm:$0xff]
    %v2209 = vld [vmem:[#allocation9 + $0x7e0] sm:$0xff]
    %v2210 = vld [vmem:[#allocation9 + $0x7e8] sm:$0xff]
    %v2211 = vld [vmem:[#allocation9 + $0x7f0] sm:$0xff]
    %v2212 = vld [vmem:[#allocation9 + $0x7f8] sm:$0xff]
    %2213 = vmatprep.subr.mxu0 %v1958
    %2214 = vmatpush1.msra.mxu0 %v1957
    %2215 = vmatprep.subr.mxu0 %v1966
    %2216 = vmatpush1.msra.mxu0 %v1965
    %2217 = vmatprep.subr.mxu0 %v1974
    %2218 = vmatpush1.msra.mxu0 %v1973
    %2219 = vmatprep.subr.mxu0 %v1982
    %2220 = vmatpush1.msra.mxu0 %v1981
    %2221 = vmatprep.subr.mxu0 %v1990
    %2222 = vmatpush1.msra.mxu0 %v1989
    %2223 = vmatprep.subr.mxu0 %v1998
    %2224 = vmatpush1.msra.mxu0 %v1997
    %2225 = vmatprep.subr.mxu0 %v2006
    %2226 = vmatpush1.msra.mxu0 %v2005
    %2227 = vmatprep.subr.mxu0 %v2014
    %2228 = vmatpush1.msra.mxu0 %v2013
    %2229 = vmatprep.subr.mxu0 %v2022
    %2230 = vmatpush1.msra.mxu0 %v2021
    %2231 = vmatprep.subr.mxu0 %v2030
    %2232 = vmatpush1.msra.mxu0 %v2029
    %2233 = vmatprep.subr.mxu0 %v2038
    %2234 = vmatpush1.msra.mxu0 %v2037
    %2235 = vmatprep.subr.mxu0 %v2046
    %2236 = vmatpush1.msra.mxu0 %v2045
    %2237 = vmatprep.subr.mxu0 %v2054
    %2238 = vmatpush1.msra.mxu0 %v2053
    %2239 = vmatprep.subr.mxu0 %v2062
    %2240 = vmatpush1.msra.mxu0 %v2061
    %2241 = vmatprep.subr.mxu0 %v2070
    %2242 = vmatpush1.msra.mxu0 %v2069
    %2243 = vmatprep.subr.mxu0 %v2078
    %2244 = vmatpush1.msra.mxu0 %v2077
    %2245 = vmatprep.subr.mxu0 %v2086
    %2246 = vmatpush1.msra.mxu0 %v2085
    %2247 = vmatprep.subr.mxu0 %v2094
    %2248 = vmatpush1.msra.mxu0 %v2093
    %2249 = vmatprep.subr.mxu0 %v2102
    %2250 = vmatpush1.msra.mxu0 %v2101
    %2251 = vmatprep.subr.mxu0 %v2110
    %2252 = vmatpush1.msra.mxu0 %v2109
    %2253 = vmatprep.subr.mxu0 %v2118
    %2254 = vmatpush1.msra.mxu0 %v2117
    %2255 = vmatprep.subr.mxu0 %v2126
    %2256 = vmatpush1.msra.mxu0 %v2125
    %2257 = vmatprep.subr.mxu0 %v2134
    %2258 = vmatpush1.msra.mxu0 %v2133
    %2259 = vmatprep.subr.mxu0 %v2142
    %2260 = vmatpush1.msra.mxu0 %v2141
    %2261 = vmatprep.subr.mxu0 %v2150
    %2262 = vmatpush1.msra.mxu0 %v2149
    %2263 = vmatprep.subr.mxu0 %v2158
    %2264 = vmatpush1.msra.mxu0 %v2157
    %2265 = vmatprep.subr.mxu0 %v2166
    %2266 = vmatpush1.msra.mxu0 %v2165
    %2267 = vmatprep.subr.mxu0 %v2174
    %2268 = vmatpush1.msra.mxu0 %v2173
    %2269 = vmatprep.subr.mxu0 %v2182
    %2270 = vmatpush1.msra.mxu0 %v2181
    %2271 = vmatprep.subr.mxu0 %v2190
    %2272 = vmatpush1.msra.mxu0 %v2189
    %2273 = vmatprep.subr.mxu0 %v2198
    %2274 = vmatpush1.msra.mxu0 %v2197
    %2275 = vmatprep.subr.mxu0 %v2206
    %2276 = vmatpush1.msra.mxu0 %v2205
    %2277 = vmatprep.mubr.f32.mxu0 %v1406
    %2278 = vmatmul.mubr.f32.gmra.mrb[0].mxu0 %v1405
    %v2279 = vpop.f32.mrb[0].mxu0
    %v2280 = vadd.f32 %v1740, %v2279
    %v2281 = vpop.f32.mrb[0].mxu0
    %v2282 = vadd.f32 %v1742, %v2281
    %2283 = vdwg.mxu0
    %2284 = vmatprep.subr.mxu0 %v1960
    %2285 = vmatpush1.msra.mxu0 %v1959
    %2286 = vmatprep.subr.mxu0 %v1968
    %2287 = vmatpush1.msra.mxu0 %v1967
    %2288 = vmatprep.subr.mxu0 %v1976
    %2289 = vmatpush1.msra.mxu0 %v1975
    %2290 = vmatprep.subr.mxu0 %v1984
    %2291 = vmatpush1.msra.mxu0 %v1983
    %2292 = vmatprep.subr.mxu0 %v1992
    %2293 = vmatpush1.msra.mxu0 %v1991
    %2294 = vmatprep.subr.mxu0 %v2000
    %2295 = vmatpush1.msra.mxu0 %v1999
    %2296 = vmatprep.subr.mxu0 %v2008
    %2297 = vmatpush1.msra.mxu0 %v2007
    %2298 = vmatprep.subr.mxu0 %v2016
    %2299 = vmatpush1.msra.mxu0 %v2015
    %2300 = vmatprep.subr.mxu0 %v2024
    %2301 = vmatpush1.msra.mxu0 %v2023
    %2302 = vmatprep.subr.mxu0 %v2032
    %2303 = vmatpush1.msra.mxu0 %v2031
    %2304 = vmatprep.subr.mxu0 %v2040
    %2305 = vmatpush1.msra.mxu0 %v2039
    %2306 = vmatprep.subr.mxu0 %v2048
    %2307 = vmatpush1.msra.mxu0 %v2047
    %2308 = vmatprep.subr.mxu0 %v2056
    %2309 = vmatpush1.msra.mxu0 %v2055
    %2310 = vmatprep.subr.mxu0 %v2064
    %2311 = vmatpush1.msra.mxu0 %v2063
    %2312 = vmatprep.subr.mxu0 %v2072
    %2313 = vmatpush1.msra.mxu0 %v2071
    %2314 = vmatprep.subr.mxu0 %v2080
    %2315 = vmatpush1.msra.mxu0 %v2079
    %2316 = vmatprep.subr.mxu0 %v2088
    %2317 = vmatpush1.msra.mxu0 %v2087
    %2318 = vmatprep.subr.mxu0 %v2096
    %2319 = vmatpush1.msra.mxu0 %v2095
    %2320 = vmatprep.subr.mxu0 %v2104
    %2321 = vmatpush1.msra.mxu0 %v2103
    %2322 = vmatprep.subr.mxu0 %v2112
    %2323 = vmatpush1.msra.mxu0 %v2111
    %2324 = vmatprep.subr.mxu0 %v2120
    %2325 = vmatpush1.msra.mxu0 %v2119
    %2326 = vmatprep.subr.mxu0 %v2128
    %2327 = vmatpush1.msra.mxu0 %v2127
    %2328 = vmatprep.subr.mxu0 %v2136
    %2329 = vmatpush1.msra.mxu0 %v2135
    %2330 = vmatprep.subr.mxu0 %v2144
    %2331 = vmatpush1.msra.mxu0 %v2143
    %2332 = vmatprep.subr.mxu0 %v2152
    %2333 = vmatpush1.msra.mxu0 %v2151
    %2334 = vmatprep.subr.mxu0 %v2160
    %2335 = vmatpush1.msra.mxu0 %v2159
    %2336 = vmatprep.subr.mxu0 %v2168
    %2337 = vmatpush1.msra.mxu0 %v2167
    %2338 = vmatprep.subr.mxu0 %v2176
    %2339 = vmatpush1.msra.mxu0 %v2175
    %2340 = vmatprep.subr.mxu0 %v2184
    %2341 = vmatpush1.msra.mxu0 %v2183
    %2342 = vmatprep.subr.mxu0 %v2192
    %2343 = vmatpush1.msra.mxu0 %v2191
    %2344 = vmatprep.subr.mxu0 %v2200
    %2345 = vmatpush1.msra.mxu0 %v2199
    %2346 = vmatprep.subr.mxu0 %v2208
    %2347 = vmatpush1.msra.mxu0 %v2207
    %2348 = vmatprep.mubr.f32.mxu0 %v1406
    %2349 = vmatmul.mubr.f32.gmra.mrb[0].mxu0 %v1405
    %v2350 = vpop.f32.mrb[0].mxu0
    %v2351 = vadd.f32 %v1811, %v2350
    %v2352 = vpop.f32.mrb[0].mxu0
    %v2353 = vadd.f32 %v1813, %v2352
    %2354 = vdwg.mxu0
    %2355 = vmatprep.subr.mxu0 %v1962
    %2356 = vmatpush1.msra.mxu0 %v1961
    %2357 = vmatprep.subr.mxu0 %v1970
    %2358 = vmatpush1.msra.mxu0 %v1969
    %2359 = vmatprep.subr.mxu0 %v1978
    %2360 = vmatpush1.msra.mxu0 %v1977
    %2361 = vmatprep.subr.mxu0 %v1986
    %2362 = vmatpush1.msra.mxu0 %v1985
    %2363 = vmatprep.subr.mxu0 %v1994
    %2364 = vmatpush1.msra.mxu0 %v1993
    %2365 = vmatprep.subr.mxu0 %v2002
    %2366 = vmatpush1.msra.mxu0 %v2001
    %2367 = vmatprep.subr.mxu0 %v2010
    %2368 = vmatpush1.msra.mxu0 %v2009
    %2369 = vmatprep.subr.mxu0 %v2018
    %2370 = vmatpush1.msra.mxu0 %v2017
    %2371 = vmatprep.subr.mxu0 %v2026
    %2372 = vmatpush1.msra.mxu0 %v2025
    %2373 = vmatprep.subr.mxu0 %v2034
    %2374 = vmatpush1.msra.mxu0 %v2033
    %2375 = vmatprep.subr.mxu0 %v2042
    %2376 = vmatpush1.msra.mxu0 %v2041
    %2377 = vmatprep.subr.mxu0 %v2050
    %2378 = vmatpush1.msra.mxu0 %v2049
    %2379 = vmatprep.subr.mxu0 %v2058
    %2380 = vmatpush1.msra.mxu0 %v2057
    %2381 = vmatprep.subr.mxu0 %v2066
    %2382 = vmatpush1.msra.mxu0 %v2065
    %2383 = vmatprep.subr.mxu0 %v2074
    %2384 = vmatpush1.msra.mxu0 %v2073
    %2385 = vmatprep.subr.mxu0 %v2082
    %2386 = vmatpush1.msra.mxu0 %v2081
    %2387 = vmatprep.subr.mxu0 %v2090
    %2388 = vmatpush1.msra.mxu0 %v2089
    %2389 = vmatprep.subr.mxu0 %v2098
    %2390 = vmatpush1.msra.mxu0 %v2097
    %2391 = vmatprep.subr.mxu0 %v2106
    %2392 = vmatpush1.msra.mxu0 %v2105
    %2393 = vmatprep.subr.mxu0 %v2114
    %2394 = vmatpush1.msra.mxu0 %v2113
    %2395 = vmatprep.subr.mxu0 %v2122
    %2396 = vmatpush1.msra.mxu0 %v2121
    %2397 = vmatprep.subr.mxu0 %v2130
    %2398 = vmatpush1.msra.mxu0 %v2129
    %2399 = vmatprep.subr.mxu0 %v2138
    %2400 = vmatpush1.msra.mxu0 %v2137
    %2401 = vmatprep.subr.mxu0 %v2146
    %2402 = vmatpush1.msra.mxu0 %v2145
    %2403 = vmatprep.subr.mxu0 %v2154
    %2404 = vmatpush1.msra.mxu0 %v2153
    %2405 = vmatprep.subr.mxu0 %v2162
    %2406 = vmatpush1.msra.mxu0 %v2161
    %2407 = vmatprep.subr.mxu0 %v2170
    %2408 = vmatpush1.msra.mxu0 %v2169
    %2409 = vmatprep.subr.mxu0 %v2178
    %2410 = vmatpush1.msra.mxu0 %v2177
    %2411 = vmatprep.subr.mxu0 %v2186
    %2412 = vmatpush1.msra.mxu0 %v2185
    %2413 = vmatprep.subr.mxu0 %v2194
    %2414 = vmatpush1.msra.mxu0 %v2193
    %2415 = vmatprep.subr.mxu0 %v2202
    %2416 = vmatpush1.msra.mxu0 %v2201
    %2417 = vmatprep.subr.mxu0 %v2210
    %2418 = vmatpush1.msra.mxu0 %v2209
    %2419 = vmatprep.mubr.f32.mxu0 %v1406
    %2420 = vmatmul.mubr.f32.gmra.mrb[0].mxu0 %v1405
    %v2421 = vpop.f32.mrb[0].mxu0
    %v2422 = vadd.f32 %v1882, %v2421
    %v2423 = vpop.f32.mrb[0].mxu0
    %v2424 = vadd.f32 %v1884, %v2423
    %2425 = vdwg.mxu0
    %2426 = vmatprep.subr.mxu0 %v1964
    %2427 = vmatpush1.msra.mxu0 %v1963
    %2428 = vmatprep.subr.mxu0 %v1972
    %2429 = vmatpush1.msra.mxu0 %v1971
    %2430 = vmatprep.subr.mxu0 %v1980
    %2431 = vmatpush1.msra.mxu0 %v1979
    %2432 = vmatprep.subr.mxu0 %v1988
    %2433 = vmatpush1.msra.mxu0 %v1987
    %2434 = vmatprep.subr.mxu0 %v1996
    %2435 = vmatpush1.msra.mxu0 %v1995
    %2436 = vmatprep.subr.mxu0 %v2004
    %2437 = vmatpush1.msra.mxu0 %v2003
    %2438 = vmatprep.subr.mxu0 %v2012
    %2439 = vmatpush1.msra.mxu0 %v2011
    %2440 = vmatprep.subr.mxu0 %v2020
    %2441 = vmatpush1.msra.mxu0 %v2019
    %2442 = vmatprep.subr.mxu0 %v2028
    %2443 = vmatpush1.msra.mxu0 %v2027
    %2444 = vmatprep.subr.mxu0 %v2036
    %2445 = vmatpush1.msra.mxu0 %v2035
    %2446 = vmatprep.subr.mxu0 %v2044
    %2447 = vmatpush1.msra.mxu0 %v2043
    %2448 = vmatprep.subr.mxu0 %v2052
    %2449 = vmatpush1.msra.mxu0 %v2051
    %2450 = vmatprep.subr.mxu0 %v2060
    %2451 = vmatpush1.msra.mxu0 %v2059
    %2452 = vmatprep.subr.mxu0 %v2068
    %2453 = vmatpush1.msra.mxu0 %v2067
    %2454 = vmatprep.subr.mxu0 %v2076
    %2455 = vmatpush1.msra.mxu0 %v2075
    %2456 = vmatprep.subr.mxu0 %v2084
    %2457 = vmatpush1.msra.mxu0 %v2083
    %2458 = vmatprep.subr.mxu0 %v2092
    %2459 = vmatpush1.msra.mxu0 %v2091
    %2460 = vmatprep.subr.mxu0 %v2100
    %2461 = vmatpush1.msra.mxu0 %v2099
    %2462 = vmatprep.subr.mxu0 %v2108
    %2463 = vmatpush1.msra.mxu0 %v2107
    %2464 = vmatprep.subr.mxu0 %v2116
    %2465 = vmatpush1.msra.mxu0 %v2115
    %2466 = vmatprep.subr.mxu0 %v2124
    %2467 = vmatpush1.msra.mxu0 %v2123
    %2468 = vmatprep.subr.mxu0 %v2132
    %2469 = vmatpush1.msra.mxu0 %v2131
    %2470 = vmatprep.subr.mxu0 %v2140
    %2471 = vmatpush1.msra.mxu0 %v2139
    %2472 = vmatprep.subr.mxu0 %v2148
    %2473 = vmatpush1.msra.mxu0 %v2147
    %2474 = vmatprep.subr.mxu0 %v2156
    %2475 = vmatpush1.msra.mxu0 %v2155
    %2476 = vmatprep.subr.mxu0 %v2164
    %2477 = vmatpush1.msra.mxu0 %v2163
    %2478 = vmatprep.subr.mxu0 %v2172
    %2479 = vmatpush1.msra.mxu0 %v2171
    %2480 = vmatprep.subr.mxu0 %v2180
    %2481 = vmatpush1.msra.mxu0 %v2179
    %2482 = vmatprep.subr.mxu0 %v2188
    %2483 = vmatpush1.msra.mxu0 %v2187
    %2484 = vmatprep.subr.mxu0 %v2196
    %2485 = vmatpush1.msra.mxu0 %v2195
    %2486 = vmatprep.subr.mxu0 %v2204
    %2487 = vmatpush1.msra.mxu0 %v2203
    %2488 = vmatprep.subr.mxu0 %v2212
    %2489 = vmatpush1.msra.mxu0 %v2211
    %2490 = vmatprep.mubr.f32.mxu0 %v1406
    %2491 = vmatmul.mubr.f32.gmra.mrb[0].mxu0 %v1405
    %v2492 = vpop.f32.mrb[0].mxu0
    %v2493 = vadd.f32 %v1953, %v2492
    %v2494 = vpop.f32.mrb[0].mxu0
    %v2495 = vadd.f32 %v1955, %v2494
    %2496 = vdwg.mxu0
    %v2497 = vld [vmem:[%s8] sm:$0xff]
    %v2499 = vlaneseq
    %v2500 = vshrl.u32 %v2499, 7
    %v2501 = vsub.s32 0, %v2500
    %v2502 = vrot.slane %v2497, %v2501
    %v2503 = vlaneseq
    %v2504 = vshrl.u32 %v2503, 7
    %v2505 = vsub.s32 1, %v2504
    %v2506 = vrot.slane %v2497, %v2505
    %v2507 = vlaneseq
    %v2508 = vshrl.u32 %v2507, 7
    %v2509 = vsub.s32 2, %v2508
    %v2510 = vrot.slane %v2497, %v2509
    %v2511 = vlaneseq
    %v2512 = vshrl.u32 %v2511, 7
    %v2513 = vsub.s32 3, %v2512
    %v2514 = vrot.slane %v2497, %v2513
    %v2515 = vlaneseq
    %v2516 = vshrl.u32 %v2515, 7
    %v2517 = vsub.s32 4, %v2516
    %v2518 = vrot.slane %v2497, %v2517
    %v2519 = vlaneseq
    %v2520 = vshrl.u32 %v2519, 7
    %v2521 = vsub.s32 5, %v2520
    %v2522 = vrot.slane %v2497, %v2521
    %v2523 = vlaneseq
    %v2524 = vshrl.u32 %v2523, 7
    %v2525 = vsub.s32 6, %v2524
    %v2526 = vrot.slane %v2497, %v2525
    %v2527 = vlaneseq
    %v2528 = vshrl.u32 %v2527, 7
    %v2529 = vsub.s32 7, %v2528
    %v2530 = vrot.slane %v2497, %v2529
    %v2539 = vadd.f32 %v2280, %v2502
    %v2540 = vadd.f32 %v2282, %v2506
    %v2541 = vadd.f32 %v2351, %v2510
    %v2542 = vadd.f32 %v2353, %v2514
    %v2543 = vadd.f32 %v2422, %v2518
    %v2544 = vadd.f32 %v2424, %v2522
    %v2545 = vadd.f32 %v2493, %v2526
    %v2546 = vadd.f32 %v2495, %v2530
    %v2547 = vmul.f32 %v2539, 0.5
    %v2548 = vmul.f32 %v2540, 0.5
    %v2549 = vtanh.pop %v2547
    %v2550 = vtanh.pop %v2548
    %v2551 = vadd.f32 %v2549, 1.0
    %v2552 = vadd.f32 %v2550, 1.0
    %v2553 = vmul.f32 %v2551, 0.5
    %v2554 = vmul.f32 %v2552, 0.5
    %v2555 = vmul.f32 %v2541, 0.5
    %v2556 = vmul.f32 %v2542, 0.5
    %v2557 = vtanh.pop %v2555
    %v2558 = vtanh.pop %v2556
    %v2559 = vadd.f32 %v2557, 1.0
    %v2560 = vadd.f32 %v2558, 1.0
    %v2561 = vmul.f32 %v2559, 0.5
    %v2562 = vmul.f32 %v2560, 0.5
    %v2563 = vtanh.pop %v2543
    %v2564 = vtanh.pop %v2544
    %v2565 = vmul.f32 %v2545, 0.5
    %v2566 = vmul.f32 %v2546, 0.5
    %v2567 = vtanh.pop %v2565
    %v2568 = vtanh.pop %v2566
    %v2569 = vadd.f32 %v2567, 1.0
    %v2570 = vadd.f32 %v2568, 1.0
    %v2571 = vmul.f32 %v2569, 0.5
    %v2572 = vmul.f32 %v2570, 0.5
    %v2573 = vmul.f32 %v2561, %v1671
    %v2574 = vmul.f32 %v2562, %v1672
    %v2575 = vmul.f32 %v2553, %v2563
    %v2576 = vmul.f32 %v2554, %v2564
    %v2577 = vadd.f32 %v2573, %v2575
    %v2578 = vadd.f32 %v2574, %v2576
    %v2579 = vtanh.pop %v2577
    %v2580 = vtanh.pop %v2578
    %v2581 = vmul.f32 %v2571, %v2579
    %v2582 = vmul.f32 %v2572, %v2580
    %2583 = vst [vmem:[%s1667] sm:$0xff] %v2581
    %2584 = vst [vmem:[%s1667 + $0x8] sm:$0xff] %v2582
    %2585 = vst [vmem:[%s1670] sm:$0xff] %v2577
    %2586 = vst [vmem:[%s1670 + $0x8] sm:$0xff] %v2578
    %v2587 = vld [vmem:[#allocation14] sm:$0xff]
    %v2588 = vld [vmem:[#allocation14 + $0x8] sm:$0xff]
    %v2589 = vld [vmem:[#allocation14 + $0x10] sm:$0xff]
    %v2590 = vld [vmem:[#allocation14 + $0x18] sm:$0xff]
    %v2591 = vld [vmem:[#allocation14 + $0x20] sm:$0xff]
    %v2592 = vld [vmem:[#allocation14 + $0x28] sm:$0xff]
    %v2593 = vld [vmem:[#allocation14 + $0x30] sm:$0xff]
    %v2594 = vld [vmem:[#allocation14 + $0x38] sm:$0xff]
    %v2595 = vld [vmem:[#allocation14 + $0x40] sm:$0xff]
    %v2596 = vld [vmem:[#allocation14 + $0x48] sm:$0xff]
    %v2597 = vld [vmem:[#allocation14 + $0x50] sm:$0xff]
    %v2598 = vld [vmem:[#allocation14 + $0x58] sm:$0xff]
    %v2599 = vld [vmem:[#allocation14 + $0x60] sm:$0xff]
    %v2600 = vld [vmem:[#allocation14 + $0x68] sm:$0xff]
    %v2601 = vld [vmem:[#allocation14 + $0x70] sm:$0xff]
    %v2602 = vld [vmem:[#allocation14 + $0x78] sm:$0xff]
    %v2603 = vld [vmem:[#allocation14 + $0x80] sm:$0xff]
    %v2604 = vld [vmem:[#allocation14 + $0x88] sm:$0xff]
    %v2605 = vld [vmem:[#allocation14 + $0x90] sm:$0xff]
    %v2606 = vld [vmem:[#allocation14 + $0x98] sm:$0xff]
    %v2607 = vld [vmem:[#allocation14 + $0xa0] sm:$0xff]
    %v2608 = vld [vmem:[#allocation14 + $0xa8] sm:$0xff]
    %v2609 = vld [vmem:[#allocation14 + $0xb0] sm:$0xff]
    %v2610 = vld [vmem:[#allocation14 + $0xb8] sm:$0xff]
    %v2611 = vld [vmem:[#allocation14 + $0xc0] sm:$0xff]
    %v2612 = vld [vmem:[#allocation14 + $0xc8] sm:$0xff]
    %v2613 = vld [vmem:[#allocation14 + $0xd0] sm:$0xff]
    %v2614 = vld [vmem:[#allocation14 + $0xd8] sm:$0xff]
    %v2615 = vld [vmem:[#allocation14 + $0xe0] sm:$0xff]
    %v2616 = vld [vmem:[#allocation14 + $0xe8] sm:$0xff]
    %v2617 = vld [vmem:[#allocation14 + $0xf0] sm:$0xff]
    %v2618 = vld [vmem:[#allocation14 + $0xf8] sm:$0xff]
    %v2619 = vld [vmem:[#allocation14 + $0x100] sm:$0xff]
    %v2620 = vld [vmem:[#allocation14 + $0x108] sm:$0xff]
    %v2621 = vld [vmem:[#allocation14 + $0x110] sm:$0xff]
    %v2622 = vld [vmem:[#allocation14 + $0x118] sm:$0xff]
    %v2623 = vld [vmem:[#allocation14 + $0x120] sm:$0xff]
    %v2624 = vld [vmem:[#allocation14 + $0x128] sm:$0xff]
    %v2625 = vld [vmem:[#allocation14 + $0x130] sm:$0xff]
    %v2626 = vld [vmem:[#allocation14 + $0x138] sm:$0xff]
    %v2627 = vld [vmem:[#allocation14 + $0x140] sm:$0xff]
    %v2628 = vld [vmem:[#allocation14 + $0x148] sm:$0xff]
    %v2629 = vld [vmem:[#allocation14 + $0x150] sm:$0xff]
    %v2630 = vld [vmem:[#allocation14 + $0x158] sm:$0xff]
    %v2631 = vld [vmem:[#allocation14 + $0x160] sm:$0xff]
    %v2632 = vld [vmem:[#allocation14 + $0x168] sm:$0xff]
    %v2633 = vld [vmem:[#allocation14 + $0x170] sm:$0xff]
    %v2634 = vld [vmem:[#allocation14 + $0x178] sm:$0xff]
    %v2635 = vld [vmem:[#allocation14 + $0x180] sm:$0xff]
    %v2636 = vld [vmem:[#allocation14 + $0x188] sm:$0xff]
    %v2637 = vld [vmem:[#allocation14 + $0x190] sm:$0xff]
    %v2638 = vld [vmem:[#allocation14 + $0x198] sm:$0xff]
    %v2639 = vld [vmem:[#allocation14 + $0x1a0] sm:$0xff]
    %v2640 = vld [vmem:[#allocation14 + $0x1a8] sm:$0xff]
    %v2641 = vld [vmem:[#allocation14 + $0x1b0] sm:$0xff]
    %v2642 = vld [vmem:[#allocation14 + $0x1b8] sm:$0xff]
    %v2643 = vld [vmem:[#allocation14 + $0x1c0] sm:$0xff]
    %v2644 = vld [vmem:[#allocation14 + $0x1c8] sm:$0xff]
    %v2645 = vld [vmem:[#allocation14 + $0x1d0] sm:$0xff]
    %v2646 = vld [vmem:[#allocation14 + $0x1d8] sm:$0xff]
    %v2647 = vld [vmem:[#allocation14 + $0x1e0] sm:$0xff]
    %v2648 = vld [vmem:[#allocation14 + $0x1e8] sm:$0xff]
    %v2649 = vld [vmem:[#allocation14 + $0x1f0] sm:$0xff]
    %v2650 = vld [vmem:[#allocation14 + $0x1f8] sm:$0xff]
    %v2651 = vld [vmem:[#allocation14 + $0x200] sm:$0xff]
    %v2652 = vld [vmem:[#allocation14 + $0x208] sm:$0xff]
    %v2653 = vld [vmem:[#allocation14 + $0x210] sm:$0xff]
    %v2654 = vld [vmem:[#allocation14 + $0x218] sm:$0xff]
    %v2655 = vld [vmem:[#allocation14 + $0x220] sm:$0xff]
    %v2656 = vld [vmem:[#allocation14 + $0x228] sm:$0xff]
    %v2657 = vld [vmem:[#allocation14 + $0x230] sm:$0xff]
    %v2658 = vld [vmem:[#allocation14 + $0x238] sm:$0xff]
    %v2659 = vld [vmem:[#allocation14 + $0x240] sm:$0xff]
    %v2660 = vld [vmem:[#allocation14 + $0x248] sm:$0xff]
    %v2661 = vld [vmem:[#allocation14 + $0x250] sm:$0xff]
    %v2662 = vld [vmem:[#allocation14 + $0x258] sm:$0xff]
    %v2663 = vld [vmem:[#allocation14 + $0x260] sm:$0xff]
    %v2664 = vld [vmem:[#allocation14 + $0x268] sm:$0xff]
    %v2665 = vld [vmem:[#allocation14 + $0x270] sm:$0xff]
    %v2666 = vld [vmem:[#allocation14 + $0x278] sm:$0xff]
    %v2667 = vld [vmem:[#allocation14 + $0x280] sm:$0xff]
    %v2668 = vld [vmem:[#allocation14 + $0x288] sm:$0xff]
    %v2669 = vld [vmem:[#allocation14 + $0x290] sm:$0xff]
    %v2670 = vld [vmem:[#allocation14 + $0x298] sm:$0xff]
    %v2671 = vld [vmem:[#allocation14 + $0x2a0] sm:$0xff]
    %v2672 = vld [vmem:[#allocation14 + $0x2a8] sm:$0xff]
    %v2673 = vld [vmem:[#allocation14 + $0x2b0] sm:$0xff]
    %v2674 = vld [vmem:[#allocation14 + $0x2b8] sm:$0xff]
    %v2675 = vld [vmem:[#allocation14 + $0x2c0] sm:$0xff]
    %v2676 = vld [vmem:[#allocation14 + $0x2c8] sm:$0xff]
    %v2677 = vld [vmem:[#allocation14 + $0x2d0] sm:$0xff]
    %v2678 = vld [vmem:[#allocation14 + $0x2d8] sm:$0xff]
    %v2679 = vld [vmem:[#allocation14 + $0x2e0] sm:$0xff]
    %v2680 = vld [vmem:[#allocation14 + $0x2e8] sm:$0xff]
    %v2681 = vld [vmem:[#allocation14 + $0x2f0] sm:$0xff]
    %v2682 = vld [vmem:[#allocation14 + $0x2f8] sm:$0xff]
    %v2683 = vld [vmem:[#allocation14 + $0x300] sm:$0xff]
    %v2684 = vld [vmem:[#allocation14 + $0x308] sm:$0xff]
    %v2685 = vld [vmem:[#allocation14 + $0x310] sm:$0xff]
    %v2686 = vld [vmem:[#allocation14 + $0x318] sm:$0xff]
    %v2687 = vld [vmem:[#allocation14 + $0x320] sm:$0xff]
    %v2688 = vld [vmem:[#allocation14 + $0x328] sm:$0xff]
    %v2689 = vld [vmem:[#allocation14 + $0x330] sm:$0xff]
    %v2690 = vld [vmem:[#allocation14 + $0x338] sm:$0xff]
    %v2691 = vld [vmem:[#allocation14 + $0x340] sm:$0xff]
    %v2692 = vld [vmem:[#allocation14 + $0x348] sm:$0xff]
    %v2693 = vld [vmem:[#allocation14 + $0x350] sm:$0xff]
    %v2694 = vld [vmem:[#allocation14 + $0x358] sm:$0xff]
    %v2695 = vld [vmem:[#allocation14 + $0x360] sm:$0xff]
    %v2696 = vld [vmem:[#allocation14 + $0x368] sm:$0xff]
    %v2697 = vld [vmem:[#allocation14 + $0x370] sm:$0xff]
    %v2698 = vld [vmem:[#allocation14 + $0x378] sm:$0xff]
    %v2699 = vld [vmem:[#allocation14 + $0x380] sm:$0xff]
    %v2700 = vld [vmem:[#allocation14 + $0x388] sm:$0xff]
    %v2701 = vld [vmem:[#allocation14 + $0x390] sm:$0xff]
    %v2702 = vld [vmem:[#allocation14 + $0x398] sm:$0xff]
    %v2703 = vld [vmem:[#allocation14 + $0x3a0] sm:$0xff]
    %v2704 = vld [vmem:[#allocation14 + $0x3a8] sm:$0xff]
    %v2705 = vld [vmem:[#allocation14 + $0x3b0] sm:$0xff]
    %v2706 = vld [vmem:[#allocation14 + $0x3b8] sm:$0xff]
    %v2707 = vld [vmem:[#allocation14 + $0x3c0] sm:$0xff]
    %v2708 = vld [vmem:[#allocation14 + $0x3c8] sm:$0xff]
    %v2709 = vld [vmem:[#allocation14 + $0x3d0] sm:$0xff]
    %v2710 = vld [vmem:[#allocation14 + $0x3d8] sm:$0xff]
    %v2711 = vld [vmem:[#allocation14 + $0x3e0] sm:$0xff]
    %v2712 = vld [vmem:[#allocation14 + $0x3e8] sm:$0xff]
    %v2713 = vld [vmem:[#allocation14 + $0x3f0] sm:$0xff]
    %v2714 = vld [vmem:[#allocation14 + $0x3f8] sm:$0xff]
    %v2715 = vld [vmem:[#allocation14 + $0x400] sm:$0xff]
    %v2716 = vld [vmem:[#allocation14 + $0x408] sm:$0xff]
    %v2717 = vld [vmem:[#allocation14 + $0x410] sm:$0xff]
    %v2718 = vld [vmem:[#allocation14 + $0x418] sm:$0xff]
    %v2719 = vld [vmem:[#allocation14 + $0x420] sm:$0xff]
    %v2720 = vld [vmem:[#allocation14 + $0x428] sm:$0xff]
    %v2721 = vld [vmem:[#allocation14 + $0x430] sm:$0xff]
    %v2722 = vld [vmem:[#allocation14 + $0x438] sm:$0xff]
    %v2723 = vld [vmem:[#allocation14 + $0x440] sm:$0xff]
    %v2724 = vld [vmem:[#allocation14 + $0x448] sm:$0xff]
    %v2725 = vld [vmem:[#allocation14 + $0x450] sm:$0xff]
    %v2726 = vld [vmem:[#allocation14 + $0x458] sm:$0xff]
    %v2727 = vld [vmem:[#allocation14 + $0x460] sm:$0xff]
    %v2728 = vld [vmem:[#allocation14 + $0x468] sm:$0xff]
    %v2729 = vld [vmem:[#allocation14 + $0x470] sm:$0xff]
    %v2730 = vld [vmem:[#allocation14 + $0x478] sm:$0xff]
    %v2731 = vld [vmem:[#allocation14 + $0x480] sm:$0xff]
    %v2732 = vld [vmem:[#allocation14 + $0x488] sm:$0xff]
    %v2733 = vld [vmem:[#allocation14 + $0x490] sm:$0xff]
    %v2734 = vld [vmem:[#allocation14 + $0x498] sm:$0xff]
    %v2735 = vld [vmem:[#allocation14 + $0x4a0] sm:$0xff]
    %v2736 = vld [vmem:[#allocation14 + $0x4a8] sm:$0xff]
    %v2737 = vld [vmem:[#allocation14 + $0x4b0] sm:$0xff]
    %v2738 = vld [vmem:[#allocation14 + $0x4b8] sm:$0xff]
    %v2739 = vld [vmem:[#allocation14 + $0x4c0] sm:$0xff]
    %v2740 = vld [vmem:[#allocation14 + $0x4c8] sm:$0xff]
    %v2741 = vld [vmem:[#allocation14 + $0x4d0] sm:$0xff]
    %v2742 = vld [vmem:[#allocation14 + $0x4d8] sm:$0xff]
    %v2743 = vld [vmem:[#allocation14 + $0x4e0] sm:$0xff]
    %v2744 = vld [vmem:[#allocation14 + $0x4e8] sm:$0xff]
    %v2745 = vld [vmem:[#allocation14 + $0x4f0] sm:$0xff]
    %v2746 = vld [vmem:[#allocation14 + $0x4f8] sm:$0xff]
    %v2747 = vld [vmem:[#allocation14 + $0x500] sm:$0xff]
    %v2748 = vld [vmem:[#allocation14 + $0x508] sm:$0xff]
    %v2749 = vld [vmem:[#allocation14 + $0x510] sm:$0xff]
    %v2750 = vld [vmem:[#allocation14 + $0x518] sm:$0xff]
    %v2751 = vld [vmem:[#allocation14 + $0x520] sm:$0xff]
    %v2752 = vld [vmem:[#allocation14 + $0x528] sm:$0xff]
    %v2753 = vld [vmem:[#allocation14 + $0x530] sm:$0xff]
    %v2754 = vld [vmem:[#allocation14 + $0x538] sm:$0xff]
    %v2755 = vld [vmem:[#allocation14 + $0x540] sm:$0xff]
    %v2756 = vld [vmem:[#allocation14 + $0x548] sm:$0xff]
    %v2757 = vld [vmem:[#allocation14 + $0x550] sm:$0xff]
    %v2758 = vld [vmem:[#allocation14 + $0x558] sm:$0xff]
    %v2759 = vld [vmem:[#allocation14 + $0x560] sm:$0xff]
    %v2760 = vld [vmem:[#allocation14 + $0x568] sm:$0xff]
    %v2761 = vld [vmem:[#allocation14 + $0x570] sm:$0xff]
    %v2762 = vld [vmem:[#allocation14 + $0x578] sm:$0xff]
    %v2763 = vld [vmem:[#allocation14 + $0x580] sm:$0xff]
    %v2764 = vld [vmem:[#allocation14 + $0x588] sm:$0xff]
    %v2765 = vld [vmem:[#allocation14 + $0x590] sm:$0xff]
    %v2766 = vld [vmem:[#allocation14 + $0x598] sm:$0xff]
    %v2767 = vld [vmem:[#allocation14 + $0x5a0] sm:$0xff]
    %v2768 = vld [vmem:[#allocation14 + $0x5a8] sm:$0xff]
    %v2769 = vld [vmem:[#allocation14 + $0x5b0] sm:$0xff]
    %v2770 = vld [vmem:[#allocation14 + $0x5b8] sm:$0xff]
    %v2771 = vld [vmem:[#allocation14 + $0x5c0] sm:$0xff]
    %v2772 = vld [vmem:[#allocation14 + $0x5c8] sm:$0xff]
    %v2773 = vld [vmem:[#allocation14 + $0x5d0] sm:$0xff]
    %v2774 = vld [vmem:[#allocation14 + $0x5d8] sm:$0xff]
    %v2775 = vld [vmem:[#allocation14 + $0x5e0] sm:$0xff]
    %v2776 = vld [vmem:[#allocation14 + $0x5e8] sm:$0xff]
    %v2777 = vld [vmem:[#allocation14 + $0x5f0] sm:$0xff]
    %v2778 = vld [vmem:[#allocation14 + $0x5f8] sm:$0xff]
    %v2779 = vld [vmem:[#allocation14 + $0x600] sm:$0xff]
    %v2780 = vld [vmem:[#allocation14 + $0x608] sm:$0xff]
    %v2781 = vld [vmem:[#allocation14 + $0x610] sm:$0xff]
    %v2782 = vld [vmem:[#allocation14 + $0x618] sm:$0xff]
    %v2783 = vld [vmem:[#allocation14 + $0x620] sm:$0xff]
    %v2784 = vld [vmem:[#allocation14 + $0x628] sm:$0xff]
    %v2785 = vld [vmem:[#allocation14 + $0x630] sm:$0xff]
    %v2786 = vld [vmem:[#allocation14 + $0x638] sm:$0xff]
    %v2787 = vld [vmem:[#allocation14 + $0x640] sm:$0xff]
    %v2788 = vld [vmem:[#allocation14 + $0x648] sm:$0xff]
    %v2789 = vld [vmem:[#allocation14 + $0x650] sm:$0xff]
    %v2790 = vld [vmem:[#allocation14 + $0x658] sm:$0xff]
    %v2791 = vld [vmem:[#allocation14 + $0x660] sm:$0xff]
    %v2792 = vld [vmem:[#allocation14 + $0x668] sm:$0xff]
    %v2793 = vld [vmem:[#allocation14 + $0x670] sm:$0xff]
    %v2794 = vld [vmem:[#allocation14 + $0x678] sm:$0xff]
    %v2795 = vld [vmem:[#allocation14 + $0x680] sm:$0xff]
    %v2796 = vld [vmem:[#allocation14 + $0x688] sm:$0xff]
    %v2797 = vld [vmem:[#allocation14 + $0x690] sm:$0xff]
    %v2798 = vld [vmem:[#allocation14 + $0x698] sm:$0xff]
    %v2799 = vld [vmem:[#allocation14 + $0x6a0] sm:$0xff]
    %v2800 = vld [vmem:[#allocation14 + $0x6a8] sm:$0xff]
    %v2801 = vld [vmem:[#allocation14 + $0x6b0] sm:$0xff]
    %v2802 = vld [vmem:[#allocation14 + $0x6b8] sm:$0xff]
    %v2803 = vld [vmem:[#allocation14 + $0x6c0] sm:$0xff]
    %v2804 = vld [vmem:[#allocation14 + $0x6c8] sm:$0xff]
    %v2805 = vld [vmem:[#allocation14 + $0x6d0] sm:$0xff]
    %v2806 = vld [vmem:[#allocation14 + $0x6d8] sm:$0xff]
    %v2807 = vld [vmem:[#allocation14 + $0x6e0] sm:$0xff]
    %v2808 = vld [vmem:[#allocation14 + $0x6e8] sm:$0xff]
    %v2809 = vld [vmem:[#allocation14 + $0x6f0] sm:$0xff]
    %v2810 = vld [vmem:[#allocation14 + $0x6f8] sm:$0xff]
    %v2811 = vld [vmem:[#allocation14 + $0x700] sm:$0xff]
    %v2812 = vld [vmem:[#allocation14 + $0x708] sm:$0xff]
    %v2813 = vld [vmem:[#allocation14 + $0x710] sm:$0xff]
    %v2814 = vld [vmem:[#allocation14 + $0x718] sm:$0xff]
    %v2815 = vld [vmem:[#allocation14 + $0x720] sm:$0xff]
    %v2816 = vld [vmem:[#allocation14 + $0x728] sm:$0xff]
    %v2817 = vld [vmem:[#allocation14 + $0x730] sm:$0xff]
    %v2818 = vld [vmem:[#allocation14 + $0x738] sm:$0xff]
    %v2819 = vld [vmem:[#allocation14 + $0x740] sm:$0xff]
    %v2820 = vld [vmem:[#allocation14 + $0x748] sm:$0xff]
    %v2821 = vld [vmem:[#allocation14 + $0x750] sm:$0xff]
    %v2822 = vld [vmem:[#allocation14 + $0x758] sm:$0xff]
    %v2823 = vld [vmem:[#allocation14 + $0x760] sm:$0xff]
    %v2824 = vld [vmem:[#allocation14 + $0x768] sm:$0xff]
    %v2825 = vld [vmem:[#allocation14 + $0x770] sm:$0xff]
    %v2826 = vld [vmem:[#allocation14 + $0x778] sm:$0xff]
    %v2827 = vld [vmem:[#allocation14 + $0x780] sm:$0xff]
    %v2828 = vld [vmem:[#allocation14 + $0x788] sm:$0xff]
    %v2829 = vld [vmem:[#allocation14 + $0x790] sm:$0xff]
    %v2830 = vld [vmem:[#allocation14 + $0x798] sm:$0xff]
    %v2831 = vld [vmem:[#allocation14 + $0x7a0] sm:$0xff]
    %v2832 = vld [vmem:[#allocation14 + $0x7a8] sm:$0xff]
    %v2833 = vld [vmem:[#allocation14 + $0x7b0] sm:$0xff]
    %v2834 = vld [vmem:[#allocation14 + $0x7b8] sm:$0xff]
    %v2835 = vld [vmem:[#allocation14 + $0x7c0] sm:$0xff]
    %v2836 = vld [vmem:[#allocation14 + $0x7c8] sm:$0xff]
    %v2837 = vld [vmem:[#allocation14 + $0x7d0] sm:$0xff]
    %v2838 = vld [vmem:[#allocation14 + $0x7d8] sm:$0xff]
    %v2839 = vld [vmem:[#allocation14 + $0x7e0] sm:$0xff]
    %v2840 = vld [vmem:[#allocation14 + $0x7e8] sm:$0xff]
    %v2841 = vld [vmem:[#allocation14 + $0x7f0] sm:$0xff]
    %v2842 = vld [vmem:[#allocation14 + $0x7f8] sm:$0xff]
    %s2843 = scalar_lea.vmem %s20, 32
    %v2844 = vld [vmem:[%s2843] sm:$0xff]
    %v2845 = vld [vmem:[%s2843 + $0x8] sm:$0xff]
    %s2846 = scalar_lea.vmem %s21, 32
    %v2847 = vld [vmem:[%s2846] sm:$0xff]
    %v2848 = vld [vmem:[%s2846 + $0x8] sm:$0xff]
    %2849 = vmatprep.subr.mxu0 %v2588
    %2850 = vmatpush1.msra.mxu0 %v2587
    %2851 = vmatprep.subr.mxu0 %v2596
    %2852 = vmatpush1.msra.mxu0 %v2595
    %2853 = vmatprep.subr.mxu0 %v2604
    %2854 = vmatpush1.msra.mxu0 %v2603
    %2855 = vmatprep.subr.mxu0 %v2612
    %2856 = vmatpush1.msra.mxu0 %v2611
    %2857 = vmatprep.subr.mxu0 %v2620
    %2858 = vmatpush1.msra.mxu0 %v2619
    %2859 = vmatprep.subr.mxu0 %v2628
    %2860 = vmatpush1.msra.mxu0 %v2627
    %2861 = vmatprep.subr.mxu0 %v2636
    %2862 = vmatpush1.msra.mxu0 %v2635
    %2863 = vmatprep.subr.mxu0 %v2644
    %2864 = vmatpush1.msra.mxu0 %v2643
    %2865 = vmatprep.subr.mxu0 %v2652
    %2866 = vmatpush1.msra.mxu0 %v2651
    %2867 = vmatprep.subr.mxu0 %v2660
    %2868 = vmatpush1.msra.mxu0 %v2659
    %2869 = vmatprep.subr.mxu0 %v2668
    %2870 = vmatpush1.msra.mxu0 %v2667
    %2871 = vmatprep.subr.mxu0 %v2676
    %2872 = vmatpush1.msra.mxu0 %v2675
    %2873 = vmatprep.subr.mxu0 %v2684
    %2874 = vmatpush1.msra.mxu0 %v2683
    %2875 = vmatprep.subr.mxu0 %v2692
    %2876 = vmatpush1.msra.mxu0 %v2691
    %2877 = vmatprep.subr.mxu0 %v2700
    %2878 = vmatpush1.msra.mxu0 %v2699
    %2879 = vmatprep.subr.mxu0 %v2708
    %2880 = vmatpush1.msra.mxu0 %v2707
    %2881 = vmatprep.subr.mxu0 %v2716
    %2882 = vmatpush1.msra.mxu0 %v2715
    %2883 = vmatprep.subr.mxu0 %v2724
    %2884 = vmatpush1.msra.mxu0 %v2723
    %2885 = vmatprep.subr.mxu0 %v2732
    %2886 = vmatpush1.msra.mxu0 %v2731
    %2887 = vmatprep.subr.mxu0 %v2740
    %2888 = vmatpush1.msra.mxu0 %v2739
    %2889 = vmatprep.subr.mxu0 %v2748
    %2890 = vmatpush1.msra.mxu0 %v2747
    %2891 = vmatprep.subr.mxu0 %v2756
    %2892 = vmatpush1.msra.mxu0 %v2755
    %2893 = vmatprep.subr.mxu0 %v2764
    %2894 = vmatpush1.msra.mxu0 %v2763
    %2895 = vmatprep.subr.mxu0 %v2772
    %2896 = vmatpush1.msra.mxu0 %v2771
    %2897 = vmatprep.subr.mxu0 %v2780
    %2898 = vmatpush1.msra.mxu0 %v2779
    %2899 = vmatprep.subr.mxu0 %v2788
    %2900 = vmatpush1.msra.mxu0 %v2787
    %2901 = vmatprep.subr.mxu0 %v2796
    %2902 = vmatpush1.msra.mxu0 %v2795
    %2903 = vmatprep.subr.mxu0 %v2804
    %2904 = vmatpush1.msra.mxu0 %v2803
    %2905 = vmatprep.subr.mxu0 %v2812
    %2906 = vmatpush1.msra.mxu0 %v2811
    %2907 = vmatprep.subr.mxu0 %v2820
    %2908 = vmatpush1.msra.mxu0 %v2819
    %2909 = vmatprep.subr.mxu0 %v2828
    %2910 = vmatpush1.msra.mxu0 %v2827
    %2911 = vmatprep.subr.mxu0 %v2836
    %2912 = vmatpush1.msra.mxu0 %v2835
    %2913 = vmatprep.mubr.f32.mxu0 %v2845
    %2914 = vmatmul.mubr.f32.gmra.mrb[0].mxu0 %v2844
    %v2915 = vpop.f32.mrb[0].mxu0
    %v2916 = vadd.f32 0.0, %v2915
    %v2917 = vpop.f32.mrb[0].mxu0
    %v2918 = vadd.f32 0.0, %v2917
    %2919 = vdwg.mxu0
    %2920 = vmatprep.subr.mxu0 %v2590
    %2921 = vmatpush1.msra.mxu0 %v2589
    %2922 = vmatprep.subr.mxu0 %v2598
    %2923 = vmatpush1.msra.mxu0 %v2597
    %2924 = vmatprep.subr.mxu0 %v2606
    %2925 = vmatpush1.msra.mxu0 %v2605
    %2926 = vmatprep.subr.mxu0 %v2614
    %2927 = vmatpush1.msra.mxu0 %v2613
    %2928 = vmatprep.subr.mxu0 %v2622
    %2929 = vmatpush1.msra.mxu0 %v2621
    %2930 = vmatprep.subr.mxu0 %v2630
    %2931 = vmatpush1.msra.mxu0 %v2629
    %2932 = vmatprep.subr.mxu0 %v2638
    %2933 = vmatpush1.msra.mxu0 %v2637
    %2934 = vmatprep.subr.mxu0 %v2646
    %2935 = vmatpush1.msra.mxu0 %v2645
    %2936 = vmatprep.subr.mxu0 %v2654
    %2937 = vmatpush1.msra.mxu0 %v2653
    %2938 = vmatprep.subr.mxu0 %v2662
    %2939 = vmatpush1.msra.mxu0 %v2661
    %2940 = vmatprep.subr.mxu0 %v2670
    %2941 = vmatpush1.msra.mxu0 %v2669
    %2942 = vmatprep.subr.mxu0 %v2678
    %2943 = vmatpush1.msra.mxu0 %v2677
    %2944 = vmatprep.subr.mxu0 %v2686
    %2945 = vmatpush1.msra.mxu0 %v2685
    %2946 = vmatprep.subr.mxu0 %v2694
    %2947 = vmatpush1.msra.mxu0 %v2693
    %2948 = vmatprep.subr.mxu0 %v2702
    %2949 = vmatpush1.msra.mxu0 %v2701
    %2950 = vmatprep.subr.mxu0 %v2710
    %2951 = vmatpush1.msra.mxu0 %v2709
    %2952 = vmatprep.subr.mxu0 %v2718
    %2953 = vmatpush1.msra.mxu0 %v2717
    %2954 = vmatprep.subr.mxu0 %v2726
    %2955 = vmatpush1.msra.mxu0 %v2725
    %2956 = vmatprep.subr.mxu0 %v2734
    %2957 = vmatpush1.msra.mxu0 %v2733
    %2958 = vmatprep.subr.mxu0 %v2742
    %2959 = vmatpush1.msra.mxu0 %v2741
    %2960 = vmatprep.subr.mxu0 %v2750
    %2961 = vmatpush1.msra.mxu0 %v2749
    %2962 = vmatprep.subr.mxu0 %v2758
    %2963 = vmatpush1.msra.mxu0 %v2757
    %2964 = vmatprep.subr.mxu0 %v2766
    %2965 = vmatpush1.msra.mxu0 %v2765
    %2966 = vmatprep.subr.mxu0 %v2774
    %2967 = vmatpush1.msra.mxu0 %v2773
    %2968 = vmatprep.subr.mxu0 %v2782
    %2969 = vmatpush1.msra.mxu0 %v2781
    %2970 = vmatprep.subr.mxu0 %v2790
    %2971 = vmatpush1.msra.mxu0 %v2789
    %2972 = vmatprep.subr.mxu0 %v2798
    %2973 = vmatpush1.msra.mxu0 %v2797
    %2974 = vmatprep.subr.mxu0 %v2806
    %2975 = vmatpush1.msra.mxu0 %v2805
    %2976 = vmatprep.subr.mxu0 %v2814
    %2977 = vmatpush1.msra.mxu0 %v2813
    %2978 = vmatprep.subr.mxu0 %v2822
    %2979 = vmatpush1.msra.mxu0 %v2821
    %2980 = vmatprep.subr.mxu0 %v2830
    %2981 = vmatpush1.msra.mxu0 %v2829
    %2982 = vmatprep.subr.mxu0 %v2838
    %2983 = vmatpush1.msra.mxu0 %v2837
    %2984 = vmatprep.mubr.f32.mxu0 %v2845
    %2985 = vmatmul.mubr.f32.gmra.mrb[0].mxu0 %v2844
    %v2986 = vpop.f32.mrb[0].mxu0
    %v2987 = vadd.f32 0.0, %v2986
    %v2988 = vpop.f32.mrb[0].mxu0
    %v2989 = vadd.f32 0.0, %v2988
    %2990 = vdwg.mxu0
    %2991 = vmatprep.subr.mxu0 %v2592
    %2992 = vmatpush1.msra.mxu0 %v2591
    %2993 = vmatprep.subr.mxu0 %v2600
    %2994 = vmatpush1.msra.mxu0 %v2599
    %2995 = vmatprep.subr.mxu0 %v2608
    %2996 = vmatpush1.msra.mxu0 %v2607
    %2997 = vmatprep.subr.mxu0 %v2616
    %2998 = vmatpush1.msra.mxu0 %v2615
    %2999 = vmatprep.subr.mxu0 %v2624
    %3000 = vmatpush1.msra.mxu0 %v2623
    %3001 = vmatprep.subr.mxu0 %v2632
    %3002 = vmatpush1.msra.mxu0 %v2631
    %3003 = vmatprep.subr.mxu0 %v2640
    %3004 = vmatpush1.msra.mxu0 %v2639
    %3005 = vmatprep.subr.mxu0 %v2648
    %3006 = vmatpush1.msra.mxu0 %v2647
    %3007 = vmatprep.subr.mxu0 %v2656
    %3008 = vmatpush1.msra.mxu0 %v2655
    %3009 = vmatprep.subr.mxu0 %v2664
    %3010 = vmatpush1.msra.mxu0 %v2663
    %3011 = vmatprep.subr.mxu0 %v2672
    %3012 = vmatpush1.msra.mxu0 %v2671
    %3013 = vmatprep.subr.mxu0 %v2680
    %3014 = vmatpush1.msra.mxu0 %v2679
    %3015 = vmatprep.subr.mxu0 %v2688
    %3016 = vmatpush1.msra.mxu0 %v2687
    %3017 = vmatprep.subr.mxu0 %v2696
    %3018 = vmatpush1.msra.mxu0 %v2695
    %3019 = vmatprep.subr.mxu0 %v2704
    %3020 = vmatpush1.msra.mxu0 %v2703
    %3021 = vmatprep.subr.mxu0 %v2712
    %3022 = vmatpush1.msra.mxu0 %v2711
    %3023 = vmatprep.subr.mxu0 %v2720
    %3024 = vmatpush1.msra.mxu0 %v2719
    %3025 = vmatprep.subr.mxu0 %v2728
    %3026 = vmatpush1.msra.mxu0 %v2727
    %3027 = vmatprep.subr.mxu0 %v2736
    %3028 = vmatpush1.msra.mxu0 %v2735
    %3029 = vmatprep.subr.mxu0 %v2744
    %3030 = vmatpush1.msra.mxu0 %v2743
    %3031 = vmatprep.subr.mxu0 %v2752
    %3032 = vmatpush1.msra.mxu0 %v2751
    %3033 = vmatprep.subr.mxu0 %v2760
    %3034 = vmatpush1.msra.mxu0 %v2759
    %3035 = vmatprep.subr.mxu0 %v2768
    %3036 = vmatpush1.msra.mxu0 %v2767
    %3037 = vmatprep.subr.mxu0 %v2776
    %3038 = vmatpush1.msra.mxu0 %v2775
    %3039 = vmatprep.subr.mxu0 %v2784
    %3040 = vmatpush1.msra.mxu0 %v2783
    %3041 = vmatprep.subr.mxu0 %v2792
    %3042 = vmatpush1.msra.mxu0 %v2791
    %3043 = vmatprep.subr.mxu0 %v2800
    %3044 = vmatpush1.msra.mxu0 %v2799
    %3045 = vmatprep.subr.mxu0 %v2808
    %3046 = vmatpush1.msra.mxu0 %v2807
    %3047 = vmatprep.subr.mxu0 %v2816
    %3048 = vmatpush1.msra.mxu0 %v2815
    %3049 = vmatprep.subr.mxu0 %v2824
    %3050 = vmatpush1.msra.mxu0 %v2823
    %3051 = vmatprep.subr.mxu0 %v2832
    %3052 = vmatpush1.msra.mxu0 %v2831
    %3053 = vmatprep.subr.mxu0 %v2840
    %3054 = vmatpush1.msra.mxu0 %v2839
    %3055 = vmatprep.mubr.f32.mxu0 %v2845
    %3056 = vmatmul.mubr.f32.gmra.mrb[0].mxu0 %v2844
    %v3057 = vpop.f32.mrb[0].mxu0
    %v3058 = vadd.f32 0.0, %v3057
    %v3059 = vpop.f32.mrb[0].mxu0
    %v3060 = vadd.f32 0.0, %v3059
    %3061 = vdwg.mxu0
    %3062 = vmatprep.subr.mxu0 %v2594
    %3063 = vmatpush1.msra.mxu0 %v2593
    %3064 = vmatprep.subr.mxu0 %v2602
    %3065 = vmatpush1.msra.mxu0 %v2601
    %3066 = vmatprep.subr.mxu0 %v2610
    %3067 = vmatpush1.msra.mxu0 %v2609
    %3068 = vmatprep.subr.mxu0 %v2618
    %3069 = vmatpush1.msra.mxu0 %v2617
    %3070 = vmatprep.subr.mxu0 %v2626
    %3071 = vmatpush1.msra.mxu0 %v2625
    %3072 = vmatprep.subr.mxu0 %v2634
    %3073 = vmatpush1.msra.mxu0 %v2633
    %3074 = vmatprep.subr.mxu0 %v2642
    %3075 = vmatpush1.msra.mxu0 %v2641
    %3076 = vmatprep.subr.mxu0 %v2650
    %3077 = vmatpush1.msra.mxu0 %v2649
    %3078 = vmatprep.subr.mxu0 %v2658
    %3079 = vmatpush1.msra.mxu0 %v2657
    %3080 = vmatprep.subr.mxu0 %v2666
    %3081 = vmatpush1.msra.mxu0 %v2665
    %3082 = vmatprep.subr.mxu0 %v2674
    %3083 = vmatpush1.msra.mxu0 %v2673
    %3084 = vmatprep.subr.mxu0 %v2682
    %3085 = vmatpush1.msra.mxu0 %v2681
    %3086 = vmatprep.subr.mxu0 %v2690
    %3087 = vmatpush1.msra.mxu0 %v2689
    %3088 = vmatprep.subr.mxu0 %v2698
    %3089 = vmatpush1.msra.mxu0 %v2697
    %3090 = vmatprep.subr.mxu0 %v2706
    %3091 = vmatpush1.msra.mxu0 %v2705
    %3092 = vmatprep.subr.mxu0 %v2714
    %3093 = vmatpush1.msra.mxu0 %v2713
    %3094 = vmatprep.subr.mxu0 %v2722
    %3095 = vmatpush1.msra.mxu0 %v2721
    %3096 = vmatprep.subr.mxu0 %v2730
    %3097 = vmatpush1.msra.mxu0 %v2729
    %3098 = vmatprep.subr.mxu0 %v2738
    %3099 = vmatpush1.msra.mxu0 %v2737
    %3100 = vmatprep.subr.mxu0 %v2746
    %3101 = vmatpush1.msra.mxu0 %v2745
    %3102 = vmatprep.subr.mxu0 %v2754
    %3103 = vmatpush1.msra.mxu0 %v2753
    %3104 = vmatprep.subr.mxu0 %v2762
    %3105 = vmatpush1.msra.mxu0 %v2761
    %3106 = vmatprep.subr.mxu0 %v2770
    %3107 = vmatpush1.msra.mxu0 %v2769
    %3108 = vmatprep.subr.mxu0 %v2778
    %3109 = vmatpush1.msra.mxu0 %v2777
    %3110 = vmatprep.subr.mxu0 %v2786
    %3111 = vmatpush1.msra.mxu0 %v2785
    %3112 = vmatprep.subr.mxu0 %v2794
    %3113 = vmatpush1.msra.mxu0 %v2793
    %3114 = vmatprep.subr.mxu0 %v2802
    %3115 = vmatpush1.msra.mxu0 %v2801
    %3116 = vmatprep.subr.mxu0 %v2810
    %3117 = vmatpush1.msra.mxu0 %v2809
    %3118 = vmatprep.subr.mxu0 %v2818
    %3119 = vmatpush1.msra.mxu0 %v2817
    %3120 = vmatprep.subr.mxu0 %v2826
    %3121 = vmatpush1.msra.mxu0 %v2825
    %3122 = vmatprep.subr.mxu0 %v2834
    %3123 = vmatpush1.msra.mxu0 %v2833
    %3124 = vmatprep.subr.mxu0 %v2842
    %3125 = vmatpush1.msra.mxu0 %v2841
    %3126 = vmatprep.mubr.f32.mxu0 %v2845
    %3127 = vmatmul.mubr.f32.gmra.mrb[0].mxu0 %v2844
    %v3128 = vpop.f32.mrb[0].mxu0
    %v3129 = vadd.f32 0.0, %v3128
    %v3130 = vpop.f32.mrb[0].mxu0
    %v3131 = vadd.f32 0.0, %v3130
    %3132 = vdwg.mxu0
    %v3133 = vld [vmem:[#allocation12] sm:$0xff]
    %v3134 = vld [vmem:[#allocation12 + $0x8] sm:$0xff]
    %v3135 = vld [vmem:[#allocation12 + $0x10] sm:$0xff]
    %v3136 = vld [vmem:[#allocation12 + $0x18] sm:$0xff]
    %v3137 = vld [vmem:[#allocation12 + $0x20] sm:$0xff]
    %v3138 = vld [vmem:[#allocation12 + $0x28] sm:$0xff]
    %v3139 = vld [vmem:[#allocation12 + $0x30] sm:$0xff]
    %v3140 = vld [vmem:[#allocation12 + $0x38] sm:$0xff]
    %v3141 = vld [vmem:[#allocation12 + $0x40] sm:$0xff]
    %v3142 = vld [vmem:[#allocation12 + $0x48] sm:$0xff]
    %v3143 = vld [vmem:[#allocation12 + $0x50] sm:$0xff]
    %v3144 = vld [vmem:[#allocation12 + $0x58] sm:$0xff]
    %v3145 = vld [vmem:[#allocation12 + $0x60] sm:$0xff]
    %v3146 = vld [vmem:[#allocation12 + $0x68] sm:$0xff]
    %v3147 = vld [vmem:[#allocation12 + $0x70] sm:$0xff]
    %v3148 = vld [vmem:[#allocation12 + $0x78] sm:$0xff]
    %v3149 = vld [vmem:[#allocation12 + $0x80] sm:$0xff]
    %v3150 = vld [vmem:[#allocation12 + $0x88] sm:$0xff]
    %v3151 = vld [vmem:[#allocation12 + $0x90] sm:$0xff]
    %v3152 = vld [vmem:[#allocation12 + $0x98] sm:$0xff]
    %v3153 = vld [vmem:[#allocation12 + $0xa0] sm:$0xff]
    %v3154 = vld [vmem:[#allocation12 + $0xa8] sm:$0xff]
    %v3155 = vld [vmem:[#allocation12 + $0xb0] sm:$0xff]
    %v3156 = vld [vmem:[#allocation12 + $0xb8] sm:$0xff]
    %v3157 = vld [vmem:[#allocation12 + $0xc0] sm:$0xff]
    %v3158 = vld [vmem:[#allocation12 + $0xc8] sm:$0xff]
    %v3159 = vld [vmem:[#allocation12 + $0xd0] sm:$0xff]
    %v3160 = vld [vmem:[#allocation12 + $0xd8] sm:$0xff]
    %v3161 = vld [vmem:[#allocation12 + $0xe0] sm:$0xff]
    %v3162 = vld [vmem:[#allocation12 + $0xe8] sm:$0xff]
    %v3163 = vld [vmem:[#allocation12 + $0xf0] sm:$0xff]
    %v3164 = vld [vmem:[#allocation12 + $0xf8] sm:$0xff]
    %v3165 = vld [vmem:[#allocation12 + $0x100] sm:$0xff]
    %v3166 = vld [vmem:[#allocation12 + $0x108] sm:$0xff]
    %v3167 = vld [vmem:[#allocation12 + $0x110] sm:$0xff]
    %v3168 = vld [vmem:[#allocation12 + $0x118] sm:$0xff]
    %v3169 = vld [vmem:[#allocation12 + $0x120] sm:$0xff]
    %v3170 = vld [vmem:[#allocation12 + $0x128] sm:$0xff]
    %v3171 = vld [vmem:[#allocation12 + $0x130] sm:$0xff]
    %v3172 = vld [vmem:[#allocation12 + $0x138] sm:$0xff]
    %v3173 = vld [vmem:[#allocation12 + $0x140] sm:$0xff]
    %v3174 = vld [vmem:[#allocation12 + $0x148] sm:$0xff]
    %v3175 = vld [vmem:[#allocation12 + $0x150] sm:$0xff]
    %v3176 = vld [vmem:[#allocation12 + $0x158] sm:$0xff]
    %v3177 = vld [vmem:[#allocation12 + $0x160] sm:$0xff]
    %v3178 = vld [vmem:[#allocation12 + $0x168] sm:$0xff]
    %v3179 = vld [vmem:[#allocation12 + $0x170] sm:$0xff]
    %v3180 = vld [vmem:[#allocation12 + $0x178] sm:$0xff]
    %v3181 = vld [vmem:[#allocation12 + $0x180] sm:$0xff]
    %v3182 = vld [vmem:[#allocation12 + $0x188] sm:$0xff]
    %v3183 = vld [vmem:[#allocation12 + $0x190] sm:$0xff]
    %v3184 = vld [vmem:[#allocation12 + $0x198] sm:$0xff]
    %v3185 = vld [vmem:[#allocation12 + $0x1a0] sm:$0xff]
    %v3186 = vld [vmem:[#allocation12 + $0x1a8] sm:$0xff]
    %v3187 = vld [vmem:[#allocation12 + $0x1b0] sm:$0xff]
    %v3188 = vld [vmem:[#allocation12 + $0x1b8] sm:$0xff]
    %v3189 = vld [vmem:[#allocation12 + $0x1c0] sm:$0xff]
    %v3190 = vld [vmem:[#allocation12 + $0x1c8] sm:$0xff]
    %v3191 = vld [vmem:[#allocation12 + $0x1d0] sm:$0xff]
    %v3192 = vld [vmem:[#allocation12 + $0x1d8] sm:$0xff]
    %v3193 = vld [vmem:[#allocation12 + $0x1e0] sm:$0xff]
    %v3194 = vld [vmem:[#allocation12 + $0x1e8] sm:$0xff]
    %v3195 = vld [vmem:[#allocation12 + $0x1f0] sm:$0xff]
    %v3196 = vld [vmem:[#allocation12 + $0x1f8] sm:$0xff]
    %v3197 = vld [vmem:[#allocation12 + $0x200] sm:$0xff]
    %v3198 = vld [vmem:[#allocation12 + $0x208] sm:$0xff]
    %v3199 = vld [vmem:[#allocation12 + $0x210] sm:$0xff]
    %v3200 = vld [vmem:[#allocation12 + $0x218] sm:$0xff]
    %v3201 = vld [vmem:[#allocation12 + $0x220] sm:$0xff]
    %v3202 = vld [vmem:[#allocation12 + $0x228] sm:$0xff]
    %v3203 = vld [vmem:[#allocation12 + $0x230] sm:$0xff]
    %v3204 = vld [vmem:[#allocation12 + $0x238] sm:$0xff]
    %v3205 = vld [vmem:[#allocation12 + $0x240] sm:$0xff]
    %v3206 = vld [vmem:[#allocation12 + $0x248] sm:$0xff]
    %v3207 = vld [vmem:[#allocation12 + $0x250] sm:$0xff]
    %v3208 = vld [vmem:[#allocation12 + $0x258] sm:$0xff]
    %v3209 = vld [vmem:[#allocation12 + $0x260] sm:$0xff]
    %v3210 = vld [vmem:[#allocation12 + $0x268] sm:$0xff]
    %v3211 = vld [vmem:[#allocation12 + $0x270] sm:$0xff]
    %v3212 = vld [vmem:[#allocation12 + $0x278] sm:$0xff]
    %v3213 = vld [vmem:[#allocation12 + $0x280] sm:$0xff]
    %v3214 = vld [vmem:[#allocation12 + $0x288] sm:$0xff]
    %v3215 = vld [vmem:[#allocation12 + $0x290] sm:$0xff]
    %v3216 = vld [vmem:[#allocation12 + $0x298] sm:$0xff]
    %v3217 = vld [vmem:[#allocation12 + $0x2a0] sm:$0xff]
    %v3218 = vld [vmem:[#allocation12 + $0x2a8] sm:$0xff]
    %v3219 = vld [vmem:[#allocation12 + $0x2b0] sm:$0xff]
    %v3220 = vld [vmem:[#allocation12 + $0x2b8] sm:$0xff]
    %v3221 = vld [vmem:[#allocation12 + $0x2c0] sm:$0xff]
    %v3222 = vld [vmem:[#allocation12 + $0x2c8] sm:$0xff]
    %v3223 = vld [vmem:[#allocation12 + $0x2d0] sm:$0xff]
    %v3224 = vld [vmem:[#allocation12 + $0x2d8] sm:$0xff]
    %v3225 = vld [vmem:[#allocation12 + $0x2e0] sm:$0xff]
    %v3226 = vld [vmem:[#allocation12 + $0x2e8] sm:$0xff]
    %v3227 = vld [vmem:[#allocation12 + $0x2f0] sm:$0xff]
    %v3228 = vld [vmem:[#allocation12 + $0x2f8] sm:$0xff]
    %v3229 = vld [vmem:[#allocation12 + $0x300] sm:$0xff]
    %v3230 = vld [vmem:[#allocation12 + $0x308] sm:$0xff]
    %v3231 = vld [vmem:[#allocation12 + $0x310] sm:$0xff]
    %v3232 = vld [vmem:[#allocation12 + $0x318] sm:$0xff]
    %v3233 = vld [vmem:[#allocation12 + $0x320] sm:$0xff]
    %v3234 = vld [vmem:[#allocation12 + $0x328] sm:$0xff]
    %v3235 = vld [vmem:[#allocation12 + $0x330] sm:$0xff]
    %v3236 = vld [vmem:[#allocation12 + $0x338] sm:$0xff]
    %v3237 = vld [vmem:[#allocation12 + $0x340] sm:$0xff]
    %v3238 = vld [vmem:[#allocation12 + $0x348] sm:$0xff]
    %v3239 = vld [vmem:[#allocation12 + $0x350] sm:$0xff]
    %v3240 = vld [vmem:[#allocation12 + $0x358] sm:$0xff]
    %v3241 = vld [vmem:[#allocation12 + $0x360] sm:$0xff]
    %v3242 = vld [vmem:[#allocation12 + $0x368] sm:$0xff]
    %v3243 = vld [vmem:[#allocation12 + $0x370] sm:$0xff]
    %v3244 = vld [vmem:[#allocation12 + $0x378] sm:$0xff]
    %v3245 = vld [vmem:[#allocation12 + $0x380] sm:$0xff]
    %v3246 = vld [vmem:[#allocation12 + $0x388] sm:$0xff]
    %v3247 = vld [vmem:[#allocation12 + $0x390] sm:$0xff]
    %v3248 = vld [vmem:[#allocation12 + $0x398] sm:$0xff]
    %v3249 = vld [vmem:[#allocation12 + $0x3a0] sm:$0xff]
    %v3250 = vld [vmem:[#allocation12 + $0x3a8] sm:$0xff]
    %v3251 = vld [vmem:[#allocation12 + $0x3b0] sm:$0xff]
    %v3252 = vld [vmem:[#allocation12 + $0x3b8] sm:$0xff]
    %v3253 = vld [vmem:[#allocation12 + $0x3c0] sm:$0xff]
    %v3254 = vld [vmem:[#allocation12 + $0x3c8] sm:$0xff]
    %v3255 = vld [vmem:[#allocation12 + $0x3d0] sm:$0xff]
    %v3256 = vld [vmem:[#allocation12 + $0x3d8] sm:$0xff]
    %v3257 = vld [vmem:[#allocation12 + $0x3e0] sm:$0xff]
    %v3258 = vld [vmem:[#allocation12 + $0x3e8] sm:$0xff]
    %v3259 = vld [vmem:[#allocation12 + $0x3f0] sm:$0xff]
    %v3260 = vld [vmem:[#allocation12 + $0x3f8] sm:$0xff]
    %v3261 = vld [vmem:[#allocation12 + $0x400] sm:$0xff]
    %v3262 = vld [vmem:[#allocation12 + $0x408] sm:$0xff]
    %v3263 = vld [vmem:[#allocation12 + $0x410] sm:$0xff]
    %v3264 = vld [vmem:[#allocation12 + $0x418] sm:$0xff]
    %v3265 = vld [vmem:[#allocation12 + $0x420] sm:$0xff]
    %v3266 = vld [vmem:[#allocation12 + $0x428] sm:$0xff]
    %v3267 = vld [vmem:[#allocation12 + $0x430] sm:$0xff]
    %v3268 = vld [vmem:[#allocation12 + $0x438] sm:$0xff]
    %v3269 = vld [vmem:[#allocation12 + $0x440] sm:$0xff]
    %v3270 = vld [vmem:[#allocation12 + $0x448] sm:$0xff]
    %v3271 = vld [vmem:[#allocation12 + $0x450] sm:$0xff]
    %v3272 = vld [vmem:[#allocation12 + $0x458] sm:$0xff]
    %v3273 = vld [vmem:[#allocation12 + $0x460] sm:$0xff]
    %v3274 = vld [vmem:[#allocation12 + $0x468] sm:$0xff]
    %v3275 = vld [vmem:[#allocation12 + $0x470] sm:$0xff]
    %v3276 = vld [vmem:[#allocation12 + $0x478] sm:$0xff]
    %v3277 = vld [vmem:[#allocation12 + $0x480] sm:$0xff]
    %v3278 = vld [vmem:[#allocation12 + $0x488] sm:$0xff]
    %v3279 = vld [vmem:[#allocation12 + $0x490] sm:$0xff]
    %v3280 = vld [vmem:[#allocation12 + $0x498] sm:$0xff]
    %v3281 = vld [vmem:[#allocation12 + $0x4a0] sm:$0xff]
    %v3282 = vld [vmem:[#allocation12 + $0x4a8] sm:$0xff]
    %v3283 = vld [vmem:[#allocation12 + $0x4b0] sm:$0xff]
    %v3284 = vld [vmem:[#allocation12 + $0x4b8] sm:$0xff]
    %v3285 = vld [vmem:[#allocation12 + $0x4c0] sm:$0xff]
    %v3286 = vld [vmem:[#allocation12 + $0x4c8] sm:$0xff]
    %v3287 = vld [vmem:[#allocation12 + $0x4d0] sm:$0xff]
    %v3288 = vld [vmem:[#allocation12 + $0x4d8] sm:$0xff]
    %v3289 = vld [vmem:[#allocation12 + $0x4e0] sm:$0xff]
    %v3290 = vld [vmem:[#allocation12 + $0x4e8] sm:$0xff]
    %v3291 = vld [vmem:[#allocation12 + $0x4f0] sm:$0xff]
    %v3292 = vld [vmem:[#allocation12 + $0x4f8] sm:$0xff]
    %v3293 = vld [vmem:[#allocation12 + $0x500] sm:$0xff]
    %v3294 = vld [vmem:[#allocation12 + $0x508] sm:$0xff]
    %v3295 = vld [vmem:[#allocation12 + $0x510] sm:$0xff]
    %v3296 = vld [vmem:[#allocation12 + $0x518] sm:$0xff]
    %v3297 = vld [vmem:[#allocation12 + $0x520] sm:$0xff]
    %v3298 = vld [vmem:[#allocation12 + $0x528] sm:$0xff]
    %v3299 = vld [vmem:[#allocation12 + $0x530] sm:$0xff]
    %v3300 = vld [vmem:[#allocation12 + $0x538] sm:$0xff]
    %v3301 = vld [vmem:[#allocation12 + $0x540] sm:$0xff]
    %v3302 = vld [vmem:[#allocation12 + $0x548] sm:$0xff]
    %v3303 = vld [vmem:[#allocation12 + $0x550] sm:$0xff]
    %v3304 = vld [vmem:[#allocation12 + $0x558] sm:$0xff]
    %v3305 = vld [vmem:[#allocation12 + $0x560] sm:$0xff]
    %v3306 = vld [vmem:[#allocation12 + $0x568] sm:$0xff]
    %v3307 = vld [vmem:[#allocation12 + $0x570] sm:$0xff]
    %v3308 = vld [vmem:[#allocation12 + $0x578] sm:$0xff]
    %v3309 = vld [vmem:[#allocation12 + $0x580] sm:$0xff]
    %v3310 = vld [vmem:[#allocation12 + $0x588] sm:$0xff]
    %v3311 = vld [vmem:[#allocation12 + $0x590] sm:$0xff]
    %v3312 = vld [vmem:[#allocation12 + $0x598] sm:$0xff]
    %v3313 = vld [vmem:[#allocation12 + $0x5a0] sm:$0xff]
    %v3314 = vld [vmem:[#allocation12 + $0x5a8] sm:$0xff]
    %v3315 = vld [vmem:[#allocation12 + $0x5b0] sm:$0xff]
    %v3316 = vld [vmem:[#allocation12 + $0x5b8] sm:$0xff]
    %v3317 = vld [vmem:[#allocation12 + $0x5c0] sm:$0xff]
    %v3318 = vld [vmem:[#allocation12 + $0x5c8] sm:$0xff]
    %v3319 = vld [vmem:[#allocation12 + $0x5d0] sm:$0xff]
    %v3320 = vld [vmem:[#allocation12 + $0x5d8] sm:$0xff]
    %v3321 = vld [vmem:[#allocation12 + $0x5e0] sm:$0xff]
    %v3322 = vld [vmem:[#allocation12 + $0x5e8] sm:$0xff]
    %v3323 = vld [vmem:[#allocation12 + $0x5f0] sm:$0xff]
    %v3324 = vld [vmem:[#allocation12 + $0x5f8] sm:$0xff]
    %v3325 = vld [vmem:[#allocation12 + $0x600] sm:$0xff]
    %v3326 = vld [vmem:[#allocation12 + $0x608] sm:$0xff]
    %v3327 = vld [vmem:[#allocation12 + $0x610] sm:$0xff]
    %v3328 = vld [vmem:[#allocation12 + $0x618] sm:$0xff]
    %v3329 = vld [vmem:[#allocation12 + $0x620] sm:$0xff]
    %v3330 = vld [vmem:[#allocation12 + $0x628] sm:$0xff]
    %v3331 = vld [vmem:[#allocation12 + $0x630] sm:$0xff]
    %v3332 = vld [vmem:[#allocation12 + $0x638] sm:$0xff]
    %v3333 = vld [vmem:[#allocation12 + $0x640] sm:$0xff]
    %v3334 = vld [vmem:[#allocation12 + $0x648] sm:$0xff]
    %v3335 = vld [vmem:[#allocation12 + $0x650] sm:$0xff]
    %v3336 = vld [vmem:[#allocation12 + $0x658] sm:$0xff]
    %v3337 = vld [vmem:[#allocation12 + $0x660] sm:$0xff]
    %v3338 = vld [vmem:[#allocation12 + $0x668] sm:$0xff]
    %v3339 = vld [vmem:[#allocation12 + $0x670] sm:$0xff]
    %v3340 = vld [vmem:[#allocation12 + $0x678] sm:$0xff]
    %v3341 = vld [vmem:[#allocation12 + $0x680] sm:$0xff]
    %v3342 = vld [vmem:[#allocation12 + $0x688] sm:$0xff]
    %v3343 = vld [vmem:[#allocation12 + $0x690] sm:$0xff]
    %v3344 = vld [vmem:[#allocation12 + $0x698] sm:$0xff]
    %v3345 = vld [vmem:[#allocation12 + $0x6a0] sm:$0xff]
    %v3346 = vld [vmem:[#allocation12 + $0x6a8] sm:$0xff]
    %v3347 = vld [vmem:[#allocation12 + $0x6b0] sm:$0xff]
    %v3348 = vld [vmem:[#allocation12 + $0x6b8] sm:$0xff]
    %v3349 = vld [vmem:[#allocation12 + $0x6c0] sm:$0xff]
    %v3350 = vld [vmem:[#allocation12 + $0x6c8] sm:$0xff]
    %v3351 = vld [vmem:[#allocation12 + $0x6d0] sm:$0xff]
    %v3352 = vld [vmem:[#allocation12 + $0x6d8] sm:$0xff]
    %v3353 = vld [vmem:[#allocation12 + $0x6e0] sm:$0xff]
    %v3354 = vld [vmem:[#allocation12 + $0x6e8] sm:$0xff]
    %v3355 = vld [vmem:[#allocation12 + $0x6f0] sm:$0xff]
    %v3356 = vld [vmem:[#allocation12 + $0x6f8] sm:$0xff]
    %v3357 = vld [vmem:[#allocation12 + $0x700] sm:$0xff]
    %v3358 = vld [vmem:[#allocation12 + $0x708] sm:$0xff]
    %v3359 = vld [vmem:[#allocation12 + $0x710] sm:$0xff]
    %v3360 = vld [vmem:[#allocation12 + $0x718] sm:$0xff]
    %v3361 = vld [vmem:[#allocation12 + $0x720] sm:$0xff]
    %v3362 = vld [vmem:[#allocation12 + $0x728] sm:$0xff]
    %v3363 = vld [vmem:[#allocation12 + $0x730] sm:$0xff]
    %v3364 = vld [vmem:[#allocation12 + $0x738] sm:$0xff]
    %v3365 = vld [vmem:[#allocation12 + $0x740] sm:$0xff]
    %v3366 = vld [vmem:[#allocation12 + $0x748] sm:$0xff]
    %v3367 = vld [vmem:[#allocation12 + $0x750] sm:$0xff]
    %v3368 = vld [vmem:[#allocation12 + $0x758] sm:$0xff]
    %v3369 = vld [vmem:[#allocation12 + $0x760] sm:$0xff]
    %v3370 = vld [vmem:[#allocation12 + $0x768] sm:$0xff]
    %v3371 = vld [vmem:[#allocation12 + $0x770] sm:$0xff]
    %v3372 = vld [vmem:[#allocation12 + $0x778] sm:$0xff]
    %v3373 = vld [vmem:[#allocation12 + $0x780] sm:$0xff]
    %v3374 = vld [vmem:[#allocation12 + $0x788] sm:$0xff]
    %v3375 = vld [vmem:[#allocation12 + $0x790] sm:$0xff]
    %v3376 = vld [vmem:[#allocation12 + $0x798] sm:$0xff]
    %v3377 = vld [vmem:[#allocation12 + $0x7a0] sm:$0xff]
    %v3378 = vld [vmem:[#allocation12 + $0x7a8] sm:$0xff]
    %v3379 = vld [vmem:[#allocation12 + $0x7b0] sm:$0xff]
    %v3380 = vld [vmem:[#allocation12 + $0x7b8] sm:$0xff]
    %v3381 = vld [vmem:[#allocation12 + $0x7c0] sm:$0xff]
    %v3382 = vld [vmem:[#allocation12 + $0x7c8] sm:$0xff]
    %v3383 = vld [vmem:[#allocation12 + $0x7d0] sm:$0xff]
    %v3384 = vld [vmem:[#allocation12 + $0x7d8] sm:$0xff]
    %v3385 = vld [vmem:[#allocation12 + $0x7e0] sm:$0xff]
    %v3386 = vld [vmem:[#allocation12 + $0x7e8] sm:$0xff]
    %v3387 = vld [vmem:[#allocation12 + $0x7f0] sm:$0xff]
    %v3388 = vld [vmem:[#allocation12 + $0x7f8] sm:$0xff]
    %3389 = vmatprep.subr.mxu0 %v3134
    %3390 = vmatpush1.msra.mxu0 %v3133
    %3391 = vmatprep.subr.mxu0 %v3142
    %3392 = vmatpush1.msra.mxu0 %v3141
    %3393 = vmatprep.subr.mxu0 %v3150
    %3394 = vmatpush1.msra.mxu0 %v3149
    %3395 = vmatprep.subr.mxu0 %v3158
    %3396 = vmatpush1.msra.mxu0 %v3157
    %3397 = vmatprep.subr.mxu0 %v3166
    %3398 = vmatpush1.msra.mxu0 %v3165
    %3399 = vmatprep.subr.mxu0 %v3174
    %3400 = vmatpush1.msra.mxu0 %v3173
    %3401 = vmatprep.subr.mxu0 %v3182
    %3402 = vmatpush1.msra.mxu0 %v3181
    %3403 = vmatprep.subr.mxu0 %v3190
    %3404 = vmatpush1.msra.mxu0 %v3189
    %3405 = vmatprep.subr.mxu0 %v3198
    %3406 = vmatpush1.msra.mxu0 %v3197
    %3407 = vmatprep.subr.mxu0 %v3206
    %3408 = vmatpush1.msra.mxu0 %v3205
    %3409 = vmatprep.subr.mxu0 %v3214
    %3410 = vmatpush1.msra.mxu0 %v3213
    %3411 = vmatprep.subr.mxu0 %v3222
    %3412 = vmatpush1.msra.mxu0 %v3221
    %3413 = vmatprep.subr.mxu0 %v3230
    %3414 = vmatpush1.msra.mxu0 %v3229
    %3415 = vmatprep.subr.mxu0 %v3238
    %3416 = vmatpush1.msra.mxu0 %v3237
    %3417 = vmatprep.subr.mxu0 %v3246
    %3418 = vmatpush1.msra.mxu0 %v3245
    %3419 = vmatprep.subr.mxu0 %v3254
    %3420 = vmatpush1.msra.mxu0 %v3253
    %3421 = vmatprep.subr.mxu0 %v3262
    %3422 = vmatpush1.msra.mxu0 %v3261
    %3423 = vmatprep.subr.mxu0 %v3270
    %3424 = vmatpush1.msra.mxu0 %v3269
    %3425 = vmatprep.subr.mxu0 %v3278
    %3426 = vmatpush1.msra.mxu0 %v3277
    %3427 = vmatprep.subr.mxu0 %v3286
    %3428 = vmatpush1.msra.mxu0 %v3285
    %3429 = vmatprep.subr.mxu0 %v3294
    %3430 = vmatpush1.msra.mxu0 %v3293
    %3431 = vmatprep.subr.mxu0 %v3302
    %3432 = vmatpush1.msra.mxu0 %v3301
    %3433 = vmatprep.subr.mxu0 %v3310
    %3434 = vmatpush1.msra.mxu0 %v3309
    %3435 = vmatprep.subr.mxu0 %v3318
    %3436 = vmatpush1.msra.mxu0 %v3317
    %3437 = vmatprep.subr.mxu0 %v3326
    %3438 = vmatpush1.msra.mxu0 %v3325
    %3439 = vmatprep.subr.mxu0 %v3334
    %3440 = vmatpush1.msra.mxu0 %v3333
    %3441 = vmatprep.subr.mxu0 %v3342
    %3442 = vmatpush1.msra.mxu0 %v3341
    %3443 = vmatprep.subr.mxu0 %v3350
    %3444 = vmatpush1.msra.mxu0 %v3349
    %3445 = vmatprep.subr.mxu0 %v3358
    %3446 = vmatpush1.msra.mxu0 %v3357
    %3447 = vmatprep.subr.mxu0 %v3366
    %3448 = vmatpush1.msra.mxu0 %v3365
    %3449 = vmatprep.subr.mxu0 %v3374
    %3450 = vmatpush1.msra.mxu0 %v3373
    %3451 = vmatprep.subr.mxu0 %v3382
    %3452 = vmatpush1.msra.mxu0 %v3381
    %3453 = vmatprep.mubr.f32.mxu0 %v2582
    %3454 = vmatmul.mubr.f32.gmra.mrb[0].mxu0 %v2581
    %v3455 = vpop.f32.mrb[0].mxu0
    %v3456 = vadd.f32 %v2916, %v3455
    %v3457 = vpop.f32.mrb[0].mxu0
    %v3458 = vadd.f32 %v2918, %v3457
    %3459 = vdwg.mxu0
    %3460 = vmatprep.subr.mxu0 %v3136
    %3461 = vmatpush1.msra.mxu0 %v3135
    %3462 = vmatprep.subr.mxu0 %v3144
    %3463 = vmatpush1.msra.mxu0 %v3143
    %3464 = vmatprep.subr.mxu0 %v3152
    %3465 = vmatpush1.msra.mxu0 %v3151
    %3466 = vmatprep.subr.mxu0 %v3160
    %3467 = vmatpush1.msra.mxu0 %v3159
    %3468 = vmatprep.subr.mxu0 %v3168
    %3469 = vmatpush1.msra.mxu0 %v3167
    %3470 = vmatprep.subr.mxu0 %v3176
    %3471 = vmatpush1.msra.mxu0 %v3175
    %3472 = vmatprep.subr.mxu0 %v3184
    %3473 = vmatpush1.msra.mxu0 %v3183
    %3474 = vmatprep.subr.mxu0 %v3192
    %3475 = vmatpush1.msra.mxu0 %v3191
    %3476 = vmatprep.subr.mxu0 %v3200
    %3477 = vmatpush1.msra.mxu0 %v3199
    %3478 = vmatprep.subr.mxu0 %v3208
    %3479 = vmatpush1.msra.mxu0 %v3207
    %3480 = vmatprep.subr.mxu0 %v3216
    %3481 = vmatpush1.msra.mxu0 %v3215
    %3482 = vmatprep.subr.mxu0 %v3224
    %3483 = vmatpush1.msra.mxu0 %v3223
    %3484 = vmatprep.subr.mxu0 %v3232
    %3485 = vmatpush1.msra.mxu0 %v3231
    %3486 = vmatprep.subr.mxu0 %v3240
    %3487 = vmatpush1.msra.mxu0 %v3239
    %3488 = vmatprep.subr.mxu0 %v3248
    %3489 = vmatpush1.msra.mxu0 %v3247
    %3490 = vmatprep.subr.mxu0 %v3256
    %3491 = vmatpush1.msra.mxu0 %v3255
    %3492 = vmatprep.subr.mxu0 %v3264
    %3493 = vmatpush1.msra.mxu0 %v3263
    %3494 = vmatprep.subr.mxu0 %v3272
    %3495 = vmatpush1.msra.mxu0 %v3271
    %3496 = vmatprep.subr.mxu0 %v3280
    %3497 = vmatpush1.msra.mxu0 %v3279
    %3498 = vmatprep.subr.mxu0 %v3288
    %3499 = vmatpush1.msra.mxu0 %v3287
    %3500 = vmatprep.subr.mxu0 %v3296
    %3501 = vmatpush1.msra.mxu0 %v3295
    %3502 = vmatprep.subr.mxu0 %v3304
    %3503 = vmatpush1.msra.mxu0 %v3303
    %3504 = vmatprep.subr.mxu0 %v3312
    %3505 = vmatpush1.msra.mxu0 %v3311
    %3506 = vmatprep.subr.mxu0 %v3320
    %3507 = vmatpush1.msra.mxu0 %v3319
    %3508 = vmatprep.subr.mxu0 %v3328
    %3509 = vmatpush1.msra.mxu0 %v3327
    %3510 = vmatprep.subr.mxu0 %v3336
    %3511 = vmatpush1.msra.mxu0 %v3335
    %3512 = vmatprep.subr.mxu0 %v3344
    %3513 = vmatpush1.msra.mxu0 %v3343
    %3514 = vmatprep.subr.mxu0 %v3352
    %3515 = vmatpush1.msra.mxu0 %v3351
    %3516 = vmatprep.subr.mxu0 %v3360
    %3517 = vmatpush1.msra.mxu0 %v3359
    %3518 = vmatprep.subr.mxu0 %v3368
    %3519 = vmatpush1.msra.mxu0 %v3367
    %3520 = vmatprep.subr.mxu0 %v3376
    %3521 = vmatpush1.msra.mxu0 %v3375
    %3522 = vmatprep.subr.mxu0 %v3384
    %3523 = vmatpush1.msra.mxu0 %v3383
    %3524 = vmatprep.mubr.f32.mxu0 %v2582
    %3525 = vmatmul.mubr.f32.gmra.mrb[0].mxu0 %v2581
    %v3526 = vpop.f32.mrb[0].mxu0
    %v3527 = vadd.f32 %v2987, %v3526
    %v3528 = vpop.f32.mrb[0].mxu0
    %v3529 = vadd.f32 %v2989, %v3528
    %3530 = vdwg.mxu0
    %3531 = vmatprep.subr.mxu0 %v3138
    %3532 = vmatpush1.msra.mxu0 %v3137
    %3533 = vmatprep.subr.mxu0 %v3146
    %3534 = vmatpush1.msra.mxu0 %v3145
    %3535 = vmatprep.subr.mxu0 %v3154
    %3536 = vmatpush1.msra.mxu0 %v3153
    %3537 = vmatprep.subr.mxu0 %v3162
    %3538 = vmatpush1.msra.mxu0 %v3161
    %3539 = vmatprep.subr.mxu0 %v3170
    %3540 = vmatpush1.msra.mxu0 %v3169
    %3541 = vmatprep.subr.mxu0 %v3178
    %3542 = vmatpush1.msra.mxu0 %v3177
    %3543 = vmatprep.subr.mxu0 %v3186
    %3544 = vmatpush1.msra.mxu0 %v3185
    %3545 = vmatprep.subr.mxu0 %v3194
    %3546 = vmatpush1.msra.mxu0 %v3193
    %3547 = vmatprep.subr.mxu0 %v3202
    %3548 = vmatpush1.msra.mxu0 %v3201
    %3549 = vmatprep.subr.mxu0 %v3210
    %3550 = vmatpush1.msra.mxu0 %v3209
    %3551 = vmatprep.subr.mxu0 %v3218
    %3552 = vmatpush1.msra.mxu0 %v3217
    %3553 = vmatprep.subr.mxu0 %v3226
    %3554 = vmatpush1.msra.mxu0 %v3225
    %3555 = vmatprep.subr.mxu0 %v3234
    %3556 = vmatpush1.msra.mxu0 %v3233
    %3557 = vmatprep.subr.mxu0 %v3242
    %3558 = vmatpush1.msra.mxu0 %v3241
    %3559 = vmatprep.subr.mxu0 %v3250
    %3560 = vmatpush1.msra.mxu0 %v3249
    %3561 = vmatprep.subr.mxu0 %v3258
    %3562 = vmatpush1.msra.mxu0 %v3257
    %3563 = vmatprep.subr.mxu0 %v3266
    %3564 = vmatpush1.msra.mxu0 %v3265
    %3565 = vmatprep.subr.mxu0 %v3274
    %3566 = vmatpush1.msra.mxu0 %v3273
    %3567 = vmatprep.subr.mxu0 %v3282
    %3568 = vmatpush1.msra.mxu0 %v3281
    %3569 = vmatprep.subr.mxu0 %v3290
    %3570 = vmatpush1.msra.mxu0 %v3289
    %3571 = vmatprep.subr.mxu0 %v3298
    %3572 = vmatpush1.msra.mxu0 %v3297
    %3573 = vmatprep.subr.mxu0 %v3306
    %3574 = vmatpush1.msra.mxu0 %v3305
    %3575 = vmatprep.subr.mxu0 %v3314
    %3576 = vmatpush1.msra.mxu0 %v3313
    %3577 = vmatprep.subr.mxu0 %v3322
    %3578 = vmatpush1.msra.mxu0 %v3321
    %3579 = vmatprep.subr.mxu0 %v3330
    %3580 = vmatpush1.msra.mxu0 %v3329
    %3581 = vmatprep.subr.mxu0 %v3338
    %3582 = vmatpush1.msra.mxu0 %v3337
    %3583 = vmatprep.subr.mxu0 %v3346
    %3584 = vmatpush1.msra.mxu0 %v3345
    %3585 = vmatprep.subr.mxu0 %v3354
    %3586 = vmatpush1.msra.mxu0 %v3353
    %3587 = vmatprep.subr.mxu0 %v3362
    %3588 = vmatpush1.msra.mxu0 %v3361
    %3589 = vmatprep.subr.mxu0 %v3370
    %3590 = vmatpush1.msra.mxu0 %v3369
    %3591 = vmatprep.subr.mxu0 %v3378
    %3592 = vmatpush1.msra.mxu0 %v3377
    %3593 = vmatprep.subr.mxu0 %v3386
    %3594 = vmatpush1.msra.mxu0 %v3385
    %3595 = vmatprep.mubr.f32.mxu0 %v2582
    %3596 = vmatmul.mubr.f32.gmra.mrb[0].mxu0 %v2581
    %v3597 = vpop.f32.mrb[0].mxu0
    %v3598 = vadd.f32 %v3058, %v3597
    %v3599 = vpop.f32.mrb[0].mxu0
    %v3600 = vadd.f32 %v3060, %v3599
    %3601 = vdwg.mxu0
    %3602 = vmatprep.subr.mxu0 %v3140
    %3603 = vmatpush1.msra.mxu0 %v3139
    %3604 = vmatprep.subr.mxu0 %v3148
    %3605 = vmatpush1.msra.mxu0 %v3147
    %3606 = vmatprep.subr.mxu0 %v3156
    %3607 = vmatpush1.msra.mxu0 %v3155
    %3608 = vmatprep.subr.mxu0 %v3164
    %3609 = vmatpush1.msra.mxu0 %v3163
    %3610 = vmatprep.subr.mxu0 %v3172
    %3611 = vmatpush1.msra.mxu0 %v3171
    %3612 = vmatprep.subr.mxu0 %v3180
    %3613 = vmatpush1.msra.mxu0 %v3179
    %3614 = vmatprep.subr.mxu0 %v3188
    %3615 = vmatpush1.msra.mxu0 %v3187
    %3616 = vmatprep.subr.mxu0 %v3196
    %3617 = vmatpush1.msra.mxu0 %v3195
    %3618 = vmatprep.subr.mxu0 %v3204
    %3619 = vmatpush1.msra.mxu0 %v3203
    %3620 = vmatprep.subr.mxu0 %v3212
    %3621 = vmatpush1.msra.mxu0 %v3211
    %3622 = vmatprep.subr.mxu0 %v3220
    %3623 = vmatpush1.msra.mxu0 %v3219
    %3624 = vmatprep.subr.mxu0 %v3228
    %3625 = vmatpush1.msra.mxu0 %v3227
    %3626 = vmatprep.subr.mxu0 %v3236
    %3627 = vmatpush1.msra.mxu0 %v3235
    %3628 = vmatprep.subr.mxu0 %v3244
    %3629 = vmatpush1.msra.mxu0 %v3243
    %3630 = vmatprep.subr.mxu0 %v3252
    %3631 = vmatpush1.msra.mxu0 %v3251
    %3632 = vmatprep.subr.mxu0 %v3260
    %3633 = vmatpush1.msra.mxu0 %v3259
    %3634 = vmatprep.subr.mxu0 %v3268
    %3635 = vmatpush1.msra.mxu0 %v3267
    %3636 = vmatprep.subr.mxu0 %v3276
    %3637 = vmatpush1.msra.mxu0 %v3275
    %3638 = vmatprep.subr.mxu0 %v3284
    %3639 = vmatpush1.msra.mxu0 %v3283
    %3640 = vmatprep.subr.mxu0 %v3292
    %3641 = vmatpush1.msra.mxu0 %v3291
    %3642 = vmatprep.subr.mxu0 %v3300
    %3643 = vmatpush1.msra.mxu0 %v3299
    %3644 = vmatprep.subr.mxu0 %v3308
    %3645 = vmatpush1.msra.mxu0 %v3307
    %3646 = vmatprep.subr.mxu0 %v3316
    %3647 = vmatpush1.msra.mxu0 %v3315
    %3648 = vmatprep.subr.mxu0 %v3324
    %3649 = vmatpush1.msra.mxu0 %v3323
    %3650 = vmatprep.subr.mxu0 %v3332
    %3651 = vmatpush1.msra.mxu0 %v3331
    %3652 = vmatprep.subr.mxu0 %v3340
    %3653 = vmatpush1.msra.mxu0 %v3339
    %3654 = vmatprep.subr.mxu0 %v3348
    %3655 = vmatpush1.msra.mxu0 %v3347
    %3656 = vmatprep.subr.mxu0 %v3356
    %3657 = vmatpush1.msra.mxu0 %v3355
    %3658 = vmatprep.subr.mxu0 %v3364
    %3659 = vmatpush1.msra.mxu0 %v3363
    %3660 = vmatprep.subr.mxu0 %v3372
    %3661 = vmatpush1.msra.mxu0 %v3371
    %3662 = vmatprep.subr.mxu0 %v3380
    %3663 = vmatpush1.msra.mxu0 %v3379
    %3664 = vmatprep.subr.mxu0 %v3388
    %3665 = vmatpush1.msra.mxu0 %v3387
    %3666 = vmatprep.mubr.f32.mxu0 %v2582
    %3667 = vmatmul.mubr.f32.gmra.mrb[0].mxu0 %v2581
    %v3668 = vpop.f32.mrb[0].mxu0
    %v3669 = vadd.f32 %v3129, %v3668
    %v3670 = vpop.f32.mrb[0].mxu0
    %v3671 = vadd.f32 %v3131, %v3670
    %3672 = vdwg.mxu0
    %v3673 = vld [vmem:[#allocation15] sm:$0xff]
    %v3675 = vlaneseq
    %v3676 = vshrl.u32 %v3675, 7
    %v3677 = vsub.s32 0, %v3676
    %v3678 = vrot.slane %v3673, %v3677
    %v3679 = vlaneseq
    %v3680 = vshrl.u32 %v3679, 7
    %v3681 = vsub.s32 1, %v3680
    %v3682 = vrot.slane %v3673, %v3681
    %v3683 = vlaneseq
    %v3684 = vshrl.u32 %v3683, 7
    %v3685 = vsub.s32 2, %v3684
    %v3686 = vrot.slane %v3673, %v3685
    %v3687 = vlaneseq
    %v3688 = vshrl.u32 %v3687, 7
    %v3689 = vsub.s32 3, %v3688
    %v3690 = vrot.slane %v3673, %v3689
    %v3691 = vlaneseq
    %v3692 = vshrl.u32 %v3691, 7
    %v3693 = vsub.s32 4, %v3692
    %v3694 = vrot.slane %v3673, %v3693
    %v3695 = vlaneseq
    %v3696 = vshrl.u32 %v3695, 7
    %v3697 = vsub.s32 5, %v3696
    %v3698 = vrot.slane %v3673, %v3697
    %v3699 = vlaneseq
    %v3700 = vshrl.u32 %v3699, 7
    %v3701 = vsub.s32 6, %v3700
    %v3702 = vrot.slane %v3673, %v3701
    %v3703 = vlaneseq
    %v3704 = vshrl.u32 %v3703, 7
    %v3705 = vsub.s32 7, %v3704
    %v3706 = vrot.slane %v3673, %v3705
    %v3715 = vadd.f32 %v3456, %v3678
    %v3716 = vadd.f32 %v3458, %v3682
    %v3717 = vadd.f32 %v3527, %v3686
    %v3718 = vadd.f32 %v3529, %v3690
    %v3719 = vadd.f32 %v3598, %v3694
    %v3720 = vadd.f32 %v3600, %v3698
    %v3721 = vadd.f32 %v3669, %v3702
    %v3722 = vadd.f32 %v3671, %v3706
    %v3723 = vmul.f32 %v3715, 0.5
    %v3724 = vmul.f32 %v3716, 0.5
    %v3725 = vtanh.pop %v3723
    %v3726 = vtanh.pop %v3724
    %v3727 = vadd.f32 %v3725, 1.0
    %v3728 = vadd.f32 %v3726, 1.0
    %v3729 = vmul.f32 %v3727, 0.5
    %v3730 = vmul.f32 %v3728, 0.5
    %v3731 = vmul.f32 %v3717, 0.5
    %v3732 = vmul.f32 %v3718, 0.5
    %v3733 = vtanh.pop %v3731
    %v3734 = vtanh.pop %v3732
    %v3735 = vadd.f32 %v3733, 1.0
    %v3736 = vadd.f32 %v3734, 1.0
    %v3737 = vmul.f32 %v3735, 0.5
    %v3738 = vmul.f32 %v3736, 0.5
    %v3739 = vtanh.pop %v3719
    %v3740 = vtanh.pop %v3720
    %v3741 = vmul.f32 %v3721, 0.5
    %v3742 = vmul.f32 %v3722, 0.5
    %v3743 = vtanh.pop %v3741
    %v3744 = vtanh.pop %v3742
    %v3745 = vadd.f32 %v3743, 1.0
    %v3746 = vadd.f32 %v3744, 1.0
    %v3747 = vmul.f32 %v3745, 0.5
    %v3748 = vmul.f32 %v3746, 0.5
    %v3749 = vmul.f32 %v3737, %v2847
    %v3750 = vmul.f32 %v3738, %v2848
    %v3751 = vmul.f32 %v3729, %v3739
    %v3752 = vmul.f32 %v3730, %v3740
    %v3753 = vadd.f32 %v3749, %v3751
    %v3754 = vadd.f32 %v3750, %v3752
    %v3755 = vtanh.pop %v3753
    %v3756 = vtanh.pop %v3754
    %v3757 = vmul.f32 %v3747, %v3755
    %v3758 = vmul.f32 %v3748, %v3756
    %3759 = vst [vmem:[%s2843] sm:$0xff] %v3757
    %3760 = vst [vmem:[%s2843 + $0x8] sm:$0xff] %v3758
    %3761 = vst [vmem:[%s2846] sm:$0xff] %v3753
    %3762 = vst [vmem:[%s2846 + $0x8] sm:$0xff] %v3754
    %v3763 = vld [vmem:[#allocation18] sm:$0xff]
    %v3764 = vld [vmem:[#allocation18 + $0x8] sm:$0xff]
    %v3765 = vld [vmem:[#allocation18 + $0x10] sm:$0xff]
    %v3766 = vld [vmem:[#allocation18 + $0x18] sm:$0xff]
    %v3767 = vld [vmem:[#allocation18 + $0x20] sm:$0xff]
    %v3768 = vld [vmem:[#allocation18 + $0x28] sm:$0xff]
    %v3769 = vld [vmem:[#allocation18 + $0x30] sm:$0xff]
    %v3770 = vld [vmem:[#allocation18 + $0x38] sm:$0xff]
    %v3771 = vld [vmem:[#allocation18 + $0x40] sm:$0xff]
    %v3772 = vld [vmem:[#allocation18 + $0x48] sm:$0xff]
    %v3773 = vld [vmem:[#allocation18 + $0x50] sm:$0xff]
    %v3774 = vld [vmem:[#allocation18 + $0x58] sm:$0xff]
    %v3775 = vld [vmem:[#allocation18 + $0x60] sm:$0xff]
    %v3776 = vld [vmem:[#allocation18 + $0x68] sm:$0xff]
    %v3777 = vld [vmem:[#allocation18 + $0x70] sm:$0xff]
    %v3778 = vld [vmem:[#allocation18 + $0x78] sm:$0xff]
    %v3779 = vld [vmem:[#allocation18 + $0x80] sm:$0xff]
    %v3780 = vld [vmem:[#allocation18 + $0x88] sm:$0xff]
    %v3781 = vld [vmem:[#allocation18 + $0x90] sm:$0xff]
    %v3782 = vld [vmem:[#allocation18 + $0x98] sm:$0xff]
    %v3783 = vld [vmem:[#allocation18 + $0xa0] sm:$0xff]
    %v3784 = vld [vmem:[#allocation18 + $0xa8] sm:$0xff]
    %v3785 = vld [vmem:[#allocation18 + $0xb0] sm:$0xff]
    %v3786 = vld [vmem:[#allocation18 + $0xb8] sm:$0xff]
    %v3787 = vld [vmem:[#allocation18 + $0xc0] sm:$0xff]
    %v3788 = vld [vmem:[#allocation18 + $0xc8] sm:$0xff]
    %v3789 = vld [vmem:[#allocation18 + $0xd0] sm:$0xff]
    %v3790 = vld [vmem:[#allocation18 + $0xd8] sm:$0xff]
    %v3791 = vld [vmem:[#allocation18 + $0xe0] sm:$0xff]
    %v3792 = vld [vmem:[#allocation18 + $0xe8] sm:$0xff]
    %v3793 = vld [vmem:[#allocation18 + $0xf0] sm:$0xff]
    %v3794 = vld [vmem:[#allocation18 + $0xf8] sm:$0xff]
    %v3795 = vld [vmem:[#allocation18 + $0x100] sm:$0xff]
    %v3796 = vld [vmem:[#allocation18 + $0x108] sm:$0xff]
    %v3797 = vld [vmem:[#allocation18 + $0x110] sm:$0xff]
    %v3798 = vld [vmem:[#allocation18 + $0x118] sm:$0xff]
    %v3799 = vld [vmem:[#allocation18 + $0x120] sm:$0xff]
    %v3800 = vld [vmem:[#allocation18 + $0x128] sm:$0xff]
    %v3801 = vld [vmem:[#allocation18 + $0x130] sm:$0xff]
    %v3802 = vld [vmem:[#allocation18 + $0x138] sm:$0xff]
    %v3803 = vld [vmem:[#allocation18 + $0x140] sm:$0xff]
    %v3804 = vld [vmem:[#allocation18 + $0x148] sm:$0xff]
    %v3805 = vld [vmem:[#allocation18 + $0x150] sm:$0xff]
    %v3806 = vld [vmem:[#allocation18 + $0x158] sm:$0xff]
    %v3807 = vld [vmem:[#allocation18 + $0x160] sm:$0xff]
    %v3808 = vld [vmem:[#allocation18 + $0x168] sm:$0xff]
    %v3809 = vld [vmem:[#allocation18 + $0x170] sm:$0xff]
    %v3810 = vld [vmem:[#allocation18 + $0x178] sm:$0xff]
    %v3811 = vld [vmem:[#allocation18 + $0x180] sm:$0xff]
    %v3812 = vld [vmem:[#allocation18 + $0x188] sm:$0xff]
    %v3813 = vld [vmem:[#allocation18 + $0x190] sm:$0xff]
    %v3814 = vld [vmem:[#allocation18 + $0x198] sm:$0xff]
    %v3815 = vld [vmem:[#allocation18 + $0x1a0] sm:$0xff]
    %v3816 = vld [vmem:[#allocation18 + $0x1a8] sm:$0xff]
    %v3817 = vld [vmem:[#allocation18 + $0x1b0] sm:$0xff]
    %v3818 = vld [vmem:[#allocation18 + $0x1b8] sm:$0xff]
    %v3819 = vld [vmem:[#allocation18 + $0x1c0] sm:$0xff]
    %v3820 = vld [vmem:[#allocation18 + $0x1c8] sm:$0xff]
    %v3821 = vld [vmem:[#allocation18 + $0x1d0] sm:$0xff]
    %v3822 = vld [vmem:[#allocation18 + $0x1d8] sm:$0xff]
    %v3823 = vld [vmem:[#allocation18 + $0x1e0] sm:$0xff]
    %v3824 = vld [vmem:[#allocation18 + $0x1e8] sm:$0xff]
    %v3825 = vld [vmem:[#allocation18 + $0x1f0] sm:$0xff]
    %v3826 = vld [vmem:[#allocation18 + $0x1f8] sm:$0xff]
    %v3827 = vld [vmem:[#allocation18 + $0x200] sm:$0xff]
    %v3828 = vld [vmem:[#allocation18 + $0x208] sm:$0xff]
    %v3829 = vld [vmem:[#allocation18 + $0x210] sm:$0xff]
    %v3830 = vld [vmem:[#allocation18 + $0x218] sm:$0xff]
    %v3831 = vld [vmem:[#allocation18 + $0x220] sm:$0xff]
    %v3832 = vld [vmem:[#allocation18 + $0x228] sm:$0xff]
    %v3833 = vld [vmem:[#allocation18 + $0x230] sm:$0xff]
    %v3834 = vld [vmem:[#allocation18 + $0x238] sm:$0xff]
    %v3835 = vld [vmem:[#allocation18 + $0x240] sm:$0xff]
    %v3836 = vld [vmem:[#allocation18 + $0x248] sm:$0xff]
    %v3837 = vld [vmem:[#allocation18 + $0x250] sm:$0xff]
    %v3838 = vld [vmem:[#allocation18 + $0x258] sm:$0xff]
    %v3839 = vld [vmem:[#allocation18 + $0x260] sm:$0xff]
    %v3840 = vld [vmem:[#allocation18 + $0x268] sm:$0xff]
    %v3841 = vld [vmem:[#allocation18 + $0x270] sm:$0xff]
    %v3842 = vld [vmem:[#allocation18 + $0x278] sm:$0xff]
    %v3843 = vld [vmem:[#allocation18 + $0x280] sm:$0xff]
    %v3844 = vld [vmem:[#allocation18 + $0x288] sm:$0xff]
    %v3845 = vld [vmem:[#allocation18 + $0x290] sm:$0xff]
    %v3846 = vld [vmem:[#allocation18 + $0x298] sm:$0xff]
    %v3847 = vld [vmem:[#allocation18 + $0x2a0] sm:$0xff]
    %v3848 = vld [vmem:[#allocation18 + $0x2a8] sm:$0xff]
    %v3849 = vld [vmem:[#allocation18 + $0x2b0] sm:$0xff]
    %v3850 = vld [vmem:[#allocation18 + $0x2b8] sm:$0xff]
    %v3851 = vld [vmem:[#allocation18 + $0x2c0] sm:$0xff]
    %v3852 = vld [vmem:[#allocation18 + $0x2c8] sm:$0xff]
    %v3853 = vld [vmem:[#allocation18 + $0x2d0] sm:$0xff]
    %v3854 = vld [vmem:[#allocation18 + $0x2d8] sm:$0xff]
    %v3855 = vld [vmem:[#allocation18 + $0x2e0] sm:$0xff]
    %v3856 = vld [vmem:[#allocation18 + $0x2e8] sm:$0xff]
    %v3857 = vld [vmem:[#allocation18 + $0x2f0] sm:$0xff]
    %v3858 = vld [vmem:[#allocation18 + $0x2f8] sm:$0xff]
    %v3859 = vld [vmem:[#allocation18 + $0x300] sm:$0xff]
    %v3860 = vld [vmem:[#allocation18 + $0x308] sm:$0xff]
    %v3861 = vld [vmem:[#allocation18 + $0x310] sm:$0xff]
    %v3862 = vld [vmem:[#allocation18 + $0x318] sm:$0xff]
    %v3863 = vld [vmem:[#allocation18 + $0x320] sm:$0xff]
    %v3864 = vld [vmem:[#allocation18 + $0x328] sm:$0xff]
    %v3865 = vld [vmem:[#allocation18 + $0x330] sm:$0xff]
    %v3866 = vld [vmem:[#allocation18 + $0x338] sm:$0xff]
    %v3867 = vld [vmem:[#allocation18 + $0x340] sm:$0xff]
    %v3868 = vld [vmem:[#allocation18 + $0x348] sm:$0xff]
    %v3869 = vld [vmem:[#allocation18 + $0x350] sm:$0xff]
    %v3870 = vld [vmem:[#allocation18 + $0x358] sm:$0xff]
    %v3871 = vld [vmem:[#allocation18 + $0x360] sm:$0xff]
    %v3872 = vld [vmem:[#allocation18 + $0x368] sm:$0xff]
    %v3873 = vld [vmem:[#allocation18 + $0x370] sm:$0xff]
    %v3874 = vld [vmem:[#allocation18 + $0x378] sm:$0xff]
    %v3875 = vld [vmem:[#allocation18 + $0x380] sm:$0xff]
    %v3876 = vld [vmem:[#allocation18 + $0x388] sm:$0xff]
    %v3877 = vld [vmem:[#allocation18 + $0x390] sm:$0xff]
    %v3878 = vld [vmem:[#allocation18 + $0x398] sm:$0xff]
    %v3879 = vld [vmem:[#allocation18 + $0x3a0] sm:$0xff]
    %v3880 = vld [vmem:[#allocation18 + $0x3a8] sm:$0xff]
    %v3881 = vld [vmem:[#allocation18 + $0x3b0] sm:$0xff]
    %v3882 = vld [vmem:[#allocation18 + $0x3b8] sm:$0xff]
    %v3883 = vld [vmem:[#allocation18 + $0x3c0] sm:$0xff]
    %v3884 = vld [vmem:[#allocation18 + $0x3c8] sm:$0xff]
    %v3885 = vld [vmem:[#allocation18 + $0x3d0] sm:$0xff]
    %v3886 = vld [vmem:[#allocation18 + $0x3d8] sm:$0xff]
    %v3887 = vld [vmem:[#allocation18 + $0x3e0] sm:$0xff]
    %v3888 = vld [vmem:[#allocation18 + $0x3e8] sm:$0xff]
    %v3889 = vld [vmem:[#allocation18 + $0x3f0] sm:$0xff]
    %v3890 = vld [vmem:[#allocation18 + $0x3f8] sm:$0xff]
    %v3891 = vld [vmem:[#allocation18 + $0x400] sm:$0xff]
    %v3892 = vld [vmem:[#allocation18 + $0x408] sm:$0xff]
    %v3893 = vld [vmem:[#allocation18 + $0x410] sm:$0xff]
    %v3894 = vld [vmem:[#allocation18 + $0x418] sm:$0xff]
    %v3895 = vld [vmem:[#allocation18 + $0x420] sm:$0xff]
    %v3896 = vld [vmem:[#allocation18 + $0x428] sm:$0xff]
    %v3897 = vld [vmem:[#allocation18 + $0x430] sm:$0xff]
    %v3898 = vld [vmem:[#allocation18 + $0x438] sm:$0xff]
    %v3899 = vld [vmem:[#allocation18 + $0x440] sm:$0xff]
    %v3900 = vld [vmem:[#allocation18 + $0x448] sm:$0xff]
    %v3901 = vld [vmem:[#allocation18 + $0x450] sm:$0xff]
    %v3902 = vld [vmem:[#allocation18 + $0x458] sm:$0xff]
    %v3903 = vld [vmem:[#allocation18 + $0x460] sm:$0xff]
    %v3904 = vld [vmem:[#allocation18 + $0x468] sm:$0xff]
    %v3905 = vld [vmem:[#allocation18 + $0x470] sm:$0xff]
    %v3906 = vld [vmem:[#allocation18 + $0x478] sm:$0xff]
    %v3907 = vld [vmem:[#allocation18 + $0x480] sm:$0xff]
    %v3908 = vld [vmem:[#allocation18 + $0x488] sm:$0xff]
    %v3909 = vld [vmem:[#allocation18 + $0x490] sm:$0xff]
    %v3910 = vld [vmem:[#allocation18 + $0x498] sm:$0xff]
    %v3911 = vld [vmem:[#allocation18 + $0x4a0] sm:$0xff]
    %v3912 = vld [vmem:[#allocation18 + $0x4a8] sm:$0xff]
    %v3913 = vld [vmem:[#allocation18 + $0x4b0] sm:$0xff]
    %v3914 = vld [vmem:[#allocation18 + $0x4b8] sm:$0xff]
    %v3915 = vld [vmem:[#allocation18 + $0x4c0] sm:$0xff]
    %v3916 = vld [vmem:[#allocation18 + $0x4c8] sm:$0xff]
    %v3917 = vld [vmem:[#allocation18 + $0x4d0] sm:$0xff]
    %v3918 = vld [vmem:[#allocation18 + $0x4d8] sm:$0xff]
    %v3919 = vld [vmem:[#allocation18 + $0x4e0] sm:$0xff]
    %v3920 = vld [vmem:[#allocation18 + $0x4e8] sm:$0xff]
    %v3921 = vld [vmem:[#allocation18 + $0x4f0] sm:$0xff]
    %v3922 = vld [vmem:[#allocation18 + $0x4f8] sm:$0xff]
    %v3923 = vld [vmem:[#allocation18 + $0x500] sm:$0xff]
    %v3924 = vld [vmem:[#allocation18 + $0x508] sm:$0xff]
    %v3925 = vld [vmem:[#allocation18 + $0x510] sm:$0xff]
    %v3926 = vld [vmem:[#allocation18 + $0x518] sm:$0xff]
    %v3927 = vld [vmem:[#allocation18 + $0x520] sm:$0xff]
    %v3928 = vld [vmem:[#allocation18 + $0x528] sm:$0xff]
    %v3929 = vld [vmem:[#allocation18 + $0x530] sm:$0xff]
    %v3930 = vld [vmem:[#allocation18 + $0x538] sm:$0xff]
    %v3931 = vld [vmem:[#allocation18 + $0x540] sm:$0xff]
    %v3932 = vld [vmem:[#allocation18 + $0x548] sm:$0xff]
    %v3933 = vld [vmem:[#allocation18 + $0x550] sm:$0xff]
    %v3934 = vld [vmem:[#allocation18 + $0x558] sm:$0xff]
    %v3935 = vld [vmem:[#allocation18 + $0x560] sm:$0xff]
    %v3936 = vld [vmem:[#allocation18 + $0x568] sm:$0xff]
    %v3937 = vld [vmem:[#allocation18 + $0x570] sm:$0xff]
    %v3938 = vld [vmem:[#allocation18 + $0x578] sm:$0xff]
    %v3939 = vld [vmem:[#allocation18 + $0x580] sm:$0xff]
    %v3940 = vld [vmem:[#allocation18 + $0x588] sm:$0xff]
    %v3941 = vld [vmem:[#allocation18 + $0x590] sm:$0xff]
    %v3942 = vld [vmem:[#allocation18 + $0x598] sm:$0xff]
    %v3943 = vld [vmem:[#allocation18 + $0x5a0] sm:$0xff]
    %v3944 = vld [vmem:[#allocation18 + $0x5a8] sm:$0xff]
    %v3945 = vld [vmem:[#allocation18 + $0x5b0] sm:$0xff]
    %v3946 = vld [vmem:[#allocation18 + $0x5b8] sm:$0xff]
    %v3947 = vld [vmem:[#allocation18 + $0x5c0] sm:$0xff]
    %v3948 = vld [vmem:[#allocation18 + $0x5c8] sm:$0xff]
    %v3949 = vld [vmem:[#allocation18 + $0x5d0] sm:$0xff]
    %v3950 = vld [vmem:[#allocation18 + $0x5d8] sm:$0xff]
    %v3951 = vld [vmem:[#allocation18 + $0x5e0] sm:$0xff]
    %v3952 = vld [vmem:[#allocation18 + $0x5e8] sm:$0xff]
    %v3953 = vld [vmem:[#allocation18 + $0x5f0] sm:$0xff]
    %v3954 = vld [vmem:[#allocation18 + $0x5f8] sm:$0xff]
    %v3955 = vld [vmem:[#allocation18 + $0x600] sm:$0xff]
    %v3956 = vld [vmem:[#allocation18 + $0x608] sm:$0xff]
    %v3957 = vld [vmem:[#allocation18 + $0x610] sm:$0xff]
    %v3958 = vld [vmem:[#allocation18 + $0x618] sm:$0xff]
    %v3959 = vld [vmem:[#allocation18 + $0x620] sm:$0xff]
    %v3960 = vld [vmem:[#allocation18 + $0x628] sm:$0xff]
    %v3961 = vld [vmem:[#allocation18 + $0x630] sm:$0xff]
    %v3962 = vld [vmem:[#allocation18 + $0x638] sm:$0xff]
    %v3963 = vld [vmem:[#allocation18 + $0x640] sm:$0xff]
    %v3964 = vld [vmem:[#allocation18 + $0x648] sm:$0xff]
    %v3965 = vld [vmem:[#allocation18 + $0x650] sm:$0xff]
    %v3966 = vld [vmem:[#allocation18 + $0x658] sm:$0xff]
    %v3967 = vld [vmem:[#allocation18 + $0x660] sm:$0xff]
    %v3968 = vld [vmem:[#allocation18 + $0x668] sm:$0xff]
    %v3969 = vld [vmem:[#allocation18 + $0x670] sm:$0xff]
    %v3970 = vld [vmem:[#allocation18 + $0x678] sm:$0xff]
    %v3971 = vld [vmem:[#allocation18 + $0x680] sm:$0xff]
    %v3972 = vld [vmem:[#allocation18 + $0x688] sm:$0xff]
    %v3973 = vld [vmem:[#allocation18 + $0x690] sm:$0xff]
    %v3974 = vld [vmem:[#allocation18 + $0x698] sm:$0xff]
    %v3975 = vld [vmem:[#allocation18 + $0x6a0] sm:$0xff]
    %v3976 = vld [vmem:[#allocation18 + $0x6a8] sm:$0xff]
    %v3977 = vld [vmem:[#allocation18 + $0x6b0] sm:$0xff]
    %v3978 = vld [vmem:[#allocation18 + $0x6b8] sm:$0xff]
    %v3979 = vld [vmem:[#allocation18 + $0x6c0] sm:$0xff]
    %v3980 = vld [vmem:[#allocation18 + $0x6c8] sm:$0xff]
    %v3981 = vld [vmem:[#allocation18 + $0x6d0] sm:$0xff]
    %v3982 = vld [vmem:[#allocation18 + $0x6d8] sm:$0xff]
    %v3983 = vld [vmem:[#allocation18 + $0x6e0] sm:$0xff]
    %v3984 = vld [vmem:[#allocation18 + $0x6e8] sm:$0xff]
    %v3985 = vld [vmem:[#allocation18 + $0x6f0] sm:$0xff]
    %v3986 = vld [vmem:[#allocation18 + $0x6f8] sm:$0xff]
    %v3987 = vld [vmem:[#allocation18 + $0x700] sm:$0xff]
    %v3988 = vld [vmem:[#allocation18 + $0x708] sm:$0xff]
    %v3989 = vld [vmem:[#allocation18 + $0x710] sm:$0xff]
    %v3990 = vld [vmem:[#allocation18 + $0x718] sm:$0xff]
    %v3991 = vld [vmem:[#allocation18 + $0x720] sm:$0xff]
    %v3992 = vld [vmem:[#allocation18 + $0x728] sm:$0xff]
    %v3993 = vld [vmem:[#allocation18 + $0x730] sm:$0xff]
    %v3994 = vld [vmem:[#allocation18 + $0x738] sm:$0xff]
    %v3995 = vld [vmem:[#allocation18 + $0x740] sm:$0xff]
    %v3996 = vld [vmem:[#allocation18 + $0x748] sm:$0xff]
    %v3997 = vld [vmem:[#allocation18 + $0x750] sm:$0xff]
    %v3998 = vld [vmem:[#allocation18 + $0x758] sm:$0xff]
    %v3999 = vld [vmem:[#allocation18 + $0x760] sm:$0xff]
    %v4000 = vld [vmem:[#allocation18 + $0x768] sm:$0xff]
    %v4001 = vld [vmem:[#allocation18 + $0x770] sm:$0xff]
    %v4002 = vld [vmem:[#allocation18 + $0x778] sm:$0xff]
    %v4003 = vld [vmem:[#allocation18 + $0x780] sm:$0xff]
    %v4004 = vld [vmem:[#allocation18 + $0x788] sm:$0xff]
    %v4005 = vld [vmem:[#allocation18 + $0x790] sm:$0xff]
    %v4006 = vld [vmem:[#allocation18 + $0x798] sm:$0xff]
    %v4007 = vld [vmem:[#allocation18 + $0x7a0] sm:$0xff]
    %v4008 = vld [vmem:[#allocation18 + $0x7a8] sm:$0xff]
    %v4009 = vld [vmem:[#allocation18 + $0x7b0] sm:$0xff]
    %v4010 = vld [vmem:[#allocation18 + $0x7b8] sm:$0xff]
    %v4011 = vld [vmem:[#allocation18 + $0x7c0] sm:$0xff]
    %v4012 = vld [vmem:[#allocation18 + $0x7c8] sm:$0xff]
    %v4013 = vld [vmem:[#allocation18 + $0x7d0] sm:$0xff]
    %v4014 = vld [vmem:[#allocation18 + $0x7d8] sm:$0xff]
    %v4015 = vld [vmem:[#allocation18 + $0x7e0] sm:$0xff]
    %v4016 = vld [vmem:[#allocation18 + $0x7e8] sm:$0xff]
    %v4017 = vld [vmem:[#allocation18 + $0x7f0] sm:$0xff]
    %v4018 = vld [vmem:[#allocation18 + $0x7f8] sm:$0xff]
    %s4019 = scalar_lea.vmem %s20, 48
    %v4020 = vld [vmem:[%s4019] sm:$0xff]
    %v4021 = vld [vmem:[%s4019 + $0x8] sm:$0xff]
    %s4022 = scalar_lea.vmem %s21, 48
    %v4023 = vld [vmem:[%s4022] sm:$0xff]
    %v4024 = vld [vmem:[%s4022 + $0x8] sm:$0xff]
    %4025 = vmatprep.subr.mxu0 %v3764
    %4026 = vmatpush1.msra.mxu0 %v3763
    %4027 = vmatprep.subr.mxu0 %v3772
    %4028 = vmatpush1.msra.mxu0 %v3771
    %4029 = vmatprep.subr.mxu0 %v3780
    %4030 = vmatpush1.msra.mxu0 %v3779
    %4031 = vmatprep.subr.mxu0 %v3788
    %4032 = vmatpush1.msra.mxu0 %v3787
    %4033 = vmatprep.subr.mxu0 %v3796
    %4034 = vmatpush1.msra.mxu0 %v3795
    %4035 = vmatprep.subr.mxu0 %v3804
    %4036 = vmatpush1.msra.mxu0 %v3803
    %4037 = vmatprep.subr.mxu0 %v3812
    %4038 = vmatpush1.msra.mxu0 %v3811
    %4039 = vmatprep.subr.mxu0 %v3820
    %4040 = vmatpush1.msra.mxu0 %v3819
    %4041 = vmatprep.subr.mxu0 %v3828
    %4042 = vmatpush1.msra.mxu0 %v3827
    %4043 = vmatprep.subr.mxu0 %v3836
    %4044 = vmatpush1.msra.mxu0 %v3835
    %4045 = vmatprep.subr.mxu0 %v3844
    %4046 = vmatpush1.msra.mxu0 %v3843
    %4047 = vmatprep.subr.mxu0 %v3852
    %4048 = vmatpush1.msra.mxu0 %v3851
    %4049 = vmatprep.subr.mxu0 %v3860
    %4050 = vmatpush1.msra.mxu0 %v3859
    %4051 = vmatprep.subr.mxu0 %v3868
    %4052 = vmatpush1.msra.mxu0 %v3867
    %4053 = vmatprep.subr.mxu0 %v3876
    %4054 = vmatpush1.msra.mxu0 %v3875
    %4055 = vmatprep.subr.mxu0 %v3884
    %4056 = vmatpush1.msra.mxu0 %v3883
    %4057 = vmatprep.subr.mxu0 %v3892
    %4058 = vmatpush1.msra.mxu0 %v3891
    %4059 = vmatprep.subr.mxu0 %v3900
    %4060 = vmatpush1.msra.mxu0 %v3899
    %4061 = vmatprep.subr.mxu0 %v3908
    %4062 = vmatpush1.msra.mxu0 %v3907
    %4063 = vmatprep.subr.mxu0 %v3916
    %4064 = vmatpush1.msra.mxu0 %v3915
    %4065 = vmatprep.subr.mxu0 %v3924
    %4066 = vmatpush1.msra.mxu0 %v3923
    %4067 = vmatprep.subr.mxu0 %v3932
    %4068 = vmatpush1.msra.mxu0 %v3931
    %4069 = vmatprep.subr.mxu0 %v3940
    %4070 = vmatpush1.msra.mxu0 %v3939
    %4071 = vmatprep.subr.mxu0 %v3948
    %4072 = vmatpush1.msra.mxu0 %v3947
    %4073 = vmatprep.subr.mxu0 %v3956
    %4074 = vmatpush1.msra.mxu0 %v3955
    %4075 = vmatprep.subr.mxu0 %v3964
    %4076 = vmatpush1.msra.mxu0 %v3963
    %4077 = vmatprep.subr.mxu0 %v3972
    %4078 = vmatpush1.msra.mxu0 %v3971
    %4079 = vmatprep.subr.mxu0 %v3980
    %4080 = vmatpush1.msra.mxu0 %v3979
    %4081 = vmatprep.subr.mxu0 %v3988
    %4082 = vmatpush1.msra.mxu0 %v3987
    %4083 = vmatprep.subr.mxu0 %v3996
    %4084 = vmatpush1.msra.mxu0 %v3995
    %4085 = vmatprep.subr.mxu0 %v4004
    %4086 = vmatpush1.msra.mxu0 %v4003
    %4087 = vmatprep.subr.mxu0 %v4012
    %4088 = vmatpush1.msra.mxu0 %v4011
    %4089 = vmatprep.mubr.f32.mxu0 %v4021
    %4090 = vmatmul.mubr.f32.gmra.mrb[0].mxu0 %v4020
    %v4091 = vpop.f32.mrb[0].mxu0
    %v4092 = vadd.f32 0.0, %v4091
    %v4093 = vpop.f32.mrb[0].mxu0
    %v4094 = vadd.f32 0.0, %v4093
    %4095 = vdwg.mxu0
    %4096 = vmatprep.subr.mxu0 %v3766
    %4097 = vmatpush1.msra.mxu0 %v3765
    %4098 = vmatprep.subr.mxu0 %v3774
    %4099 = vmatpush1.msra.mxu0 %v3773
    %4100 = vmatprep.subr.mxu0 %v3782
    %4101 = vmatpush1.msra.mxu0 %v3781
    %4102 = vmatprep.subr.mxu0 %v3790
    %4103 = vmatpush1.msra.mxu0 %v3789
    %4104 = vmatprep.subr.mxu0 %v3798
    %4105 = vmatpush1.msra.mxu0 %v3797
    %4106 = vmatprep.subr.mxu0 %v3806
    %4107 = vmatpush1.msra.mxu0 %v3805
    %4108 = vmatprep.subr.mxu0 %v3814
    %4109 = vmatpush1.msra.mxu0 %v3813
    %4110 = vmatprep.subr.mxu0 %v3822
    %4111 = vmatpush1.msra.mxu0 %v3821
    %4112 = vmatprep.subr.mxu0 %v3830
    %4113 = vmatpush1.msra.mxu0 %v3829
    %4114 = vmatprep.subr.mxu0 %v3838
    %4115 = vmatpush1.msra.mxu0 %v3837
    %4116 = vmatprep.subr.mxu0 %v3846
    %4117 = vmatpush1.msra.mxu0 %v3845
    %4118 = vmatprep.subr.mxu0 %v3854
    %4119 = vmatpush1.msra.mxu0 %v3853
    %4120 = vmatprep.subr.mxu0 %v3862
    %4121 = vmatpush1.msra.mxu0 %v3861
    %4122 = vmatprep.subr.mxu0 %v3870
    %4123 = vmatpush1.msra.mxu0 %v3869
    %4124 = vmatprep.subr.mxu0 %v3878
    %4125 = vmatpush1.msra.mxu0 %v3877
    %4126 = vmatprep.subr.mxu0 %v3886
    %4127 = vmatpush1.msra.mxu0 %v3885
    %4128 = vmatprep.subr.mxu0 %v3894
    %4129 = vmatpush1.msra.mxu0 %v3893
    %4130 = vmatprep.subr.mxu0 %v3902
    %4131 = vmatpush1.msra.mxu0 %v3901
    %4132 = vmatprep.subr.mxu0 %v3910
    %4133 = vmatpush1.msra.mxu0 %v3909
    %4134 = vmatprep.subr.mxu0 %v3918
    %4135 = vmatpush1.msra.mxu0 %v3917
    %4136 = vmatprep.subr.mxu0 %v3926
    %4137 = vmatpush1.msra.mxu0 %v3925
    %4138 = vmatprep.subr.mxu0 %v3934
    %4139 = vmatpush1.msra.mxu0 %v3933
    %4140 = vmatprep.subr.mxu0 %v3942
    %4141 = vmatpush1.msra.mxu0 %v3941
    %4142 = vmatprep.subr.mxu0 %v3950
    %4143 = vmatpush1.msra.mxu0 %v3949
    %4144 = vmatprep.subr.mxu0 %v3958
    %4145 = vmatpush1.msra.mxu0 %v3957
    %4146 = vmatprep.subr.mxu0 %v3966
    %4147 = vmatpush1.msra.mxu0 %v3965
    %4148 = vmatprep.subr.mxu0 %v3974
    %4149 = vmatpush1.msra.mxu0 %v3973
    %4150 = vmatprep.subr.mxu0 %v3982
    %4151 = vmatpush1.msra.mxu0 %v3981
    %4152 = vmatprep.subr.mxu0 %v3990
    %4153 = vmatpush1.msra.mxu0 %v3989
    %4154 = vmatprep.subr.mxu0 %v3998
    %4155 = vmatpush1.msra.mxu0 %v3997
    %4156 = vmatprep.subr.mxu0 %v4006
    %4157 = vmatpush1.msra.mxu0 %v4005
    %4158 = vmatprep.subr.mxu0 %v4014
    %4159 = vmatpush1.msra.mxu0 %v4013
    %4160 = vmatprep.mubr.f32.mxu0 %v4021
    %4161 = vmatmul.mubr.f32.gmra.mrb[0].mxu0 %v4020
    %v4162 = vpop.f32.mrb[0].mxu0
    %v4163 = vadd.f32 0.0, %v4162
    %v4164 = vpop.f32.mrb[0].mxu0
    %v4165 = vadd.f32 0.0, %v4164
    %4166 = vdwg.mxu0
    %4167 = vmatprep.subr.mxu0 %v3768
    %4168 = vmatpush1.msra.mxu0 %v3767
    %4169 = vmatprep.subr.mxu0 %v3776
    %4170 = vmatpush1.msra.mxu0 %v3775
    %4171 = vmatprep.subr.mxu0 %v3784
    %4172 = vmatpush1.msra.mxu0 %v3783
    %4173 = vmatprep.subr.mxu0 %v3792
    %4174 = vmatpush1.msra.mxu0 %v3791
    %4175 = vmatprep.subr.mxu0 %v3800
    %4176 = vmatpush1.msra.mxu0 %v3799
    %4177 = vmatprep.subr.mxu0 %v3808
    %4178 = vmatpush1.msra.mxu0 %v3807
    %4179 = vmatprep.subr.mxu0 %v3816
    %4180 = vmatpush1.msra.mxu0 %v3815
    %4181 = vmatprep.subr.mxu0 %v3824
    %4182 = vmatpush1.msra.mxu0 %v3823
    %4183 = vmatprep.subr.mxu0 %v3832
    %4184 = vmatpush1.msra.mxu0 %v3831
    %4185 = vmatprep.subr.mxu0 %v3840
    %4186 = vmatpush1.msra.mxu0 %v3839
    %4187 = vmatprep.subr.mxu0 %v3848
    %4188 = vmatpush1.msra.mxu0 %v3847
    %4189 = vmatprep.subr.mxu0 %v3856
    %4190 = vmatpush1.msra.mxu0 %v3855
    %4191 = vmatprep.subr.mxu0 %v3864
    %4192 = vmatpush1.msra.mxu0 %v3863
    %4193 = vmatprep.subr.mxu0 %v3872
    %4194 = vmatpush1.msra.mxu0 %v3871
    %4195 = vmatprep.subr.mxu0 %v3880
    %4196 = vmatpush1.msra.mxu0 %v3879
    %4197 = vmatprep.subr.mxu0 %v3888
    %4198 = vmatpush1.msra.mxu0 %v3887
    %4199 = vmatprep.subr.mxu0 %v3896
    %4200 = vmatpush1.msra.mxu0 %v3895
    %4201 = vmatprep.subr.mxu0 %v3904
    %4202 = vmatpush1.msra.mxu0 %v3903
    %4203 = vmatprep.subr.mxu0 %v3912
    %4204 = vmatpush1.msra.mxu0 %v3911
    %4205 = vmatprep.subr.mxu0 %v3920
    %4206 = vmatpush1.msra.mxu0 %v3919
    %4207 = vmatprep.subr.mxu0 %v3928
    %4208 = vmatpush1.msra.mxu0 %v3927
    %4209 = vmatprep.subr.mxu0 %v3936
    %4210 = vmatpush1.msra.mxu0 %v3935
    %4211 = vmatprep.subr.mxu0 %v3944
    %4212 = vmatpush1.msra.mxu0 %v3943
    %4213 = vmatprep.subr.mxu0 %v3952
    %4214 = vmatpush1.msra.mxu0 %v3951
    %4215 = vmatprep.subr.mxu0 %v3960
    %4216 = vmatpush1.msra.mxu0 %v3959
    %4217 = vmatprep.subr.mxu0 %v3968
    %4218 = vmatpush1.msra.mxu0 %v3967
    %4219 = vmatprep.subr.mxu0 %v3976
    %4220 = vmatpush1.msra.mxu0 %v3975
    %4221 = vmatprep.subr.mxu0 %v3984
    %4222 = vmatpush1.msra.mxu0 %v3983
    %4223 = vmatprep.subr.mxu0 %v3992
    %4224 = vmatpush1.msra.mxu0 %v3991
    %4225 = vmatprep.subr.mxu0 %v4000
    %4226 = vmatpush1.msra.mxu0 %v3999
    %4227 = vmatprep.subr.mxu0 %v4008
    %4228 = vmatpush1.msra.mxu0 %v4007
    %4229 = vmatprep.subr.mxu0 %v4016
    %4230 = vmatpush1.msra.mxu0 %v4015
    %4231 = vmatprep.mubr.f32.mxu0 %v4021
    %4232 = vmatmul.mubr.f32.gmra.mrb[0].mxu0 %v4020
    %v4233 = vpop.f32.mrb[0].mxu0
    %v4234 = vadd.f32 0.0, %v4233
    %v4235 = vpop.f32.mrb[0].mxu0
    %v4236 = vadd.f32 0.0, %v4235
    %4237 = vdwg.mxu0
    %4238 = vmatprep.subr.mxu0 %v3770
    %4239 = vmatpush1.msra.mxu0 %v3769
    %4240 = vmatprep.subr.mxu0 %v3778
    %4241 = vmatpush1.msra.mxu0 %v3777
    %4242 = vmatprep.subr.mxu0 %v3786
    %4243 = vmatpush1.msra.mxu0 %v3785
    %4244 = vmatprep.subr.mxu0 %v3794
    %4245 = vmatpush1.msra.mxu0 %v3793
    %4246 = vmatprep.subr.mxu0 %v3802
    %4247 = vmatpush1.msra.mxu0 %v3801
    %4248 = vmatprep.subr.mxu0 %v3810
    %4249 = vmatpush1.msra.mxu0 %v3809
    %4250 = vmatprep.subr.mxu0 %v3818
    %4251 = vmatpush1.msra.mxu0 %v3817
    %4252 = vmatprep.subr.mxu0 %v3826
    %4253 = vmatpush1.msra.mxu0 %v3825
    %4254 = vmatprep.subr.mxu0 %v3834
    %4255 = vmatpush1.msra.mxu0 %v3833
    %4256 = vmatprep.subr.mxu0 %v3842
    %4257 = vmatpush1.msra.mxu0 %v3841
    %4258 = vmatprep.subr.mxu0 %v3850
    %4259 = vmatpush1.msra.mxu0 %v3849
    %4260 = vmatprep.subr.mxu0 %v3858
    %4261 = vmatpush1.msra.mxu0 %v3857
    %4262 = vmatprep.subr.mxu0 %v3866
    %4263 = vmatpush1.msra.mxu0 %v3865
    %4264 = vmatprep.subr.mxu0 %v3874
    %4265 = vmatpush1.msra.mxu0 %v3873
    %4266 = vmatprep.subr.mxu0 %v3882
    %4267 = vmatpush1.msra.mxu0 %v3881
    %4268 = vmatprep.subr.mxu0 %v3890
    %4269 = vmatpush1.msra.mxu0 %v3889
    %4270 = vmatprep.subr.mxu0 %v3898
    %4271 = vmatpush1.msra.mxu0 %v3897
    %4272 = vmatprep.subr.mxu0 %v3906
    %4273 = vmatpush1.msra.mxu0 %v3905
    %4274 = vmatprep.subr.mxu0 %v3914
    %4275 = vmatpush1.msra.mxu0 %v3913
    %4276 = vmatprep.subr.mxu0 %v3922
    %4277 = vmatpush1.msra.mxu0 %v3921
    %4278 = vmatprep.subr.mxu0 %v3930
    %4279 = vmatpush1.msra.mxu0 %v3929
    %4280 = vmatprep.subr.mxu0 %v3938
    %4281 = vmatpush1.msra.mxu0 %v3937
    %4282 = vmatprep.subr.mxu0 %v3946
    %4283 = vmatpush1.msra.mxu0 %v3945
    %4284 = vmatprep.subr.mxu0 %v3954
    %4285 = vmatpush1.msra.mxu0 %v3953
    %4286 = vmatprep.subr.mxu0 %v3962
    %4287 = vmatpush1.msra.mxu0 %v3961
    %4288 = vmatprep.subr.mxu0 %v3970
    %4289 = vmatpush1.msra.mxu0 %v3969
    %4290 = vmatprep.subr.mxu0 %v3978
    %4291 = vmatpush1.msra.mxu0 %v3977
    %4292 = vmatprep.subr.mxu0 %v3986
    %4293 = vmatpush1.msra.mxu0 %v3985
    %4294 = vmatprep.subr.mxu0 %v3994
    %4295 = vmatpush1.msra.mxu0 %v3993
    %4296 = vmatprep.subr.mxu0 %v4002
    %4297 = vmatpush1.msra.mxu0 %v4001
    %4298 = vmatprep.subr.mxu0 %v4010
    %4299 = vmatpush1.msra.mxu0 %v4009
    %4300 = vmatprep.subr.mxu0 %v4018
    %4301 = vmatpush1.msra.mxu0 %v4017
    %4302 = vmatprep.mubr.f32.mxu0 %v4021
    %4303 = vmatmul.mubr.f32.gmra.mrb[0].mxu0 %v4020
    %v4304 = vpop.f32.mrb[0].mxu0
    %v4305 = vadd.f32 0.0, %v4304
    %v4306 = vpop.f32.mrb[0].mxu0
    %v4307 = vadd.f32 0.0, %v4306
    %4308 = vdwg.mxu0
    %v4309 = vld [vmem:[#allocation17] sm:$0xff]
    %v4310 = vld [vmem:[#allocation17 + $0x8] sm:$0xff]
    %v4311 = vld [vmem:[#allocation17 + $0x10] sm:$0xff]
    %v4312 = vld [vmem:[#allocation17 + $0x18] sm:$0xff]
    %v4313 = vld [vmem:[#allocation17 + $0x20] sm:$0xff]
    %v4314 = vld [vmem:[#allocation17 + $0x28] sm:$0xff]
    %v4315 = vld [vmem:[#allocation17 + $0x30] sm:$0xff]
    %v4316 = vld [vmem:[#allocation17 + $0x38] sm:$0xff]
    %v4317 = vld [vmem:[#allocation17 + $0x40] sm:$0xff]
    %v4318 = vld [vmem:[#allocation17 + $0x48] sm:$0xff]
    %v4319 = vld [vmem:[#allocation17 + $0x50] sm:$0xff]
    %v4320 = vld [vmem:[#allocation17 + $0x58] sm:$0xff]
    %v4321 = vld [vmem:[#allocation17 + $0x60] sm:$0xff]
    %v4322 = vld [vmem:[#allocation17 + $0x68] sm:$0xff]
    %v4323 = vld [vmem:[#allocation17 + $0x70] sm:$0xff]
    %v4324 = vld [vmem:[#allocation17 + $0x78] sm:$0xff]
    %v4325 = vld [vmem:[#allocation17 + $0x80] sm:$0xff]
    %v4326 = vld [vmem:[#allocation17 + $0x88] sm:$0xff]
    %v4327 = vld [vmem:[#allocation17 + $0x90] sm:$0xff]
    %v4328 = vld [vmem:[#allocation17 + $0x98] sm:$0xff]
    %v4329 = vld [vmem:[#allocation17 + $0xa0] sm:$0xff]
    %v4330 = vld [vmem:[#allocation17 + $0xa8] sm:$0xff]
    %v4331 = vld [vmem:[#allocation17 + $0xb0] sm:$0xff]
    %v4332 = vld [vmem:[#allocation17 + $0xb8] sm:$0xff]
    %v4333 = vld [vmem:[#allocation17 + $0xc0] sm:$0xff]
    %v4334 = vld [vmem:[#allocation17 + $0xc8] sm:$0xff]
    %v4335 = vld [vmem:[#allocation17 + $0xd0] sm:$0xff]
    %v4336 = vld [vmem:[#allocation17 + $0xd8] sm:$0xff]
    %v4337 = vld [vmem:[#allocation17 + $0xe0] sm:$0xff]
    %v4338 = vld [vmem:[#allocation17 + $0xe8] sm:$0xff]
    %v4339 = vld [vmem:[#allocation17 + $0xf0] sm:$0xff]
    %v4340 = vld [vmem:[#allocation17 + $0xf8] sm:$0xff]
    %v4341 = vld [vmem:[#allocation17 + $0x100] sm:$0xff]
    %v4342 = vld [vmem:[#allocation17 + $0x108] sm:$0xff]
    %v4343 = vld [vmem:[#allocation17 + $0x110] sm:$0xff]
    %v4344 = vld [vmem:[#allocation17 + $0x118] sm:$0xff]
    %v4345 = vld [vmem:[#allocation17 + $0x120] sm:$0xff]
    %v4346 = vld [vmem:[#allocation17 + $0x128] sm:$0xff]
    %v4347 = vld [vmem:[#allocation17 + $0x130] sm:$0xff]
    %v4348 = vld [vmem:[#allocation17 + $0x138] sm:$0xff]
    %v4349 = vld [vmem:[#allocation17 + $0x140] sm:$0xff]
    %v4350 = vld [vmem:[#allocation17 + $0x148] sm:$0xff]
    %v4351 = vld [vmem:[#allocation17 + $0x150] sm:$0xff]
    %v4352 = vld [vmem:[#allocation17 + $0x158] sm:$0xff]
    %v4353 = vld [vmem:[#allocation17 + $0x160] sm:$0xff]
    %v4354 = vld [vmem:[#allocation17 + $0x168] sm:$0xff]
    %v4355 = vld [vmem:[#allocation17 + $0x170] sm:$0xff]
    %v4356 = vld [vmem:[#allocation17 + $0x178] sm:$0xff]
    %v4357 = vld [vmem:[#allocation17 + $0x180] sm:$0xff]
    %v4358 = vld [vmem:[#allocation17 + $0x188] sm:$0xff]
    %v4359 = vld [vmem:[#allocation17 + $0x190] sm:$0xff]
    %v4360 = vld [vmem:[#allocation17 + $0x198] sm:$0xff]
    %v4361 = vld [vmem:[#allocation17 + $0x1a0] sm:$0xff]
    %v4362 = vld [vmem:[#allocation17 + $0x1a8] sm:$0xff]
    %v4363 = vld [vmem:[#allocation17 + $0x1b0] sm:$0xff]
    %v4364 = vld [vmem:[#allocation17 + $0x1b8] sm:$0xff]
    %v4365 = vld [vmem:[#allocation17 + $0x1c0] sm:$0xff]
    %v4366 = vld [vmem:[#allocation17 + $0x1c8] sm:$0xff]
    %v4367 = vld [vmem:[#allocation17 + $0x1d0] sm:$0xff]
    %v4368 = vld [vmem:[#allocation17 + $0x1d8] sm:$0xff]
    %v4369 = vld [vmem:[#allocation17 + $0x1e0] sm:$0xff]
    %v4370 = vld [vmem:[#allocation17 + $0x1e8] sm:$0xff]
    %v4371 = vld [vmem:[#allocation17 + $0x1f0] sm:$0xff]
    %v4372 = vld [vmem:[#allocation17 + $0x1f8] sm:$0xff]
    %v4373 = vld [vmem:[#allocation17 + $0x200] sm:$0xff]
    %v4374 = vld [vmem:[#allocation17 + $0x208] sm:$0xff]
    %v4375 = vld [vmem:[#allocation17 + $0x210] sm:$0xff]
    %v4376 = vld [vmem:[#allocation17 + $0x218] sm:$0xff]
    %v4377 = vld [vmem:[#allocation17 + $0x220] sm:$0xff]
    %v4378 = vld [vmem:[#allocation17 + $0x228] sm:$0xff]
    %v4379 = vld [vmem:[#allocation17 + $0x230] sm:$0xff]
    %v4380 = vld [vmem:[#allocation17 + $0x238] sm:$0xff]
    %v4381 = vld [vmem:[#allocation17 + $0x240] sm:$0xff]
    %v4382 = vld [vmem:[#allocation17 + $0x248] sm:$0xff]
    %v4383 = vld [vmem:[#allocation17 + $0x250] sm:$0xff]
    %v4384 = vld [vmem:[#allocation17 + $0x258] sm:$0xff]
    %v4385 = vld [vmem:[#allocation17 + $0x260] sm:$0xff]
    %v4386 = vld [vmem:[#allocation17 + $0x268] sm:$0xff]
    %v4387 = vld [vmem:[#allocation17 + $0x270] sm:$0xff]
    %v4388 = vld [vmem:[#allocation17 + $0x278] sm:$0xff]
    %v4389 = vld [vmem:[#allocation17 + $0x280] sm:$0xff]
    %v4390 = vld [vmem:[#allocation17 + $0x288] sm:$0xff]
    %v4391 = vld [vmem:[#allocation17 + $0x290] sm:$0xff]
    %v4392 = vld [vmem:[#allocation17 + $0x298] sm:$0xff]
    %v4393 = vld [vmem:[#allocation17 + $0x2a0] sm:$0xff]
    %v4394 = vld [vmem:[#allocation17 + $0x2a8] sm:$0xff]
    %v4395 = vld [vmem:[#allocation17 + $0x2b0] sm:$0xff]
    %v4396 = vld [vmem:[#allocation17 + $0x2b8] sm:$0xff]
    %v4397 = vld [vmem:[#allocation17 + $0x2c0] sm:$0xff]
    %v4398 = vld [vmem:[#allocation17 + $0x2c8] sm:$0xff]
    %v4399 = vld [vmem:[#allocation17 + $0x2d0] sm:$0xff]
    %v4400 = vld [vmem:[#allocation17 + $0x2d8] sm:$0xff]
    %v4401 = vld [vmem:[#allocation17 + $0x2e0] sm:$0xff]
    %v4402 = vld [vmem:[#allocation17 + $0x2e8] sm:$0xff]
    %v4403 = vld [vmem:[#allocation17 + $0x2f0] sm:$0xff]
    %v4404 = vld [vmem:[#allocation17 + $0x2f8] sm:$0xff]
    %v4405 = vld [vmem:[#allocation17 + $0x300] sm:$0xff]
    %v4406 = vld [vmem:[#allocation17 + $0x308] sm:$0xff]
    %v4407 = vld [vmem:[#allocation17 + $0x310] sm:$0xff]
    %v4408 = vld [vmem:[#allocation17 + $0x318] sm:$0xff]
    %v4409 = vld [vmem:[#allocation17 + $0x320] sm:$0xff]
    %v4410 = vld [vmem:[#allocation17 + $0x328] sm:$0xff]
    %v4411 = vld [vmem:[#allocation17 + $0x330] sm:$0xff]
    %v4412 = vld [vmem:[#allocation17 + $0x338] sm:$0xff]
    %v4413 = vld [vmem:[#allocation17 + $0x340] sm:$0xff]
    %v4414 = vld [vmem:[#allocation17 + $0x348] sm:$0xff]
    %v4415 = vld [vmem:[#allocation17 + $0x350] sm:$0xff]
    %v4416 = vld [vmem:[#allocation17 + $0x358] sm:$0xff]
    %v4417 = vld [vmem:[#allocation17 + $0x360] sm:$0xff]
    %v4418 = vld [vmem:[#allocation17 + $0x368] sm:$0xff]
    %v4419 = vld [vmem:[#allocation17 + $0x370] sm:$0xff]
    %v4420 = vld [vmem:[#allocation17 + $0x378] sm:$0xff]
    %v4421 = vld [vmem:[#allocation17 + $0x380] sm:$0xff]
    %v4422 = vld [vmem:[#allocation17 + $0x388] sm:$0xff]
    %v4423 = vld [vmem:[#allocation17 + $0x390] sm:$0xff]
    %v4424 = vld [vmem:[#allocation17 + $0x398] sm:$0xff]
    %v4425 = vld [vmem:[#allocation17 + $0x3a0] sm:$0xff]
    %v4426 = vld [vmem:[#allocation17 + $0x3a8] sm:$0xff]
    %v4427 = vld [vmem:[#allocation17 + $0x3b0] sm:$0xff]
    %v4428 = vld [vmem:[#allocation17 + $0x3b8] sm:$0xff]
    %v4429 = vld [vmem:[#allocation17 + $0x3c0] sm:$0xff]
    %v4430 = vld [vmem:[#allocation17 + $0x3c8] sm:$0xff]
    %v4431 = vld [vmem:[#allocation17 + $0x3d0] sm:$0xff]
    %v4432 = vld [vmem:[#allocation17 + $0x3d8] sm:$0xff]
    %v4433 = vld [vmem:[#allocation17 + $0x3e0] sm:$0xff]
    %v4434 = vld [vmem:[#allocation17 + $0x3e8] sm:$0xff]
    %v4435 = vld [vmem:[#allocation17 + $0x3f0] sm:$0xff]
    %v4436 = vld [vmem:[#allocation17 + $0x3f8] sm:$0xff]
    %v4437 = vld [vmem:[#allocation17 + $0x400] sm:$0xff]
    %v4438 = vld [vmem:[#allocation17 + $0x408] sm:$0xff]
    %v4439 = vld [vmem:[#allocation17 + $0x410] sm:$0xff]
    %v4440 = vld [vmem:[#allocation17 + $0x418] sm:$0xff]
    %v4441 = vld [vmem:[#allocation17 + $0x420] sm:$0xff]
    %v4442 = vld [vmem:[#allocation17 + $0x428] sm:$0xff]
    %v4443 = vld [vmem:[#allocation17 + $0x430] sm:$0xff]
    %v4444 = vld [vmem:[#allocation17 + $0x438] sm:$0xff]
    %v4445 = vld [vmem:[#allocation17 + $0x440] sm:$0xff]
    %v4446 = vld [vmem:[#allocation17 + $0x448] sm:$0xff]
    %v4447 = vld [vmem:[#allocation17 + $0x450] sm:$0xff]
    %v4448 = vld [vmem:[#allocation17 + $0x458] sm:$0xff]
    %v4449 = vld [vmem:[#allocation17 + $0x460] sm:$0xff]
    %v4450 = vld [vmem:[#allocation17 + $0x468] sm:$0xff]
    %v4451 = vld [vmem:[#allocation17 + $0x470] sm:$0xff]
    %v4452 = vld [vmem:[#allocation17 + $0x478] sm:$0xff]
    %v4453 = vld [vmem:[#allocation17 + $0x480] sm:$0xff]
    %v4454 = vld [vmem:[#allocation17 + $0x488] sm:$0xff]
    %v4455 = vld [vmem:[#allocation17 + $0x490] sm:$0xff]
    %v4456 = vld [vmem:[#allocation17 + $0x498] sm:$0xff]
    %v4457 = vld [vmem:[#allocation17 + $0x4a0] sm:$0xff]
    %v4458 = vld [vmem:[#allocation17 + $0x4a8] sm:$0xff]
    %v4459 = vld [vmem:[#allocation17 + $0x4b0] sm:$0xff]
    %v4460 = vld [vmem:[#allocation17 + $0x4b8] sm:$0xff]
    %v4461 = vld [vmem:[#allocation17 + $0x4c0] sm:$0xff]
    %v4462 = vld [vmem:[#allocation17 + $0x4c8] sm:$0xff]
    %v4463 = vld [vmem:[#allocation17 + $0x4d0] sm:$0xff]
    %v4464 = vld [vmem:[#allocation17 + $0x4d8] sm:$0xff]
    %v4465 = vld [vmem:[#allocation17 + $0x4e0] sm:$0xff]
    %v4466 = vld [vmem:[#allocation17 + $0x4e8] sm:$0xff]
    %v4467 = vld [vmem:[#allocation17 + $0x4f0] sm:$0xff]
    %v4468 = vld [vmem:[#allocation17 + $0x4f8] sm:$0xff]
    %v4469 = vld [vmem:[#allocation17 + $0x500] sm:$0xff]
    %v4470 = vld [vmem:[#allocation17 + $0x508] sm:$0xff]
    %v4471 = vld [vmem:[#allocation17 + $0x510] sm:$0xff]
    %v4472 = vld [vmem:[#allocation17 + $0x518] sm:$0xff]
    %v4473 = vld [vmem:[#allocation17 + $0x520] sm:$0xff]
    %v4474 = vld [vmem:[#allocation17 + $0x528] sm:$0xff]
    %v4475 = vld [vmem:[#allocation17 + $0x530] sm:$0xff]
    %v4476 = vld [vmem:[#allocation17 + $0x538] sm:$0xff]
    %v4477 = vld [vmem:[#allocation17 + $0x540] sm:$0xff]
    %v4478 = vld [vmem:[#allocation17 + $0x548] sm:$0xff]
    %v4479 = vld [vmem:[#allocation17 + $0x550] sm:$0xff]
    %v4480 = vld [vmem:[#allocation17 + $0x558] sm:$0xff]
    %v4481 = vld [vmem:[#allocation17 + $0x560] sm:$0xff]
    %v4482 = vld [vmem:[#allocation17 + $0x568] sm:$0xff]
    %v4483 = vld [vmem:[#allocation17 + $0x570] sm:$0xff]
    %v4484 = vld [vmem:[#allocation17 + $0x578] sm:$0xff]
    %v4485 = vld [vmem:[#allocation17 + $0x580] sm:$0xff]
    %v4486 = vld [vmem:[#allocation17 + $0x588] sm:$0xff]
    %v4487 = vld [vmem:[#allocation17 + $0x590] sm:$0xff]
    %v4488 = vld [vmem:[#allocation17 + $0x598] sm:$0xff]
    %v4489 = vld [vmem:[#allocation17 + $0x5a0] sm:$0xff]
    %v4490 = vld [vmem:[#allocation17 + $0x5a8] sm:$0xff]
    %v4491 = vld [vmem:[#allocation17 + $0x5b0] sm:$0xff]
    %v4492 = vld [vmem:[#allocation17 + $0x5b8] sm:$0xff]
    %v4493 = vld [vmem:[#allocation17 + $0x5c0] sm:$0xff]
    %v4494 = vld [vmem:[#allocation17 + $0x5c8] sm:$0xff]
    %v4495 = vld [vmem:[#allocation17 + $0x5d0] sm:$0xff]
    %v4496 = vld [vmem:[#allocation17 + $0x5d8] sm:$0xff]
    %v4497 = vld [vmem:[#allocation17 + $0x5e0] sm:$0xff]
    %v4498 = vld [vmem:[#allocation17 + $0x5e8] sm:$0xff]
    %v4499 = vld [vmem:[#allocation17 + $0x5f0] sm:$0xff]
    %v4500 = vld [vmem:[#allocation17 + $0x5f8] sm:$0xff]
    %v4501 = vld [vmem:[#allocation17 + $0x600] sm:$0xff]
    %v4502 = vld [vmem:[#allocation17 + $0x608] sm:$0xff]
    %v4503 = vld [vmem:[#allocation17 + $0x610] sm:$0xff]
    %v4504 = vld [vmem:[#allocation17 + $0x618] sm:$0xff]
    %v4505 = vld [vmem:[#allocation17 + $0x620] sm:$0xff]
    %v4506 = vld [vmem:[#allocation17 + $0x628] sm:$0xff]
    %v4507 = vld [vmem:[#allocation17 + $0x630] sm:$0xff]
    %v4508 = vld [vmem:[#allocation17 + $0x638] sm:$0xff]
    %v4509 = vld [vmem:[#allocation17 + $0x640] sm:$0xff]
    %v4510 = vld [vmem:[#allocation17 + $0x648] sm:$0xff]
    %v4511 = vld [vmem:[#allocation17 + $0x650] sm:$0xff]
    %v4512 = vld [vmem:[#allocation17 + $0x658] sm:$0xff]
    %v4513 = vld [vmem:[#allocation17 + $0x660] sm:$0xff]
    %v4514 = vld [vmem:[#allocation17 + $0x668] sm:$0xff]
    %v4515 = vld [vmem:[#allocation17 + $0x670] sm:$0xff]
    %v4516 = vld [vmem:[#allocation17 + $0x678] sm:$0xff]
    %v4517 = vld [vmem:[#allocation17 + $0x680] sm:$0xff]
    %v4518 = vld [vmem:[#allocation17 + $0x688] sm:$0xff]
    %v4519 = vld [vmem:[#allocation17 + $0x690] sm:$0xff]
    %v4520 = vld [vmem:[#allocation17 + $0x698] sm:$0xff]
    %v4521 = vld [vmem:[#allocation17 + $0x6a0] sm:$0xff]
    %v4522 = vld [vmem:[#allocation17 + $0x6a8] sm:$0xff]
    %v4523 = vld [vmem:[#allocation17 + $0x6b0] sm:$0xff]
    %v4524 = vld [vmem:[#allocation17 + $0x6b8] sm:$0xff]
    %v4525 = vld [vmem:[#allocation17 + $0x6c0] sm:$0xff]
    %v4526 = vld [vmem:[#allocation17 + $0x6c8] sm:$0xff]
    %v4527 = vld [vmem:[#allocation17 + $0x6d0] sm:$0xff]
    %v4528 = vld [vmem:[#allocation17 + $0x6d8] sm:$0xff]
    %v4529 = vld [vmem:[#allocation17 + $0x6e0] sm:$0xff]
    %v4530 = vld [vmem:[#allocation17 + $0x6e8] sm:$0xff]
    %v4531 = vld [vmem:[#allocation17 + $0x6f0] sm:$0xff]
    %v4532 = vld [vmem:[#allocation17 + $0x6f8] sm:$0xff]
    %v4533 = vld [vmem:[#allocation17 + $0x700] sm:$0xff]
    %v4534 = vld [vmem:[#allocation17 + $0x708] sm:$0xff]
    %v4535 = vld [vmem:[#allocation17 + $0x710] sm:$0xff]
    %v4536 = vld [vmem:[#allocation17 + $0x718] sm:$0xff]
    %v4537 = vld [vmem:[#allocation17 + $0x720] sm:$0xff]
    %v4538 = vld [vmem:[#allocation17 + $0x728] sm:$0xff]
    %v4539 = vld [vmem:[#allocation17 + $0x730] sm:$0xff]
    %v4540 = vld [vmem:[#allocation17 + $0x738] sm:$0xff]
    %v4541 = vld [vmem:[#allocation17 + $0x740] sm:$0xff]
    %v4542 = vld [vmem:[#allocation17 + $0x748] sm:$0xff]
    %v4543 = vld [vmem:[#allocation17 + $0x750] sm:$0xff]
    %v4544 = vld [vmem:[#allocation17 + $0x758] sm:$0xff]
    %v4545 = vld [vmem:[#allocation17 + $0x760] sm:$0xff]
    %v4546 = vld [vmem:[#allocation17 + $0x768] sm:$0xff]
    %v4547 = vld [vmem:[#allocation17 + $0x770] sm:$0xff]
    %v4548 = vld [vmem:[#allocation17 + $0x778] sm:$0xff]
    %v4549 = vld [vmem:[#allocation17 + $0x780] sm:$0xff]
    %v4550 = vld [vmem:[#allocation17 + $0x788] sm:$0xff]
    %v4551 = vld [vmem:[#allocation17 + $0x790] sm:$0xff]
    %v4552 = vld [vmem:[#allocation17 + $0x798] sm:$0xff]
    %v4553 = vld [vmem:[#allocation17 + $0x7a0] sm:$0xff]
    %v4554 = vld [vmem:[#allocation17 + $0x7a8] sm:$0xff]
    %v4555 = vld [vmem:[#allocation17 + $0x7b0] sm:$0xff]
    %v4556 = vld [vmem:[#allocation17 + $0x7b8] sm:$0xff]
    %v4557 = vld [vmem:[#allocation17 + $0x7c0] sm:$0xff]
    %v4558 = vld [vmem:[#allocation17 + $0x7c8] sm:$0xff]
    %v4559 = vld [vmem:[#allocation17 + $0x7d0] sm:$0xff]
    %v4560 = vld [vmem:[#allocation17 + $0x7d8] sm:$0xff]
    %v4561 = vld [vmem:[#allocation17 + $0x7e0] sm:$0xff]
    %v4562 = vld [vmem:[#allocation17 + $0x7e8] sm:$0xff]
    %v4563 = vld [vmem:[#allocation17 + $0x7f0] sm:$0xff]
    %v4564 = vld [vmem:[#allocation17 + $0x7f8] sm:$0xff]
    %4565 = vmatprep.subr.mxu0 %v4310
    %4566 = vmatpush1.msra.mxu0 %v4309
    %4567 = vmatprep.subr.mxu0 %v4318
    %4568 = vmatpush1.msra.mxu0 %v4317
    %4569 = vmatprep.subr.mxu0 %v4326
    %4570 = vmatpush1.msra.mxu0 %v4325
    %4571 = vmatprep.subr.mxu0 %v4334
    %4572 = vmatpush1.msra.mxu0 %v4333
    %4573 = vmatprep.subr.mxu0 %v4342
    %4574 = vmatpush1.msra.mxu0 %v4341
    %4575 = vmatprep.subr.mxu0 %v4350
    %4576 = vmatpush1.msra.mxu0 %v4349
    %4577 = vmatprep.subr.mxu0 %v4358
    %4578 = vmatpush1.msra.mxu0 %v4357
    %4579 = vmatprep.subr.mxu0 %v4366
    %4580 = vmatpush1.msra.mxu0 %v4365
    %4581 = vmatprep.subr.mxu0 %v4374
    %4582 = vmatpush1.msra.mxu0 %v4373
    %4583 = vmatprep.subr.mxu0 %v4382
    %4584 = vmatpush1.msra.mxu0 %v4381
    %4585 = vmatprep.subr.mxu0 %v4390
    %4586 = vmatpush1.msra.mxu0 %v4389
    %4587 = vmatprep.subr.mxu0 %v4398
    %4588 = vmatpush1.msra.mxu0 %v4397
    %4589 = vmatprep.subr.mxu0 %v4406
    %4590 = vmatpush1.msra.mxu0 %v4405
    %4591 = vmatprep.subr.mxu0 %v4414
    %4592 = vmatpush1.msra.mxu0 %v4413
    %4593 = vmatprep.subr.mxu0 %v4422
    %4594 = vmatpush1.msra.mxu0 %v4421
    %4595 = vmatprep.subr.mxu0 %v4430
    %4596 = vmatpush1.msra.mxu0 %v4429
    %4597 = vmatprep.subr.mxu0 %v4438
    %4598 = vmatpush1.msra.mxu0 %v4437
    %4599 = vmatprep.subr.mxu0 %v4446
    %4600 = vmatpush1.msra.mxu0 %v4445
    %4601 = vmatprep.subr.mxu0 %v4454
    %4602 = vmatpush1.msra.mxu0 %v4453
    %4603 = vmatprep.subr.mxu0 %v4462
    %4604 = vmatpush1.msra.mxu0 %v4461
    %4605 = vmatprep.subr.mxu0 %v4470
    %4606 = vmatpush1.msra.mxu0 %v4469
    %4607 = vmatprep.subr.mxu0 %v4478
    %4608 = vmatpush1.msra.mxu0 %v4477
    %4609 = vmatprep.subr.mxu0 %v4486
    %4610 = vmatpush1.msra.mxu0 %v4485
    %4611 = vmatprep.subr.mxu0 %v4494
    %4612 = vmatpush1.msra.mxu0 %v4493
    %4613 = vmatprep.subr.mxu0 %v4502
    %4614 = vmatpush1.msra.mxu0 %v4501
    %4615 = vmatprep.subr.mxu0 %v4510
    %4616 = vmatpush1.msra.mxu0 %v4509
    %4617 = vmatprep.subr.mxu0 %v4518
    %4618 = vmatpush1.msra.mxu0 %v4517
    %4619 = vmatprep.subr.mxu0 %v4526
    %4620 = vmatpush1.msra.mxu0 %v4525
    %4621 = vmatprep.subr.mxu0 %v4534
    %4622 = vmatpush1.msra.mxu0 %v4533
    %4623 = vmatprep.subr.mxu0 %v4542
    %4624 = vmatpush1.msra.mxu0 %v4541
    %4625 = vmatprep.subr.mxu0 %v4550
    %4626 = vmatpush1.msra.mxu0 %v4549
    %4627 = vmatprep.subr.mxu0 %v4558
    %4628 = vmatpush1.msra.mxu0 %v4557
    %4629 = vmatprep.mubr.f32.mxu0 %v3758
    %4630 = vmatmul.mubr.f32.gmra.mrb[0].mxu0 %v3757
    %v4631 = vpop.f32.mrb[0].mxu0
    %v4632 = vadd.f32 %v4092, %v4631
    %v4633 = vpop.f32.mrb[0].mxu0
    %v4634 = vadd.f32 %v4094, %v4633
    %4635 = vdwg.mxu0
    %4636 = vmatprep.subr.mxu0 %v4312
    %4637 = vmatpush1.msra.mxu0 %v4311
    %4638 = vmatprep.subr.mxu0 %v4320
    %4639 = vmatpush1.msra.mxu0 %v4319
    %4640 = vmatprep.subr.mxu0 %v4328
    %4641 = vmatpush1.msra.mxu0 %v4327
    %4642 = vmatprep.subr.mxu0 %v4336
    %4643 = vmatpush1.msra.mxu0 %v4335
    %4644 = vmatprep.subr.mxu0 %v4344
    %4645 = vmatpush1.msra.mxu0 %v4343
    %4646 = vmatprep.subr.mxu0 %v4352
    %4647 = vmatpush1.msra.mxu0 %v4351
    %4648 = vmatprep.subr.mxu0 %v4360
    %4649 = vmatpush1.msra.mxu0 %v4359
    %4650 = vmatprep.subr.mxu0 %v4368
    %4651 = vmatpush1.msra.mxu0 %v4367
    %4652 = vmatprep.subr.mxu0 %v4376
    %4653 = vmatpush1.msra.mxu0 %v4375
    %4654 = vmatprep.subr.mxu0 %v4384
    %4655 = vmatpush1.msra.mxu0 %v4383
    %4656 = vmatprep.subr.mxu0 %v4392
    %4657 = vmatpush1.msra.mxu0 %v4391
    %4658 = vmatprep.subr.mxu0 %v4400
    %4659 = vmatpush1.msra.mxu0 %v4399
    %4660 = vmatprep.subr.mxu0 %v4408
    %4661 = vmatpush1.msra.mxu0 %v4407
    %4662 = vmatprep.subr.mxu0 %v4416
    %4663 = vmatpush1.msra.mxu0 %v4415
    %4664 = vmatprep.subr.mxu0 %v4424
    %4665 = vmatpush1.msra.mxu0 %v4423
    %4666 = vmatprep.subr.mxu0 %v4432
    %4667 = vmatpush1.msra.mxu0 %v4431
    %4668 = vmatprep.subr.mxu0 %v4440
    %4669 = vmatpush1.msra.mxu0 %v4439
    %4670 = vmatprep.subr.mxu0 %v4448
    %4671 = vmatpush1.msra.mxu0 %v4447
    %4672 = vmatprep.subr.mxu0 %v4456
    %4673 = vmatpush1.msra.mxu0 %v4455
    %4674 = vmatprep.subr.mxu0 %v4464
    %4675 = vmatpush1.msra.mxu0 %v4463
    %4676 = vmatprep.subr.mxu0 %v4472
    %4677 = vmatpush1.msra.mxu0 %v4471
    %4678 = vmatprep.subr.mxu0 %v4480
    %4679 = vmatpush1.msra.mxu0 %v4479
    %4680 = vmatprep.subr.mxu0 %v4488
    %4681 = vmatpush1.msra.mxu0 %v4487
    %4682 = vmatprep.subr.mxu0 %v4496
    %4683 = vmatpush1.msra.mxu0 %v4495
    %4684 = vmatprep.subr.mxu0 %v4504
    %4685 = vmatpush1.msra.mxu0 %v4503
    %4686 = vmatprep.subr.mxu0 %v4512
    %4687 = vmatpush1.msra.mxu0 %v4511
    %4688 = vmatprep.subr.mxu0 %v4520
    %4689 = vmatpush1.msra.mxu0 %v4519
    %4690 = vmatprep.subr.mxu0 %v4528
    %4691 = vmatpush1.msra.mxu0 %v4527
    %4692 = vmatprep.subr.mxu0 %v4536
    %4693 = vmatpush1.msra.mxu0 %v4535
    %4694 = vmatprep.subr.mxu0 %v4544
    %4695 = vmatpush1.msra.mxu0 %v4543
    %4696 = vmatprep.subr.mxu0 %v4552
    %4697 = vmatpush1.msra.mxu0 %v4551
    %4698 = vmatprep.subr.mxu0 %v4560
    %4699 = vmatpush1.msra.mxu0 %v4559
    %4700 = vmatprep.mubr.f32.mxu0 %v3758
    %4701 = vmatmul.mubr.f32.gmra.mrb[0].mxu0 %v3757
    %v4702 = vpop.f32.mrb[0].mxu0
    %v4703 = vadd.f32 %v4163, %v4702
    %v4704 = vpop.f32.mrb[0].mxu0
    %v4705 = vadd.f32 %v4165, %v4704
    %4706 = vdwg.mxu0
    %4707 = vmatprep.subr.mxu0 %v4314
    %4708 = vmatpush1.msra.mxu0 %v4313
    %4709 = vmatprep.subr.mxu0 %v4322
    %4710 = vmatpush1.msra.mxu0 %v4321
    %4711 = vmatprep.subr.mxu0 %v4330
    %4712 = vmatpush1.msra.mxu0 %v4329
    %4713 = vmatprep.subr.mxu0 %v4338
    %4714 = vmatpush1.msra.mxu0 %v4337
    %4715 = vmatprep.subr.mxu0 %v4346
    %4716 = vmatpush1.msra.mxu0 %v4345
    %4717 = vmatprep.subr.mxu0 %v4354
    %4718 = vmatpush1.msra.mxu0 %v4353
    %4719 = vmatprep.subr.mxu0 %v4362
    %4720 = vmatpush1.msra.mxu0 %v4361
    %4721 = vmatprep.subr.mxu0 %v4370
    %4722 = vmatpush1.msra.mxu0 %v4369
    %4723 = vmatprep.subr.mxu0 %v4378
    %4724 = vmatpush1.msra.mxu0 %v4377
    %4725 = vmatprep.subr.mxu0 %v4386
    %4726 = vmatpush1.msra.mxu0 %v4385
    %4727 = vmatprep.subr.mxu0 %v4394
    %4728 = vmatpush1.msra.mxu0 %v4393
    %4729 = vmatprep.subr.mxu0 %v4402
    %4730 = vmatpush1.msra.mxu0 %v4401
    %4731 = vmatprep.subr.mxu0 %v4410
    %4732 = vmatpush1.msra.mxu0 %v4409
    %4733 = vmatprep.subr.mxu0 %v4418
    %4734 = vmatpush1.msra.mxu0 %v4417
    %4735 = vmatprep.subr.mxu0 %v4426
    %4736 = vmatpush1.msra.mxu0 %v4425
    %4737 = vmatprep.subr.mxu0 %v4434
    %4738 = vmatpush1.msra.mxu0 %v4433
    %4739 = vmatprep.subr.mxu0 %v4442
    %4740 = vmatpush1.msra.mxu0 %v4441
    %4741 = vmatprep.subr.mxu0 %v4450
    %4742 = vmatpush1.msra.mxu0 %v4449
    %4743 = vmatprep.subr.mxu0 %v4458
    %4744 = vmatpush1.msra.mxu0 %v4457
    %4745 = vmatprep.subr.mxu0 %v4466
    %4746 = vmatpush1.msra.mxu0 %v4465
    %4747 = vmatprep.subr.mxu0 %v4474
    %4748 = vmatpush1.msra.mxu0 %v4473
    %4749 = vmatprep.subr.mxu0 %v4482
    %4750 = vmatpush1.msra.mxu0 %v4481
    %4751 = vmatprep.subr.mxu0 %v4490
    %4752 = vmatpush1.msra.mxu0 %v4489
    %4753 = vmatprep.subr.mxu0 %v4498
    %4754 = vmatpush1.msra.mxu0 %v4497
    %4755 = vmatprep.subr.mxu0 %v4506
    %4756 = vmatpush1.msra.mxu0 %v4505
    %4757 = vmatprep.subr.mxu0 %v4514
    %4758 = vmatpush1.msra.mxu0 %v4513
    %4759 = vmatprep.subr.mxu0 %v4522
    %4760 = vmatpush1.msra.mxu0 %v4521
    %4761 = vmatprep.subr.mxu0 %v4530
    %4762 = vmatpush1.msra.mxu0 %v4529
    %4763 = vmatprep.subr.mxu0 %v4538
    %4764 = vmatpush1.msra.mxu0 %v4537
    %4765 = vmatprep.subr.mxu0 %v4546
    %4766 = vmatpush1.msra.mxu0 %v4545
    %4767 = vmatprep.subr.mxu0 %v4554
    %4768 = vmatpush1.msra.mxu0 %v4553
    %4769 = vmatprep.subr.mxu0 %v4562
    %4770 = vmatpush1.msra.mxu0 %v4561
    %4771 = vmatprep.mubr.f32.mxu0 %v3758
    %4772 = vmatmul.mubr.f32.gmra.mrb[0].mxu0 %v3757
    %v4773 = vpop.f32.mrb[0].mxu0
    %v4774 = vadd.f32 %v4234, %v4773
    %v4775 = vpop.f32.mrb[0].mxu0
    %v4776 = vadd.f32 %v4236, %v4775
    %4777 = vdwg.mxu0
    %4778 = vmatprep.subr.mxu0 %v4316
    %4779 = vmatpush1.msra.mxu0 %v4315
    %4780 = vmatprep.subr.mxu0 %v4324
    %4781 = vmatpush1.msra.mxu0 %v4323
    %4782 = vmatprep.subr.mxu0 %v4332
    %4783 = vmatpush1.msra.mxu0 %v4331
    %4784 = vmatprep.subr.mxu0 %v4340
    %4785 = vmatpush1.msra.mxu0 %v4339
    %4786 = vmatprep.subr.mxu0 %v4348
    %4787 = vmatpush1.msra.mxu0 %v4347
    %4788 = vmatprep.subr.mxu0 %v4356
    %4789 = vmatpush1.msra.mxu0 %v4355
    %4790 = vmatprep.subr.mxu0 %v4364
    %4791 = vmatpush1.msra.mxu0 %v4363
    %4792 = vmatprep.subr.mxu0 %v4372
    %4793 = vmatpush1.msra.mxu0 %v4371
    %4794 = vmatprep.subr.mxu0 %v4380
    %4795 = vmatpush1.msra.mxu0 %v4379
    %4796 = vmatprep.subr.mxu0 %v4388
    %4797 = vmatpush1.msra.mxu0 %v4387
    %4798 = vmatprep.subr.mxu0 %v4396
    %4799 = vmatpush1.msra.mxu0 %v4395
    %4800 = vmatprep.subr.mxu0 %v4404
    %4801 = vmatpush1.msra.mxu0 %v4403
    %4802 = vmatprep.subr.mxu0 %v4412
    %4803 = vmatpush1.msra.mxu0 %v4411
    %4804 = vmatprep.subr.mxu0 %v4420
    %4805 = vmatpush1.msra.mxu0 %v4419
    %4806 = vmatprep.subr.mxu0 %v4428
    %4807 = vmatpush1.msra.mxu0 %v4427
    %4808 = vmatprep.subr.mxu0 %v4436
    %4809 = vmatpush1.msra.mxu0 %v4435
    %4810 = vmatprep.subr.mxu0 %v4444
    %4811 = vmatpush1.msra.mxu0 %v4443
    %4812 = vmatprep.subr.mxu0 %v4452
    %4813 = vmatpush1.msra.mxu0 %v4451
    %4814 = vmatprep.subr.mxu0 %v4460
    %4815 = vmatpush1.msra.mxu0 %v4459
    %4816 = vmatprep.subr.mxu0 %v4468
    %4817 = vmatpush1.msra.mxu0 %v4467
    %4818 = vmatprep.subr.mxu0 %v4476
    %4819 = vmatpush1.msra.mxu0 %v4475
    %4820 = vmatprep.subr.mxu0 %v4484
    %4821 = vmatpush1.msra.mxu0 %v4483
    %4822 = vmatprep.subr.mxu0 %v4492
    %4823 = vmatpush1.msra.mxu0 %v4491
    %4824 = vmatprep.subr.mxu0 %v4500
    %4825 = vmatpush1.msra.mxu0 %v4499
    %4826 = vmatprep.subr.mxu0 %v4508
    %4827 = vmatpush1.msra.mxu0 %v4507
    %4828 = vmatprep.subr.mxu0 %v4516
    %4829 = vmatpush1.msra.mxu0 %v4515
    %4830 = vmatprep.subr.mxu0 %v4524
    %4831 = vmatpush1.msra.mxu0 %v4523
    %4832 = vmatprep.subr.mxu0 %v4532
    %4833 = vmatpush1.msra.mxu0 %v4531
    %4834 = vmatprep.subr.mxu0 %v4540
    %4835 = vmatpush1.msra.mxu0 %v4539
    %4836 = vmatprep.subr.mxu0 %v4548
    %4837 = vmatpush1.msra.mxu0 %v4547
    %4838 = vmatprep.subr.mxu0 %v4556
    %4839 = vmatpush1.msra.mxu0 %v4555
    %4840 = vmatprep.subr.mxu0 %v4564
    %4841 = vmatpush1.msra.mxu0 %v4563
    %4842 = vmatprep.mubr.f32.mxu0 %v3758
    %4843 = vmatmul.mubr.f32.gmra.mrb[0].mxu0 %v3757
    %v4844 = vpop.f32.mrb[0].mxu0
    %v4845 = vadd.f32 %v4305, %v4844
    %v4846 = vpop.f32.mrb[0].mxu0
    %v4847 = vadd.f32 %v4307, %v4846
    %4848 = vdwg.mxu0
    %v4849 = vld [vmem:[#allocation20] sm:$0xff]
    %v4851 = vlaneseq
    %v4852 = vshrl.u32 %v4851, 7
    %v4853 = vsub.s32 0, %v4852
    %v4854 = vrot.slane %v4849, %v4853
    %v4855 = vlaneseq
    %v4856 = vshrl.u32 %v4855, 7
    %v4857 = vsub.s32 1, %v4856
    %v4858 = vrot.slane %v4849, %v4857
    %v4859 = vlaneseq
    %v4860 = vshrl.u32 %v4859, 7
    %v4861 = vsub.s32 2, %v4860
    %v4862 = vrot.slane %v4849, %v4861
    %v4863 = vlaneseq
    %v4864 = vshrl.u32 %v4863, 7
    %v4865 = vsub.s32 3, %v4864
    %v4866 = vrot.slane %v4849, %v4865
    %v4867 = vlaneseq
    %v4868 = vshrl.u32 %v4867, 7
    %v4869 = vsub.s32 4, %v4868
    %v4870 = vrot.slane %v4849, %v4869
    %v4871 = vlaneseq
    %v4872 = vshrl.u32 %v4871, 7
    %v4873 = vsub.s32 5, %v4872
    %v4874 = vrot.slane %v4849, %v4873
    %v4875 = vlaneseq
    %v4876 = vshrl.u32 %v4875, 7
    %v4877 = vsub.s32 6, %v4876
    %v4878 = vrot.slane %v4849, %v4877
    %v4879 = vlaneseq
    %v4880 = vshrl.u32 %v4879, 7
    %v4881 = vsub.s32 7, %v4880
    %v4882 = vrot.slane %v4849, %v4881
    %v4891 = vadd.f32 %v4632, %v4854
    %v4892 = vadd.f32 %v4634, %v4858
    %v4893 = vadd.f32 %v4703, %v4862
    %v4894 = vadd.f32 %v4705, %v4866
    %v4895 = vadd.f32 %v4774, %v4870
    %v4896 = vadd.f32 %v4776, %v4874
    %v4897 = vadd.f32 %v4845, %v4878
    %v4898 = vadd.f32 %v4847, %v4882
    %v4899 = vmul.f32 %v4891, 0.5
    %v4900 = vmul.f32 %v4892, 0.5
    %v4901 = vtanh.pop %v4899
    %v4902 = vtanh.pop %v4900
    %v4903 = vadd.f32 %v4901, 1.0
    %v4904 = vadd.f32 %v4902, 1.0
    %v4905 = vmul.f32 %v4903, 0.5
    %v4906 = vmul.f32 %v4904, 0.5
    %v4907 = vmul.f32 %v4893, 0.5
    %v4908 = vmul.f32 %v4894, 0.5
    %v4909 = vtanh.pop %v4907
    %v4910 = vtanh.pop %v4908
    %v4911 = vadd.f32 %v4909, 1.0
    %v4912 = vadd.f32 %v4910, 1.0
    %v4913 = vmul.f32 %v4911, 0.5
    %v4914 = vmul.f32 %v4912, 0.5
    %v4915 = vtanh.pop %v4895
    %v4916 = vtanh.pop %v4896
    %v4917 = vmul.f32 %v4897, 0.5
    %v4918 = vmul.f32 %v4898, 0.5
    %v4919 = vtanh.pop %v4917
    %v4920 = vtanh.pop %v4918
    %v4921 = vadd.f32 %v4919, 1.0
    %v4922 = vadd.f32 %v4920, 1.0
    %v4923 = vmul.f32 %v4921, 0.5
    %v4924 = vmul.f32 %v4922, 0.5
    %v4925 = vmul.f32 %v4913, %v4023
    %v4926 = vmul.f32 %v4914, %v4024
    %v4927 = vmul.f32 %v4905, %v4915
    %v4928 = vmul.f32 %v4906, %v4916
    %v4929 = vadd.f32 %v4925, %v4927
    %v4930 = vadd.f32 %v4926, %v4928
    %v4931 = vtanh.pop %v4929
    %v4932 = vtanh.pop %v4930
    %v4933 = vmul.f32 %v4923, %v4931
    %v4934 = vmul.f32 %v4924, %v4932
    %4935 = vst [vmem:[%s4019] sm:$0xff] %v4933
    %4936 = vst [vmem:[%s4019 + $0x8] sm:$0xff] %v4934
    %4937 = vst [vmem:[%s4022] sm:$0xff] %v4929
    %4938 = vst [vmem:[%s4022 + $0x8] sm:$0xff] %v4930
    %4939 = vst [vmem:[#allocation3] sm:$0xff] %v4933
    %4940 = vst [vmem:[#allocation3 + $0x8] sm:$0xff] %v4934
    %v4941 = vld [vmem:[%s15] sm:$0xff]
    %v4942 = vld [vmem:[%s15 + $0x8] sm:$0xff]
    %v4943 = vld [vmem:[%s15 + $0x10] sm:$0xff]
    %v4944 = vld [vmem:[%s15 + $0x18] sm:$0xff]
    %v4945 = vld [vmem:[%s15 + $0x20] sm:$0xff]
    %v4946 = vld [vmem:[%s15 + $0x28] sm:$0xff]
    %v4947 = vld [vmem:[%s15 + $0x30] sm:$0xff]
    %v4948 = vld [vmem:[%s15 + $0x38] sm:$0xff]
    %v4949 = vld [vmem:[%s15 + $0x40] sm:$0xff]
    %v4950 = vld [vmem:[%s15 + $0x48] sm:$0xff]
    %v4951 = vld [vmem:[%s15 + $0x50] sm:$0xff]
    %v4952 = vld [vmem:[%s15 + $0x58] sm:$0xff]
    %v4953 = vld [vmem:[%s15 + $0x60] sm:$0xff]
    %v4954 = vld [vmem:[%s15 + $0x68] sm:$0xff]
    %v4955 = vld [vmem:[%s15 + $0x70] sm:$0xff]
    %v4956 = vld [vmem:[%s15 + $0x78] sm:$0xff]
    %v4957 = vld [vmem:[%s15 + $0x80] sm:$0xff]
    %v4958 = vld [vmem:[%s15 + $0x88] sm:$0xff]
    %v4959 = vld [vmem:[%s15 + $0x90] sm:$0xff]
    %v4960 = vld [vmem:[%s15 + $0x98] sm:$0xff]
    %v4961 = vld [vmem:[%s15 + $0xa0] sm:$0xff]
    %v4962 = vld [vmem:[%s15 + $0xa8] sm:$0xff]
    %v4963 = vld [vmem:[%s15 + $0xb0] sm:$0xff]
    %v4964 = vld [vmem:[%s15 + $0xb8] sm:$0xff]
    %v4965 = vld [vmem:[%s15 + $0xc0] sm:$0xff]
    %v4966 = vld [vmem:[%s15 + $0xc8] sm:$0xff]
    %v4967 = vld [vmem:[%s15 + $0xd0] sm:$0xff]
    %v4968 = vld [vmem:[%s15 + $0xd8] sm:$0xff]
    %v4969 = vld [vmem:[%s15 + $0xe0] sm:$0xff]
    %v4970 = vld [vmem:[%s15 + $0xe8] sm:$0xff]
    %v4971 = vld [vmem:[%s15 + $0xf0] sm:$0xff]
    %v4972 = vld [vmem:[%s15 + $0xf8] sm:$0xff]
    %v4973 = vld [vmem:[#allocation3] sm:$0xff]
    %v4974 = vld [vmem:[#allocation3 + $0x8] sm:$0xff]
    %v4975 = vld [vmem:[#allocation21] sm:$0x1]
    %v4977 = vlaneseq
    %v4978 = vshrl.u32 %v4977, 7
    %v4979 = vsub.s32 0, %v4978
    %v4980 = vrot.slane %v4975, %v4979
    %4982 = vmatprep.subr.mxu0 0.0
    %4983 = vmatpush1.msra.mxu0 %v4941
    %4984 = vmatprep.subr.mxu0 0.0
    %4985 = vmatpush1.msra.mxu0 %v4942
    %4986 = vmatprep.subr.mxu0 0.0
    %4987 = vmatpush1.msra.mxu0 %v4943
    %4988 = vmatprep.subr.mxu0 0.0
    %4989 = vmatpush1.msra.mxu0 %v4944
    %4990 = vmatprep.subr.mxu0 0.0
    %4991 = vmatpush1.msra.mxu0 %v4945
    %4992 = vmatprep.subr.mxu0 0.0
    %4993 = vmatpush1.msra.mxu0 %v4946
    %4994 = vmatprep.subr.mxu0 0.0
    %4995 = vmatpush1.msra.mxu0 %v4947
    %4996 = vmatprep.subr.mxu0 0.0
    %4997 = vmatpush1.msra.mxu0 %v4948
    %4998 = vmatprep.subr.mxu0 0.0
    %4999 = vmatpush1.msra.mxu0 %v4949
    %5000 = vmatprep.subr.mxu0 0.0
    %5001 = vmatpush1.msra.mxu0 %v4950
    %5002 = vmatprep.subr.mxu0 0.0
    %5003 = vmatpush1.msra.mxu0 %v4951
    %5004 = vmatprep.subr.mxu0 0.0
    %5005 = vmatpush1.msra.mxu0 %v4952
    %5006 = vmatprep.subr.mxu0 0.0
    %5007 = vmatpush1.msra.mxu0 %v4953
    %5008 = vmatprep.subr.mxu0 0.0
    %5009 = vmatpush1.msra.mxu0 %v4954
    %5010 = vmatprep.subr.mxu0 0.0
    %5011 = vmatpush1.msra.mxu0 %v4955
    %5012 = vmatprep.subr.mxu0 0.0
    %5013 = vmatpush1.msra.mxu0 %v4956
    %5014 = vmatprep.subr.mxu0 0.0
    %5015 = vmatpush1.msra.mxu0 %v4957
    %5016 = vmatprep.subr.mxu0 0.0
    %5017 = vmatpush1.msra.mxu0 %v4958
    %5018 = vmatprep.subr.mxu0 0.0
    %5019 = vmatpush1.msra.mxu0 %v4959
    %5020 = vmatprep.subr.mxu0 0.0
    %5021 = vmatpush1.msra.mxu0 %v4960
    %5022 = vmatprep.subr.mxu0 0.0
    %5023 = vmatpush1.msra.mxu0 %v4961
    %5024 = vmatprep.subr.mxu0 0.0
    %5025 = vmatpush1.msra.mxu0 %v4962
    %5026 = vmatprep.subr.mxu0 0.0
    %5027 = vmatpush1.msra.mxu0 %v4963
    %5028 = vmatprep.subr.mxu0 0.0
    %5029 = vmatpush1.msra.mxu0 %v4964
    %5030 = vmatprep.subr.mxu0 0.0
    %5031 = vmatpush1.msra.mxu0 %v4965
    %5032 = vmatprep.subr.mxu0 0.0
    %5033 = vmatpush1.msra.mxu0 %v4966
    %5034 = vmatprep.subr.mxu0 0.0
    %5035 = vmatpush1.msra.mxu0 %v4967
    %5036 = vmatprep.subr.mxu0 0.0
    %5037 = vmatpush1.msra.mxu0 %v4968
    %5038 = vmatprep.subr.mxu0 0.0
    %5039 = vmatpush1.msra.mxu0 %v4969
    %5040 = vmatprep.subr.mxu0 0.0
    %5041 = vmatpush1.msra.mxu0 %v4970
    %5042 = vmatprep.subr.mxu0 0.0
    %5043 = vmatpush1.msra.mxu0 %v4971
    %5044 = vmatprep.subr.mxu0 0.0
    %5045 = vmatpush1.msra.mxu0 %v4972
    %5046 = vmatprep.mubr.f32.mxu0 %v4974
    %5047 = vmatmul.mubr.f32.gmra.mrb[0].mxu0 %v4973
    %v5048 = vpop.f32.mrb[0].mxu0
    %v5049 = vadd.f32 %v4980, %v5048
    %v5050 = vpop.f32.mrb[0].mxu0
    %5051 = vdwg.mxu0
    %5052 = vst [vmem:[%s19] sm:$0xff] %v5049
    // Predicated region
    $region126: #{decoder_rollout.1} parent=1 // pred_check
      _
    $region127: #{decoder_rollout.1} parent=1 // pred_check_branch
      %5054 = sbr.rel (0) target = $region129
    $region128: #{decoder_rollout.1} parent=1 // pred_region
      _
    $region129: #{decoder_rollout.1} parent=1 // pred_fallthru
      _
    // Predicated region
    $region130: #{decoder_rollout.1} parent=1 // pred_check
      _
    $region131: #{decoder_rollout.1} parent=1 // pred_check_branch
      %5056 = sbr.rel (0) target = $region133
    $region132: #{decoder_rollout.1} parent=1 // pred_region
      _
    $region133: #{decoder_rollout.1} parent=1 // pred_fallthru
      _
    // Predicated region
    $region134: #{decoder_rollout.1} parent=1 // pred_check
      _
    $region135: #{decoder_rollout.1} parent=1 // pred_check_branch
      %5058 = sbr.rel (0) target = $region137
    $region136: #{decoder_rollout.1} parent=1 // pred_region
      _
    $region137: #{decoder_rollout.1} parent=1 // pred_fallthru
      _
    // Predicated region
    $region138: #{decoder_rollout.1} parent=1 // pred_check
      _
    $region139: #{decoder_rollout.1} parent=1 // pred_check_branch
      %5060 = sbr.rel (0) target = $region141
    $region140: #{decoder_rollout.1} parent=1 // pred_region
      _
    $region141: #{decoder_rollout.1} parent=1 // pred_fallthru
      _
    // Predicated region
    $region142: #{decoder_rollout.1} parent=1 // pred_check
      _
    $region143: #{decoder_rollout.1} parent=1 // pred_check_branch
      %5062 = sbr.rel (0) target = $region145
    $region144: #{decoder_rollout.1} parent=1 // pred_region
      _
    $region145: #{decoder_rollout.1} parent=1 // pred_fallthru
      _
    // Predicated region
    $region146: #{decoder_rollout.1} parent=1 // pred_check
      _
    $region147: #{decoder_rollout.1} parent=1 // pred_check_branch
      %5064 = sbr.rel (0) target = $region149
    $region148: #{decoder_rollout.1} parent=1 // pred_region
      _
    $region149: #{decoder_rollout.1} parent=1 // pred_fallthru
      _
    %5065 = vsyncpa [#allocation5], 1
    %5066 = vsyncpa [#allocation7], 1
    %5067 = vsyncpa [#allocation10], 1
    %5068 = vsyncpa [#allocation13], 1
    %5069 = vsyncpa [#allocation16], 1
    %5070 = vsyncpa [#allocation19], 1
    %5071 = vsyncpa [#allocation22], 1

</llo_original>
